<compile_context>
chip_gen: v5e
topology: v5e:2x2
jax: 0.10.0
libtpu: 0.0.40
codegen_flags: <defaults>
</compile_context>

<pallas_src>
import math

import jax
import jax.numpy as jnp
from jax import lax
from jax.experimental import pallas as pl
from jax.experimental.pallas import tpu as pltpu

# ----------------------------- config ---------------------------------------
B = 2            # batch
S = 8            # sequence length
M = B * S        # flattened activation rows
VOCAB = 100      # vocab size
E = 32           # word_embed_dim (glove)
D_MODEL = 512    # transFC output / transformer d_model
NHEAD = 8
HEAD_DIM = D_MODEL // NHEAD
D_FF = 2048      # TransformerEncoderLayer default dim_feedforward
FF_CHUNK = 512   # D_FF streamed in chunks of this width
KT = D_FF // FF_CHUNK
OUT = 12         # output_size (number of POS tags)
OUT_PAD = 128    # lane-dense padded classifier width (sliced back to OUT outside)
NUM_LAYERS = 2   # self.layer_size
LN_EPS = 1e-5
NEG_INF = -1e30

_DN_T = (((1,), (1,)), ((), ()))   # contract last dim of lhs with last dim of rhs


def _layernorm(s, g, b):
    mu = jnp.mean(s, axis=-1, keepdims=True)
    var = jnp.mean((s - mu) ** 2, axis=-1, keepdims=True)
    return (s - mu) * lax.rsqrt(var + LN_EPS) * g + b


# ----------------------------- fused kernel ---------------------------------
def _encoder_kernel(
    emb_ref, tfc_w_ref, tfc_b_ref, amask_ref,
    wqkv_ref, bqkv_ref, wo_ref, bo_ref, ln1g_ref, ln1b_ref,
    w1_ref, b1_ref, w2_ref, b2_ref, ln2g_ref, ln2b_ref,
    fc_w_ref, fc_b_ref,
    p_ref, logp_ref,
    x_ref, x1_ref, h2_ref,     # VMEM scratch: resident f32 activations / FF accumulator
):
    l = pl.program_id(0)       # encoder layer
    k = pl.program_id(1)       # feed-forward D_FF chunk

    # -- prologue (first grid step only): transFC projection of the glove embeddings --
    @pl.when(jnp.logical_and(l == 0, k == 0))
    def _():
        x_ref[...] = (
            jnp.dot(emb_ref[...].astype(jnp.bfloat16), tfc_w_ref[...],
                    preferred_element_type=jnp.float32)
            + tfc_b_ref[...]
        )

    # ------------- multi-head self-attention + LN1 (once per layer, at k==0) ----------
    @pl.when(k == 0)
    def _():
        x = x_ref[...]                               # (M, D_MODEL) f32
        x16 = x.astype(jnp.bfloat16)

        # one lane-dense fused QKV projection: (16,512) @ (512,1536)
        qkv = (jnp.dot(x16, wqkv_ref[0], preferred_element_type=jnp.float32)
               + bqkv_ref[0])                        # (M, 3*D_MODEL) f32
        qkv16 = qkv.astype(jnp.bfloat16)

        amask = amask_ref[...]                       # (M, M) block-diag + key-pad bias
        scale = 1.0 / math.sqrt(HEAD_DIM)

        pv_heads = []
        for h in range(NHEAD):
            q_h = qkv16[:, h * HEAD_DIM:(h + 1) * HEAD_DIM]
            k_h = qkv16[:, D_MODEL + h * HEAD_DIM:D_MODEL + (h + 1) * HEAD_DIM]
            v_h = qkv16[:, 2 * D_MODEL + h * HEAD_DIM:2 * D_MODEL + (h + 1) * HEAD_DIM]
            # scores over ALL 16 rows at once; cross-batch pairs are masked to -1e30.
            scores = (lax.dot_general(q_h, k_h, _DN_T,
                                      preferred_element_type=jnp.float32) * scale
                      + amask)                       # (M, M)
            mx = jnp.max(scores, axis=-1, keepdims=True)
            e = jnp.exp(scores - mx)
            inv = pl.reciprocal(jnp.sum(e, axis=-1, keepdims=True), approx=True)
            p = (e * inv).astype(jnp.bfloat16)
            pv_heads.append(jnp.dot(p, v_h, preferred_element_type=jnp.float32))
        # concat heads -> ONE (16,512) @ (512,512) out-projection
        pv = jnp.concatenate(pv_heads, axis=-1).astype(jnp.bfloat16)   # (M, D_MODEL)
        attn = jnp.dot(pv, wo_ref[0], preferred_element_type=jnp.float32) + bo_ref[0]

        # residual + LayerNorm1 (post-norm); reset FF accumulator
        x1_ref[...] = _layernorm(x + attn, ln1g_ref[0], ln1b_ref[0])
        h2_ref[...] = jnp.zeros_like(h2_ref)

    # ------------------------ feed-forward, one D_FF chunk ---------------------------
    x1 = x1_ref[...]
    h1c = jnp.maximum(
        jnp.dot(x1.astype(jnp.bfloat16), w1_ref[0],
                preferred_element_type=jnp.float32) + b1_ref[0], 0.0)   # (M, FF_CHUNK)
    h2_ref[...] += jnp.dot(h1c.astype(jnp.bfloat16), w2_ref[0],
                           preferred_element_type=jnp.float32)

    # ---------------- residual + LayerNorm2 (once per layer, at last chunk) ----------
    @pl.when(k == KT - 1)
    def _():
        x_ref[...] = _layernorm(x1_ref[...] + h2_ref[...] + b2_ref[0],
                                ln2g_ref[0], ln2b_ref[0])

    # -- epilogue (last layer, last chunk): fc_tar + softmax / log_softmax --
    @pl.when(jnp.logical_and(l == NUM_LAYERS - 1, k == KT - 1))
    def _():
        logits = (jnp.dot(x_ref[...].astype(jnp.bfloat16), fc_w_ref[...],
                          preferred_element_type=jnp.float32) + fc_b_ref[...])
        mxl = jnp.max(logits, axis=-1, keepdims=True)    # pad cols hold -1e30 bias
        z = logits - mxl
        ez = jnp.exp(z)
        den = jnp.sum(ez, axis=-1, keepdims=True)
        p_ref[...] = ez / den                            # exact divide: runs once, tiny
        logp_ref[...] = z - jnp.log(den)


# ----------------------------- wrapper ---------------------------------------
def _const_spec(shape):
    zeros = (0,) * len(shape)
    return pl.BlockSpec(shape, lambda l, k: zeros)


def _layer_spec(shape):
    zeros = (0,) * len(shape)
    return pl.BlockSpec((1,) + shape, lambda l, k: (l,) + zeros)


def pos_model_forward(params, sentence, mask):
    # glove lookup: tiny (B*S, E) gather, left to XLA.
    emb = jnp.take(params["embedding"], sentence.reshape(-1), axis=0)      # (M, E)

    # additive attention mask, pre-broadcast to (M, M): query row i may attend to key j
    # only if same batch AND key j is not padding (src_key_padding_mask semantics).
    valid = mask.reshape(-1) > 0                                           # (M,)
    batch_id = jnp.arange(M) // S
    same_batch = batch_id[:, None] == batch_id[None, :]                    # (M, M)
    attn_mask = jnp.where(same_batch & valid[None, :], 0.0, NEG_INF
                          ).astype(jnp.float32)                            # (M, M)

    p_pad, logp_pad = pl.pallas_call(
        _encoder_kernel,
        out_shape=(jax.ShapeDtypeStruct((M, OUT_PAD), jnp.float32),
                   jax.ShapeDtypeStruct((M, OUT_PAD), jnp.float32)),
        grid=(NUM_LAYERS, KT),
        in_specs=[
            _const_spec((M, E)),                              # emb
            _const_spec((E, D_MODEL)),                        # transFC weight (bf16)
            _const_spec((1, D_MODEL)),                        # transFC bias
            _const_spec((M, M)),                              # attention additive mask
            _layer_spec((D_MODEL, 3 * D_MODEL)),              # fused QKV weight (bf16)
            _layer_spec((1, 3 * D_MODEL)),                    # fused QKV bias (lane-dense)
            _layer_spec((D_MODEL, D_MODEL)),                  # out-proj weight (bf16)
            _layer_spec((1, D_MODEL)),                        # out-proj bias
            _layer_spec((1, D_MODEL)),                        # ln1 gamma
            _layer_spec((1, D_MODEL)),                        # ln1 beta
            pl.BlockSpec((1, D_MODEL, FF_CHUNK), lambda l, k: (l, 0, k)),   # ff w1 chunk (bf16)
            pl.BlockSpec((1, 1, FF_CHUNK), lambda l, k: (l, 0, k)),         # ff b1 chunk
            pl.BlockSpec((1, FF_CHUNK, D_MODEL), lambda l, k: (l, k, 0)),   # ff w2 chunk (bf16)
            _layer_spec((1, D_MODEL)),                        # ff b2
            _layer_spec((1, D_MODEL)),                        # ln2 gamma
            _layer_spec((1, D_MODEL)),                        # ln2 beta
            _const_spec((D_MODEL, OUT_PAD)),                  # fc_tar weight, padded (bf16)
            _const_spec((1, OUT_PAD)),                        # fc_tar bias (-1e30 in pad cols)
        ],
        out_specs=(_const_spec((M, OUT_PAD)), _const_spec((M, OUT_PAD))),
        scratch_shapes=[pltpu.VMEM((M, D_MODEL), jnp.float32),   # x   (layer input/output)
                        pltpu.VMEM((M, D_MODEL), jnp.float32),   # x1  (post-attention)
                        pltpu.VMEM((M, D_MODEL), jnp.float32)],  # h2  (FF accumulator)
        compiler_params=pltpu.CompilerParams(
            dimension_semantics=("arbitrary", "arbitrary"),   # layer carry, FF-chunk accum
            vmem_limit_bytes=32 * 1024 * 1024,                # ~7 MB used; headroom everywhere
        ),
    )(emb, params["tfc_w"], params["tfc_b"], attn_mask,
      params["wqkv"], params["bqkv"], params["wo"], params["bo"],
      params["ln1_g"], params["ln1_b"],
      params["w1"], params["b1"], params["w2"], params["b2"],
      params["ln2_g"], params["ln2_b"],
      params["fc_w"], params["fc_b"])

    p = p_pad[:, :OUT].reshape(B, S, OUT)
    logp = logp_pad[:, :OUT].reshape(B, S, OUT)
    return p, logp


# ----------------------------- parameters -----------------------------------
def init_params(key):
    def dense(k, shape, scale=0.02):
        return scale * jax.random.normal(k, shape, dtype=jnp.float32)

    ks = jax.random.split(key, 8)

    # classifier: pad to OUT_PAD lanes; padded logits get a -1e30 bias so softmax ignores them
    fc_w = jnp.pad(dense(ks[5], (D_MODEL, OUT)), ((0, 0), (0, OUT_PAD - OUT)))
    fc_b = jnp.concatenate(
        [jnp.zeros((1, OUT), jnp.float32),
         jnp.full((1, OUT_PAD - OUT), NEG_INF, jnp.float32)], axis=1)

    params = {
        "embedding": dense(ks[0], (VOCAB, E), scale=1.0),                       # f32
        "tfc_w": dense(ks[6], (E, D_MODEL)).astype(jnp.bfloat16),
        "tfc_b": jnp.zeros((1, D_MODEL), jnp.float32),
        # fused QKV weight, right-multiply layout (= in_proj_weight.T), columns
        # [Q heads | K heads | V heads], each head occupying HEAD_DIM contiguous columns
        "wqkv": dense(ks[1], (NUM_LAYERS, D_MODEL, 3 * D_MODEL)).astype(jnp.bfloat16),
        "bqkv": jnp.zeros((NUM_LAYERS, 1, 3 * D_MODEL), jnp.float32),
        # out-proj weight, right-multiply layout (= out_proj.weight.T), rows grouped by head
        "wo": dense(ks[2], (NUM_LAYERS, D_MODEL, D_MODEL)).astype(jnp.bfloat16),
        "bo": jnp.zeros((NUM_LAYERS, 1, D_MODEL), jnp.float32),
        "ln1_g": jnp.ones((NUM_LAYERS, 1, D_MODEL), jnp.float32),
        "ln1_b": jnp.zeros((NUM_LAYERS, 1, D_MODEL), jnp.float32),
        "w1": dense(ks[3], (NUM_LAYERS, D_MODEL, D_FF)).astype(jnp.bfloat16),
        "b1": jnp.zeros((NUM_LAYERS, 1, D_FF), jnp.float32),
        "w2": dense(ks[4], (NUM_LAYERS, D_FF, D_MODEL)).astype(jnp.bfloat16),
        "b2": jnp.zeros((NUM_LAYERS, 1, D_MODEL), jnp.float32),
        "ln2_g": jnp.ones((NUM_LAYERS, 1, D_MODEL), jnp.float32),
        "ln2_b": jnp.zeros((NUM_LAYERS, 1, D_MODEL), jnp.float32),
        "fc_w": fc_w.astype(jnp.bfloat16),
        "fc_b": fc_b,
    }
    return params


# ----------------------------- main ------------------------------------------
if __name__ == "__main__":
    key = jax.random.PRNGKey(0)
    pkey, skey = jax.random.split(key)
    params = init_params(pkey)

    sentence = jax.random.randint(skey, (B, S), 0, VOCAB, dtype=jnp.int32)
    # sequence lengths [8, 6] -> last two tokens of sample 1 are padding
    mask = jnp.array([[1] * 8, [1] * 6 + [0] * 2], dtype=jnp.int32)

    outputP, log_outputP = jax.jit(pos_model_forward)(params, sentence, mask)
    jax.block_until_ready((outputP, log_outputP))

    assert outputP.shape == (B, S, OUT) and log_outputP.shape == (B, S, OUT)
    assert bool(jnp.allclose(outputP.sum(-1), 1.0, atol=1e-4))
    assert bool(jnp.allclose(jnp.exp(log_outputP), outputP, atol=1e-4))
    print("KERNEL_OK")
</pallas_src>

<mosaic_0001>
module attributes {stable_mosaic.version = 11 : i64} {
  func.func @_encoder_kernel(%arg0: i32, %arg1: i32, %arg2: memref<16x32xf32, #tpu.memory_space<vmem>>, %arg3: memref<32x512xbf16, #tpu.memory_space<vmem>>, %arg4: memref<1x512xf32, #tpu.memory_space<vmem>>, %arg5: memref<16x16xf32, #tpu.memory_space<vmem>>, %arg6: memref<1x512x1536xbf16, #tpu.memory_space<vmem>>, %arg7: memref<1x1x1536xf32, #tpu.memory_space<vmem>>, %arg8: memref<1x512x512xbf16, #tpu.memory_space<vmem>>, %arg9: memref<1x1x512xf32, #tpu.memory_space<vmem>>, %arg10: memref<1x1x512xf32, #tpu.memory_space<vmem>>, %arg11: memref<1x1x512xf32, #tpu.memory_space<vmem>>, %arg12: memref<1x512x512xbf16, #tpu.memory_space<vmem>>, %arg13: memref<1x1x512xf32, #tpu.memory_space<vmem>>, %arg14: memref<1x512x512xbf16, #tpu.memory_space<vmem>>, %arg15: memref<1x1x512xf32, #tpu.memory_space<vmem>>, %arg16: memref<1x1x512xf32, #tpu.memory_space<vmem>>, %arg17: memref<1x1x512xf32, #tpu.memory_space<vmem>>, %arg18: memref<512x128xbf16, #tpu.memory_space<vmem>>, %arg19: memref<1x128xf32, #tpu.memory_space<vmem>>, %arg20: memref<16x128xf32, #tpu.memory_space<vmem>>, %arg21: memref<16x128xf32, #tpu.memory_space<vmem>>, %arg22: memref<16x512xf32, #tpu.memory_space<vmem>>, %arg23: memref<16x512xf32, #tpu.memory_space<vmem>>, %arg24: memref<16x512xf32, #tpu.memory_space<vmem>>) attributes {dimension_semantics = [#tpu.dimension_semantics<arbitrary>, #tpu.dimension_semantics<arbitrary>], iteration_bounds = array<i64: 2, 4>, scalar_prefetch = 0 : i64, scratch_operands = 3 : i64, tpu.core_type = #tpu.core_type<tc>, window_params = [{pipeline_mode = #tpu.pipeline_mode<synchronous>, transform_indices = @transform_0, window_bounds = array<i64: 16, 32>}, {pipeline_mode = #tpu.pipeline_mode<synchronous>, transform_indices = @transform_1, window_bounds = array<i64: 32, 512>}, {pipeline_mode = #tpu.pipeline_mode<synchronous>, transform_indices = @transform_2, window_bounds = array<i64: 1, 512>}, {pipeline_mode = #tpu.pipeline_mode<synchronous>, transform_indices = @transform_3, window_bounds = array<i64: 16, 16>}, {transform_indices = @transform_4, window_bounds = array<i64: 1, 512, 1536>}, {transform_indices = @transform_5, window_bounds = array<i64: 1, 1, 1536>}, {transform_indices = @transform_6, window_bounds = array<i64: 1, 512, 512>}, {transform_indices = @transform_7, window_bounds = array<i64: 1, 1, 512>}, {transform_indices = @transform_8, window_bounds = array<i64: 1, 1, 512>}, {transform_indices = @transform_9, window_bounds = array<i64: 1, 1, 512>}, {transform_indices = @transform_10, window_bounds = array<i64: 1, 512, 512>}, {transform_indices = @transform_11, window_bounds = array<i64: 1, 1, 512>}, {transform_indices = @transform_12, window_bounds = array<i64: 1, 512, 512>}, {transform_indices = @transform_13, window_bounds = array<i64: 1, 1, 512>}, {transform_indices = @transform_14, window_bounds = array<i64: 1, 1, 512>}, {transform_indices = @transform_15, window_bounds = array<i64: 1, 1, 512>}, {pipeline_mode = #tpu.pipeline_mode<synchronous>, transform_indices = @transform_16, window_bounds = array<i64: 512, 128>}, {pipeline_mode = #tpu.pipeline_mode<synchronous>, transform_indices = @transform_17, window_bounds = array<i64: 1, 128>}, {pipeline_mode = #tpu.pipeline_mode<synchronous>, transform_indices = @transform_18, window_bounds = array<i64: 16, 128>}, {pipeline_mode = #tpu.pipeline_mode<synchronous>, transform_indices = @transform_19, window_bounds = array<i64: 16, 128>}]} {
    %c0_i32 = arith.constant 0 : i32
    %0 = arith.cmpi eq, %arg0, %c0_i32 : i32
    %c0_i32_0 = arith.constant 0 : i32
    %1 = arith.cmpi eq, %arg1, %c0_i32_0 : i32
    %2 = arith.andi %0, %1 : i1
    %3 = arith.extui %2 : i1 to i32
    %c0_i32_1 = arith.constant 0 : i32
    %4 = arith.cmpi ne, %3, %c0_i32_1 : i32
    scf.if %4 {
      %c0_23 = arith.constant 0 : index
      %c0_24 = arith.constant 0 : index
      %34 = vector.load %arg2[%c0_23, %c0_24] : memref<16x32xf32, #tpu.memory_space<vmem>>, vector<16x32xf32>
      %35 = arith.truncf %34 : vector<16x32xf32> to vector<16x32xbf16>
      %c0_25 = arith.constant 0 : index
      %c0_26 = arith.constant 0 : index
      %36 = vector.load %arg3[%c0_25, %c0_26] : memref<32x512xbf16, #tpu.memory_space<vmem>>, vector<32x512xbf16>
      %cst_27 = arith.constant dense<0.000000e+00> : vector<16x512xf32>
      %37 = tpu.matmul %35, %36, %cst_27 {dimension_numbers = #tpu.dot_dimension_numbers<[1], [0], [0], [1], [0, 0, 1, 1], [], []>} : vector<16x32xbf16>, vector<32x512xbf16>, vector<16x512xf32> -> vector<16x512xf32>
      %c0_28 = arith.constant 0 : index
      %c0_29 = arith.constant 0 : index
      %38 = vector.load %arg4[%c0_28, %c0_29] : memref<1x512xf32, #tpu.memory_space<vmem>>, vector<1x512xf32>
      %39 = vector.broadcast %38 : vector<1x512xf32> to vector<16x512xf32>
      %40 = arith.addf %37, %39 : vector<16x512xf32>
      %c0_30 = arith.constant 0 : index
      %c0_31 = arith.constant 0 : index
      %41 = vector.load %arg22[%c0_30, %c0_31] : memref<16x512xf32, #tpu.memory_space<vmem>>, vector<16x512xf32>
      tpu.vector_store %arg22[%c0_30, %c0_31], %40 {strides = array<i32>} : memref<16x512xf32, #tpu.memory_space<vmem>>, vector<16x512xf32>,
    } else {
    }
    %c0_i32_2 = arith.constant 0 : i32
    %5 = arith.cmpi eq, %arg1, %c0_i32_2 : i32
    %6 = arith.extui %5 : i1 to i32
    %c0_i32_3 = arith.constant 0 : i32
    %7 = arith.cmpi ne, %6, %c0_i32_3 : i32
    scf.if %7 {
      %c0_23 = arith.constant 0 : index
      %c0_24 = arith.constant 0 : index
      %34 = vector.load %arg22[%c0_23, %c0_24] : memref<16x512xf32, #tpu.memory_space<vmem>>, vector<16x512xf32>
      %35 = arith.truncf %34 : vector<16x512xf32> to vector<16x512xbf16>
      %c0_25 = arith.constant 0 : index
      %c0_26 = arith.constant 0 : index
      %c0_27 = arith.constant 0 : index
      %36 = vector.load %arg6[%c0_25, %c0_26, %c0_27] : memref<1x512x1536xbf16, #tpu.memory_space<vmem>>, vector<1x512x1536xbf16>
      %37 = vector.shape_cast %36 : vector<1x512x1536xbf16> to vector<512x1536xbf16>
      %cst_28 = arith.constant dense<0.000000e+00> : vector<16x1536xf32>
      %38 = tpu.matmul %35, %37, %cst_28 {dimension_numbers = #tpu.dot_dimension_numbers<[1], [0], [0], [1], [0, 0, 1, 1], [], []>} : vector<16x512xbf16>, vector<512x1536xbf16>, vector<16x1536xf32> -> vector<16x1536xf32>
      %c0_29 = arith.constant 0 : index
      %c0_30 = arith.constant 0 : index
      %c0_31 = arith.constant 0 : index
      %39 = vector.load %arg7[%c0_29, %c0_30, %c0_31] : memref<1x1x1536xf32, #tpu.memory_space<vmem>>, vector<1x1x1536xf32>
      %40 = vector.shape_cast %39 : vector<1x1x1536xf32> to vector<1x1536xf32>
      %41 = vector.broadcast %40 : vector<1x1536xf32> to vector<16x1536xf32>
      %42 = arith.addf %38, %41 : vector<16x1536xf32>
      %43 = arith.truncf %42 : vector<16x1536xf32> to vector<16x1536xbf16>
      %c0_32 = arith.constant 0 : index
      %c0_33 = arith.constant 0 : index
      %44 = vector.load %arg5[%c0_32, %c0_33] : memref<16x16xf32, #tpu.memory_space<vmem>>, vector<16x16xf32>
      %45 = vector.extract_strided_slice %43 {offsets = [0, 0], sizes = [16, 64], strides = [1, 1]} : vector<16x1536xbf16> to vector<16x64xbf16>
      %46 = vector.extract_strided_slice %43 {offsets = [0, 512], sizes = [16, 64], strides = [1, 1]} : vector<16x1536xbf16> to vector<16x64xbf16>
      %47 = vector.extract_strided_slice %43 {offsets = [0, 1024], sizes = [16, 64], strides = [1, 1]} : vector<16x1536xbf16> to vector<16x64xbf16>
      %cst_34 = arith.constant dense<0.000000e+00> : vector<16x16xf32>
      %48 = tpu.matmul %45, %46, %cst_34 {dimension_numbers = #tpu.dot_dimension_numbers<[1], [1], [0], [0], [0, 0, 1, 0], [], []>} : vector<16x64xbf16>, vector<16x64xbf16>, vector<16x16xf32> -> vector<16x16xf32>
      %cst_35 = arith.constant 1.250000e-01 : f32
      %49 = vector.broadcast %cst_35 : f32 to vector<16x16xf32>
      %50 = arith.mulf %48, %49 : vector<16x16xf32>
      %51 = arith.addf %50, %44 : vector<16x16xf32>
      %cst_36 = arith.constant dense<0xFF800000> : vector<16xf32>
      %52 = vector.multi_reduction <maximumf>, %51, %cst_36 [1] : vector<16x16xf32> to vector<16xf32>
      %53 = vector.shape_cast %52 : vector<16xf32> to vector<16x1xf32>
      %54 = vector.broadcast %53 : vector<16x1xf32> to vector<16x16xf32>
      %55 = arith.subf %51, %54 : vector<16x16xf32>
      %56 = math.exp %55 : vector<16x16xf32>
      %cst_37 = arith.constant dense<0.000000e+00> : vector<16xf32>
      %57 = vector.multi_reduction <add>, %56, %cst_37 [1] : vector<16x16xf32> to vector<16xf32>
      %58 = vector.shape_cast %57 : vector<16xf32> to vector<16x1xf32>
      %59 = tpu.reciprocal %58 {approx = true} : vector<16x1xf32> -> vector<16x1xf32>
      %60 = vector.broadcast %59 : vector<16x1xf32> to vector<16x16xf32>
      %61 = arith.mulf %56, %60 : vector<16x16xf32>
      %62 = arith.truncf %61 : vector<16x16xf32> to vector<16x16xbf16>
      %cst_38 = arith.constant dense<0.000000e+00> : vector<16x64xf32>
      %63 = tpu.matmul %62, %47, %cst_38 {dimension_numbers = #tpu.dot_dimension_numbers<[1], [0], [0], [1], [0, 0, 1, 1], [], []>} : vector<16x16xbf16>, vector<16x64xbf16>, vector<16x64xf32> -> vector<16x64xf32>
      %64 = vector.extract_strided_slice %43 {offsets = [0, 64], sizes = [16, 64], strides = [1, 1]} : vector<16x1536xbf16> to vector<16x64xbf16>
      %65 = vector.extract_strided_slice %43 {offsets = [0, 576], sizes = [16, 64], strides = [1, 1]} : vector<16x1536xbf16> to vector<16x64xbf16>
      %66 = vector.extract_strided_slice %43 {offsets = [0, 1088], sizes = [16, 64], strides = [1, 1]} : vector<16x1536xbf16> to vector<16x64xbf16>
      %cst_39 = arith.constant dense<0.000000e+00> : vector<16x16xf32>
      %67 = tpu.matmul %64, %65, %cst_39 {dimension_numbers = #tpu.dot_dimension_numbers<[1], [1], [0], [0], [0, 0, 1, 0], [], []>} : vector<16x64xbf16>, vector<16x64xbf16>, vector<16x16xf32> -> vector<16x16xf32>
      %cst_40 = arith.constant 1.250000e-01 : f32
      %68 = vector.broadcast %cst_40 : f32 to vector<16x16xf32>
      %69 = arith.mulf %67, %68 : vector<16x16xf32>
      %70 = arith.addf %69, %44 : vector<16x16xf32>
      %cst_41 = arith.constant dense<0xFF800000> : vector<16xf32>
      %71 = vector.multi_reduction <maximumf>, %70, %cst_41 [1] : vector<16x16xf32> to vector<16xf32>
      %72 = vector.shape_cast %71 : vector<16xf32> to vector<16x1xf32>
      %73 = vector.broadcast %72 : vector<16x1xf32> to vector<16x16xf32>
      %74 = arith.subf %70, %73 : vector<16x16xf32>
      %75 = math.exp %74 : vector<16x16xf32>
      %cst_42 = arith.constant dense<0.000000e+00> : vector<16xf32>
      %76 = vector.multi_reduction <add>, %75, %cst_42 [1] : vector<16x16xf32> to vector<16xf32>
      %77 = vector.shape_cast %76 : vector<16xf32> to vector<16x1xf32>
      %78 = tpu.reciprocal %77 {approx = true} : vector<16x1xf32> -> vector<16x1xf32>
      %79 = vector.broadcast %78 : vector<16x1xf32> to vector<16x16xf32>
      %80 = arith.mulf %75, %79 : vector<16x16xf32>
      %81 = arith.truncf %80 : vector<16x16xf32> to vector<16x16xbf16>
      %cst_43 = arith.constant dense<0.000000e+00> : vector<16x64xf32>
      %82 = tpu.matmul %81, %66, %cst_43 {dimension_numbers = #tpu.dot_dimension_numbers<[1], [0], [0], [1], [0, 0, 1, 1], [], []>} : vector<16x16xbf16>, vector<16x64xbf16>, vector<16x64xf32> -> vector<16x64xf32>
      %83 = vector.extract_strided_slice %43 {offsets = [0, 128], sizes = [16, 64], strides = [1, 1]} : vector<16x1536xbf16> to vector<16x64xbf16>
      %84 = vector.extract_strided_slice %43 {offsets = [0, 640], sizes = [16, 64], strides = [1, 1]} : vector<16x1536xbf16> to vector<16x64xbf16>
      %85 = vector.extract_strided_slice %43 {offsets = [0, 1152], sizes = [16, 64], strides = [1, 1]} : vector<16x1536xbf16> to vector<16x64xbf16>
      %cst_44 = arith.constant dense<0.000000e+00> : vector<16x16xf32>
      %86 = tpu.matmul %83, %84, %cst_44 {dimension_numbers = #tpu.dot_dimension_numbers<[1], [1], [0], [0], [0, 0, 1, 0], [], []>} : vector<16x64xbf16>, vector<16x64xbf16>, vector<16x16xf32> -> vector<16x16xf32>
      %cst_45 = arith.constant 1.250000e-01 : f32
      %87 = vector.broadcast %cst_45 : f32 to vector<16x16xf32>
      %88 = arith.mulf %86, %87 : vector<16x16xf32>
      %89 = arith.addf %88, %44 : vector<16x16xf32>
      %cst_46 = arith.constant dense<0xFF800000> : vector<16xf32>
      %90 = vector.multi_reduction <maximumf>, %89, %cst_46 [1] : vector<16x16xf32> to vector<16xf32>
      %91 = vector.shape_cast %90 : vector<16xf32> to vector<16x1xf32>
      %92 = vector.broadcast %91 : vector<16x1xf32> to vector<16x16xf32>
      %93 = arith.subf %89, %92 : vector<16x16xf32>
      %94 = math.exp %93 : vector<16x16xf32>
      %cst_47 = arith.constant dense<0.000000e+00> : vector<16xf32>
      %95 = vector.multi_reduction <add>, %94, %cst_47 [1] : vector<16x16xf32> to vector<16xf32>
      %96 = vector.shape_cast %95 : vector<16xf32> to vector<16x1xf32>
      %97 = tpu.reciprocal %96 {approx = true} : vector<16x1xf32> -> vector<16x1xf32>
      %98 = vector.broadcast %97 : vector<16x1xf32> to vector<16x16xf32>
      %99 = arith.mulf %94, %98 : vector<16x16xf32>
      %100 = arith.truncf %99 : vector<16x16xf32> to vector<16x16xbf16>
      %cst_48 = arith.constant dense<0.000000e+00> : vector<16x64xf32>
      %101 = tpu.matmul %100, %85, %cst_48 {dimension_numbers = #tpu.dot_dimension_numbers<[1], [0], [0], [1], [0, 0, 1, 1], [], []>} : vector<16x16xbf16>, vector<16x64xbf16>, vector<16x64xf32> -> vector<16x64xf32>
      %102 = vector.extract_strided_slice %43 {offsets = [0, 192], sizes = [16, 64], strides = [1, 1]} : vector<16x1536xbf16> to vector<16x64xbf16>
      %103 = vector.extract_strided_slice %43 {offsets = [0, 704], sizes = [16, 64], strides = [1, 1]} : vector<16x1536xbf16> to vector<16x64xbf16>
      %104 = vector.extract_strided_slice %43 {offsets = [0, 1216], sizes = [16, 64], strides = [1, 1]} : vector<16x1536xbf16> to vector<16x64xbf16>
      %cst_49 = arith.constant dense<0.000000e+00> : vector<16x16xf32>
      %105 = tpu.matmul %102, %103, %cst_49 {dimension_numbers = #tpu.dot_dimension_numbers<[1], [1], [0], [0], [0, 0, 1, 0], [], []>} : vector<16x64xbf16>, vector<16x64xbf16>, vector<16x16xf32> -> vector<16x16xf32>
      %cst_50 = arith.constant 1.250000e-01 : f32
      %106 = vector.broadcast %cst_50 : f32 to vector<16x16xf32>
      %107 = arith.mulf %105, %106 : vector<16x16xf32>
      %108 = arith.addf %107, %44 : vector<16x16xf32>
      %cst_51 = arith.constant dense<0xFF800000> : vector<16xf32>
      %109 = vector.multi_reduction <maximumf>, %108, %cst_51 [1] : vector<16x16xf32> to vector<16xf32>
      %110 = vector.shape_cast %109 : vector<16xf32> to vector<16x1xf32>
      %111 = vector.broadcast %110 : vector<16x1xf32> to vector<16x16xf32>
      %112 = arith.subf %108, %111 : vector<16x16xf32>
      %113 = math.exp %112 : vector<16x16xf32>
      %cst_52 = arith.constant dense<0.000000e+00> : vector<16xf32>
      %114 = vector.multi_reduction <add>, %113, %cst_52 [1] : vector<16x16xf32> to vector<16xf32>
      %115 = vector.shape_cast %114 : vector<16xf32> to vector<16x1xf32>
      %116 = tpu.reciprocal %115 {approx = true} : vector<16x1xf32> -> vector<16x1xf32>
      %117 = vector.broadcast %116 : vector<16x1xf32> to vector<16x16xf32>
      %118 = arith.mulf %113, %117 : vector<16x16xf32>
      %119 = arith.truncf %118 : vector<16x16xf32> to vector<16x16xbf16>
      %cst_53 = arith.constant dense<0.000000e+00> : vector<16x64xf32>
      %120 = tpu.matmul %119, %104, %cst_53 {dimension_numbers = #tpu.dot_dimension_numbers<[1], [0], [0], [1], [0, 0, 1, 1], [], []>} : vector<16x16xbf16>, vector<16x64xbf16>, vector<16x64xf32> -> vector<16x64xf32>
      %121 = vector.extract_strided_slice %43 {offsets = [0, 256], sizes = [16, 64], strides = [1, 1]} : vector<16x1536xbf16> to vector<16x64xbf16>
      %122 = vector.extract_strided_slice %43 {offsets = [0, 768], sizes = [16, 64], strides = [1, 1]} : vector<16x1536xbf16> to vector<16x64xbf16>
      %123 = vector.extract_strided_slice %43 {offsets = [0, 1280], sizes = [16, 64], strides = [1, 1]} : vector<16x1536xbf16> to vector<16x64xbf16>
      %cst_54 = arith.constant dense<0.000000e+00> : vector<16x16xf32>
      %124 = tpu.matmul %121, %122, %cst_54 {dimension_numbers = #tpu.dot_dimension_numbers<[1], [1], [0], [0], [0, 0, 1, 0], [], []>} : vector<16x64xbf16>, vector<16x64xbf16>, vector<16x16xf32> -> vector<16x16xf32>
      %cst_55 = arith.constant 1.250000e-01 : f32
      %125 = vector.broadcast %cst_55 : f32 to vector<16x16xf32>
      %126 = arith.mulf %124, %125 : vector<16x16xf32>
      %127 = arith.addf %126, %44 : vector<16x16xf32>
      %cst_56 = arith.constant dense<0xFF800000> : vector<16xf32>
      %128 = vector.multi_reduction <maximumf>, %127, %cst_56 [1] : vector<16x16xf32> to vector<16xf32>
      %129 = vector.shape_cast %128 : vector<16xf32> to vector<16x1xf32>
      %130 = vector.broadcast %129 : vector<16x1xf32> to vector<16x16xf32>
      %131 = arith.subf %127, %130 : vector<16x16xf32>
      %132 = math.exp %131 : vector<16x16xf32>
      %cst_57 = arith.constant dense<0.000000e+00> : vector<16xf32>
      %133 = vector.multi_reduction <add>, %132, %cst_57 [1] : vector<16x16xf32> to vector<16xf32>
      %134 = vector.shape_cast %133 : vector<16xf32> to vector<16x1xf32>
      %135 = tpu.reciprocal %134 {approx = true} : vector<16x1xf32> -> vector<16x1xf32>
      %136 = vector.broadcast %135 : vector<16x1xf32> to vector<16x16xf32>
      %137 = arith.mulf %132, %136 : vector<16x16xf32>
      %138 = arith.truncf %137 : vector<16x16xf32> to vector<16x16xbf16>
      %cst_58 = arith.constant dense<0.000000e+00> : vector<16x64xf32>
      %139 = tpu.matmul %138, %123, %cst_58 {dimension_numbers = #tpu.dot_dimension_numbers<[1], [0], [0], [1], [0, 0, 1, 1], [], []>} : vector<16x16xbf16>, vector<16x64xbf16>, vector<16x64xf32> -> vector<16x64xf32>
      %140 = vector.extract_strided_slice %43 {offsets = [0, 320], sizes = [16, 64], strides = [1, 1]} : vector<16x1536xbf16> to vector<16x64xbf16>
      %141 = vector.extract_strided_slice %43 {offsets = [0, 832], sizes = [16, 64], strides = [1, 1]} : vector<16x1536xbf16> to vector<16x64xbf16>
      %142 = vector.extract_strided_slice %43 {offsets = [0, 1344], sizes = [16, 64], strides = [1, 1]} : vector<16x1536xbf16> to vector<16x64xbf16>
      %cst_59 = arith.constant dense<0.000000e+00> : vector<16x16xf32>
      %143 = tpu.matmul %140, %141, %cst_59 {dimension_numbers = #tpu.dot_dimension_numbers<[1], [1], [0], [0], [0, 0, 1, 0], [], []>} : vector<16x64xbf16>, vector<16x64xbf16>, vector<16x16xf32> -> vector<16x16xf32>
      %cst_60 = arith.constant 1.250000e-01 : f32
      %144 = vector.broadcast %cst_60 : f32 to vector<16x16xf32>
      %145 = arith.mulf %143, %144 : vector<16x16xf32>
      %146 = arith.addf %145, %44 : vector<16x16xf32>
      %cst_61 = arith.constant dense<0xFF800000> : vector<16xf32>
      %147 = vector.multi_reduction <maximumf>, %146, %cst_61 [1] : vector<16x16xf32> to vector<16xf32>
      %148 = vector.shape_cast %147 : vector<16xf32> to vector<16x1xf32>
      %149 = vector.broadcast %148 : vector<16x1xf32> to vector<16x16xf32>
      %150 = arith.subf %146, %149 : vector<16x16xf32>
      %151 = math.exp %150 : vector<16x16xf32>
      %cst_62 = arith.constant dense<0.000000e+00> : vector<16xf32>
      %152 = vector.multi_reduction <add>, %151, %cst_62 [1] : vector<16x16xf32> to vector<16xf32>
      %153 = vector.shape_cast %152 : vector<16xf32> to vector<16x1xf32>
      %154 = tpu.reciprocal %153 {approx = true} : vector<16x1xf32> -> vector<16x1xf32>
      %155 = vector.broadcast %154 : vector<16x1xf32> to vector<16x16xf32>
      %156 = arith.mulf %151, %155 : vector<16x16xf32>
      %157 = arith.truncf %156 : vector<16x16xf32> to vector<16x16xbf16>
      %cst_63 = arith.constant dense<0.000000e+00> : vector<16x64xf32>
      %158 = tpu.matmul %157, %142, %cst_63 {dimension_numbers = #tpu.dot_dimension_numbers<[1], [0], [0], [1], [0, 0, 1, 1], [], []>} : vector<16x16xbf16>, vector<16x64xbf16>, vector<16x64xf32> -> vector<16x64xf32>
      %159 = vector.extract_strided_slice %43 {offsets = [0, 384], sizes = [16, 64], strides = [1, 1]} : vector<16x1536xbf16> to vector<16x64xbf16>
      %160 = vector.extract_strided_slice %43 {offsets = [0, 896], sizes = [16, 64], strides = [1, 1]} : vector<16x1536xbf16> to vector<16x64xbf16>
      %161 = vector.extract_strided_slice %43 {offsets = [0, 1408], sizes = [16, 64], strides = [1, 1]} : vector<16x1536xbf16> to vector<16x64xbf16>
      %cst_64 = arith.constant dense<0.000000e+00> : vector<16x16xf32>
      %162 = tpu.matmul %159, %160, %cst_64 {dimension_numbers = #tpu.dot_dimension_numbers<[1], [1], [0], [0], [0, 0, 1, 0], [], []>} : vector<16x64xbf16>, vector<16x64xbf16>, vector<16x16xf32> -> vector<16x16xf32>
      %cst_65 = arith.constant 1.250000e-01 : f32
      %163 = vector.broadcast %cst_65 : f32 to vector<16x16xf32>
      %164 = arith.mulf %162, %163 : vector<16x16xf32>
      %165 = arith.addf %164, %44 : vector<16x16xf32>
      %cst_66 = arith.constant dense<0xFF800000> : vector<16xf32>
      %166 = vector.multi_reduction <maximumf>, %165, %cst_66 [1] : vector<16x16xf32> to vector<16xf32>
      %167 = vector.shape_cast %166 : vector<16xf32> to vector<16x1xf32>
      %168 = vector.broadcast %167 : vector<16x1xf32> to vector<16x16xf32>
      %169 = arith.subf %165, %168 : vector<16x16xf32>
      %170 = math.exp %169 : vector<16x16xf32>
      %cst_67 = arith.constant dense<0.000000e+00> : vector<16xf32>
      %171 = vector.multi_reduction <add>, %170, %cst_67 [1] : vector<16x16xf32> to vector<16xf32>
      %172 = vector.shape_cast %171 : vector<16xf32> to vector<16x1xf32>
      %173 = tpu.reciprocal %172 {approx = true} : vector<16x1xf32> -> vector<16x1xf32>
      %174 = vector.broadcast %173 : vector<16x1xf32> to vector<16x16xf32>
      %175 = arith.mulf %170, %174 : vector<16x16xf32>
      %176 = arith.truncf %175 : vector<16x16xf32> to vector<16x16xbf16>
      %cst_68 = arith.constant dense<0.000000e+00> : vector<16x64xf32>
      %177 = tpu.matmul %176, %161, %cst_68 {dimension_numbers = #tpu.dot_dimension_numbers<[1], [0], [0], [1], [0, 0, 1, 1], [], []>} : vector<16x16xbf16>, vector<16x64xbf16>, vector<16x64xf32> -> vector<16x64xf32>
      %178 = vector.extract_strided_slice %43 {offsets = [0, 448], sizes = [16, 64], strides = [1, 1]} : vector<16x1536xbf16> to vector<16x64xbf16>
      %179 = vector.extract_strided_slice %43 {offsets = [0, 960], sizes = [16, 64], strides = [1, 1]} : vector<16x1536xbf16> to vector<16x64xbf16>
      %180 = vector.extract_strided_slice %43 {offsets = [0, 1472], sizes = [16, 64], strides = [1, 1]} : vector<16x1536xbf16> to vector<16x64xbf16>
      %cst_69 = arith.constant dense<0.000000e+00> : vector<16x16xf32>
      %181 = tpu.matmul %178, %179, %cst_69 {dimension_numbers = #tpu.dot_dimension_numbers<[1], [1], [0], [0], [0, 0, 1, 0], [], []>} : vector<16x64xbf16>, vector<16x64xbf16>, vector<16x16xf32> -> vector<16x16xf32>
      %cst_70 = arith.constant 1.250000e-01 : f32
      %182 = vector.broadcast %cst_70 : f32 to vector<16x16xf32>
      %183 = arith.mulf %181, %182 : vector<16x16xf32>
      %184 = arith.addf %183, %44 : vector<16x16xf32>
      %cst_71 = arith.constant dense<0xFF800000> : vector<16xf32>
      %185 = vector.multi_reduction <maximumf>, %184, %cst_71 [1] : vector<16x16xf32> to vector<16xf32>
      %186 = vector.shape_cast %185 : vector<16xf32> to vector<16x1xf32>
      %187 = vector.broadcast %186 : vector<16x1xf32> to vector<16x16xf32>
      %188 = arith.subf %184, %187 : vector<16x16xf32>
      %189 = math.exp %188 : vector<16x16xf32>
      %cst_72 = arith.constant dense<0.000000e+00> : vector<16xf32>
      %190 = vector.multi_reduction <add>, %189, %cst_72 [1] : vector<16x16xf32> to vector<16xf32>
      %191 = vector.shape_cast %190 : vector<16xf32> to vector<16x1xf32>
      %192 = tpu.reciprocal %191 {approx = true} : vector<16x1xf32> -> vector<16x1xf32>
      %193 = vector.broadcast %192 : vector<16x1xf32> to vector<16x16xf32>
      %194 = arith.mulf %189, %193 : vector<16x16xf32>
      %195 = arith.truncf %194 : vector<16x16xf32> to vector<16x16xbf16>
      %cst_73 = arith.constant dense<0.000000e+00> : vector<16x64xf32>
      %196 = tpu.matmul %195, %180, %cst_73 {dimension_numbers = #tpu.dot_dimension_numbers<[1], [0], [0], [1], [0, 0, 1, 1], [], []>} : vector<16x16xbf16>, vector<16x64xbf16>, vector<16x64xf32> -> vector<16x64xf32>
      %197 = tpu.concatenate %63, %82, %101, %120, %139, %158, %177, %196 in 1 : vector<16x64xf32>, vector<16x64xf32>, vector<16x64xf32>, vector<16x64xf32>, vector<16x64xf32>, vector<16x64xf32>, vector<16x64xf32>, vector<16x64xf32> -> vector<16x512xf32>
      %198 = arith.truncf %197 : vector<16x512xf32> to vector<16x512xbf16>
      %c0_74 = arith.constant 0 : index
      %c0_75 = arith.constant 0 : index
      %c0_76 = arith.constant 0 : index
      %199 = vector.load %arg8[%c0_74, %c0_75, %c0_76] : memref<1x512x512xbf16, #tpu.memory_space<vmem>>, vector<1x512x512xbf16>
      %200 = vector.shape_cast %199 : vector<1x512x512xbf16> to vector<512x512xbf16>
      %cst_77 = arith.constant dense<0.000000e+00> : vector<16x512xf32>
      %201 = tpu.matmul %198, %200, %cst_77 {dimension_numbers = #tpu.dot_dimension_numbers<[1], [0], [0], [1], [0, 0, 1, 1], [], []>} : vector<16x512xbf16>, vector<512x512xbf16>, vector<16x512xf32> -> vector<16x512xf32>
      %c0_78 = arith.constant 0 : index
      %c0_79 = arith.constant 0 : index
      %c0_80 = arith.constant 0 : index
      %202 = vector.load %arg9[%c0_78, %c0_79, %c0_80] : memref<1x1x512xf32, #tpu.memory_space<vmem>>, vector<1x1x512xf32>
      %203 = vector.shape_cast %202 : vector<1x1x512xf32> to vector<1x512xf32>
      %204 = vector.broadcast %203 : vector<1x512xf32> to vector<16x512xf32>
      %205 = arith.addf %201, %204 : vector<16x512xf32>
      %206 = arith.addf %34, %205 : vector<16x512xf32>
      %c0_81 = arith.constant 0 : index
      %c0_82 = arith.constant 0 : index
      %c0_83 = arith.constant 0 : index
      %207 = vector.load %arg10[%c0_81, %c0_82, %c0_83] : memref<1x1x512xf32, #tpu.memory_space<vmem>>, vector<1x1x512xf32>
      %208 = vector.shape_cast %207 : vector<1x1x512xf32> to vector<1x512xf32>
      %c0_84 = arith.constant 0 : index
      %c0_85 = arith.constant 0 : index
      %c0_86 = arith.constant 0 : index
      %209 = vector.load %arg11[%c0_84, %c0_85, %c0_86] : memref<1x1x512xf32, #tpu.memory_space<vmem>>, vector<1x1x512xf32>
      %210 = vector.shape_cast %209 : vector<1x1x512xf32> to vector<1x512xf32>
      %cst_87 = arith.constant dense<0.000000e+00> : vector<16xf32>
      %211 = vector.multi_reduction <add>, %206, %cst_87 [1] : vector<16x512xf32> to vector<16xf32>
      %212 = vector.shape_cast %211 : vector<16xf32> to vector<16x1xf32>
      %cst_88 = arith.constant 5.120000e+02 : f32
      %213 = vector.broadcast %cst_88 : f32 to vector<16x1xf32>
      %214 = arith.divf %212, %213 : vector<16x1xf32>
      %215 = vector.broadcast %214 : vector<16x1xf32> to vector<16x512xf32>
      %216 = arith.subf %206, %215 : vector<16x512xf32>
      %217 = arith.mulf %216, %216 : vector<16x512xf32>
      %cst_89 = arith.constant dense<0.000000e+00> : vector<16xf32>
      %218 = vector.multi_reduction <add>, %217, %cst_89 [1] : vector<16x512xf32> to vector<16xf32>
      %219 = vector.shape_cast %218 : vector<16xf32> to vector<16x1xf32>
      %cst_90 = arith.constant 5.120000e+02 : f32
      %220 = vector.broadcast %cst_90 : f32 to vector<16x1xf32>
      %221 = arith.divf %219, %220 : vector<16x1xf32>
      %222 = vector.broadcast %214 : vector<16x1xf32> to vector<16x512xf32>
      %223 = arith.subf %206, %222 : vector<16x512xf32>
      %cst_91 = arith.constant 9.99999974E-6 : f32
      %224 = vector.broadcast %cst_91 : f32 to vector<16x1xf32>
      %225 = arith.addf %221, %224 : vector<16x1xf32>
      %226 = math.rsqrt %225 : vector<16x1xf32>
      %227 = vector.broadcast %226 : vector<16x1xf32> to vector<16x512xf32>
      %228 = arith.mulf %223, %227 : vector<16x512xf32>
      %229 = vector.broadcast %208 : vector<1x512xf32> to vector<16x512xf32>
      %230 = arith.mulf %228, %229 : vector<16x512xf32>
      %231 = vector.broadcast %210 : vector<1x512xf32> to vector<16x512xf32>
      %232 = arith.addf %230, %231 : vector<16x512xf32>
      %c0_92 = arith.constant 0 : index
      %c0_93 = arith.constant 0 : index
      %233 = vector.load %arg23[%c0_92, %c0_93] : memref<16x512xf32, #tpu.memory_space<vmem>>, vector<16x512xf32>
      tpu.vector_store %arg23[%c0_92, %c0_93], %232 {strides = array<i32>} : memref<16x512xf32, #tpu.memory_space<vmem>>, vector<16x512xf32>,
      %cst_94 = arith.constant 0.000000e+00 : f32
      %234 = vector.broadcast %cst_94 : f32 to vector<16x512xf32>
      %c0_95 = arith.constant 0 : index
      %c0_96 = arith.constant 0 : index
      %235 = vector.load %arg24[%c0_95, %c0_96] : memref<16x512xf32, #tpu.memory_space<vmem>>, vector<16x512xf32>
      tpu.vector_store %arg24[%c0_95, %c0_96], %234 {strides = array<i32>} : memref<16x512xf32, #tpu.memory_space<vmem>>, vector<16x512xf32>,
    } else {
    }
    %c0 = arith.constant 0 : index
    %c0_4 = arith.constant 0 : index
    %8 = vector.load %arg23[%c0, %c0_4] : memref<16x512xf32, #tpu.memory_space<vmem>>, vector<16x512xf32>
    %9 = arith.truncf %8 : vector<16x512xf32> to vector<16x512xbf16>
    %c0_5 = arith.constant 0 : index
    %c0_6 = arith.constant 0 : index
    %c0_7 = arith.constant 0 : index
    %10 = vector.load %arg12[%c0_5, %c0_6, %c0_7] : memref<1x512x512xbf16, #tpu.memory_space<vmem>>, vector<1x512x512xbf16>
    %11 = vector.shape_cast %10 : vector<1x512x512xbf16> to vector<512x512xbf16>
    %cst = arith.constant dense<0.000000e+00> : vector<16x512xf32>
    %12 = tpu.matmul %9, %11, %cst {dimension_numbers = #tpu.dot_dimension_numbers<[1], [0], [0], [1], [0, 0, 1, 1], [], []>} : vector<16x512xbf16>, vector<512x512xbf16>, vector<16x512xf32> -> vector<16x512xf32>
    %c0_8 = arith.constant 0 : index
    %c0_9 = arith.constant 0 : index
    %c0_10 = arith.constant 0 : index
    %13 = vector.load %arg13[%c0_8, %c0_9, %c0_10] : memref<1x1x512xf32, #tpu.memory_space<vmem>>, vector<1x1x512xf32>
    %14 = vector.shape_cast %13 : vector<1x1x512xf32> to vector<1x512xf32>
    %15 = vector.broadcast %14 : vector<1x512xf32> to vector<16x512xf32>
    %16 = arith.addf %12, %15 : vector<16x512xf32>
    %cst_11 = arith.constant 0.000000e+00 : f32
    %17 = vector.broadcast %cst_11 : f32 to vector<16x512xf32>
    %18 = arith.maximumf %16, %17 : vector<16x512xf32>
    %c0_12 = arith.constant 0 : index
    %c0_13 = arith.constant 0 : index
    %19 = vector.load %arg24[%c0_12, %c0_13] : memref<16x512xf32, #tpu.memory_space<vmem>>, vector<16x512xf32>
    %20 = arith.truncf %18 : vector<16x512xf32> to vector<16x512xbf16>
    %c0_14 = arith.constant 0 : index
    %c0_15 = arith.constant 0 : index
    %c0_16 = arith.constant 0 : index
    %21 = vector.load %arg14[%c0_14, %c0_15, %c0_16] : memref<1x512x512xbf16, #tpu.memory_space<vmem>>, vector<1x512x512xbf16>
    %22 = vector.shape_cast %21 : vector<1x512x512xbf16> to vector<512x512xbf16>
    %cst_17 = arith.constant dense<0.000000e+00> : vector<16x512xf32>
    %23 = tpu.matmul %20, %22, %cst_17 {dimension_numbers = #tpu.dot_dimension_numbers<[1], [0], [0], [1], [0, 0, 1, 1], [], []>} : vector<16x512xbf16>, vector<512x512xbf16>, vector<16x512xf32> -> vector<16x512xf32>
    %24 = arith.addf %19, %23 : vector<16x512xf32>
    %c0_18 = arith.constant 0 : index
    %c0_19 = arith.constant 0 : index
    %25 = vector.load %arg24[%c0_18, %c0_19] : memref<16x512xf32, #tpu.memory_space<vmem>>, vector<16x512xf32>
    tpu.vector_store %arg24[%c0_18, %c0_19], %24 {strides = array<i32>} : memref<16x512xf32, #tpu.memory_space<vmem>>, vector<16x512xf32>,
    %c3_i32 = arith.constant 3 : i32
    %26 = arith.cmpi eq, %arg1, %c3_i32 : i32
    %27 = arith.extui %26 : i1 to i32
    %c0_i32_20 = arith.constant 0 : i32
    %28 = arith.cmpi ne, %27, %c0_i32_20 : i32
    scf.if %28 {
      %c0_23 = arith.constant 0 : index
      %c0_24 = arith.constant 0 : index
      %34 = vector.load %arg23[%c0_23, %c0_24] : memref<16x512xf32, #tpu.memory_space<vmem>>, vector<16x512xf32>
      %c0_25 = arith.constant 0 : index
      %c0_26 = arith.constant 0 : index
      %35 = vector.load %arg24[%c0_25, %c0_26] : memref<16x512xf32, #tpu.memory_space<vmem>>, vector<16x512xf32>
      %36 = arith.addf %34, %35 : vector<16x512xf32>
      %c0_27 = arith.constant 0 : index
      %c0_28 = arith.constant 0 : index
      %c0_29 = arith.constant 0 : index
      %37 = vector.load %arg15[%c0_27, %c0_28, %c0_29] : memref<1x1x512xf32, #tpu.memory_space<vmem>>, vector<1x1x512xf32>
      %38 = vector.shape_cast %37 : vector<1x1x512xf32> to vector<1x512xf32>
      %39 = vector.broadcast %38 : vector<1x512xf32> to vector<16x512xf32>
      %40 = arith.addf %36, %39 : vector<16x512xf32>
      %c0_30 = arith.constant 0 : index
      %c0_31 = arith.constant 0 : index
      %c0_32 = arith.constant 0 : index
      %41 = vector.load %arg16[%c0_30, %c0_31, %c0_32] : memref<1x1x512xf32, #tpu.memory_space<vmem>>, vector<1x1x512xf32>
      %42 = vector.shape_cast %41 : vector<1x1x512xf32> to vector<1x512xf32>
      %c0_33 = arith.constant 0 : index
      %c0_34 = arith.constant 0 : index
      %c0_35 = arith.constant 0 : index
      %43 = vector.load %arg17[%c0_33, %c0_34, %c0_35] : memref<1x1x512xf32, #tpu.memory_space<vmem>>, vector<1x1x512xf32>
      %44 = vector.shape_cast %43 : vector<1x1x512xf32> to vector<1x512xf32>
      %cst_36 = arith.constant dense<0.000000e+00> : vector<16xf32>
      %45 = vector.multi_reduction <add>, %40, %cst_36 [1] : vector<16x512xf32> to vector<16xf32>
      %46 = vector.shape_cast %45 : vector<16xf32> to vector<16x1xf32>
      %cst_37 = arith.constant 5.120000e+02 : f32
      %47 = vector.broadcast %cst_37 : f32 to vector<16x1xf32>
      %48 = arith.divf %46, %47 : vector<16x1xf32>
      %49 = vector.broadcast %48 : vector<16x1xf32> to vector<16x512xf32>
      %50 = arith.subf %40, %49 : vector<16x512xf32>
      %51 = arith.mulf %50, %50 : vector<16x512xf32>
      %cst_38 = arith.constant dense<0.000000e+00> : vector<16xf32>
      %52 = vector.multi_reduction <add>, %51, %cst_38 [1] : vector<16x512xf32> to vector<16xf32>
      %53 = vector.shape_cast %52 : vector<16xf32> to vector<16x1xf32>
      %cst_39 = arith.constant 5.120000e+02 : f32
      %54 = vector.broadcast %cst_39 : f32 to vector<16x1xf32>
      %55 = arith.divf %53, %54 : vector<16x1xf32>
      %56 = vector.broadcast %48 : vector<16x1xf32> to vector<16x512xf32>
      %57 = arith.subf %40, %56 : vector<16x512xf32>
      %cst_40 = arith.constant 9.99999974E-6 : f32
      %58 = vector.broadcast %cst_40 : f32 to vector<16x1xf32>
      %59 = arith.addf %55, %58 : vector<16x1xf32>
      %60 = math.rsqrt %59 : vector<16x1xf32>
      %61 = vector.broadcast %60 : vector<16x1xf32> to vector<16x512xf32>
      %62 = arith.mulf %57, %61 : vector<16x512xf32>
      %63 = vector.broadcast %42 : vector<1x512xf32> to vector<16x512xf32>
      %64 = arith.mulf %62, %63 : vector<16x512xf32>
      %65 = vector.broadcast %44 : vector<1x512xf32> to vector<16x512xf32>
      %66 = arith.addf %64, %65 : vector<16x512xf32>
      %c0_41 = arith.constant 0 : index
      %c0_42 = arith.constant 0 : index
      %67 = vector.load %arg22[%c0_41, %c0_42] : memref<16x512xf32, #tpu.memory_space<vmem>>, vector<16x512xf32>
      tpu.vector_store %arg22[%c0_41, %c0_42], %66 {strides = array<i32>} : memref<16x512xf32, #tpu.memory_space<vmem>>, vector<16x512xf32>,
    } else {
    }
    %c1_i32 = arith.constant 1 : i32
    %29 = arith.cmpi eq, %arg0, %c1_i32 : i32
    %c3_i32_21 = arith.constant 3 : i32
    %30 = arith.cmpi eq, %arg1, %c3_i32_21 : i32
    %31 = arith.andi %29, %30 : i1
    %32 = arith.extui %31 : i1 to i32
    %c0_i32_22 = arith.constant 0 : i32
    %33 = arith.cmpi ne, %32, %c0_i32_22 : i32
    scf.if %33 {
      %c0_23 = arith.constant 0 : index
      %c0_24 = arith.constant 0 : index
      %34 = vector.load %arg22[%c0_23, %c0_24] : memref<16x512xf32, #tpu.memory_space<vmem>>, vector<16x512xf32>
      %35 = arith.truncf %34 : vector<16x512xf32> to vector<16x512xbf16>
      %c0_25 = arith.constant 0 : index
      %c0_26 = arith.constant 0 : index
      %36 = vector.load %arg18[%c0_25, %c0_26] : memref<512x128xbf16, #tpu.memory_space<vmem>>, vector<512x128xbf16>
      %cst_27 = arith.constant dense<0.000000e+00> : vector<16x128xf32>
      %37 = tpu.matmul %35, %36, %cst_27 {dimension_numbers = #tpu.dot_dimension_numbers<[1], [0], [0], [1], [0, 0, 1, 1], [], []>} : vector<16x512xbf16>, vector<512x128xbf16>, vector<16x128xf32> -> vector<16x128xf32>
      %c0_28 = arith.constant 0 : index
      %c0_29 = arith.constant 0 : index
      %38 = vector.load %arg19[%c0_28, %c0_29] : memref<1x128xf32, #tpu.memory_space<vmem>>, vector<1x128xf32>
      %39 = vector.broadcast %38 : vector<1x128xf32> to vector<16x128xf32>
      %40 = arith.addf %37, %39 : vector<16x128xf32>
      %cst_30 = arith.constant dense<0xFF800000> : vector<16xf32>
      %41 = vector.multi_reduction <maximumf>, %40, %cst_30 [1] : vector<16x128xf32> to vector<16xf32>
      %42 = vector.shape_cast %41 : vector<16xf32> to vector<16x1xf32>
      %43 = vector.broadcast %42 : vector<16x1xf32> to vector<16x128xf32>
      %44 = arith.subf %40, %43 : vector<16x128xf32>
      %45 = math.exp %44 : vector<16x128xf32>
      %cst_31 = arith.constant dense<0.000000e+00> : vector<16xf32>
      %46 = vector.multi_reduction <add>, %45, %cst_31 [1] : vector<16x128xf32> to vector<16xf32>
      %47 = vector.shape_cast %46 : vector<16xf32> to vector<16x1xf32>
      %48 = vector.broadcast %47 : vector<16x1xf32> to vector<16x128xf32>
      %49 = arith.divf %45, %48 : vector<16x128xf32>
      %c0_32 = arith.constant 0 : index
      %c0_33 = arith.constant 0 : index
      %50 = vector.load %arg20[%c0_32, %c0_33] : memref<16x128xf32, #tpu.memory_space<vmem>>, vector<16x128xf32>
      tpu.vector_store %arg20[%c0_32, %c0_33], %49 {strides = array<i32>} : memref<16x128xf32, #tpu.memory_space<vmem>>, vector<16x128xf32>,
      %51 = math.log %47 : vector<16x1xf32>
      %52 = vector.broadcast %51 : vector<16x1xf32> to vector<16x128xf32>
      %53 = arith.subf %44, %52 : vector<16x128xf32>
      %c0_34 = arith.constant 0 : index
      %c0_35 = arith.constant 0 : index
      %54 = vector.load %arg21[%c0_34, %c0_35] : memref<16x128xf32, #tpu.memory_space<vmem>>, vector<16x128xf32>
      tpu.vector_store %arg21[%c0_34, %c0_35], %53 {strides = array<i32>} : memref<16x128xf32, #tpu.memory_space<vmem>>, vector<16x128xf32>,
    } else {
    }
    return
  }
  func.func @transform_0(%arg0: i32, %arg1: i32) -> (i32, i32) {
    %c0_i32 = arith.constant 0 : i32
    %c0_i32_0 = arith.constant 0 : i32
    %c0_i32_1 = arith.constant 0 : i32
    return %c0_i32, %c0_i32_0 : i32, i32
  }
  func.func @transform_1(%arg0: i32, %arg1: i32) -> (i32, i32) {
    %c0_i32 = arith.constant 0 : i32
    %c0_i32_0 = arith.constant 0 : i32
    %c0_i32_1 = arith.constant 0 : i32
    return %c0_i32, %c0_i32_0 : i32, i32
  }
  func.func @transform_2(%arg0: i32, %arg1: i32) -> (i32, i32) {
    %c0_i32 = arith.constant 0 : i32
    %c0_i32_0 = arith.constant 0 : i32
    %c0_i32_1 = arith.constant 0 : i32
    return %c0_i32, %c0_i32_0 : i32, i32
  }
  func.func @transform_3(%arg0: i32, %arg1: i32) -> (i32, i32) {
    %c0_i32 = arith.constant 0 : i32
    %c0_i32_0 = arith.constant 0 : i32
    %c0_i32_1 = arith.constant 0 : i32
    return %c0_i32, %c0_i32_0 : i32, i32
  }
  func.func @transform_4(%arg0: i32, %arg1: i32) -> (i32, i32, i32) {
    %c0_i32 = arith.constant 0 : i32
    %c0_i32_0 = arith.constant 0 : i32
    %c0_i32_1 = arith.constant 0 : i32
    return %arg0, %c0_i32, %c0_i32_0 : i32, i32, i32
  }
  func.func @transform_5(%arg0: i32, %arg1: i32) -> (i32, i32, i32) {
    %c0_i32 = arith.constant 0 : i32
    %c0_i32_0 = arith.constant 0 : i32
    %c0_i32_1 = arith.constant 0 : i32
    return %arg0, %c0_i32, %c0_i32_0 : i32, i32, i32
  }
  func.func @transform_6(%arg0: i32, %arg1: i32) -> (i32, i32, i32) {
    %c0_i32 = arith.constant 0 : i32
    %c0_i32_0 = arith.constant 0 : i32
    %c0_i32_1 = arith.constant 0 : i32
    return %arg0, %c0_i32, %c0_i32_0 : i32, i32, i32
  }
  func.func @transform_7(%arg0: i32, %arg1: i32) -> (i32, i32, i32) {
    %c0_i32 = arith.constant 0 : i32
    %c0_i32_0 = arith.constant 0 : i32
    %c0_i32_1 = arith.constant 0 : i32
    return %arg0, %c0_i32, %c0_i32_0 : i32, i32, i32
  }
  func.func @transform_8(%arg0: i32, %arg1: i32) -> (i32, i32, i32) {
    %c0_i32 = arith.constant 0 : i32
    %c0_i32_0 = arith.constant 0 : i32
    %c0_i32_1 = arith.constant 0 : i32
    return %arg0, %c0_i32, %c0_i32_0 : i32, i32, i32
  }
  func.func @transform_9(%arg0: i32, %arg1: i32) -> (i32, i32, i32) {
    %c0_i32 = arith.constant 0 : i32
    %c0_i32_0 = arith.constant 0 : i32
    %c0_i32_1 = arith.constant 0 : i32
    return %arg0, %c0_i32, %c0_i32_0 : i32, i32, i32
  }
  func.func @transform_10(%arg0: i32, %arg1: i32) -> (i32, i32, i32) {
    %c0_i32 = arith.constant 0 : i32
    %c0_i32_0 = arith.constant 0 : i32
    return %arg0, %c0_i32, %arg1 : i32, i32, i32
  }
  func.func @transform_11(%arg0: i32, %arg1: i32) -> (i32, i32, i32) {
    %c0_i32 = arith.constant 0 : i32
    %c0_i32_0 = arith.constant 0 : i32
    return %arg0, %c0_i32, %arg1 : i32, i32, i32
  }
  func.func @transform_12(%arg0: i32, %arg1: i32) -> (i32, i32, i32) {
    %c0_i32 = arith.constant 0 : i32
    %c0_i32_0 = arith.constant 0 : i32
    return %arg0, %arg1, %c0_i32 : i32, i32, i32
  }
  func.func @transform_13(%arg0: i32, %arg1: i32) -> (i32, i32, i32) {
    %c0_i32 = arith.constant 0 : i32
    %c0_i32_0 = arith.constant 0 : i32
    %c0_i32_1 = arith.constant 0 : i32
    return %arg0, %c0_i32, %c0_i32_0 : i32, i32, i32
  }
  func.func @transform_14(%arg0: i32, %arg1: i32) -> (i32, i32, i32) {
    %c0_i32 = arith.constant 0 : i32
    %c0_i32_0 = arith.constant 0 : i32
    %c0_i32_1 = arith.constant 0 : i32
    return %arg0, %c0_i32, %c0_i32_0 : i32, i32, i32
  }
  func.func @transform_15(%arg0: i32, %arg1: i32) -> (i32, i32, i32) {
    %c0_i32 = arith.constant 0 : i32
    %c0_i32_0 = arith.constant 0 : i32
    %c0_i32_1 = arith.constant 0 : i32
    return %arg0, %c0_i32, %c0_i32_0 : i32, i32, i32
  }
  func.func @transform_16(%arg0: i32, %arg1: i32) -> (i32, i32) {
    %c0_i32 = arith.constant 0 : i32
    %c0_i32_0 = arith.constant 0 : i32
    %c0_i32_1 = arith.constant 0 : i32
    return %c0_i32, %c0_i32_0 : i32, i32
  }
  func.func @transform_17(%arg0: i32, %arg1: i32) -> (i32, i32) {
    %c0_i32 = arith.constant 0 : i32
    %c0_i32_0 = arith.constant 0 : i32
    %c0_i32_1 = arith.constant 0 : i32
    return %c0_i32, %c0_i32_0 : i32, i32
  }
  func.func @transform_18(%arg0: i32, %arg1: i32) -> (i32, i32) {
    %c0_i32 = arith.constant 0 : i32
    %c0_i32_0 = arith.constant 0 : i32
    %c0_i32_1 = arith.constant 0 : i32
    return %c0_i32, %c0_i32_0 : i32, i32
  }
  func.func @transform_19(%arg0: i32, %arg1: i32) -> (i32, i32) {
    %c0_i32 = arith.constant 0 : i32
    %c0_i32_0 = arith.constant 0 : i32
    %c0_i32_1 = arith.constant 0 : i32
    return %c0_i32, %c0_i32_0 : i32, i32
  }
}

</mosaic_0001>

<llo_original>
// kernel: pos_model_forward.1
$region0: #{pos_model_forward.1}
  #allocation0 [shape = 'u32[]', space=smem, size = 0x4, offset = 0x4, fixed_abs, tag = 'smem constant byte address 0x4 - core index']
  #allocation1 [shape = 'u32[72,128]{1,0:T(1,128)}', space=vmem, size = 0x9000, scoped, tag = 'internal scratch']
  #allocation2 [shape = 'f32[16,512]{1,0:T(8,128)}', space=vmem, size = 0x8000, scoped, tag = 'scratch operand']
  #allocation3 [shape = 'f32[16,512]{1,0:T(8,128)}', space=vmem, size = 0x8000, scoped, tag = 'scratch operand']
  #allocation4 [shape = 'f32[16,512]{1,0:T(8,128)}', space=vmem, size = 0x8000, scoped, tag = 'scratch operand']
  %s0 = inlined_call_operand.vmem [shape: f32[16,32], index: 0, kind: input, shape index: {}]
  %s1 = inlined_call_operand.hbm [shape: bf16[32,512], index: 1, kind: input, shape index: {}]
  %s2 = inlined_call_operand.hbm [shape: f32[1,512], index: 2, kind: input, shape index: {}]
  %s3 = inlined_call_operand.vmem [shape: f32[16,16], index: 3, kind: input, shape index: {}]
  %s4 = inlined_call_operand.hbm [shape: bf16[2,512,1536], index: 4, kind: input, shape index: {}]
  %s5 = inlined_call_operand.hbm [shape: f32[2,1,1536], index: 5, kind: input, shape index: {}]
  %s6 = inlined_call_operand.hbm [shape: bf16[2,512,512], index: 6, kind: input, shape index: {}]
  %s7 = inlined_call_operand.hbm [shape: f32[2,1,512], index: 7, kind: input, shape index: {}]
  %s8 = inlined_call_operand.hbm [shape: f32[2,1,512], index: 8, kind: input, shape index: {}]
  %s9 = inlined_call_operand.hbm [shape: f32[2,1,512], index: 9, kind: input, shape index: {}]
  %s10 = inlined_call_operand.hbm [shape: bf16[2,512,2048], index: 10, kind: input, shape index: {}]
  %s11 = inlined_call_operand.hbm [shape: f32[2,1,2048], index: 11, kind: input, shape index: {}]
  %s12 = inlined_call_operand.hbm [shape: bf16[2,2048,512], index: 12, kind: input, shape index: {}]
  %s13 = inlined_call_operand.hbm [shape: f32[2,1,512], index: 13, kind: input, shape index: {}]
  %s14 = inlined_call_operand.hbm [shape: f32[2,1,512], index: 14, kind: input, shape index: {}]
  %s15 = inlined_call_operand.hbm [shape: f32[2,1,512], index: 15, kind: input, shape index: {}]
  %s16 = inlined_call_operand.hbm [shape: bf16[512,128], index: 16, kind: input, shape index: {}]
  %s17 = inlined_call_operand.hbm [shape: f32[1,128], index: 17, kind: input, shape index: {}]
  %s18 = inlined_call_operand.vmem [shape: f32[16,128], index: 18, kind: output, shape index: {0}]
  %s19 = inlined_call_operand.vmem [shape: f32[16,128], index: 19, kind: output, shape index: {1}]
  %20 = xla_tuple %s18, %s19
  %s21 = sld [smem:[#allocation0]]
  $region193: #{pos_model_forward.1} parent=0
    _
  %s23 = ssub.s32 1, %s21
  %s24 = scalar_select 0, %s23, %s21
  $region1: #{pos_model_forward.1} parent=0
    #allocation5 [shape = 'u8[32768]{0}', space=vmem, size = 0x8000, scoped, tag = 'input window, operand 1, single buffered']
    #allocation6 [shape = 's32[2]{0}', space=sflag, size = 0x8, scoped, tag = 'scoped memory for pos_model_forward.1']
    #allocation7 [shape = 'u8[2048]{0}', space=vmem, size = 0x800, scoped, tag = 'input window, operand 2, single buffered']
    #allocation8 [shape = 's32[1]{0}', space=sflag, size = 0x4, scoped, tag = 'scoped memory for pos_model_forward.1']
    #allocation9 [shape = 'u8[3145728]{0}', space=vmem, size = 0x300000, scoped, tag = 'input window, operand 4']
    #allocation10 [shape = 'u8[12288]{0}', space=vmem, size = 0x3000, scoped, tag = 'input window, operand 5']
    #allocation11 [shape = 'u8[1048576]{0}', space=vmem, size = 0x100000, scoped, tag = 'input window, operand 6']
    #allocation12 [shape = 'u8[4096]{0}', space=vmem, size = 0x1000, scoped, tag = 'input window, operand 7']
    #allocation13 [shape = 'u8[4096]{0}', space=vmem, size = 0x1000, scoped, tag = 'input window, operand 8']
    #allocation14 [shape = 'u8[4096]{0}', space=vmem, size = 0x1000, scoped, tag = 'input window, operand 9']
    #allocation15 [shape = 'u8[1048576]{0}', space=vmem, size = 0x100000, scoped, tag = 'input window, operand 10']
    #allocation16 [shape = 'u8[4096]{0}', space=vmem, size = 0x1000, scoped, tag = 'input window, operand 11']
    #allocation17 [shape = 'u8[1048576]{0}', space=vmem, size = 0x100000, scoped, tag = 'input window, operand 12']
    #allocation18 [shape = 'u8[4096]{0}', space=vmem, size = 0x1000, scoped, tag = 'input window, operand 13']
    #allocation19 [shape = 'u8[4096]{0}', space=vmem, size = 0x1000, scoped, tag = 'input window, operand 14']
    #allocation20 [shape = 'u8[4096]{0}', space=vmem, size = 0x1000, scoped, tag = 'input window, operand 15']
    #allocation21 [shape = 'u8[131072]{0}', space=vmem, size = 0x20000, scoped, tag = 'input window, operand 16, single buffered']
    #allocation22 [shape = 'u8[512]{0}', space=vmem, size = 0x400, scoped, tag = 'input window, operand 17, single buffered']
    #allocation23 [shape = 's32[1]{0}', space=sflag, size = 0x4, scoped, tag = 'scoped memory for pos_model_forward.1']
    %25 = vsyncpa [#allocation6], 0
    %26 = vsyncpa [#allocation8], 0
    %27 = vsyncpa [#allocation23], 0
    loop: start=0, step=1, limit=10
    $region2: #{pos_model_forward.1} parent=1 // loop_pre_header
      _
    $region3: #{pos_model_forward.1} parent=1 // loop_header
      %s29 = sphi 0, %s33
      %p30 = scmp.ge.s32.totalorder %s29, 10
      %s36 = sphi 0, %s48
      %s37 = sphi 0, %s44
      %s38 = sphi 0, %s36
      %s39 = sphi 0, %s37
      %s40 = sphi 0, %s38
      %s41 = sphi 0, %s39
      %s49 = sphi 0, %s49
      %s51 = sphi 0, %s49
      %s52 = sphi 0, %s51
      %s66 = sphi 0, %s52
      %s70 = sphi 0, %s70
      %s72 = sphi 0, %s70
      %s73 = sphi 0, %s72
      %s87 = sphi 0, %s73
      %s91 = sphi 0, %s91
      %s93 = sphi 0, %s91
      %s94 = sphi 0, %s93
      %s108 = sphi 0, %s94
      %s112 = sphi 0, %s112
      %s114 = sphi 0, %s112
      %s115 = sphi 0, %s114
      %s129 = sphi 0, %s115
      %s135 = sphi 0, %s137
      %s138 = sphi 0, %s135
      %s139 = sphi 0, %s138
      %s155 = sphi 0, %s139
      %s161 = sphi 0, %s163
      %s164 = sphi 0, %s161
      %s165 = sphi 0, %s164
      %s181 = sphi 0, %s165
      %s187 = sphi 0, %s189
      %s190 = sphi 0, %s187
      %s191 = sphi 0, %s190
      %s207 = sphi 0, %s191
      %s213 = sphi 0, %s215
      %s216 = sphi 0, %s213
      %s217 = sphi 0, %s216
      %s233 = sphi 0, %s217
      %s239 = sphi 0, %s241
      %s242 = sphi 0, %s239
      %s243 = sphi 0, %s242
      %s259 = sphi 0, %s243
      %s265 = sphi 0, %s267
      %s268 = sphi 0, %s265
      %s269 = sphi 0, %s268
      %s285 = sphi 0, %s269
      %s293 = sphi 0, %s295
      %s296 = sphi 0, %s293
      %s297 = sphi 0, %s296
      %s313 = sphi 0, %s297
      %s321 = sphi 0, %s323
      %s324 = sphi 0, %s321
      %s325 = sphi 0, %s324
      %s341 = sphi 0, %s325
      %s349 = sphi 0, %s351
      %s352 = sphi 0, %s349
      %s353 = sphi 0, %s352
      %s369 = sphi 0, %s353
      %s375 = sphi 0, %s377
      %s378 = sphi 0, %s375
      %s379 = sphi 0, %s378
      %s395 = sphi 0, %s379
      %s401 = sphi 0, %s403
      %s404 = sphi 0, %s401
      %s405 = sphi 0, %s404
      %s421 = sphi 0, %s405
      %s427 = sphi 0, %s429
      %s430 = sphi 0, %s427
      %s431 = sphi 0, %s430
      %s447 = sphi 0, %s431
      %s451 = sphi 0, %s451
      %s453 = sphi 0, %s451
      %s454 = sphi 0, %s453
      %s468 = sphi 0, %s454
      %s472 = sphi 0, %s472
      %s474 = sphi 0, %s472
      %s475 = sphi 0, %s474
      %s489 = sphi 0, %s475
      %s493 = sphi 0, %s493
      %s495 = sphi 0, %s493
      %s496 = sphi 0, %s495
      %s510 = sphi 0, %s496
      %s514 = sphi 0, %s514
      %s516 = sphi 0, %s514
      %s517 = sphi 0, %s516
      %s531 = sphi 0, %s517
    $region4: #{pos_model_forward.1} parent=1 // loop_header_branch
      %32 = sbr.rel (%p30) target = $region8
    $region5: #{pos_model_forward.1} parent=1 // loop_body
      %s34 = ssub.s32 %s29, 1
      %s35 = ssub.s32 %s29, 2
      %s42 = sadd.s32 1, %s37
      %p43 = scmp.ge.s32.totalorder %s42, 4
      %s44 = scalar_select %p43, 0, %s42
      %s45 = sadd.s32 1, %s36
      %s46 = scalar_select %p43, %s45, %s36
      %p47 = scmp.ge.s32.totalorder %s46, 2
      %s48 = scalar_select %p47, 0, %s46
      %s50 = sadd.s32 %s49, 1
      %p53 = scmp.eq.s32.totalorder %s29, 7
      %p54 = scmp.ne.s32.totalorder %s49, %s51
      %p55 = scmp.eq.s32.totalorder %s29, 0
      %p56 = por %p54, %p55
      %p57 = scmp.ne.s32.totalorder %s49, %s51
      %p58 = scmp.eq.s32.totalorder %s34, 7
      %p59 = por %p57, %p58
      %p60 = scmp.ne.s32.totalorder %s51, %s52
      %p61 = scmp.eq.s32.totalorder %s34, 0
      %p62 = por %p60, %p61
      %p63 = scmp.ne.s32.totalorder %s51, %s52
      %p64 = scmp.eq.s32.totalorder %s35, 7
      %p65 = por %p63, %p64
      %p67 = scmp.ne.s32.totalorder %s52, %s66
      %p68 = scmp.eq.s32.totalorder %s35, 0
      %p69 = por %p67, %p68
      %s71 = sadd.s32 %s70, 1
      %p74 = scmp.eq.s32.totalorder %s29, 7
      %p75 = scmp.ne.s32.totalorder %s70, %s72
      %p76 = scmp.eq.s32.totalorder %s29, 0
      %p77 = por %p75, %p76
      %p78 = scmp.ne.s32.totalorder %s70, %s72
      %p79 = scmp.eq.s32.totalorder %s34, 7
      %p80 = por %p78, %p79
      %p81 = scmp.ne.s32.totalorder %s72, %s73
      %p82 = scmp.eq.s32.totalorder %s34, 0
      %p83 = por %p81, %p82
      %p84 = scmp.ne.s32.totalorder %s72, %s73
      %p85 = scmp.eq.s32.totalorder %s35, 7
      %p86 = por %p84, %p85
      %p88 = scmp.ne.s32.totalorder %s73, %s87
      %p89 = scmp.eq.s32.totalorder %s35, 0
      %p90 = por %p88, %p89
      %s92 = sadd.s32 %s91, 1
      %p95 = scmp.eq.s32.totalorder %s29, 7
      %p96 = scmp.ne.s32.totalorder %s91, %s93
      %p97 = scmp.eq.s32.totalorder %s29, 0
      %p98 = por %p96, %p97
      %p99 = scmp.ne.s32.totalorder %s91, %s93
      %p100 = scmp.eq.s32.totalorder %s34, 7
      %p101 = por %p99, %p100
      %p102 = scmp.ne.s32.totalorder %s93, %s94
      %p103 = scmp.eq.s32.totalorder %s34, 0
      %p104 = por %p102, %p103
      %p105 = scmp.ne.s32.totalorder %s93, %s94
      %p106 = scmp.eq.s32.totalorder %s35, 7
      %p107 = por %p105, %p106
      %p109 = scmp.ne.s32.totalorder %s94, %s108
      %p110 = scmp.eq.s32.totalorder %s35, 0
      %p111 = por %p109, %p110
      %s113 = sadd.s32 %s112, 1
      %p116 = scmp.eq.s32.totalorder %s29, 7
      %p117 = scmp.ne.s32.totalorder %s112, %s114
      %p118 = scmp.eq.s32.totalorder %s29, 0
      %p119 = por %p117, %p118
      %p120 = scmp.ne.s32.totalorder %s112, %s114
      %p121 = scmp.eq.s32.totalorder %s34, 7
      %p122 = por %p120, %p121
      %p123 = scmp.ne.s32.totalorder %s114, %s115
      %p124 = scmp.eq.s32.totalorder %s34, 0
      %p125 = por %p123, %p124
      %p126 = scmp.ne.s32.totalorder %s114, %s115
      %p127 = scmp.eq.s32.totalorder %s35, 7
      %p128 = por %p126, %p127
      %p130 = scmp.ne.s32.totalorder %s115, %s129
      %p131 = scmp.eq.s32.totalorder %s35, 0
      %p132 = por %p130, %p131
      %s133 = ssub.s32 %s36, %s48
      %p134 = scmp.eq.s32.totalorder %s133, 0
      %s136 = sadd.s32 %s135, 1
      %s137 = scalar_select %p134, %s135, %s136
      %p140 = pneg %p134
      %p141 = scmp.eq.s32.totalorder %s29, 7
      %p142 = por %p140, %p141
      %p143 = scmp.ne.s32.totalorder %s135, %s138
      %p144 = scmp.eq.s32.totalorder %s29, 0
      %p145 = por %p143, %p144
      %p146 = scmp.ne.s32.totalorder %s135, %s138
      %p147 = scmp.eq.s32.totalorder %s34, 7
      %p148 = por %p146, %p147
      %p149 = scmp.ne.s32.totalorder %s138, %s139
      %p150 = scmp.eq.s32.totalorder %s34, 0
      %p151 = por %p149, %p150
      %p152 = scmp.ne.s32.totalorder %s138, %s139
      %p153 = scmp.eq.s32.totalorder %s35, 7
      %p154 = por %p152, %p153
      %p156 = scmp.ne.s32.totalorder %s139, %s155
      %p157 = scmp.eq.s32.totalorder %s35, 0
      %p158 = por %p156, %p157
      %s159 = ssub.s32 %s36, %s48
      %p160 = scmp.eq.s32.totalorder %s159, 0
      %s162 = sadd.s32 %s161, 1
      %s163 = scalar_select %p160, %s161, %s162
      %p166 = pneg %p160
      %p167 = scmp.eq.s32.totalorder %s29, 7
      %p168 = por %p166, %p167
      %p169 = scmp.ne.s32.totalorder %s161, %s164
      %p170 = scmp.eq.s32.totalorder %s29, 0
      %p171 = por %p169, %p170
      %p172 = scmp.ne.s32.totalorder %s161, %s164
      %p173 = scmp.eq.s32.totalorder %s34, 7
      %p174 = por %p172, %p173
      %p175 = scmp.ne.s32.totalorder %s164, %s165
      %p176 = scmp.eq.s32.totalorder %s34, 0
      %p177 = por %p175, %p176
      %p178 = scmp.ne.s32.totalorder %s164, %s165
      %p179 = scmp.eq.s32.totalorder %s35, 7
      %p180 = por %p178, %p179
      %p182 = scmp.ne.s32.totalorder %s165, %s181
      %p183 = scmp.eq.s32.totalorder %s35, 0
      %p184 = por %p182, %p183
      %s185 = ssub.s32 %s36, %s48
      %p186 = scmp.eq.s32.totalorder %s185, 0
      %s188 = sadd.s32 %s187, 1
      %s189 = scalar_select %p186, %s187, %s188
      %p192 = pneg %p186
      %p193 = scmp.eq.s32.totalorder %s29, 7
      %p194 = por %p192, %p193
      %p195 = scmp.ne.s32.totalorder %s187, %s190
      %p196 = scmp.eq.s32.totalorder %s29, 0
      %p197 = por %p195, %p196
      %p198 = scmp.ne.s32.totalorder %s187, %s190
      %p199 = scmp.eq.s32.totalorder %s34, 7
      %p200 = por %p198, %p199
      %p201 = scmp.ne.s32.totalorder %s190, %s191
      %p202 = scmp.eq.s32.totalorder %s34, 0
      %p203 = por %p201, %p202
      %p204 = scmp.ne.s32.totalorder %s190, %s191
      %p205 = scmp.eq.s32.totalorder %s35, 7
      %p206 = por %p204, %p205
      %p208 = scmp.ne.s32.totalorder %s191, %s207
      %p209 = scmp.eq.s32.totalorder %s35, 0
      %p210 = por %p208, %p209
      %s211 = ssub.s32 %s36, %s48
      %p212 = scmp.eq.s32.totalorder %s211, 0
      %s214 = sadd.s32 %s213, 1
      %s215 = scalar_select %p212, %s213, %s214
      %p218 = pneg %p212
      %p219 = scmp.eq.s32.totalorder %s29, 7
      %p220 = por %p218, %p219
      %p221 = scmp.ne.s32.totalorder %s213, %s216
      %p222 = scmp.eq.s32.totalorder %s29, 0
      %p223 = por %p221, %p222
      %p224 = scmp.ne.s32.totalorder %s213, %s216
      %p225 = scmp.eq.s32.totalorder %s34, 7
      %p226 = por %p224, %p225
      %p227 = scmp.ne.s32.totalorder %s216, %s217
      %p228 = scmp.eq.s32.totalorder %s34, 0
      %p229 = por %p227, %p228
      %p230 = scmp.ne.s32.totalorder %s216, %s217
      %p231 = scmp.eq.s32.totalorder %s35, 7
      %p232 = por %p230, %p231
      %p234 = scmp.ne.s32.totalorder %s217, %s233
      %p235 = scmp.eq.s32.totalorder %s35, 0
      %p236 = por %p234, %p235
      %s237 = ssub.s32 %s36, %s48
      %p238 = scmp.eq.s32.totalorder %s237, 0
      %s240 = sadd.s32 %s239, 1
      %s241 = scalar_select %p238, %s239, %s240
      %p244 = pneg %p238
      %p245 = scmp.eq.s32.totalorder %s29, 7
      %p246 = por %p244, %p245
      %p247 = scmp.ne.s32.totalorder %s239, %s242
      %p248 = scmp.eq.s32.totalorder %s29, 0
      %p249 = por %p247, %p248
      %p250 = scmp.ne.s32.totalorder %s239, %s242
      %p251 = scmp.eq.s32.totalorder %s34, 7
      %p252 = por %p250, %p251
      %p253 = scmp.ne.s32.totalorder %s242, %s243
      %p254 = scmp.eq.s32.totalorder %s34, 0
      %p255 = por %p253, %p254
      %p256 = scmp.ne.s32.totalorder %s242, %s243
      %p257 = scmp.eq.s32.totalorder %s35, 7
      %p258 = por %p256, %p257
      %p260 = scmp.ne.s32.totalorder %s243, %s259
      %p261 = scmp.eq.s32.totalorder %s35, 0
      %p262 = por %p260, %p261
      %s263 = ssub.s32 %s36, %s48
      %p264 = scmp.eq.s32.totalorder %s263, 0
      %s266 = sadd.s32 %s265, 1
      %s267 = scalar_select %p264, %s265, %s266
      %p270 = pneg %p264
      %p271 = scmp.eq.s32.totalorder %s29, 7
      %p272 = por %p270, %p271
      %p273 = scmp.ne.s32.totalorder %s265, %s268
      %p274 = scmp.eq.s32.totalorder %s29, 0
      %p275 = por %p273, %p274
      %p276 = scmp.ne.s32.totalorder %s265, %s268
      %p277 = scmp.eq.s32.totalorder %s34, 7
      %p278 = por %p276, %p277
      %p279 = scmp.ne.s32.totalorder %s268, %s269
      %p280 = scmp.eq.s32.totalorder %s34, 0
      %p281 = por %p279, %p280
      %p282 = scmp.ne.s32.totalorder %s268, %s269
      %p283 = scmp.eq.s32.totalorder %s35, 7
      %p284 = por %p282, %p283
      %p286 = scmp.ne.s32.totalorder %s269, %s285
      %p287 = scmp.eq.s32.totalorder %s35, 0
      %p288 = por %p286, %p287
      %s289 = ssub.s32 %s36, %s48
      %s290 = ssub.s32 %s37, %s44
      %s291 = sor.u32 %s289, %s290
      %p292 = scmp.eq.s32.totalorder %s291, 0
      %s294 = sadd.s32 %s293, 1
      %s295 = scalar_select %p292, %s293, %s294
      %p298 = pneg %p292
      %p299 = scmp.eq.s32.totalorder %s29, 7
      %p300 = por %p298, %p299
      %p301 = scmp.ne.s32.totalorder %s293, %s296
      %p302 = scmp.eq.s32.totalorder %s29, 0
      %p303 = por %p301, %p302
      %p304 = scmp.ne.s32.totalorder %s293, %s296
      %p305 = scmp.eq.s32.totalorder %s34, 7
      %p306 = por %p304, %p305
      %p307 = scmp.ne.s32.totalorder %s296, %s297
      %p308 = scmp.eq.s32.totalorder %s34, 0
      %p309 = por %p307, %p308
      %p310 = scmp.ne.s32.totalorder %s296, %s297
      %p311 = scmp.eq.s32.totalorder %s35, 7
      %p312 = por %p310, %p311
      %p314 = scmp.ne.s32.totalorder %s297, %s313
      %p315 = scmp.eq.s32.totalorder %s35, 0
      %p316 = por %p314, %p315
      %s317 = ssub.s32 %s36, %s48
      %s318 = ssub.s32 %s37, %s44
      %s319 = sor.u32 %s317, %s318
      %p320 = scmp.eq.s32.totalorder %s319, 0
      %s322 = sadd.s32 %s321, 1
      %s323 = scalar_select %p320, %s321, %s322
      %p326 = pneg %p320
      %p327 = scmp.eq.s32.totalorder %s29, 7
      %p328 = por %p326, %p327
      %p329 = scmp.ne.s32.totalorder %s321, %s324
      %p330 = scmp.eq.s32.totalorder %s29, 0
      %p331 = por %p329, %p330
      %p332 = scmp.ne.s32.totalorder %s321, %s324
      %p333 = scmp.eq.s32.totalorder %s34, 7
      %p334 = por %p332, %p333
      %p335 = scmp.ne.s32.totalorder %s324, %s325
      %p336 = scmp.eq.s32.totalorder %s34, 0
      %p337 = por %p335, %p336
      %p338 = scmp.ne.s32.totalorder %s324, %s325
      %p339 = scmp.eq.s32.totalorder %s35, 7
      %p340 = por %p338, %p339
      %p342 = scmp.ne.s32.totalorder %s325, %s341
      %p343 = scmp.eq.s32.totalorder %s35, 0
      %p344 = por %p342, %p343
      %s345 = ssub.s32 %s36, %s48
      %s346 = ssub.s32 %s37, %s44
      %s347 = sor.u32 %s345, %s346
      %p348 = scmp.eq.s32.totalorder %s347, 0
      %s350 = sadd.s32 %s349, 1
      %s351 = scalar_select %p348, %s349, %s350
      %p354 = pneg %p348
      %p355 = scmp.eq.s32.totalorder %s29, 7
      %p356 = por %p354, %p355
      %p357 = scmp.ne.s32.totalorder %s349, %s352
      %p358 = scmp.eq.s32.totalorder %s29, 0
      %p359 = por %p357, %p358
      %p360 = scmp.ne.s32.totalorder %s349, %s352
      %p361 = scmp.eq.s32.totalorder %s34, 7
      %p362 = por %p360, %p361
      %p363 = scmp.ne.s32.totalorder %s352, %s353
      %p364 = scmp.eq.s32.totalorder %s34, 0
      %p365 = por %p363, %p364
      %p366 = scmp.ne.s32.totalorder %s352, %s353
      %p367 = scmp.eq.s32.totalorder %s35, 7
      %p368 = por %p366, %p367
      %p370 = scmp.ne.s32.totalorder %s353, %s369
      %p371 = scmp.eq.s32.totalorder %s35, 0
      %p372 = por %p370, %p371
      %s373 = ssub.s32 %s36, %s48
      %p374 = scmp.eq.s32.totalorder %s373, 0
      %s376 = sadd.s32 %s375, 1
      %s377 = scalar_select %p374, %s375, %s376
      %p380 = pneg %p374
      %p381 = scmp.eq.s32.totalorder %s29, 7
      %p382 = por %p380, %p381
      %p383 = scmp.ne.s32.totalorder %s375, %s378
      %p384 = scmp.eq.s32.totalorder %s29, 0
      %p385 = por %p383, %p384
      %p386 = scmp.ne.s32.totalorder %s375, %s378
      %p387 = scmp.eq.s32.totalorder %s34, 7
      %p388 = por %p386, %p387
      %p389 = scmp.ne.s32.totalorder %s378, %s379
      %p390 = scmp.eq.s32.totalorder %s34, 0
      %p391 = por %p389, %p390
      %p392 = scmp.ne.s32.totalorder %s378, %s379
      %p393 = scmp.eq.s32.totalorder %s35, 7
      %p394 = por %p392, %p393
      %p396 = scmp.ne.s32.totalorder %s379, %s395
      %p397 = scmp.eq.s32.totalorder %s35, 0
      %p398 = por %p396, %p397
      %s399 = ssub.s32 %s36, %s48
      %p400 = scmp.eq.s32.totalorder %s399, 0
      %s402 = sadd.s32 %s401, 1
      %s403 = scalar_select %p400, %s401, %s402
      %p406 = pneg %p400
      %p407 = scmp.eq.s32.totalorder %s29, 7
      %p408 = por %p406, %p407
      %p409 = scmp.ne.s32.totalorder %s401, %s404
      %p410 = scmp.eq.s32.totalorder %s29, 0
      %p411 = por %p409, %p410
      %p412 = scmp.ne.s32.totalorder %s401, %s404
      %p413 = scmp.eq.s32.totalorder %s34, 7
      %p414 = por %p412, %p413
      %p415 = scmp.ne.s32.totalorder %s404, %s405
      %p416 = scmp.eq.s32.totalorder %s34, 0
      %p417 = por %p415, %p416
      %p418 = scmp.ne.s32.totalorder %s404, %s405
      %p419 = scmp.eq.s32.totalorder %s35, 7
      %p420 = por %p418, %p419
      %p422 = scmp.ne.s32.totalorder %s405, %s421
      %p423 = scmp.eq.s32.totalorder %s35, 0
      %p424 = por %p422, %p423
      %s425 = ssub.s32 %s36, %s48
      %p426 = scmp.eq.s32.totalorder %s425, 0
      %s428 = sadd.s32 %s427, 1
      %s429 = scalar_select %p426, %s427, %s428
      %p432 = pneg %p426
      %p433 = scmp.eq.s32.totalorder %s29, 7
      %p434 = por %p432, %p433
      %p435 = scmp.ne.s32.totalorder %s427, %s430
      %p436 = scmp.eq.s32.totalorder %s29, 0
      %p437 = por %p435, %p436
      %p438 = scmp.ne.s32.totalorder %s427, %s430
      %p439 = scmp.eq.s32.totalorder %s34, 7
      %p440 = por %p438, %p439
      %p441 = scmp.ne.s32.totalorder %s430, %s431
      %p442 = scmp.eq.s32.totalorder %s34, 0
      %p443 = por %p441, %p442
      %p444 = scmp.ne.s32.totalorder %s430, %s431
      %p445 = scmp.eq.s32.totalorder %s35, 7
      %p446 = por %p444, %p445
      %p448 = scmp.ne.s32.totalorder %s431, %s447
      %p449 = scmp.eq.s32.totalorder %s35, 0
      %p450 = por %p448, %p449
      %s452 = sadd.s32 %s451, 1
      %p455 = scmp.eq.s32.totalorder %s29, 7
      %p456 = scmp.ne.s32.totalorder %s451, %s453
      %p457 = scmp.eq.s32.totalorder %s29, 0
      %p458 = por %p456, %p457
      %p459 = scmp.ne.s32.totalorder %s451, %s453
      %p460 = scmp.eq.s32.totalorder %s34, 7
      %p461 = por %p459, %p460
      %p462 = scmp.ne.s32.totalorder %s453, %s454
      %p463 = scmp.eq.s32.totalorder %s34, 0
      %p464 = por %p462, %p463
      %p465 = scmp.ne.s32.totalorder %s453, %s454
      %p466 = scmp.eq.s32.totalorder %s35, 7
      %p467 = por %p465, %p466
      %p469 = scmp.ne.s32.totalorder %s454, %s468
      %p470 = scmp.eq.s32.totalorder %s35, 0
      %p471 = por %p469, %p470
      %s473 = sadd.s32 %s472, 1
      %p476 = scmp.eq.s32.totalorder %s29, 7
      %p477 = scmp.ne.s32.totalorder %s472, %s474
      %p478 = scmp.eq.s32.totalorder %s29, 0
      %p479 = por %p477, %p478
      %p480 = scmp.ne.s32.totalorder %s472, %s474
      %p481 = scmp.eq.s32.totalorder %s34, 7
      %p482 = por %p480, %p481
      %p483 = scmp.ne.s32.totalorder %s474, %s475
      %p484 = scmp.eq.s32.totalorder %s34, 0
      %p485 = por %p483, %p484
      %p486 = scmp.ne.s32.totalorder %s474, %s475
      %p487 = scmp.eq.s32.totalorder %s35, 7
      %p488 = por %p486, %p487
      %p490 = scmp.ne.s32.totalorder %s475, %s489
      %p491 = scmp.eq.s32.totalorder %s35, 0
      %p492 = por %p490, %p491
      %s494 = sadd.s32 %s493, 1
      %p497 = scmp.eq.s32.totalorder %s29, 7
      %p498 = scmp.ne.s32.totalorder %s493, %s495
      %p499 = scmp.eq.s32.totalorder %s29, 0
      %p500 = por %p498, %p499
      %p501 = scmp.ne.s32.totalorder %s493, %s495
      %p502 = scmp.eq.s32.totalorder %s34, 7
      %p503 = por %p501, %p502
      %p504 = scmp.ne.s32.totalorder %s495, %s496
      %p505 = scmp.eq.s32.totalorder %s34, 0
      %p506 = por %p504, %p505
      %p507 = scmp.ne.s32.totalorder %s495, %s496
      %p508 = scmp.eq.s32.totalorder %s35, 7
      %p509 = por %p507, %p508
      %p511 = scmp.ne.s32.totalorder %s496, %s510
      %p512 = scmp.eq.s32.totalorder %s35, 0
      %p513 = por %p511, %p512
      %s515 = sadd.s32 %s514, 1
      %p518 = scmp.eq.s32.totalorder %s29, 7
      %p519 = scmp.ne.s32.totalorder %s514, %s516
      %p520 = scmp.eq.s32.totalorder %s29, 0
      %p521 = por %p519, %p520
      %p522 = scmp.ne.s32.totalorder %s514, %s516
      %p523 = scmp.eq.s32.totalorder %s34, 7
      %p524 = por %p522, %p523
      %p525 = scmp.ne.s32.totalorder %s516, %s517
      %p526 = scmp.eq.s32.totalorder %s34, 0
      %p527 = por %p525, %p526
      %p528 = scmp.ne.s32.totalorder %s516, %s517
      %p529 = scmp.eq.s32.totalorder %s35, 7
      %p530 = por %p528, %p529
      %p532 = scmp.ne.s32.totalorder %s517, %s531
      %p533 = scmp.eq.s32.totalorder %s35, 0
      %p534 = por %p532, %p533
      %p535 = scmp.le.s32.totalorder 1, %s29
      %p536 = scmp.lt.s32.totalorder %s29, 9
      %p537 = pnand %p535, %p536
      %p538 = pneg %p537
      // Predicated region
      $region9: #{pos_model_forward.1} parent=5 // pred_check
        _
      $region10: #{pos_model_forward.1} parent=5 // pred_check_branch
        %540 = sbr.rel (%p537) target = $region12
      $region11: #{pos_model_forward.1} parent=5 // pred_region
        %s541 = ssub.s32 %s29, 1
        // Predicated region
        $region13: #{pos_model_forward.1} parent=11 // pred_check
          %p542 = pneg %p62
        $region14: #{pos_model_forward.1} parent=11 // pred_check_branch
          %544 = sbr.rel (%p542) target = $region16
        $region15: #{pos_model_forward.1} parent=11 // pred_region
          _
        $region16: #{pos_model_forward.1} parent=11 // pred_fallthru
          _
        // Predicated region
        $region17: #{pos_model_forward.1} parent=11 // pred_check
          %p545 = pneg %p83
        $region18: #{pos_model_forward.1} parent=11 // pred_check_branch
          %547 = sbr.rel (%p545) target = $region20
        $region19: #{pos_model_forward.1} parent=11 // pred_region
          %549 = vsyncadd [#allocation6], 0
          %s550 = sshll.u32 %s1, 4
          %s551 = int_to_ptr.hbm [resolvable:$true] %s550
          %s552 = sshll.u32 [#allocation5], 4
          %s553 = int_to_ptr.vmem [resolvable:$true] %s552
          %558 = dma.hbm_to_vmem [thread:$0]  %s551, 1024, %s553, [#allocation6], 256, 256, 16
        $region20: #{pos_model_forward.1} parent=11 // pred_fallthru
          _
        // Predicated region
        $region21: #{pos_model_forward.1} parent=11 // pred_check
          %p559 = pneg %p104
        $region22: #{pos_model_forward.1} parent=11 // pred_check_branch
          %561 = sbr.rel (%p559) target = $region24
        $region23: #{pos_model_forward.1} parent=11 // pred_region
          %563 = vsyncadd [#allocation8], 0
          %s565 = sshll.u32 %s2, 4
          %s566 = int_to_ptr.hbm [resolvable:$true] %s565
          %s567 = sshll.u32 [#allocation7], 4
          %s568 = int_to_ptr.vmem [resolvable:$true] %s567
          %570 = dma.hbm_to_vmem [thread:$0]  %s566, 64, %s568, [#allocation8]
        $region24: #{pos_model_forward.1} parent=11 // pred_fallthru
          _
        // Predicated region
        $region25: #{pos_model_forward.1} parent=11 // pred_check
          %p571 = pneg %p125
        $region26: #{pos_model_forward.1} parent=11 // pred_check_branch
          %573 = sbr.rel (%p571) target = $region28
        $region27: #{pos_model_forward.1} parent=11 // pred_region
          _
        $region28: #{pos_model_forward.1} parent=11 // pred_fallthru
          _
        // Predicated region
        $region29: #{pos_model_forward.1} parent=11 // pred_check
          %p574 = pneg %p464
        $region30: #{pos_model_forward.1} parent=11 // pred_check_branch
          %576 = sbr.rel (%p574) target = $region32
        $region31: #{pos_model_forward.1} parent=11 // pred_region
          %578 = vsyncadd [#allocation8], 0
          %s579 = sshll.u32 %s16, 4
          %s580 = int_to_ptr.hbm [resolvable:$true] %s579
          %s581 = sshll.u32 [#allocation21], 4
          %s582 = int_to_ptr.vmem [resolvable:$true] %s581
          %587 = dma.hbm_to_vmem [thread:$0]  %s580, 4096, %s582, [#allocation8], 64, 64, 4
        $region32: #{pos_model_forward.1} parent=11 // pred_fallthru
          _
        // Predicated region
        $region33: #{pos_model_forward.1} parent=11 // pred_check
          %p588 = pneg %p485
        $region34: #{pos_model_forward.1} parent=11 // pred_check_branch
          %590 = sbr.rel (%p588) target = $region36
        $region35: #{pos_model_forward.1} parent=11 // pred_region
          %592 = vsyncadd [#allocation23], 0
          %s594 = sshll.u32 %s17, 4
          %s595 = int_to_ptr.hbm [resolvable:$true] %s594
          %s596 = sshll.u32 [#allocation22], 4
          %s597 = int_to_ptr.vmem [resolvable:$true] %s596
          %599 = dma.hbm_to_vmem [thread:$0]  %s595, 16, %s597, [#allocation23]
        $region36: #{pos_model_forward.1} parent=11 // pred_fallthru
          _
      $region12: #{pos_model_forward.1} parent=5 // pred_fallthru
        _
      %p600 = scmp.lt.s32.totalorder %s29, 8
      // Predicated region
      $region37: #{pos_model_forward.1} parent=5 // pred_check
        %p601 = pneg %p600
      $region38: #{pos_model_forward.1} parent=5 // pred_check_branch
        %603 = sbr.rel (%p601) target = $region40
      $region39: #{pos_model_forward.1} parent=5 // pred_region
        // Predicated region
        $region41: #{pos_model_forward.1} parent=39 // pred_check
          %p604 = pneg %p145
        $region42: #{pos_model_forward.1} parent=39 // pred_check_branch
          %606 = sbr.rel (%p604) target = $region44
        $region43: #{pos_model_forward.1} parent=39 // pred_region
          %s607 = sand.u32 %s29, 1
          %s608 = scalar_lea.sflag [#allocation6], %s607
          %s609 = sand.u32 %s135, 1
          %s610 = smul.addr %s609, 3072
          %s611 = scalar_lea.vmem [#allocation9], %s610
          %613 = vsyncadd %s608, 0
          %s614 = smul.addr %s36, 768
          %s615 = smul.addr %s614, 4
          %s616 = scalar_lea.hbm %s4, %s615
          %s617 = sshll.u32 %s616, 4
          %s618 = int_to_ptr.hbm [resolvable:$true] %s617
          %s619 = sshll.u32 %s611, 4
          %s620 = int_to_ptr.vmem [resolvable:$true] %s619
          %625 = dma.hbm_to_vmem [thread:$0]  %s618, 49152, %s620, %s608, 768, 768, 48
        $region44: #{pos_model_forward.1} parent=39 // pred_fallthru
          _
        // Predicated region
        $region45: #{pos_model_forward.1} parent=39 // pred_check
          %p626 = pneg %p171
        $region46: #{pos_model_forward.1} parent=39 // pred_check_branch
          %628 = sbr.rel (%p626) target = $region48
        $region47: #{pos_model_forward.1} parent=39 // pred_region
          %s629 = sand.u32 %s29, 1
          %s630 = scalar_lea.sflag [#allocation6], %s629
          %s631 = sand.u32 %s161, 1
          %s632 = smul.addr %s631, 12
          %s633 = scalar_lea.vmem [#allocation10], %s632
          %635 = vsyncadd %s630, 0
          %s636 = smul.addr %s36, 12
          %s637 = scalar_lea.hbm %s5, %s636
          %s639 = sshll.u32 %s637, 4
          %s640 = int_to_ptr.hbm [resolvable:$true] %s639
          %s641 = sshll.u32 %s633, 4
          %s642 = int_to_ptr.vmem [resolvable:$true] %s641
          %644 = dma.hbm_to_vmem [thread:$0]  %s640, 192, %s642, %s630
        $region48: #{pos_model_forward.1} parent=39 // pred_fallthru
          _
        // Predicated region
        $region49: #{pos_model_forward.1} parent=39 // pred_check
          %p645 = pneg %p197
        $region50: #{pos_model_forward.1} parent=39 // pred_check_branch
          %647 = sbr.rel (%p645) target = $region52
        $region51: #{pos_model_forward.1} parent=39 // pred_region
          %s648 = sand.u32 %s29, 1
          %s649 = scalar_lea.sflag [#allocation6], %s648
          %s650 = sand.u32 %s187, 1
          %s651 = smul.addr %s650, 1024
          %s652 = scalar_lea.vmem [#allocation11], %s651
          %654 = vsyncadd %s649, 0
          %s655 = smul.addr %s36, 256
          %s656 = smul.addr %s655, 4
          %s657 = scalar_lea.hbm %s6, %s656
          %s658 = sshll.u32 %s657, 4
          %s659 = int_to_ptr.hbm [resolvable:$true] %s658
          %s660 = sshll.u32 %s652, 4
          %s661 = int_to_ptr.vmem [resolvable:$true] %s660
          %666 = dma.hbm_to_vmem [thread:$0]  %s659, 16384, %s661, %s649, 256, 256, 16
        $region52: #{pos_model_forward.1} parent=39 // pred_fallthru
          _
        // Predicated region
        $region53: #{pos_model_forward.1} parent=39 // pred_check
          %p667 = pneg %p223
        $region54: #{pos_model_forward.1} parent=39 // pred_check_branch
          %669 = sbr.rel (%p667) target = $region56
        $region55: #{pos_model_forward.1} parent=39 // pred_region
          %s670 = sand.u32 %s29, 1
          %s671 = scalar_lea.sflag [#allocation6], %s670
          %s672 = sand.u32 %s213, 1
          %s673 = smul.addr %s672, 4
          %s674 = scalar_lea.vmem [#allocation12], %s673
          %676 = vsyncadd %s671, 0
          %s677 = smul.addr %s36, 4
          %s678 = scalar_lea.hbm %s7, %s677
          %s680 = sshll.u32 %s678, 4
          %s681 = int_to_ptr.hbm [resolvable:$true] %s680
          %s682 = sshll.u32 %s674, 4
          %s683 = int_to_ptr.vmem [resolvable:$true] %s682
          %685 = dma.hbm_to_vmem [thread:$0]  %s681, 64, %s683, %s671
        $region56: #{pos_model_forward.1} parent=39 // pred_fallthru
          _
        // Predicated region
        $region57: #{pos_model_forward.1} parent=39 // pred_check
          %p686 = pneg %p249
        $region58: #{pos_model_forward.1} parent=39 // pred_check_branch
          %688 = sbr.rel (%p686) target = $region60
        $region59: #{pos_model_forward.1} parent=39 // pred_region
          %s689 = sand.u32 %s29, 1
          %s690 = scalar_lea.sflag [#allocation6], %s689
          %s691 = sand.u32 %s239, 1
          %s692 = smul.addr %s691, 4
          %s693 = scalar_lea.vmem [#allocation13], %s692
          %695 = vsyncadd %s690, 0
          %s696 = smul.addr %s36, 4
          %s697 = scalar_lea.hbm %s8, %s696
          %s699 = sshll.u32 %s697, 4
          %s700 = int_to_ptr.hbm [resolvable:$true] %s699
          %s701 = sshll.u32 %s693, 4
          %s702 = int_to_ptr.vmem [resolvable:$true] %s701
          %704 = dma.hbm_to_vmem [thread:$0]  %s700, 64, %s702, %s690
        $region60: #{pos_model_forward.1} parent=39 // pred_fallthru
          _
        // Predicated region
        $region61: #{pos_model_forward.1} parent=39 // pred_check
          %p705 = pneg %p275
        $region62: #{pos_model_forward.1} parent=39 // pred_check_branch
          %707 = sbr.rel (%p705) target = $region64
        $region63: #{pos_model_forward.1} parent=39 // pred_region
          %s708 = sand.u32 %s29, 1
          %s709 = scalar_lea.sflag [#allocation6], %s708
          %s710 = sand.u32 %s265, 1
          %s711 = smul.addr %s710, 4
          %s712 = scalar_lea.vmem [#allocation14], %s711
          %714 = vsyncadd %s709, 0
          %s715 = smul.addr %s36, 4
          %s716 = scalar_lea.hbm %s9, %s715
          %s718 = sshll.u32 %s716, 4
          %s719 = int_to_ptr.hbm [resolvable:$true] %s718
          %s720 = sshll.u32 %s712, 4
          %s721 = int_to_ptr.vmem [resolvable:$true] %s720
          %723 = dma.hbm_to_vmem [thread:$0]  %s719, 64, %s721, %s709
        $region64: #{pos_model_forward.1} parent=39 // pred_fallthru
          _
        // Predicated region
        $region65: #{pos_model_forward.1} parent=39 // pred_check
          %p724 = pneg %p303
        $region66: #{pos_model_forward.1} parent=39 // pred_check_branch
          %726 = sbr.rel (%p724) target = $region68
        $region67: #{pos_model_forward.1} parent=39 // pred_region
          %s727 = sand.u32 %s29, 1
          %s728 = scalar_lea.sflag [#allocation6], %s727
          %s729 = sand.u32 %s293, 1
          %s730 = smul.addr %s729, 1024
          %s731 = scalar_lea.vmem [#allocation15], %s730
          %s732 = smul.u32 4, %s37
          %734 = vsyncadd %s728, 0
          %s735 = smul.addr %s36, 1024
          %s736 = sadd.s32 %s732, %s735
          %s737 = smul.addr %s736, 4
          %s738 = scalar_lea.hbm %s10, %s737
          %s739 = sshll.u32 %s738, 4
          %s740 = int_to_ptr.hbm [resolvable:$true] %s739
          %s741 = sshll.u32 %s731, 4
          %s742 = int_to_ptr.vmem [resolvable:$true] %s741
          %747 = dma.hbm_to_vmem [thread:$0]  %s740, 16384, %s742, %s728, 1024, 256, 16
        $region68: #{pos_model_forward.1} parent=39 // pred_fallthru
          _
        // Predicated region
        $region69: #{pos_model_forward.1} parent=39 // pred_check
          %p748 = pneg %p331
        $region70: #{pos_model_forward.1} parent=39 // pred_check_branch
          %750 = sbr.rel (%p748) target = $region72
        $region71: #{pos_model_forward.1} parent=39 // pred_region
          %s751 = sand.u32 %s29, 1
          %s752 = scalar_lea.sflag [#allocation6], %s751
          %s753 = sand.u32 %s321, 1
          %s754 = smul.addr %s753, 4
          %s755 = scalar_lea.vmem [#allocation16], %s754
          %s756 = smul.u32 4, %s37
          %758 = vsyncadd %s752, 0
          %s759 = smul.addr %s36, 16
          %s760 = sadd.s32 %s756, %s759
          %s761 = scalar_lea.hbm %s11, %s760
          %s763 = sshll.u32 %s761, 4
          %s764 = int_to_ptr.hbm [resolvable:$true] %s763
          %s765 = sshll.u32 %s755, 4
          %s766 = int_to_ptr.vmem [resolvable:$true] %s765
          %768 = dma.hbm_to_vmem [thread:$0]  %s764, 64, %s766, %s752
        $region72: #{pos_model_forward.1} parent=39 // pred_fallthru
          _
        // Predicated region
        $region73: #{pos_model_forward.1} parent=39 // pred_check
          %p769 = pneg %p359
        $region74: #{pos_model_forward.1} parent=39 // pred_check_branch
          %771 = sbr.rel (%p769) target = $region76
        $region75: #{pos_model_forward.1} parent=39 // pred_region
          %s772 = sand.u32 %s29, 1
          %s773 = scalar_lea.sflag [#allocation6], %s772
          %s774 = sand.u32 %s349, 1
          %s775 = smul.addr %s774, 1024
          %s776 = scalar_lea.vmem [#allocation17], %s775
          %s777 = smul.u32 64, %s37
          %779 = vsyncadd %s773, 0
          %s780 = smul.addr %s777, 4
          %s781 = smul.addr %s36, 1024
          %s782 = sadd.s32 %s780, %s781
          %s783 = smul.addr %s782, 4
          %s784 = scalar_lea.hbm %s12, %s783
          %s785 = sshll.u32 %s784, 4
          %s786 = int_to_ptr.hbm [resolvable:$true] %s785
          %s787 = sshll.u32 %s776, 4
          %s788 = int_to_ptr.vmem [resolvable:$true] %s787
          %793 = dma.hbm_to_vmem [thread:$0]  %s786, 16384, %s788, %s773, 256, 256, 16
        $region76: #{pos_model_forward.1} parent=39 // pred_fallthru
          _
        // Predicated region
        $region77: #{pos_model_forward.1} parent=39 // pred_check
          %p794 = pneg %p385
        $region78: #{pos_model_forward.1} parent=39 // pred_check_branch
          %796 = sbr.rel (%p794) target = $region80
        $region79: #{pos_model_forward.1} parent=39 // pred_region
          %s797 = sand.u32 %s29, 1
          %s798 = scalar_lea.sflag [#allocation6], %s797
          %s799 = sand.u32 %s375, 1
          %s800 = smul.addr %s799, 4
          %s801 = scalar_lea.vmem [#allocation18], %s800
          %803 = vsyncadd %s798, 0
          %s804 = smul.addr %s36, 4
          %s805 = scalar_lea.hbm %s13, %s804
          %s807 = sshll.u32 %s805, 4
          %s808 = int_to_ptr.hbm [resolvable:$true] %s807
          %s809 = sshll.u32 %s801, 4
          %s810 = int_to_ptr.vmem [resolvable:$true] %s809
          %812 = dma.hbm_to_vmem [thread:$0]  %s808, 64, %s810, %s798
        $region80: #{pos_model_forward.1} parent=39 // pred_fallthru
          _
        // Predicated region
        $region81: #{pos_model_forward.1} parent=39 // pred_check
          %p813 = pneg %p411
        $region82: #{pos_model_forward.1} parent=39 // pred_check_branch
          %815 = sbr.rel (%p813) target = $region84
        $region83: #{pos_model_forward.1} parent=39 // pred_region
          %s816 = sand.u32 %s29, 1
          %s817 = scalar_lea.sflag [#allocation6], %s816
          %s818 = sand.u32 %s401, 1
          %s819 = smul.addr %s818, 4
          %s820 = scalar_lea.vmem [#allocation19], %s819
          %822 = vsyncadd %s817, 0
          %s823 = smul.addr %s36, 4
          %s824 = scalar_lea.hbm %s14, %s823
          %s826 = sshll.u32 %s824, 4
          %s827 = int_to_ptr.hbm [resolvable:$true] %s826
          %s828 = sshll.u32 %s820, 4
          %s829 = int_to_ptr.vmem [resolvable:$true] %s828
          %831 = dma.hbm_to_vmem [thread:$0]  %s827, 64, %s829, %s817
        $region84: #{pos_model_forward.1} parent=39 // pred_fallthru
          _
        // Predicated region
        $region85: #{pos_model_forward.1} parent=39 // pred_check
          %p832 = pneg %p437
        $region86: #{pos_model_forward.1} parent=39 // pred_check_branch
          %834 = sbr.rel (%p832) target = $region88
        $region87: #{pos_model_forward.1} parent=39 // pred_region
          %s835 = sand.u32 %s29, 1
          %s836 = scalar_lea.sflag [#allocation6], %s835
          %s837 = sand.u32 %s427, 1
          %s838 = smul.addr %s837, 4
          %s839 = scalar_lea.vmem [#allocation20], %s838
          %841 = vsyncadd %s836, 0
          %s842 = smul.addr %s36, 4
          %s843 = scalar_lea.hbm %s15, %s842
          %s845 = sshll.u32 %s843, 4
          %s846 = int_to_ptr.hbm [resolvable:$true] %s845
          %s847 = sshll.u32 %s839, 4
          %s848 = int_to_ptr.vmem [resolvable:$true] %s847
          %850 = dma.hbm_to_vmem [thread:$0]  %s846, 64, %s848, %s836
        $region88: #{pos_model_forward.1} parent=39 // pred_fallthru
          _
      $region40: #{pos_model_forward.1} parent=5 // pred_fallthru
        _
      %p851 = scmp.le.s32.totalorder 1, %s29
      %p852 = scmp.lt.s32.totalorder %s29, 9
      %p853 = pnand %p851, %p852
      %p854 = pneg %p853
      // Predicated region
      $region89: #{pos_model_forward.1} parent=5 // pred_check
        _
      $region90: #{pos_model_forward.1} parent=5 // pred_check_branch
        %856 = sbr.rel (%p853) target = $region92
      $region91: #{pos_model_forward.1} parent=5 // pred_region
        %s857 = ssub.s32 %s29, 1
        // Predicated region
        $region93: #{pos_model_forward.1} parent=91 // pred_check
          %p858 = pneg %p83
        $region94: #{pos_model_forward.1} parent=91 // pred_check_branch
          %860 = sbr.rel (%p858) target = $region96
        $region95: #{pos_model_forward.1} parent=91 // pred_region
          %862 = dma.done [#allocation6], 1024
        $region96: #{pos_model_forward.1} parent=91 // pred_fallthru
          _
        // Predicated region
        $region97: #{pos_model_forward.1} parent=91 // pred_check
          %p863 = pneg %p104
        $region98: #{pos_model_forward.1} parent=91 // pred_check_branch
          %865 = sbr.rel (%p863) target = $region100
        $region99: #{pos_model_forward.1} parent=91 // pred_region
          %867 = dma.done [#allocation8], 64
        $region100: #{pos_model_forward.1} parent=91 // pred_fallthru
          _
        %s868 = sand.u32 %s34, 1
        %s869 = scalar_lea.sflag [#allocation6], %s868
        %s870 = sand.u32 %s138, 1
        %s871 = smul.addr %s870, 3072
        %s872 = scalar_lea.vmem [#allocation9], %s871
        // Predicated region
        $region101: #{pos_model_forward.1} parent=91 // pred_check
          %p873 = pneg %p151
        $region102: #{pos_model_forward.1} parent=91 // pred_check_branch
          %875 = sbr.rel (%p873) target = $region104
        $region103: #{pos_model_forward.1} parent=91 // pred_region
          %877 = dma.done %s869, 49152
        $region104: #{pos_model_forward.1} parent=91 // pred_fallthru
          _
        %s878 = sand.u32 %s34, 1
        %s879 = scalar_lea.sflag [#allocation6], %s878
        %s880 = sand.u32 %s164, 1
        %s881 = smul.addr %s880, 12
        %s882 = scalar_lea.vmem [#allocation10], %s881
        // Predicated region
        $region105: #{pos_model_forward.1} parent=91 // pred_check
          %p883 = pneg %p177
        $region106: #{pos_model_forward.1} parent=91 // pred_check_branch
          %885 = sbr.rel (%p883) target = $region108
        $region107: #{pos_model_forward.1} parent=91 // pred_region
          %887 = dma.done %s879, 192
        $region108: #{pos_model_forward.1} parent=91 // pred_fallthru
          _
        %s888 = sand.u32 %s34, 1
        %s889 = scalar_lea.sflag [#allocation6], %s888
        %s890 = sand.u32 %s190, 1
        %s891 = smul.addr %s890, 1024
        %s892 = scalar_lea.vmem [#allocation11], %s891
        // Predicated region
        $region109: #{pos_model_forward.1} parent=91 // pred_check
          %p893 = pneg %p203
        $region110: #{pos_model_forward.1} parent=91 // pred_check_branch
          %895 = sbr.rel (%p893) target = $region112
        $region111: #{pos_model_forward.1} parent=91 // pred_region
          %897 = dma.done %s889, 16384
        $region112: #{pos_model_forward.1} parent=91 // pred_fallthru
          _
        %s898 = sand.u32 %s34, 1
        %s899 = scalar_lea.sflag [#allocation6], %s898
        %s900 = sand.u32 %s216, 1
        %s901 = smul.addr %s900, 4
        %s902 = scalar_lea.vmem [#allocation12], %s901
        // Predicated region
        $region113: #{pos_model_forward.1} parent=91 // pred_check
          %p903 = pneg %p229
        $region114: #{pos_model_forward.1} parent=91 // pred_check_branch
          %905 = sbr.rel (%p903) target = $region116
        $region115: #{pos_model_forward.1} parent=91 // pred_region
          %907 = dma.done %s899, 64
        $region116: #{pos_model_forward.1} parent=91 // pred_fallthru
          _
        %s908 = sand.u32 %s34, 1
        %s909 = scalar_lea.sflag [#allocation6], %s908
        %s910 = sand.u32 %s242, 1
        %s911 = smul.addr %s910, 4
        %s912 = scalar_lea.vmem [#allocation13], %s911
        // Predicated region
        $region117: #{pos_model_forward.1} parent=91 // pred_check
          %p913 = pneg %p255
        $region118: #{pos_model_forward.1} parent=91 // pred_check_branch
          %915 = sbr.rel (%p913) target = $region120
        $region119: #{pos_model_forward.1} parent=91 // pred_region
          %917 = dma.done %s909, 64
        $region120: #{pos_model_forward.1} parent=91 // pred_fallthru
          _
        %s918 = sand.u32 %s34, 1
        %s919 = scalar_lea.sflag [#allocation6], %s918
        %s920 = sand.u32 %s268, 1
        %s921 = smul.addr %s920, 4
        %s922 = scalar_lea.vmem [#allocation14], %s921
        // Predicated region
        $region121: #{pos_model_forward.1} parent=91 // pred_check
          %p923 = pneg %p281
        $region122: #{pos_model_forward.1} parent=91 // pred_check_branch
          %925 = sbr.rel (%p923) target = $region124
        $region123: #{pos_model_forward.1} parent=91 // pred_region
          %927 = dma.done %s919, 64
        $region124: #{pos_model_forward.1} parent=91 // pred_fallthru
          _
        %s928 = sand.u32 %s34, 1
        %s929 = scalar_lea.sflag [#allocation6], %s928
        %s930 = sand.u32 %s296, 1
        %s931 = smul.addr %s930, 1024
        %s932 = scalar_lea.vmem [#allocation15], %s931
        // Predicated region
        $region125: #{pos_model_forward.1} parent=91 // pred_check
          %p933 = pneg %p309
        $region126: #{pos_model_forward.1} parent=91 // pred_check_branch
          %935 = sbr.rel (%p933) target = $region128
        $region127: #{pos_model_forward.1} parent=91 // pred_region
          %937 = dma.done %s929, 16384
        $region128: #{pos_model_forward.1} parent=91 // pred_fallthru
          _
        %s938 = sand.u32 %s34, 1
        %s939 = scalar_lea.sflag [#allocation6], %s938
        %s940 = sand.u32 %s324, 1
        %s941 = smul.addr %s940, 4
        %s942 = scalar_lea.vmem [#allocation16], %s941
        // Predicated region
        $region129: #{pos_model_forward.1} parent=91 // pred_check
          %p943 = pneg %p337
        $region130: #{pos_model_forward.1} parent=91 // pred_check_branch
          %945 = sbr.rel (%p943) target = $region132
        $region131: #{pos_model_forward.1} parent=91 // pred_region
          %947 = dma.done %s939, 64
        $region132: #{pos_model_forward.1} parent=91 // pred_fallthru
          _
        %s948 = sand.u32 %s34, 1
        %s949 = scalar_lea.sflag [#allocation6], %s948
        %s950 = sand.u32 %s352, 1
        %s951 = smul.addr %s950, 1024
        %s952 = scalar_lea.vmem [#allocation17], %s951
        // Predicated region
        $region133: #{pos_model_forward.1} parent=91 // pred_check
          %p953 = pneg %p365
        $region134: #{pos_model_forward.1} parent=91 // pred_check_branch
          %955 = sbr.rel (%p953) target = $region136
        $region135: #{pos_model_forward.1} parent=91 // pred_region
          %957 = dma.done %s949, 16384
        $region136: #{pos_model_forward.1} parent=91 // pred_fallthru
          _
        %s958 = sand.u32 %s34, 1
        %s959 = scalar_lea.sflag [#allocation6], %s958
        %s960 = sand.u32 %s378, 1
        %s961 = smul.addr %s960, 4
        %s962 = scalar_lea.vmem [#allocation18], %s961
        // Predicated region
        $region137: #{pos_model_forward.1} parent=91 // pred_check
          %p963 = pneg %p391
        $region138: #{pos_model_forward.1} parent=91 // pred_check_branch
          %965 = sbr.rel (%p963) target = $region140
        $region139: #{pos_model_forward.1} parent=91 // pred_region
          %967 = dma.done %s959, 64
        $region140: #{pos_model_forward.1} parent=91 // pred_fallthru
          _
        %s968 = sand.u32 %s34, 1
        %s969 = scalar_lea.sflag [#allocation6], %s968
        %s970 = sand.u32 %s404, 1
        %s971 = smul.addr %s970, 4
        %s972 = scalar_lea.vmem [#allocation19], %s971
        // Predicated region
        $region141: #{pos_model_forward.1} parent=91 // pred_check
          %p973 = pneg %p417
        $region142: #{pos_model_forward.1} parent=91 // pred_check_branch
          %975 = sbr.rel (%p973) target = $region144
        $region143: #{pos_model_forward.1} parent=91 // pred_region
          %977 = dma.done %s969, 64
        $region144: #{pos_model_forward.1} parent=91 // pred_fallthru
          _
        %s978 = sand.u32 %s34, 1
        %s979 = scalar_lea.sflag [#allocation6], %s978
        %s980 = sand.u32 %s430, 1
        %s981 = smul.addr %s980, 4
        %s982 = scalar_lea.vmem [#allocation20], %s981
        // Predicated region
        $region145: #{pos_model_forward.1} parent=91 // pred_check
          %p983 = pneg %p443
        $region146: #{pos_model_forward.1} parent=91 // pred_check_branch
          %985 = sbr.rel (%p983) target = $region148
        $region147: #{pos_model_forward.1} parent=91 // pred_region
          %987 = dma.done %s979, 64
        $region148: #{pos_model_forward.1} parent=91 // pred_fallthru
          _
        // Predicated region
        $region149: #{pos_model_forward.1} parent=91 // pred_check
          %p988 = pneg %p464
        $region150: #{pos_model_forward.1} parent=91 // pred_check_branch
          %990 = sbr.rel (%p988) target = $region152
        $region151: #{pos_model_forward.1} parent=91 // pred_region
          %992 = dma.done [#allocation8], 4096
        $region152: #{pos_model_forward.1} parent=91 // pred_fallthru
          _
        // Predicated region
        $region153: #{pos_model_forward.1} parent=91 // pred_check
          %p993 = pneg %p485
        $region154: #{pos_model_forward.1} parent=91 // pred_check_branch
          %995 = sbr.rel (%p993) target = $region156
        $region155: #{pos_model_forward.1} parent=91 // pred_region
          %997 = dma.done [#allocation23], 16
        $region156: #{pos_model_forward.1} parent=91 // pred_fallthru
          _
        %p998 = pneg %p62
        %p999 = pneg %p59
        %p1000 = pneg %p83
        %p1001 = pneg %p80
        %p1002 = pneg %p104
        %p1003 = pneg %p101
        %p1004 = pneg %p125
        %p1005 = pneg %p122
        %s1006 = sand.u32 %s34, 1
        %s1007 = scalar_lea.sflag [#allocation6], %s1006
        %s1008 = sand.u32 %s138, 1
        %s1009 = smul.addr %s1008, 3072
        %s1010 = scalar_lea.vmem [#allocation9], %s1009
        %p1011 = pneg %p151
        %p1012 = pneg %p148
        %s1013 = sand.u32 %s34, 1
        %s1014 = scalar_lea.sflag [#allocation6], %s1013
        %s1015 = sand.u32 %s164, 1
        %s1016 = smul.addr %s1015, 12
        %s1017 = scalar_lea.vmem [#allocation10], %s1016
        %p1018 = pneg %p177
        %p1019 = pneg %p174
        %s1020 = sand.u32 %s34, 1
        %s1021 = scalar_lea.sflag [#allocation6], %s1020
        %s1022 = sand.u32 %s190, 1
        %s1023 = smul.addr %s1022, 1024
        %s1024 = scalar_lea.vmem [#allocation11], %s1023
        %p1025 = pneg %p203
        %p1026 = pneg %p200
        %s1027 = sand.u32 %s34, 1
        %s1028 = scalar_lea.sflag [#allocation6], %s1027
        %s1029 = sand.u32 %s216, 1
        %s1030 = smul.addr %s1029, 4
        %s1031 = scalar_lea.vmem [#allocation12], %s1030
        %p1032 = pneg %p229
        %p1033 = pneg %p226
        %s1034 = sand.u32 %s34, 1
        %s1035 = scalar_lea.sflag [#allocation6], %s1034
        %s1036 = sand.u32 %s242, 1
        %s1037 = smul.addr %s1036, 4
        %s1038 = scalar_lea.vmem [#allocation13], %s1037
        %p1039 = pneg %p255
        %p1040 = pneg %p252
        %s1041 = sand.u32 %s34, 1
        %s1042 = scalar_lea.sflag [#allocation6], %s1041
        %s1043 = sand.u32 %s268, 1
        %s1044 = smul.addr %s1043, 4
        %s1045 = scalar_lea.vmem [#allocation14], %s1044
        %p1046 = pneg %p281
        %p1047 = pneg %p278
        %s1048 = sand.u32 %s34, 1
        %s1049 = scalar_lea.sflag [#allocation6], %s1048
        %s1050 = sand.u32 %s296, 1
        %s1051 = smul.addr %s1050, 1024
        %s1052 = scalar_lea.vmem [#allocation15], %s1051
        %p1053 = pneg %p309
        %p1054 = pneg %p306
        %s1055 = sand.u32 %s34, 1
        %s1056 = scalar_lea.sflag [#allocation6], %s1055
        %s1057 = sand.u32 %s324, 1
        %s1058 = smul.addr %s1057, 4
        %s1059 = scalar_lea.vmem [#allocation16], %s1058
        %p1060 = pneg %p337
        %p1061 = pneg %p334
        %s1062 = sand.u32 %s34, 1
        %s1063 = scalar_lea.sflag [#allocation6], %s1062
        %s1064 = sand.u32 %s352, 1
        %s1065 = smul.addr %s1064, 1024
        %s1066 = scalar_lea.vmem [#allocation17], %s1065
        %p1067 = pneg %p365
        %p1068 = pneg %p362
        %s1069 = sand.u32 %s34, 1
        %s1070 = scalar_lea.sflag [#allocation6], %s1069
        %s1071 = sand.u32 %s378, 1
        %s1072 = smul.addr %s1071, 4
        %s1073 = scalar_lea.vmem [#allocation18], %s1072
        %p1074 = pneg %p391
        %p1075 = pneg %p388
        %s1076 = sand.u32 %s34, 1
        %s1077 = scalar_lea.sflag [#allocation6], %s1076
        %s1078 = sand.u32 %s404, 1
        %s1079 = smul.addr %s1078, 4
        %s1080 = scalar_lea.vmem [#allocation19], %s1079
        %p1081 = pneg %p417
        %p1082 = pneg %p414
        %s1083 = sand.u32 %s34, 1
        %s1084 = scalar_lea.sflag [#allocation6], %s1083
        %s1085 = sand.u32 %s430, 1
        %s1086 = smul.addr %s1085, 4
        %s1087 = scalar_lea.vmem [#allocation20], %s1086
        %p1088 = pneg %p443
        %p1089 = pneg %p440
        %p1090 = pneg %p464
        %p1091 = pneg %p461
        %p1092 = pneg %p485
        %p1093 = pneg %p482
        %p1094 = pneg %p506
        %p1095 = pneg %p503
        %p1096 = pneg %p527
        %p1097 = pneg %p524
        %s1098 = smul.u32 4, %s39
        %s1099 = smul.u32 4, %s39
        %s1100 = smul.u32 64, %s39
        %p1102 = scmp.eq.s32.totalorder %s38, 0
        %p1103 = scmp.eq.s32.totalorder %s39, 0
        %p1104 = pnand %p1102, %p1103
        %p1105 = pneg %p1104
        // Predicated region
        $region157: #{pos_model_forward.1} parent=91 // pred_check
          _
        $region158: #{pos_model_forward.1} parent=91 // pred_check_branch
          %1107 = sbr.rel (%p1104) target = $region160
        $region159: #{pos_model_forward.1} parent=91 // pred_region
          %v1108 = vld [vmem:[%s0] sm:$0xff]
          %v1109 = vld [vmem:[%s0 + $0x8] sm:$0xff]
          %v1110 = vpack.c.bf16 %v1109, %v1108
          %v1111 = vld [vmem:[#allocation5] sm:$0xff]
          %v1112 = vld [vmem:[#allocation5 + $0x8] sm:$0xff]
          %v1113 = vld [vmem:[#allocation5 + $0x10] sm:$0xff]
          %v1114 = vld [vmem:[#allocation5 + $0x18] sm:$0xff]
          %v1115 = vld [vmem:[#allocation5 + $0x20] sm:$0xff]
          %v1116 = vld [vmem:[#allocation5 + $0x28] sm:$0xff]
          %v1117 = vld [vmem:[#allocation5 + $0x30] sm:$0xff]
          %v1118 = vld [vmem:[#allocation5 + $0x38] sm:$0xff]
          %v1119 = vld [vmem:[#allocation7] sm:$0xf]
          %v1121 = vperm.slane %v1119, 0
          %v1122 = vperm.slane %v1119, 1
          %v1123 = vperm.slane %v1119, 2
          %v1124 = vperm.slane %v1119, 3
          %v1137 = vunpack.c.l.b16 %v1111
          %v1138 = vunpack.c.h.b16 %v1111
          %v1139 = vunpack.c.l.b16 %v1112
          %v1140 = vunpack.c.h.b16 %v1112
          %v1141 = vunpack.c.l.b16 %v1113
          %v1142 = vunpack.c.h.b16 %v1113
          %v1143 = vunpack.c.l.b16 %v1114
          %v1144 = vunpack.c.h.b16 %v1114
          %v1145 = vunpack.c.l.b16 %v1115
          %v1146 = vunpack.c.h.b16 %v1115
          %v1147 = vunpack.c.l.b16 %v1116
          %v1148 = vunpack.c.h.b16 %v1116
          %v1149 = vunpack.c.l.b16 %v1117
          %v1150 = vunpack.c.h.b16 %v1117
          %v1151 = vunpack.c.l.b16 %v1118
          %v1152 = vunpack.c.h.b16 %v1118
          %v1153 = vpack.c.b16 %v1141, %v1137
          %v1154 = vpack.c.b16 %v1142, %v1138
          %v1155 = vpack.c.b16 %v1143, %v1139
          %v1156 = vpack.c.b16 %v1144, %v1140
          %v1157 = vpack.c.b16 %v1149, %v1145
          %v1158 = vpack.c.b16 %v1150, %v1146
          %v1159 = vpack.c.b16 %v1151, %v1147
          %v1160 = vpack.c.b16 %v1152, %v1148
          %vm1169 = vcmask 261120
          %v1171 = vsel %vm1169, %v1110, 0
          %1173 = vmatpush.bf16.msra.mxu0 0
          %1174 = vmatpush.bf16.msra.mxu0 0
          %1175 = vmatpush.bf16.msra.mxu0 0
          %1176 = vmatpush.bf16.msra.mxu0 0
          %1177 = vmatpush.bf16.msra.mxu0 0
          %1178 = vmatpush.bf16.msra.mxu0 0
          %1179 = vmatpush.bf16.msra.mxu0 %v1157
          %1180 = vmatpush.bf16.msra.mxu0 %v1153
          %1181 = vmatmul.bf16.gmra.mxu0 %v1171
          %v1182 = vpop.f32.mrf.mxu0
          %v1183 = vadd.f32 %v1121, %v1182
          %v1184 = vpop.f32.mrf.mxu0
          %v1185 = vadd.f32 %v1121, %v1184
          %1186 = vdwg.mxu0
          %1187 = vmatpush.bf16.msra.mxu0 0
          %1188 = vmatpush.bf16.msra.mxu0 0
          %1189 = vmatpush.bf16.msra.mxu0 0
          %1190 = vmatpush.bf16.msra.mxu0 0
          %1191 = vmatpush.bf16.msra.mxu0 0
          %1192 = vmatpush.bf16.msra.mxu0 0
          %1193 = vmatpush.bf16.msra.mxu0 %v1158
          %1194 = vmatpush.bf16.msra.mxu0 %v1154
          %1195 = vmatmul.bf16.gmra.mxu0 %v1171
          %v1196 = vpop.f32.mrf.mxu0
          %v1197 = vadd.f32 %v1122, %v1196
          %v1198 = vpop.f32.mrf.mxu0
          %v1199 = vadd.f32 %v1122, %v1198
          %1200 = vdwg.mxu0
          %1201 = vmatpush.bf16.msra.mxu0 0
          %1202 = vmatpush.bf16.msra.mxu0 0
          %1203 = vmatpush.bf16.msra.mxu0 0
          %1204 = vmatpush.bf16.msra.mxu0 0
          %1205 = vmatpush.bf16.msra.mxu0 0
          %1206 = vmatpush.bf16.msra.mxu0 0
          %1207 = vmatpush.bf16.msra.mxu0 %v1159
          %1208 = vmatpush.bf16.msra.mxu0 %v1155
          %1209 = vmatmul.bf16.gmra.mxu0 %v1171
          %v1210 = vpop.f32.mrf.mxu0
          %v1211 = vadd.f32 %v1123, %v1210
          %v1212 = vpop.f32.mrf.mxu0
          %v1213 = vadd.f32 %v1123, %v1212
          %1214 = vdwg.mxu0
          %1215 = vmatpush.bf16.msra.mxu0 0
          %1216 = vmatpush.bf16.msra.mxu0 0
          %1217 = vmatpush.bf16.msra.mxu0 0
          %1218 = vmatpush.bf16.msra.mxu0 0
          %1219 = vmatpush.bf16.msra.mxu0 0
          %1220 = vmatpush.bf16.msra.mxu0 0
          %1221 = vmatpush.bf16.msra.mxu0 %v1160
          %1222 = vmatpush.bf16.msra.mxu0 %v1156
          %1223 = vmatmul.bf16.gmra.mxu0 %v1171
          %v1224 = vpop.f32.mrf.mxu0
          %v1225 = vadd.f32 %v1124, %v1224
          %v1226 = vpop.f32.mrf.mxu0
          %v1227 = vadd.f32 %v1124, %v1226
          %1228 = vdwg.mxu0
          %1229 = vst [vmem:[#allocation2] sm:$0xff] %v1183
          %1230 = vst [vmem:[#allocation2 + $0x8] sm:$0xff] %v1197
          %1231 = vst [vmem:[#allocation2 + $0x10] sm:$0xff] %v1211
          %1232 = vst [vmem:[#allocation2 + $0x18] sm:$0xff] %v1225
          %1233 = vst [vmem:[#allocation2 + $0x20] sm:$0xff] %v1185
          %1234 = vst [vmem:[#allocation2 + $0x28] sm:$0xff] %v1199
          %1235 = vst [vmem:[#allocation2 + $0x30] sm:$0xff] %v1213
          %1236 = vst [vmem:[#allocation2 + $0x38] sm:$0xff] %v1227
        $region160: #{pos_model_forward.1} parent=91 // pred_fallthru
          _
        // Predicated region
        $region161: #{pos_model_forward.1} parent=91 // pred_check
          %p1237 = pneg %p1103
        $region162: #{pos_model_forward.1} parent=91 // pred_check_branch
          %1239 = sbr.rel (%p1237) target = $region164
        $region163: #{pos_model_forward.1} parent=91 // pred_region
          %v1240 = vld [vmem:[#allocation2] sm:$0xff]
          %v1241 = vld [vmem:[#allocation2 + $0x8] sm:$0xff]
          %v1242 = vld [vmem:[#allocation2 + $0x10] sm:$0xff]
          %v1243 = vld [vmem:[#allocation2 + $0x18] sm:$0xff]
          %v1244 = vld [vmem:[#allocation2 + $0x20] sm:$0xff]
          %v1245 = vld [vmem:[#allocation2 + $0x28] sm:$0xff]
          %v1246 = vld [vmem:[#allocation2 + $0x30] sm:$0xff]
          %v1247 = vld [vmem:[#allocation2 + $0x38] sm:$0xff]
          %v1248 = vpack.c.bf16 %v1244, %v1240
          %v1249 = vpack.c.bf16 %v1245, %v1241
          %v1250 = vpack.c.bf16 %v1246, %v1242
          %v1251 = vpack.c.bf16 %v1247, %v1243
          %v1252 = vld [vmem:[%s872] sm:$0xff]
          %v1253 = vld [vmem:[%s872 + $0x8] sm:$0xff]
          %v1254 = vld [vmem:[%s872 + $0x10] sm:$0xff]
          %v1255 = vld [vmem:[%s872 + $0x18] sm:$0xff]
          %v1256 = vld [vmem:[%s872 + $0x20] sm:$0xff]
          %v1257 = vld [vmem:[%s872 + $0x28] sm:$0xff]
          %v1258 = vld [vmem:[%s872 + $0x30] sm:$0xff]
          %v1259 = vld [vmem:[%s872 + $0x38] sm:$0xff]
          %v1260 = vld [vmem:[%s872 + $0x40] sm:$0xff]
          %v1261 = vld [vmem:[%s872 + $0x48] sm:$0xff]
          %v1262 = vld [vmem:[%s872 + $0x50] sm:$0xff]
          %v1263 = vld [vmem:[%s872 + $0x58] sm:$0xff]
          %v1264 = vld [vmem:[%s872 + $0x60] sm:$0xff]
          %v1265 = vld [vmem:[%s872 + $0x68] sm:$0xff]
          %v1266 = vld [vmem:[%s872 + $0x70] sm:$0xff]
          %v1267 = vld [vmem:[%s872 + $0x78] sm:$0xff]
          %v1268 = vld [vmem:[%s872 + $0x80] sm:$0xff]
          %v1269 = vld [vmem:[%s872 + $0x88] sm:$0xff]
          %v1270 = vld [vmem:[%s872 + $0x90] sm:$0xff]
          %v1271 = vld [vmem:[%s872 + $0x98] sm:$0xff]
          %v1272 = vld [vmem:[%s872 + $0xa0] sm:$0xff]
          %v1273 = vld [vmem:[%s872 + $0xa8] sm:$0xff]
          %v1274 = vld [vmem:[%s872 + $0xb0] sm:$0xff]
          %v1275 = vld [vmem:[%s872 + $0xb8] sm:$0xff]
          %v1276 = vld [vmem:[%s872 + $0xc0] sm:$0xff]
          %v1277 = vld [vmem:[%s872 + $0xc8] sm:$0xff]
          %v1278 = vld [vmem:[%s872 + $0xd0] sm:$0xff]
          %v1279 = vld [vmem:[%s872 + $0xd8] sm:$0xff]
          %v1280 = vld [vmem:[%s872 + $0xe0] sm:$0xff]
          %v1281 = vld [vmem:[%s872 + $0xe8] sm:$0xff]
          %v1282 = vld [vmem:[%s872 + $0xf0] sm:$0xff]
          %v1283 = vld [vmem:[%s872 + $0xf8] sm:$0xff]
          %v1284 = vld [vmem:[%s872 + $0x100] sm:$0xff]
          %v1285 = vld [vmem:[%s872 + $0x108] sm:$0xff]
          %v1286 = vld [vmem:[%s872 + $0x110] sm:$0xff]
          %v1287 = vld [vmem:[%s872 + $0x118] sm:$0xff]
          %v1288 = vld [vmem:[%s872 + $0x120] sm:$0xff]
          %v1289 = vld [vmem:[%s872 + $0x128] sm:$0xff]
          %v1290 = vld [vmem:[%s872 + $0x130] sm:$0xff]
          %v1291 = vld [vmem:[%s872 + $0x138] sm:$0xff]
          %v1292 = vld [vmem:[%s872 + $0x140] sm:$0xff]
          %v1293 = vld [vmem:[%s872 + $0x148] sm:$0xff]
          %v1294 = vld [vmem:[%s872 + $0x150] sm:$0xff]
          %v1295 = vld [vmem:[%s872 + $0x158] sm:$0xff]
          %v1296 = vld [vmem:[%s872 + $0x160] sm:$0xff]
          %v1297 = vld [vmem:[%s872 + $0x168] sm:$0xff]
          %v1298 = vld [vmem:[%s872 + $0x170] sm:$0xff]
          %v1299 = vld [vmem:[%s872 + $0x178] sm:$0xff]
          %v1300 = vld [vmem:[%s872 + $0x180] sm:$0xff]
          %v1301 = vld [vmem:[%s872 + $0x188] sm:$0xff]
          %v1302 = vld [vmem:[%s872 + $0x190] sm:$0xff]
          %v1303 = vld [vmem:[%s872 + $0x198] sm:$0xff]
          %v1304 = vld [vmem:[%s872 + $0x1a0] sm:$0xff]
          %v1305 = vld [vmem:[%s872 + $0x1a8] sm:$0xff]
          %v1306 = vld [vmem:[%s872 + $0x1b0] sm:$0xff]
          %v1307 = vld [vmem:[%s872 + $0x1b8] sm:$0xff]
          %v1308 = vld [vmem:[%s872 + $0x1c0] sm:$0xff]
          %v1309 = vld [vmem:[%s872 + $0x1c8] sm:$0xff]
          %v1310 = vld [vmem:[%s872 + $0x1d0] sm:$0xff]
          %v1311 = vld [vmem:[%s872 + $0x1d8] sm:$0xff]
          %v1312 = vld [vmem:[%s872 + $0x1e0] sm:$0xff]
          %v1313 = vld [vmem:[%s872 + $0x1e8] sm:$0xff]
          %v1314 = vld [vmem:[%s872 + $0x1f0] sm:$0xff]
          %v1315 = vld [vmem:[%s872 + $0x1f8] sm:$0xff]
          %v1316 = vld [vmem:[%s872 + $0x200] sm:$0xff]
          %v1317 = vld [vmem:[%s872 + $0x208] sm:$0xff]
          %v1318 = vld [vmem:[%s872 + $0x210] sm:$0xff]
          %v1319 = vld [vmem:[%s872 + $0x218] sm:$0xff]
          %v1320 = vld [vmem:[%s872 + $0x220] sm:$0xff]
          %v1321 = vld [vmem:[%s872 + $0x228] sm:$0xff]
          %v1322 = vld [vmem:[%s872 + $0x230] sm:$0xff]
          %v1323 = vld [vmem:[%s872 + $0x238] sm:$0xff]
          %v1324 = vld [vmem:[%s872 + $0x240] sm:$0xff]
          %v1325 = vld [vmem:[%s872 + $0x248] sm:$0xff]
          %v1326 = vld [vmem:[%s872 + $0x250] sm:$0xff]
          %v1327 = vld [vmem:[%s872 + $0x258] sm:$0xff]
          %v1328 = vld [vmem:[%s872 + $0x260] sm:$0xff]
          %v1329 = vld [vmem:[%s872 + $0x268] sm:$0xff]
          %v1330 = vld [vmem:[%s872 + $0x270] sm:$0xff]
          %v1331 = vld [vmem:[%s872 + $0x278] sm:$0xff]
          %v1332 = vld [vmem:[%s872 + $0x280] sm:$0xff]
          %v1333 = vld [vmem:[%s872 + $0x288] sm:$0xff]
          %v1334 = vld [vmem:[%s872 + $0x290] sm:$0xff]
          %v1335 = vld [vmem:[%s872 + $0x298] sm:$0xff]
          %v1336 = vld [vmem:[%s872 + $0x2a0] sm:$0xff]
          %v1337 = vld [vmem:[%s872 + $0x2a8] sm:$0xff]
          %v1338 = vld [vmem:[%s872 + $0x2b0] sm:$0xff]
          %v1339 = vld [vmem:[%s872 + $0x2b8] sm:$0xff]
          %v1340 = vld [vmem:[%s872 + $0x2c0] sm:$0xff]
          %v1341 = vld [vmem:[%s872 + $0x2c8] sm:$0xff]
          %v1342 = vld [vmem:[%s872 + $0x2d0] sm:$0xff]
          %v1343 = vld [vmem:[%s872 + $0x2d8] sm:$0xff]
          %v1344 = vld [vmem:[%s872 + $0x2e0] sm:$0xff]
          %v1345 = vld [vmem:[%s872 + $0x2e8] sm:$0xff]
          %v1346 = vld [vmem:[%s872 + $0x2f0] sm:$0xff]
          %v1347 = vld [vmem:[%s872 + $0x2f8] sm:$0xff]
          %v1348 = vld [vmem:[%s872 + $0x300] sm:$0xff]
          %v1349 = vld [vmem:[%s872 + $0x308] sm:$0xff]
          %v1350 = vld [vmem:[%s872 + $0x310] sm:$0xff]
          %v1351 = vld [vmem:[%s872 + $0x318] sm:$0xff]
          %v1352 = vld [vmem:[%s872 + $0x320] sm:$0xff]
          %v1353 = vld [vmem:[%s872 + $0x328] sm:$0xff]
          %v1354 = vld [vmem:[%s872 + $0x330] sm:$0xff]
          %v1355 = vld [vmem:[%s872 + $0x338] sm:$0xff]
          %v1356 = vld [vmem:[%s872 + $0x340] sm:$0xff]
          %v1357 = vld [vmem:[%s872 + $0x348] sm:$0xff]
          %v1358 = vld [vmem:[%s872 + $0x350] sm:$0xff]
          %v1359 = vld [vmem:[%s872 + $0x358] sm:$0xff]
          %v1360 = vld [vmem:[%s872 + $0x360] sm:$0xff]
          %v1361 = vld [vmem:[%s872 + $0x368] sm:$0xff]
          %v1362 = vld [vmem:[%s872 + $0x370] sm:$0xff]
          %v1363 = vld [vmem:[%s872 + $0x378] sm:$0xff]
          %v1364 = vld [vmem:[%s872 + $0x380] sm:$0xff]
          %v1365 = vld [vmem:[%s872 + $0x388] sm:$0xff]
          %v1366 = vld [vmem:[%s872 + $0x390] sm:$0xff]
          %v1367 = vld [vmem:[%s872 + $0x398] sm:$0xff]
          %v1368 = vld [vmem:[%s872 + $0x3a0] sm:$0xff]
          %v1369 = vld [vmem:[%s872 + $0x3a8] sm:$0xff]
          %v1370 = vld [vmem:[%s872 + $0x3b0] sm:$0xff]
          %v1371 = vld [vmem:[%s872 + $0x3b8] sm:$0xff]
          %v1372 = vld [vmem:[%s872 + $0x3c0] sm:$0xff]
          %v1373 = vld [vmem:[%s872 + $0x3c8] sm:$0xff]
          %v1374 = vld [vmem:[%s872 + $0x3d0] sm:$0xff]
          %v1375 = vld [vmem:[%s872 + $0x3d8] sm:$0xff]
          %v1376 = vld [vmem:[%s872 + $0x3e0] sm:$0xff]
          %v1377 = vld [vmem:[%s872 + $0x3e8] sm:$0xff]
          %v1378 = vld [vmem:[%s872 + $0x3f0] sm:$0xff]
          %v1379 = vld [vmem:[%s872 + $0x3f8] sm:$0xff]
          %v1380 = vld [vmem:[%s872 + $0x400] sm:$0xff]
          %v1381 = vld [vmem:[%s872 + $0x408] sm:$0xff]
          %v1382 = vld [vmem:[%s872 + $0x410] sm:$0xff]
          %v1383 = vld [vmem:[%s872 + $0x418] sm:$0xff]
          %v1384 = vld [vmem:[%s872 + $0x420] sm:$0xff]
          %v1385 = vld [vmem:[%s872 + $0x428] sm:$0xff]
          %v1386 = vld [vmem:[%s872 + $0x430] sm:$0xff]
          %v1387 = vld [vmem:[%s872 + $0x438] sm:$0xff]
          %v1388 = vld [vmem:[%s872 + $0x440] sm:$0xff]
          %v1389 = vld [vmem:[%s872 + $0x448] sm:$0xff]
          %v1390 = vld [vmem:[%s872 + $0x450] sm:$0xff]
          %v1391 = vld [vmem:[%s872 + $0x458] sm:$0xff]
          %v1392 = vld [vmem:[%s872 + $0x460] sm:$0xff]
          %v1393 = vld [vmem:[%s872 + $0x468] sm:$0xff]
          %v1394 = vld [vmem:[%s872 + $0x470] sm:$0xff]
          %v1395 = vld [vmem:[%s872 + $0x478] sm:$0xff]
          %v1396 = vld [vmem:[%s872 + $0x480] sm:$0xff]
          %v1397 = vld [vmem:[%s872 + $0x488] sm:$0xff]
          %v1398 = vld [vmem:[%s872 + $0x490] sm:$0xff]
          %v1399 = vld [vmem:[%s872 + $0x498] sm:$0xff]
          %v1400 = vld [vmem:[%s872 + $0x4a0] sm:$0xff]
          %v1401 = vld [vmem:[%s872 + $0x4a8] sm:$0xff]
          %v1402 = vld [vmem:[%s872 + $0x4b0] sm:$0xff]
          %v1403 = vld [vmem:[%s872 + $0x4b8] sm:$0xff]
          %v1404 = vld [vmem:[%s872 + $0x4c0] sm:$0xff]
          %v1405 = vld [vmem:[%s872 + $0x4c8] sm:$0xff]
          %v1406 = vld [vmem:[%s872 + $0x4d0] sm:$0xff]
          %v1407 = vld [vmem:[%s872 + $0x4d8] sm:$0xff]
          %v1408 = vld [vmem:[%s872 + $0x4e0] sm:$0xff]
          %v1409 = vld [vmem:[%s872 + $0x4e8] sm:$0xff]
          %v1410 = vld [vmem:[%s872 + $0x4f0] sm:$0xff]
          %v1411 = vld [vmem:[%s872 + $0x4f8] sm:$0xff]
          %v1412 = vld [vmem:[%s872 + $0x500] sm:$0xff]
          %v1413 = vld [vmem:[%s872 + $0x508] sm:$0xff]
          %v1414 = vld [vmem:[%s872 + $0x510] sm:$0xff]
          %v1415 = vld [vmem:[%s872 + $0x518] sm:$0xff]
          %v1416 = vld [vmem:[%s872 + $0x520] sm:$0xff]
          %v1417 = vld [vmem:[%s872 + $0x528] sm:$0xff]
          %v1418 = vld [vmem:[%s872 + $0x530] sm:$0xff]
          %v1419 = vld [vmem:[%s872 + $0x538] sm:$0xff]
          %v1420 = vld [vmem:[%s872 + $0x540] sm:$0xff]
          %v1421 = vld [vmem:[%s872 + $0x548] sm:$0xff]
          %v1422 = vld [vmem:[%s872 + $0x550] sm:$0xff]
          %v1423 = vld [vmem:[%s872 + $0x558] sm:$0xff]
          %v1424 = vld [vmem:[%s872 + $0x560] sm:$0xff]
          %v1425 = vld [vmem:[%s872 + $0x568] sm:$0xff]
          %v1426 = vld [vmem:[%s872 + $0x570] sm:$0xff]
          %v1427 = vld [vmem:[%s872 + $0x578] sm:$0xff]
          %v1428 = vld [vmem:[%s872 + $0x580] sm:$0xff]
          %v1429 = vld [vmem:[%s872 + $0x588] sm:$0xff]
          %v1430 = vld [vmem:[%s872 + $0x590] sm:$0xff]
          %v1431 = vld [vmem:[%s872 + $0x598] sm:$0xff]
          %v1432 = vld [vmem:[%s872 + $0x5a0] sm:$0xff]
          %v1433 = vld [vmem:[%s872 + $0x5a8] sm:$0xff]
          %v1434 = vld [vmem:[%s872 + $0x5b0] sm:$0xff]
          %v1435 = vld [vmem:[%s872 + $0x5b8] sm:$0xff]
          %v1436 = vld [vmem:[%s872 + $0x5c0] sm:$0xff]
          %v1437 = vld [vmem:[%s872 + $0x5c8] sm:$0xff]
          %v1438 = vld [vmem:[%s872 + $0x5d0] sm:$0xff]
          %v1439 = vld [vmem:[%s872 + $0x5d8] sm:$0xff]
          %v1440 = vld [vmem:[%s872 + $0x5e0] sm:$0xff]
          %v1441 = vld [vmem:[%s872 + $0x5e8] sm:$0xff]
          %v1442 = vld [vmem:[%s872 + $0x5f0] sm:$0xff]
          %v1443 = vld [vmem:[%s872 + $0x5f8] sm:$0xff]
          %v1444 = vld [vmem:[%s872 + $0x600] sm:$0xff]
          %v1445 = vld [vmem:[%s872 + $0x608] sm:$0xff]
          %v1446 = vld [vmem:[%s872 + $0x610] sm:$0xff]
          %v1447 = vld [vmem:[%s872 + $0x618] sm:$0xff]
          %v1448 = vld [vmem:[%s872 + $0x620] sm:$0xff]
          %v1449 = vld [vmem:[%s872 + $0x628] sm:$0xff]
          %v1450 = vld [vmem:[%s872 + $0x630] sm:$0xff]
          %v1451 = vld [vmem:[%s872 + $0x638] sm:$0xff]
          %v1452 = vld [vmem:[%s872 + $0x640] sm:$0xff]
          %v1453 = vld [vmem:[%s872 + $0x648] sm:$0xff]
          %v1454 = vld [vmem:[%s872 + $0x650] sm:$0xff]
          %v1455 = vld [vmem:[%s872 + $0x658] sm:$0xff]
          %v1456 = vld [vmem:[%s872 + $0x660] sm:$0xff]
          %v1457 = vld [vmem:[%s872 + $0x668] sm:$0xff]
          %v1458 = vld [vmem:[%s872 + $0x670] sm:$0xff]
          %v1459 = vld [vmem:[%s872 + $0x678] sm:$0xff]
          %v1460 = vld [vmem:[%s872 + $0x680] sm:$0xff]
          %v1461 = vld [vmem:[%s872 + $0x688] sm:$0xff]
          %v1462 = vld [vmem:[%s872 + $0x690] sm:$0xff]
          %v1463 = vld [vmem:[%s872 + $0x698] sm:$0xff]
          %v1464 = vld [vmem:[%s872 + $0x6a0] sm:$0xff]
          %v1465 = vld [vmem:[%s872 + $0x6a8] sm:$0xff]
          %v1466 = vld [vmem:[%s872 + $0x6b0] sm:$0xff]
          %v1467 = vld [vmem:[%s872 + $0x6b8] sm:$0xff]
          %v1468 = vld [vmem:[%s872 + $0x6c0] sm:$0xff]
          %v1469 = vld [vmem:[%s872 + $0x6c8] sm:$0xff]
          %v1470 = vld [vmem:[%s872 + $0x6d0] sm:$0xff]
          %v1471 = vld [vmem:[%s872 + $0x6d8] sm:$0xff]
          %v1472 = vld [vmem:[%s872 + $0x6e0] sm:$0xff]
          %v1473 = vld [vmem:[%s872 + $0x6e8] sm:$0xff]
          %v1474 = vld [vmem:[%s872 + $0x6f0] sm:$0xff]
          %v1475 = vld [vmem:[%s872 + $0x6f8] sm:$0xff]
          %v1476 = vld [vmem:[%s872 + $0x700] sm:$0xff]
          %v1477 = vld [vmem:[%s872 + $0x708] sm:$0xff]
          %v1478 = vld [vmem:[%s872 + $0x710] sm:$0xff]
          %v1479 = vld [vmem:[%s872 + $0x718] sm:$0xff]
          %v1480 = vld [vmem:[%s872 + $0x720] sm:$0xff]
          %v1481 = vld [vmem:[%s872 + $0x728] sm:$0xff]
          %v1482 = vld [vmem:[%s872 + $0x730] sm:$0xff]
          %v1483 = vld [vmem:[%s872 + $0x738] sm:$0xff]
          %v1484 = vld [vmem:[%s872 + $0x740] sm:$0xff]
          %v1485 = vld [vmem:[%s872 + $0x748] sm:$0xff]
          %v1486 = vld [vmem:[%s872 + $0x750] sm:$0xff]
          %v1487 = vld [vmem:[%s872 + $0x758] sm:$0xff]
          %v1488 = vld [vmem:[%s872 + $0x760] sm:$0xff]
          %v1489 = vld [vmem:[%s872 + $0x768] sm:$0xff]
          %v1490 = vld [vmem:[%s872 + $0x770] sm:$0xff]
          %v1491 = vld [vmem:[%s872 + $0x778] sm:$0xff]
          %v1492 = vld [vmem:[%s872 + $0x780] sm:$0xff]
          %v1493 = vld [vmem:[%s872 + $0x788] sm:$0xff]
          %v1494 = vld [vmem:[%s872 + $0x790] sm:$0xff]
          %v1495 = vld [vmem:[%s872 + $0x798] sm:$0xff]
          %v1496 = vld [vmem:[%s872 + $0x7a0] sm:$0xff]
          %v1497 = vld [vmem:[%s872 + $0x7a8] sm:$0xff]
          %v1498 = vld [vmem:[%s872 + $0x7b0] sm:$0xff]
          %v1499 = vld [vmem:[%s872 + $0x7b8] sm:$0xff]
          %v1500 = vld [vmem:[%s872 + $0x7c0] sm:$0xff]
          %v1501 = vld [vmem:[%s872 + $0x7c8] sm:$0xff]
          %v1502 = vld [vmem:[%s872 + $0x7d0] sm:$0xff]
          %v1503 = vld [vmem:[%s872 + $0x7d8] sm:$0xff]
          %v1504 = vld [vmem:[%s872 + $0x7e0] sm:$0xff]
          %v1505 = vld [vmem:[%s872 + $0x7e8] sm:$0xff]
          %v1506 = vld [vmem:[%s872 + $0x7f0] sm:$0xff]
          %v1507 = vld [vmem:[%s872 + $0x7f8] sm:$0xff]
          %v1508 = vld [vmem:[%s872 + $0x800] sm:$0xff]
          %v1509 = vld [vmem:[%s872 + $0x808] sm:$0xff]
          %v1510 = vld [vmem:[%s872 + $0x810] sm:$0xff]
          %v1511 = vld [vmem:[%s872 + $0x818] sm:$0xff]
          %v1512 = vld [vmem:[%s872 + $0x820] sm:$0xff]
          %v1513 = vld [vmem:[%s872 + $0x828] sm:$0xff]
          %v1514 = vld [vmem:[%s872 + $0x830] sm:$0xff]
          %v1515 = vld [vmem:[%s872 + $0x838] sm:$0xff]
          %v1516 = vld [vmem:[%s872 + $0x840] sm:$0xff]
          %v1517 = vld [vmem:[%s872 + $0x848] sm:$0xff]
          %v1518 = vld [vmem:[%s872 + $0x850] sm:$0xff]
          %v1519 = vld [vmem:[%s872 + $0x858] sm:$0xff]
          %v1520 = vld [vmem:[%s872 + $0x860] sm:$0xff]
          %v1521 = vld [vmem:[%s872 + $0x868] sm:$0xff]
          %v1522 = vld [vmem:[%s872 + $0x870] sm:$0xff]
          %v1523 = vld [vmem:[%s872 + $0x878] sm:$0xff]
          %v1524 = vld [vmem:[%s872 + $0x880] sm:$0xff]
          %v1525 = vld [vmem:[%s872 + $0x888] sm:$0xff]
          %v1526 = vld [vmem:[%s872 + $0x890] sm:$0xff]
          %v1527 = vld [vmem:[%s872 + $0x898] sm:$0xff]
          %v1528 = vld [vmem:[%s872 + $0x8a0] sm:$0xff]
          %v1529 = vld [vmem:[%s872 + $0x8a8] sm:$0xff]
          %v1530 = vld [vmem:[%s872 + $0x8b0] sm:$0xff]
          %v1531 = vld [vmem:[%s872 + $0x8b8] sm:$0xff]
          %v1532 = vld [vmem:[%s872 + $0x8c0] sm:$0xff]
          %v1533 = vld [vmem:[%s872 + $0x8c8] sm:$0xff]
          %v1534 = vld [vmem:[%s872 + $0x8d0] sm:$0xff]
          %v1535 = vld [vmem:[%s872 + $0x8d8] sm:$0xff]
          %v1536 = vld [vmem:[%s872 + $0x8e0] sm:$0xff]
          %v1537 = vld [vmem:[%s872 + $0x8e8] sm:$0xff]
          %v1538 = vld [vmem:[%s872 + $0x8f0] sm:$0xff]
          %v1539 = vld [vmem:[%s872 + $0x8f8] sm:$0xff]
          %v1540 = vld [vmem:[%s872 + $0x900] sm:$0xff]
          %v1541 = vld [vmem:[%s872 + $0x908] sm:$0xff]
          %v1542 = vld [vmem:[%s872 + $0x910] sm:$0xff]
          %v1543 = vld [vmem:[%s872 + $0x918] sm:$0xff]
          %v1544 = vld [vmem:[%s872 + $0x920] sm:$0xff]
          %v1545 = vld [vmem:[%s872 + $0x928] sm:$0xff]
          %v1546 = vld [vmem:[%s872 + $0x930] sm:$0xff]
          %v1547 = vld [vmem:[%s872 + $0x938] sm:$0xff]
          %v1548 = vld [vmem:[%s872 + $0x940] sm:$0xff]
          %v1549 = vld [vmem:[%s872 + $0x948] sm:$0xff]
          %v1550 = vld [vmem:[%s872 + $0x950] sm:$0xff]
          %v1551 = vld [vmem:[%s872 + $0x958] sm:$0xff]
          %v1552 = vld [vmem:[%s872 + $0x960] sm:$0xff]
          %v1553 = vld [vmem:[%s872 + $0x968] sm:$0xff]
          %v1554 = vld [vmem:[%s872 + $0x970] sm:$0xff]
          %v1555 = vld [vmem:[%s872 + $0x978] sm:$0xff]
          %v1556 = vld [vmem:[%s872 + $0x980] sm:$0xff]
          %v1557 = vld [vmem:[%s872 + $0x988] sm:$0xff]
          %v1558 = vld [vmem:[%s872 + $0x990] sm:$0xff]
          %v1559 = vld [vmem:[%s872 + $0x998] sm:$0xff]
          %v1560 = vld [vmem:[%s872 + $0x9a0] sm:$0xff]
          %v1561 = vld [vmem:[%s872 + $0x9a8] sm:$0xff]
          %v1562 = vld [vmem:[%s872 + $0x9b0] sm:$0xff]
          %v1563 = vld [vmem:[%s872 + $0x9b8] sm:$0xff]
          %v1564 = vld [vmem:[%s872 + $0x9c0] sm:$0xff]
          %v1565 = vld [vmem:[%s872 + $0x9c8] sm:$0xff]
          %v1566 = vld [vmem:[%s872 + $0x9d0] sm:$0xff]
          %v1567 = vld [vmem:[%s872 + $0x9d8] sm:$0xff]
          %v1568 = vld [vmem:[%s872 + $0x9e0] sm:$0xff]
          %v1569 = vld [vmem:[%s872 + $0x9e8] sm:$0xff]
          %v1570 = vld [vmem:[%s872 + $0x9f0] sm:$0xff]
          %v1571 = vld [vmem:[%s872 + $0x9f8] sm:$0xff]
          %v1572 = vld [vmem:[%s872 + $0xa00] sm:$0xff]
          %v1573 = vld [vmem:[%s872 + $0xa08] sm:$0xff]
          %v1574 = vld [vmem:[%s872 + $0xa10] sm:$0xff]
          %v1575 = vld [vmem:[%s872 + $0xa18] sm:$0xff]
          %v1576 = vld [vmem:[%s872 + $0xa20] sm:$0xff]
          %v1577 = vld [vmem:[%s872 + $0xa28] sm:$0xff]
          %v1578 = vld [vmem:[%s872 + $0xa30] sm:$0xff]
          %v1579 = vld [vmem:[%s872 + $0xa38] sm:$0xff]
          %v1580 = vld [vmem:[%s872 + $0xa40] sm:$0xff]
          %v1581 = vld [vmem:[%s872 + $0xa48] sm:$0xff]
          %v1582 = vld [vmem:[%s872 + $0xa50] sm:$0xff]
          %v1583 = vld [vmem:[%s872 + $0xa58] sm:$0xff]
          %v1584 = vld [vmem:[%s872 + $0xa60] sm:$0xff]
          %v1585 = vld [vmem:[%s872 + $0xa68] sm:$0xff]
          %v1586 = vld [vmem:[%s872 + $0xa70] sm:$0xff]
          %v1587 = vld [vmem:[%s872 + $0xa78] sm:$0xff]
          %v1588 = vld [vmem:[%s872 + $0xa80] sm:$0xff]
          %v1589 = vld [vmem:[%s872 + $0xa88] sm:$0xff]
          %v1590 = vld [vmem:[%s872 + $0xa90] sm:$0xff]
          %v1591 = vld [vmem:[%s872 + $0xa98] sm:$0xff]
          %v1592 = vld [vmem:[%s872 + $0xaa0] sm:$0xff]
          %v1593 = vld [vmem:[%s872 + $0xaa8] sm:$0xff]
          %v1594 = vld [vmem:[%s872 + $0xab0] sm:$0xff]
          %v1595 = vld [vmem:[%s872 + $0xab8] sm:$0xff]
          %v1596 = vld [vmem:[%s872 + $0xac0] sm:$0xff]
          %v1597 = vld [vmem:[%s872 + $0xac8] sm:$0xff]
          %v1598 = vld [vmem:[%s872 + $0xad0] sm:$0xff]
          %v1599 = vld [vmem:[%s872 + $0xad8] sm:$0xff]
          %v1600 = vld [vmem:[%s872 + $0xae0] sm:$0xff]
          %v1601 = vld [vmem:[%s872 + $0xae8] sm:$0xff]
          %v1602 = vld [vmem:[%s872 + $0xaf0] sm:$0xff]
          %v1603 = vld [vmem:[%s872 + $0xaf8] sm:$0xff]
          %v1604 = vld [vmem:[%s872 + $0xb00] sm:$0xff]
          %v1605 = vld [vmem:[%s872 + $0xb08] sm:$0xff]
          %v1606 = vld [vmem:[%s872 + $0xb10] sm:$0xff]
          %v1607 = vld [vmem:[%s872 + $0xb18] sm:$0xff]
          %v1608 = vld [vmem:[%s872 + $0xb20] sm:$0xff]
          %v1609 = vld [vmem:[%s872 + $0xb28] sm:$0xff]
          %v1610 = vld [vmem:[%s872 + $0xb30] sm:$0xff]
          %v1611 = vld [vmem:[%s872 + $0xb38] sm:$0xff]
          %v1612 = vld [vmem:[%s872 + $0xb40] sm:$0xff]
          %v1613 = vld [vmem:[%s872 + $0xb48] sm:$0xff]
          %v1614 = vld [vmem:[%s872 + $0xb50] sm:$0xff]
          %v1615 = vld [vmem:[%s872 + $0xb58] sm:$0xff]
          %v1616 = vld [vmem:[%s872 + $0xb60] sm:$0xff]
          %v1617 = vld [vmem:[%s872 + $0xb68] sm:$0xff]
          %v1618 = vld [vmem:[%s872 + $0xb70] sm:$0xff]
          %v1619 = vld [vmem:[%s872 + $0xb78] sm:$0xff]
          %v1620 = vld [vmem:[%s872 + $0xb80] sm:$0xff]
          %v1621 = vld [vmem:[%s872 + $0xb88] sm:$0xff]
          %v1622 = vld [vmem:[%s872 + $0xb90] sm:$0xff]
          %v1623 = vld [vmem:[%s872 + $0xb98] sm:$0xff]
          %v1624 = vld [vmem:[%s872 + $0xba0] sm:$0xff]
          %v1625 = vld [vmem:[%s872 + $0xba8] sm:$0xff]
          %v1626 = vld [vmem:[%s872 + $0xbb0] sm:$0xff]
          %v1627 = vld [vmem:[%s872 + $0xbb8] sm:$0xff]
          %v1628 = vld [vmem:[%s872 + $0xbc0] sm:$0xff]
          %v1629 = vld [vmem:[%s872 + $0xbc8] sm:$0xff]
          %v1630 = vld [vmem:[%s872 + $0xbd0] sm:$0xff]
          %v1631 = vld [vmem:[%s872 + $0xbd8] sm:$0xff]
          %v1632 = vld [vmem:[%s872 + $0xbe0] sm:$0xff]
          %v1633 = vld [vmem:[%s872 + $0xbe8] sm:$0xff]
          %v1634 = vld [vmem:[%s872 + $0xbf0] sm:$0xff]
          %v1635 = vld [vmem:[%s872 + $0xbf8] sm:$0xff]
          %v1636 = vld [vmem:[%s882] sm:$0xff]
          %v1637 = vld [vmem:[%s882 + $0x8] sm:$0xf]
          %v1640 = vperm.slane %v1636, 0
          %v1641 = vperm.slane %v1636, 1
          %v1642 = vperm.slane %v1636, 2
          %v1643 = vperm.slane %v1636, 3
          %v1644 = vperm.slane %v1636, 4
          %v1645 = vperm.slane %v1636, 5
          %v1646 = vperm.slane %v1636, 6
          %v1647 = vperm.slane %v1636, 7
          %v1648 = vperm.slane %v1637, 0
          %v1649 = vperm.slane %v1637, 1
          %v1650 = vperm.slane %v1637, 2
          %v1651 = vperm.slane %v1637, 3
          %v2048 = vunpack.c.l.b16 %v1252
          %v2049 = vunpack.c.h.b16 %v1252
          %v2050 = vunpack.c.l.b16 %v1253
          %v2051 = vunpack.c.h.b16 %v1253
          %v2052 = vunpack.c.l.b16 %v1254
          %v2053 = vunpack.c.h.b16 %v1254
          %v2054 = vunpack.c.l.b16 %v1255
          %v2055 = vunpack.c.h.b16 %v1255
          %v2056 = vunpack.c.l.b16 %v1256
          %v2057 = vunpack.c.h.b16 %v1256
          %v2058 = vunpack.c.l.b16 %v1257
          %v2059 = vunpack.c.h.b16 %v1257
          %v2060 = vunpack.c.l.b16 %v1258
          %v2061 = vunpack.c.h.b16 %v1258
          %v2062 = vunpack.c.l.b16 %v1259
          %v2063 = vunpack.c.h.b16 %v1259
          %v2064 = vunpack.c.l.b16 %v1260
          %v2065 = vunpack.c.h.b16 %v1260
          %v2066 = vunpack.c.l.b16 %v1261
          %v2067 = vunpack.c.h.b16 %v1261
          %v2068 = vunpack.c.l.b16 %v1262
          %v2069 = vunpack.c.h.b16 %v1262
          %v2070 = vunpack.c.l.b16 %v1263
          %v2071 = vunpack.c.h.b16 %v1263
          %v2072 = vunpack.c.l.b16 %v1264
          %v2073 = vunpack.c.h.b16 %v1264
          %v2074 = vunpack.c.l.b16 %v1265
          %v2075 = vunpack.c.h.b16 %v1265
          %v2076 = vunpack.c.l.b16 %v1266
          %v2077 = vunpack.c.h.b16 %v1266
          %v2078 = vunpack.c.l.b16 %v1267
          %v2079 = vunpack.c.h.b16 %v1267
          %v2080 = vunpack.c.l.b16 %v1268
          %v2081 = vunpack.c.h.b16 %v1268
          %v2082 = vunpack.c.l.b16 %v1269
          %v2083 = vunpack.c.h.b16 %v1269
          %v2084 = vunpack.c.l.b16 %v1270
          %v2085 = vunpack.c.h.b16 %v1270
          %v2086 = vunpack.c.l.b16 %v1271
          %v2087 = vunpack.c.h.b16 %v1271
          %v2088 = vunpack.c.l.b16 %v1272
          %v2089 = vunpack.c.h.b16 %v1272
          %v2090 = vunpack.c.l.b16 %v1273
          %v2091 = vunpack.c.h.b16 %v1273
          %v2092 = vunpack.c.l.b16 %v1274
          %v2093 = vunpack.c.h.b16 %v1274
          %v2094 = vunpack.c.l.b16 %v1275
          %v2095 = vunpack.c.h.b16 %v1275
          %v2096 = vunpack.c.l.b16 %v1276
          %v2097 = vunpack.c.h.b16 %v1276
          %v2098 = vunpack.c.l.b16 %v1277
          %v2099 = vunpack.c.h.b16 %v1277
          %v2100 = vunpack.c.l.b16 %v1278
          %v2101 = vunpack.c.h.b16 %v1278
          %v2102 = vunpack.c.l.b16 %v1279
          %v2103 = vunpack.c.h.b16 %v1279
          %v2104 = vunpack.c.l.b16 %v1280
          %v2105 = vunpack.c.h.b16 %v1280
          %v2106 = vunpack.c.l.b16 %v1281
          %v2107 = vunpack.c.h.b16 %v1281
          %v2108 = vunpack.c.l.b16 %v1282
          %v2109 = vunpack.c.h.b16 %v1282
          %v2110 = vunpack.c.l.b16 %v1283
          %v2111 = vunpack.c.h.b16 %v1283
          %v2112 = vunpack.c.l.b16 %v1284
          %v2113 = vunpack.c.h.b16 %v1284
          %v2114 = vunpack.c.l.b16 %v1285
          %v2115 = vunpack.c.h.b16 %v1285
          %v2116 = vunpack.c.l.b16 %v1286
          %v2117 = vunpack.c.h.b16 %v1286
          %v2118 = vunpack.c.l.b16 %v1287
          %v2119 = vunpack.c.h.b16 %v1287
          %v2120 = vunpack.c.l.b16 %v1288
          %v2121 = vunpack.c.h.b16 %v1288
          %v2122 = vunpack.c.l.b16 %v1289
          %v2123 = vunpack.c.h.b16 %v1289
          %v2124 = vunpack.c.l.b16 %v1290
          %v2125 = vunpack.c.h.b16 %v1290
          %v2126 = vunpack.c.l.b16 %v1291
          %v2127 = vunpack.c.h.b16 %v1291
          %v2128 = vunpack.c.l.b16 %v1292
          %v2129 = vunpack.c.h.b16 %v1292
          %v2130 = vunpack.c.l.b16 %v1293
          %v2131 = vunpack.c.h.b16 %v1293
          %v2132 = vunpack.c.l.b16 %v1294
          %v2133 = vunpack.c.h.b16 %v1294
          %v2134 = vunpack.c.l.b16 %v1295
          %v2135 = vunpack.c.h.b16 %v1295
          %v2136 = vunpack.c.l.b16 %v1296
          %v2137 = vunpack.c.h.b16 %v1296
          %v2138 = vunpack.c.l.b16 %v1297
          %v2139 = vunpack.c.h.b16 %v1297
          %v2140 = vunpack.c.l.b16 %v1298
          %v2141 = vunpack.c.h.b16 %v1298
          %v2142 = vunpack.c.l.b16 %v1299
          %v2143 = vunpack.c.h.b16 %v1299
          %v2144 = vunpack.c.l.b16 %v1300
          %v2145 = vunpack.c.h.b16 %v1300
          %v2146 = vunpack.c.l.b16 %v1301
          %v2147 = vunpack.c.h.b16 %v1301
          %v2148 = vunpack.c.l.b16 %v1302
          %v2149 = vunpack.c.h.b16 %v1302
          %v2150 = vunpack.c.l.b16 %v1303
          %v2151 = vunpack.c.h.b16 %v1303
          %v2152 = vunpack.c.l.b16 %v1304
          %v2153 = vunpack.c.h.b16 %v1304
          %v2154 = vunpack.c.l.b16 %v1305
          %v2155 = vunpack.c.h.b16 %v1305
          %v2156 = vunpack.c.l.b16 %v1306
          %v2157 = vunpack.c.h.b16 %v1306
          %v2158 = vunpack.c.l.b16 %v1307
          %v2159 = vunpack.c.h.b16 %v1307
          %v2160 = vunpack.c.l.b16 %v1308
          %v2161 = vunpack.c.h.b16 %v1308
          %v2162 = vunpack.c.l.b16 %v1309
          %v2163 = vunpack.c.h.b16 %v1309
          %v2164 = vunpack.c.l.b16 %v1310
          %v2165 = vunpack.c.h.b16 %v1310
          %v2166 = vunpack.c.l.b16 %v1311
          %v2167 = vunpack.c.h.b16 %v1311
          %v2168 = vunpack.c.l.b16 %v1312
          %v2169 = vunpack.c.h.b16 %v1312
          %v2170 = vunpack.c.l.b16 %v1313
          %v2171 = vunpack.c.h.b16 %v1313
          %v2172 = vunpack.c.l.b16 %v1314
          %v2173 = vunpack.c.h.b16 %v1314
          %v2174 = vunpack.c.l.b16 %v1315
          %v2175 = vunpack.c.h.b16 %v1315
          %v2176 = vunpack.c.l.b16 %v1316
          %v2177 = vunpack.c.h.b16 %v1316
          %v2178 = vunpack.c.l.b16 %v1317
          %v2179 = vunpack.c.h.b16 %v1317
          %v2180 = vunpack.c.l.b16 %v1318
          %v2181 = vunpack.c.h.b16 %v1318
          %v2182 = vunpack.c.l.b16 %v1319
          %v2183 = vunpack.c.h.b16 %v1319
          %v2184 = vunpack.c.l.b16 %v1320
          %v2185 = vunpack.c.h.b16 %v1320
          %v2186 = vunpack.c.l.b16 %v1321
          %v2187 = vunpack.c.h.b16 %v1321
          %v2188 = vunpack.c.l.b16 %v1322
          %v2189 = vunpack.c.h.b16 %v1322
          %v2190 = vunpack.c.l.b16 %v1323
          %v2191 = vunpack.c.h.b16 %v1323
          %v2192 = vunpack.c.l.b16 %v1324
          %v2193 = vunpack.c.h.b16 %v1324
          %v2194 = vunpack.c.l.b16 %v1325
          %v2195 = vunpack.c.h.b16 %v1325
          %v2196 = vunpack.c.l.b16 %v1326
          %v2197 = vunpack.c.h.b16 %v1326
          %v2198 = vunpack.c.l.b16 %v1327
          %v2199 = vunpack.c.h.b16 %v1327
          %v2200 = vunpack.c.l.b16 %v1328
          %v2201 = vunpack.c.h.b16 %v1328
          %v2202 = vunpack.c.l.b16 %v1329
          %v2203 = vunpack.c.h.b16 %v1329
          %v2204 = vunpack.c.l.b16 %v1330
          %v2205 = vunpack.c.h.b16 %v1330
          %v2206 = vunpack.c.l.b16 %v1331
          %v2207 = vunpack.c.h.b16 %v1331
          %v2208 = vunpack.c.l.b16 %v1332
          %v2209 = vunpack.c.h.b16 %v1332
          %v2210 = vunpack.c.l.b16 %v1333
          %v2211 = vunpack.c.h.b16 %v1333
          %v2212 = vunpack.c.l.b16 %v1334
          %v2213 = vunpack.c.h.b16 %v1334
          %v2214 = vunpack.c.l.b16 %v1335
          %v2215 = vunpack.c.h.b16 %v1335
          %v2216 = vunpack.c.l.b16 %v1336
          %v2217 = vunpack.c.h.b16 %v1336
          %v2218 = vunpack.c.l.b16 %v1337
          %v2219 = vunpack.c.h.b16 %v1337
          %v2220 = vunpack.c.l.b16 %v1338
          %v2221 = vunpack.c.h.b16 %v1338
          %v2222 = vunpack.c.l.b16 %v1339
          %v2223 = vunpack.c.h.b16 %v1339
          %v2224 = vunpack.c.l.b16 %v1340
          %v2225 = vunpack.c.h.b16 %v1340
          %v2226 = vunpack.c.l.b16 %v1341
          %v2227 = vunpack.c.h.b16 %v1341
          %v2228 = vunpack.c.l.b16 %v1342
          %v2229 = vunpack.c.h.b16 %v1342
          %v2230 = vunpack.c.l.b16 %v1343
          %v2231 = vunpack.c.h.b16 %v1343
          %v2232 = vunpack.c.l.b16 %v1344
          %v2233 = vunpack.c.h.b16 %v1344
          %v2234 = vunpack.c.l.b16 %v1345
          %v2235 = vunpack.c.h.b16 %v1345
          %v2236 = vunpack.c.l.b16 %v1346
          %v2237 = vunpack.c.h.b16 %v1346
          %v2238 = vunpack.c.l.b16 %v1347
          %v2239 = vunpack.c.h.b16 %v1347
          %v2240 = vunpack.c.l.b16 %v1348
          %v2241 = vunpack.c.h.b16 %v1348
          %v2242 = vunpack.c.l.b16 %v1349
          %v2243 = vunpack.c.h.b16 %v1349
          %v2244 = vunpack.c.l.b16 %v1350
          %v2245 = vunpack.c.h.b16 %v1350
          %v2246 = vunpack.c.l.b16 %v1351
          %v2247 = vunpack.c.h.b16 %v1351
          %v2248 = vunpack.c.l.b16 %v1352
          %v2249 = vunpack.c.h.b16 %v1352
          %v2250 = vunpack.c.l.b16 %v1353
          %v2251 = vunpack.c.h.b16 %v1353
          %v2252 = vunpack.c.l.b16 %v1354
          %v2253 = vunpack.c.h.b16 %v1354
          %v2254 = vunpack.c.l.b16 %v1355
          %v2255 = vunpack.c.h.b16 %v1355
          %v2256 = vunpack.c.l.b16 %v1356
          %v2257 = vunpack.c.h.b16 %v1356
          %v2258 = vunpack.c.l.b16 %v1357
          %v2259 = vunpack.c.h.b16 %v1357
          %v2260 = vunpack.c.l.b16 %v1358
          %v2261 = vunpack.c.h.b16 %v1358
          %v2262 = vunpack.c.l.b16 %v1359
          %v2263 = vunpack.c.h.b16 %v1359
          %v2264 = vunpack.c.l.b16 %v1360
          %v2265 = vunpack.c.h.b16 %v1360
          %v2266 = vunpack.c.l.b16 %v1361
          %v2267 = vunpack.c.h.b16 %v1361
          %v2268 = vunpack.c.l.b16 %v1362
          %v2269 = vunpack.c.h.b16 %v1362
          %v2270 = vunpack.c.l.b16 %v1363
          %v2271 = vunpack.c.h.b16 %v1363
          %v2272 = vunpack.c.l.b16 %v1364
          %v2273 = vunpack.c.h.b16 %v1364
          %v2274 = vunpack.c.l.b16 %v1365
          %v2275 = vunpack.c.h.b16 %v1365
          %v2276 = vunpack.c.l.b16 %v1366
          %v2277 = vunpack.c.h.b16 %v1366
          %v2278 = vunpack.c.l.b16 %v1367
          %v2279 = vunpack.c.h.b16 %v1367
          %v2280 = vunpack.c.l.b16 %v1368
          %v2281 = vunpack.c.h.b16 %v1368
          %v2282 = vunpack.c.l.b16 %v1369
          %v2283 = vunpack.c.h.b16 %v1369
          %v2284 = vunpack.c.l.b16 %v1370
          %v2285 = vunpack.c.h.b16 %v1370
          %v2286 = vunpack.c.l.b16 %v1371
          %v2287 = vunpack.c.h.b16 %v1371
          %v2288 = vunpack.c.l.b16 %v1372
          %v2289 = vunpack.c.h.b16 %v1372
          %v2290 = vunpack.c.l.b16 %v1373
          %v2291 = vunpack.c.h.b16 %v1373
          %v2292 = vunpack.c.l.b16 %v1374
          %v2293 = vunpack.c.h.b16 %v1374
          %v2294 = vunpack.c.l.b16 %v1375
          %v2295 = vunpack.c.h.b16 %v1375
          %v2296 = vunpack.c.l.b16 %v1376
          %v2297 = vunpack.c.h.b16 %v1376
          %v2298 = vunpack.c.l.b16 %v1377
          %v2299 = vunpack.c.h.b16 %v1377
          %v2300 = vunpack.c.l.b16 %v1378
          %v2301 = vunpack.c.h.b16 %v1378
          %v2302 = vunpack.c.l.b16 %v1379
          %v2303 = vunpack.c.h.b16 %v1379
          %v2304 = vunpack.c.l.b16 %v1380
          %v2305 = vunpack.c.h.b16 %v1380
          %v2306 = vunpack.c.l.b16 %v1381
          %v2307 = vunpack.c.h.b16 %v1381
          %v2308 = vunpack.c.l.b16 %v1382
          %v2309 = vunpack.c.h.b16 %v1382
          %v2310 = vunpack.c.l.b16 %v1383
          %v2311 = vunpack.c.h.b16 %v1383
          %v2312 = vunpack.c.l.b16 %v1384
          %v2313 = vunpack.c.h.b16 %v1384
          %v2314 = vunpack.c.l.b16 %v1385
          %v2315 = vunpack.c.h.b16 %v1385
          %v2316 = vunpack.c.l.b16 %v1386
          %v2317 = vunpack.c.h.b16 %v1386
          %v2318 = vunpack.c.l.b16 %v1387
          %v2319 = vunpack.c.h.b16 %v1387
          %v2320 = vunpack.c.l.b16 %v1388
          %v2321 = vunpack.c.h.b16 %v1388
          %v2322 = vunpack.c.l.b16 %v1389
          %v2323 = vunpack.c.h.b16 %v1389
          %v2324 = vunpack.c.l.b16 %v1390
          %v2325 = vunpack.c.h.b16 %v1390
          %v2326 = vunpack.c.l.b16 %v1391
          %v2327 = vunpack.c.h.b16 %v1391
          %v2328 = vunpack.c.l.b16 %v1392
          %v2329 = vunpack.c.h.b16 %v1392
          %v2330 = vunpack.c.l.b16 %v1393
          %v2331 = vunpack.c.h.b16 %v1393
          %v2332 = vunpack.c.l.b16 %v1394
          %v2333 = vunpack.c.h.b16 %v1394
          %v2334 = vunpack.c.l.b16 %v1395
          %v2335 = vunpack.c.h.b16 %v1395
          %v2336 = vunpack.c.l.b16 %v1396
          %v2337 = vunpack.c.h.b16 %v1396
          %v2338 = vunpack.c.l.b16 %v1397
          %v2339 = vunpack.c.h.b16 %v1397
          %v2340 = vunpack.c.l.b16 %v1398
          %v2341 = vunpack.c.h.b16 %v1398
          %v2342 = vunpack.c.l.b16 %v1399
          %v2343 = vunpack.c.h.b16 %v1399
          %v2344 = vunpack.c.l.b16 %v1400
          %v2345 = vunpack.c.h.b16 %v1400
          %v2346 = vunpack.c.l.b16 %v1401
          %v2347 = vunpack.c.h.b16 %v1401
          %v2348 = vunpack.c.l.b16 %v1402
          %v2349 = vunpack.c.h.b16 %v1402
          %v2350 = vunpack.c.l.b16 %v1403
          %v2351 = vunpack.c.h.b16 %v1403
          %v2352 = vunpack.c.l.b16 %v1404
          %v2353 = vunpack.c.h.b16 %v1404
          %v2354 = vunpack.c.l.b16 %v1405
          %v2355 = vunpack.c.h.b16 %v1405
          %v2356 = vunpack.c.l.b16 %v1406
          %v2357 = vunpack.c.h.b16 %v1406
          %v2358 = vunpack.c.l.b16 %v1407
          %v2359 = vunpack.c.h.b16 %v1407
          %v2360 = vunpack.c.l.b16 %v1408
          %v2361 = vunpack.c.h.b16 %v1408
          %v2362 = vunpack.c.l.b16 %v1409
          %v2363 = vunpack.c.h.b16 %v1409
          %v2364 = vunpack.c.l.b16 %v1410
          %v2365 = vunpack.c.h.b16 %v1410
          %v2366 = vunpack.c.l.b16 %v1411
          %v2367 = vunpack.c.h.b16 %v1411
          %v2368 = vunpack.c.l.b16 %v1412
          %v2369 = vunpack.c.h.b16 %v1412
          %v2370 = vunpack.c.l.b16 %v1413
          %v2371 = vunpack.c.h.b16 %v1413
          %v2372 = vunpack.c.l.b16 %v1414
          %v2373 = vunpack.c.h.b16 %v1414
          %v2374 = vunpack.c.l.b16 %v1415
          %v2375 = vunpack.c.h.b16 %v1415
          %v2376 = vunpack.c.l.b16 %v1416
          %v2377 = vunpack.c.h.b16 %v1416
          %v2378 = vunpack.c.l.b16 %v1417
          %v2379 = vunpack.c.h.b16 %v1417
          %v2380 = vunpack.c.l.b16 %v1418
          %v2381 = vunpack.c.h.b16 %v1418
          %v2382 = vunpack.c.l.b16 %v1419
          %v2383 = vunpack.c.h.b16 %v1419
          %v2384 = vunpack.c.l.b16 %v1420
          %v2385 = vunpack.c.h.b16 %v1420
          %v2386 = vunpack.c.l.b16 %v1421
          %v2387 = vunpack.c.h.b16 %v1421
          %v2388 = vunpack.c.l.b16 %v1422
          %v2389 = vunpack.c.h.b16 %v1422
          %v2390 = vunpack.c.l.b16 %v1423
          %v2391 = vunpack.c.h.b16 %v1423
          %v2392 = vunpack.c.l.b16 %v1424
          %v2393 = vunpack.c.h.b16 %v1424
          %v2394 = vunpack.c.l.b16 %v1425
          %v2395 = vunpack.c.h.b16 %v1425
          %v2396 = vunpack.c.l.b16 %v1426
          %v2397 = vunpack.c.h.b16 %v1426
          %v2398 = vunpack.c.l.b16 %v1427
          %v2399 = vunpack.c.h.b16 %v1427
          %v2400 = vunpack.c.l.b16 %v1428
          %v2401 = vunpack.c.h.b16 %v1428
          %v2402 = vunpack.c.l.b16 %v1429
          %v2403 = vunpack.c.h.b16 %v1429
          %v2404 = vunpack.c.l.b16 %v1430
          %v2405 = vunpack.c.h.b16 %v1430
          %v2406 = vunpack.c.l.b16 %v1431
          %v2407 = vunpack.c.h.b16 %v1431
          %v2408 = vunpack.c.l.b16 %v1432
          %v2409 = vunpack.c.h.b16 %v1432
          %v2410 = vunpack.c.l.b16 %v1433
          %v2411 = vunpack.c.h.b16 %v1433
          %v2412 = vunpack.c.l.b16 %v1434
          %v2413 = vunpack.c.h.b16 %v1434
          %v2414 = vunpack.c.l.b16 %v1435
          %v2415 = vunpack.c.h.b16 %v1435
          %v2416 = vunpack.c.l.b16 %v1436
          %v2417 = vunpack.c.h.b16 %v1436
          %v2418 = vunpack.c.l.b16 %v1437
          %v2419 = vunpack.c.h.b16 %v1437
          %v2420 = vunpack.c.l.b16 %v1438
          %v2421 = vunpack.c.h.b16 %v1438
          %v2422 = vunpack.c.l.b16 %v1439
          %v2423 = vunpack.c.h.b16 %v1439
          %v2424 = vunpack.c.l.b16 %v1440
          %v2425 = vunpack.c.h.b16 %v1440
          %v2426 = vunpack.c.l.b16 %v1441
          %v2427 = vunpack.c.h.b16 %v1441
          %v2428 = vunpack.c.l.b16 %v1442
          %v2429 = vunpack.c.h.b16 %v1442
          %v2430 = vunpack.c.l.b16 %v1443
          %v2431 = vunpack.c.h.b16 %v1443
          %v2432 = vunpack.c.l.b16 %v1444
          %v2433 = vunpack.c.h.b16 %v1444
          %v2434 = vunpack.c.l.b16 %v1445
          %v2435 = vunpack.c.h.b16 %v1445
          %v2436 = vunpack.c.l.b16 %v1446
          %v2437 = vunpack.c.h.b16 %v1446
          %v2438 = vunpack.c.l.b16 %v1447
          %v2439 = vunpack.c.h.b16 %v1447
          %v2440 = vunpack.c.l.b16 %v1448
          %v2441 = vunpack.c.h.b16 %v1448
          %v2442 = vunpack.c.l.b16 %v1449
          %v2443 = vunpack.c.h.b16 %v1449
          %v2444 = vunpack.c.l.b16 %v1450
          %v2445 = vunpack.c.h.b16 %v1450
          %v2446 = vunpack.c.l.b16 %v1451
          %v2447 = vunpack.c.h.b16 %v1451
          %v2448 = vunpack.c.l.b16 %v1452
          %v2449 = vunpack.c.h.b16 %v1452
          %v2450 = vunpack.c.l.b16 %v1453
          %v2451 = vunpack.c.h.b16 %v1453
          %v2452 = vunpack.c.l.b16 %v1454
          %v2453 = vunpack.c.h.b16 %v1454
          %v2454 = vunpack.c.l.b16 %v1455
          %v2455 = vunpack.c.h.b16 %v1455
          %v2456 = vunpack.c.l.b16 %v1456
          %v2457 = vunpack.c.h.b16 %v1456
          %v2458 = vunpack.c.l.b16 %v1457
          %v2459 = vunpack.c.h.b16 %v1457
          %v2460 = vunpack.c.l.b16 %v1458
          %v2461 = vunpack.c.h.b16 %v1458
          %v2462 = vunpack.c.l.b16 %v1459
          %v2463 = vunpack.c.h.b16 %v1459
          %v2464 = vunpack.c.l.b16 %v1460
          %v2465 = vunpack.c.h.b16 %v1460
          %v2466 = vunpack.c.l.b16 %v1461
          %v2467 = vunpack.c.h.b16 %v1461
          %v2468 = vunpack.c.l.b16 %v1462
          %v2469 = vunpack.c.h.b16 %v1462
          %v2470 = vunpack.c.l.b16 %v1463
          %v2471 = vunpack.c.h.b16 %v1463
          %v2472 = vunpack.c.l.b16 %v1464
          %v2473 = vunpack.c.h.b16 %v1464
          %v2474 = vunpack.c.l.b16 %v1465
          %v2475 = vunpack.c.h.b16 %v1465
          %v2476 = vunpack.c.l.b16 %v1466
          %v2477 = vunpack.c.h.b16 %v1466
          %v2478 = vunpack.c.l.b16 %v1467
          %v2479 = vunpack.c.h.b16 %v1467
          %v2480 = vunpack.c.l.b16 %v1468
          %v2481 = vunpack.c.h.b16 %v1468
          %v2482 = vunpack.c.l.b16 %v1469
          %v2483 = vunpack.c.h.b16 %v1469
          %v2484 = vunpack.c.l.b16 %v1470
          %v2485 = vunpack.c.h.b16 %v1470
          %v2486 = vunpack.c.l.b16 %v1471
          %v2487 = vunpack.c.h.b16 %v1471
          %v2488 = vunpack.c.l.b16 %v1472
          %v2489 = vunpack.c.h.b16 %v1472
          %v2490 = vunpack.c.l.b16 %v1473
          %v2491 = vunpack.c.h.b16 %v1473
          %v2492 = vunpack.c.l.b16 %v1474
          %v2493 = vunpack.c.h.b16 %v1474
          %v2494 = vunpack.c.l.b16 %v1475
          %v2495 = vunpack.c.h.b16 %v1475
          %v2496 = vunpack.c.l.b16 %v1476
          %v2497 = vunpack.c.h.b16 %v1476
          %v2498 = vunpack.c.l.b16 %v1477
          %v2499 = vunpack.c.h.b16 %v1477
          %v2500 = vunpack.c.l.b16 %v1478
          %v2501 = vunpack.c.h.b16 %v1478
          %v2502 = vunpack.c.l.b16 %v1479
          %v2503 = vunpack.c.h.b16 %v1479
          %v2504 = vunpack.c.l.b16 %v1480
          %v2505 = vunpack.c.h.b16 %v1480
          %v2506 = vunpack.c.l.b16 %v1481
          %v2507 = vunpack.c.h.b16 %v1481
          %v2508 = vunpack.c.l.b16 %v1482
          %v2509 = vunpack.c.h.b16 %v1482
          %v2510 = vunpack.c.l.b16 %v1483
          %v2511 = vunpack.c.h.b16 %v1483
          %v2512 = vunpack.c.l.b16 %v1484
          %v2513 = vunpack.c.h.b16 %v1484
          %v2514 = vunpack.c.l.b16 %v1485
          %v2515 = vunpack.c.h.b16 %v1485
          %v2516 = vunpack.c.l.b16 %v1486
          %v2517 = vunpack.c.h.b16 %v1486
          %v2518 = vunpack.c.l.b16 %v1487
          %v2519 = vunpack.c.h.b16 %v1487
          %v2520 = vunpack.c.l.b16 %v1488
          %v2521 = vunpack.c.h.b16 %v1488
          %v2522 = vunpack.c.l.b16 %v1489
          %v2523 = vunpack.c.h.b16 %v1489
          %v2524 = vunpack.c.l.b16 %v1490
          %v2525 = vunpack.c.h.b16 %v1490
          %v2526 = vunpack.c.l.b16 %v1491
          %v2527 = vunpack.c.h.b16 %v1491
          %v2528 = vunpack.c.l.b16 %v1492
          %v2529 = vunpack.c.h.b16 %v1492
          %v2530 = vunpack.c.l.b16 %v1493
          %v2531 = vunpack.c.h.b16 %v1493
          %v2532 = vunpack.c.l.b16 %v1494
          %v2533 = vunpack.c.h.b16 %v1494
          %v2534 = vunpack.c.l.b16 %v1495
          %v2535 = vunpack.c.h.b16 %v1495
          %v2536 = vunpack.c.l.b16 %v1496
          %v2537 = vunpack.c.h.b16 %v1496
          %v2538 = vunpack.c.l.b16 %v1497
          %v2539 = vunpack.c.h.b16 %v1497
          %v2540 = vunpack.c.l.b16 %v1498
          %v2541 = vunpack.c.h.b16 %v1498
          %v2542 = vunpack.c.l.b16 %v1499
          %v2543 = vunpack.c.h.b16 %v1499
          %v2544 = vunpack.c.l.b16 %v1500
          %v2545 = vunpack.c.h.b16 %v1500
          %v2546 = vunpack.c.l.b16 %v1501
          %v2547 = vunpack.c.h.b16 %v1501
          %v2548 = vunpack.c.l.b16 %v1502
          %v2549 = vunpack.c.h.b16 %v1502
          %v2550 = vunpack.c.l.b16 %v1503
          %v2551 = vunpack.c.h.b16 %v1503
          %v2552 = vunpack.c.l.b16 %v1504
          %v2553 = vunpack.c.h.b16 %v1504
          %v2554 = vunpack.c.l.b16 %v1505
          %v2555 = vunpack.c.h.b16 %v1505
          %v2556 = vunpack.c.l.b16 %v1506
          %v2557 = vunpack.c.h.b16 %v1506
          %v2558 = vunpack.c.l.b16 %v1507
          %v2559 = vunpack.c.h.b16 %v1507
          %v2560 = vunpack.c.l.b16 %v1508
          %v2561 = vunpack.c.h.b16 %v1508
          %v2562 = vunpack.c.l.b16 %v1509
          %v2563 = vunpack.c.h.b16 %v1509
          %v2564 = vunpack.c.l.b16 %v1510
          %v2565 = vunpack.c.h.b16 %v1510
          %v2566 = vunpack.c.l.b16 %v1511
          %v2567 = vunpack.c.h.b16 %v1511
          %v2568 = vunpack.c.l.b16 %v1512
          %v2569 = vunpack.c.h.b16 %v1512
          %v2570 = vunpack.c.l.b16 %v1513
          %v2571 = vunpack.c.h.b16 %v1513
          %v2572 = vunpack.c.l.b16 %v1514
          %v2573 = vunpack.c.h.b16 %v1514
          %v2574 = vunpack.c.l.b16 %v1515
          %v2575 = vunpack.c.h.b16 %v1515
          %v2576 = vunpack.c.l.b16 %v1516
          %v2577 = vunpack.c.h.b16 %v1516
          %v2578 = vunpack.c.l.b16 %v1517
          %v2579 = vunpack.c.h.b16 %v1517
          %v2580 = vunpack.c.l.b16 %v1518
          %v2581 = vunpack.c.h.b16 %v1518
          %v2582 = vunpack.c.l.b16 %v1519
          %v2583 = vunpack.c.h.b16 %v1519
          %v2584 = vunpack.c.l.b16 %v1520
          %v2585 = vunpack.c.h.b16 %v1520
          %v2586 = vunpack.c.l.b16 %v1521
          %v2587 = vunpack.c.h.b16 %v1521
          %v2588 = vunpack.c.l.b16 %v1522
          %v2589 = vunpack.c.h.b16 %v1522
          %v2590 = vunpack.c.l.b16 %v1523
          %v2591 = vunpack.c.h.b16 %v1523
          %v2592 = vunpack.c.l.b16 %v1524
          %v2593 = vunpack.c.h.b16 %v1524
          %v2594 = vunpack.c.l.b16 %v1525
          %v2595 = vunpack.c.h.b16 %v1525
          %v2596 = vunpack.c.l.b16 %v1526
          %v2597 = vunpack.c.h.b16 %v1526
          %v2598 = vunpack.c.l.b16 %v1527
          %v2599 = vunpack.c.h.b16 %v1527
          %v2600 = vunpack.c.l.b16 %v1528
          %v2601 = vunpack.c.h.b16 %v1528
          %v2602 = vunpack.c.l.b16 %v1529
          %v2603 = vunpack.c.h.b16 %v1529
          %v2604 = vunpack.c.l.b16 %v1530
          %v2605 = vunpack.c.h.b16 %v1530
          %v2606 = vunpack.c.l.b16 %v1531
          %v2607 = vunpack.c.h.b16 %v1531
          %v2608 = vunpack.c.l.b16 %v1532
          %v2609 = vunpack.c.h.b16 %v1532
          %v2610 = vunpack.c.l.b16 %v1533
          %v2611 = vunpack.c.h.b16 %v1533
          %v2612 = vunpack.c.l.b16 %v1534
          %v2613 = vunpack.c.h.b16 %v1534
          %v2614 = vunpack.c.l.b16 %v1535
          %v2615 = vunpack.c.h.b16 %v1535
          %v2616 = vunpack.c.l.b16 %v1536
          %v2617 = vunpack.c.h.b16 %v1536
          %v2618 = vunpack.c.l.b16 %v1537
          %v2619 = vunpack.c.h.b16 %v1537
          %v2620 = vunpack.c.l.b16 %v1538
          %v2621 = vunpack.c.h.b16 %v1538
          %v2622 = vunpack.c.l.b16 %v1539
          %v2623 = vunpack.c.h.b16 %v1539
          %v2624 = vunpack.c.l.b16 %v1540
          %v2625 = vunpack.c.h.b16 %v1540
          %v2626 = vunpack.c.l.b16 %v1541
          %v2627 = vunpack.c.h.b16 %v1541
          %v2628 = vunpack.c.l.b16 %v1542
          %v2629 = vunpack.c.h.b16 %v1542
          %v2630 = vunpack.c.l.b16 %v1543
          %v2631 = vunpack.c.h.b16 %v1543
          %v2632 = vunpack.c.l.b16 %v1544
          %v2633 = vunpack.c.h.b16 %v1544
          %v2634 = vunpack.c.l.b16 %v1545
          %v2635 = vunpack.c.h.b16 %v1545
          %v2636 = vunpack.c.l.b16 %v1546
          %v2637 = vunpack.c.h.b16 %v1546
          %v2638 = vunpack.c.l.b16 %v1547
          %v2639 = vunpack.c.h.b16 %v1547
          %v2640 = vunpack.c.l.b16 %v1548
          %v2641 = vunpack.c.h.b16 %v1548
          %v2642 = vunpack.c.l.b16 %v1549
          %v2643 = vunpack.c.h.b16 %v1549
          %v2644 = vunpack.c.l.b16 %v1550
          %v2645 = vunpack.c.h.b16 %v1550
          %v2646 = vunpack.c.l.b16 %v1551
          %v2647 = vunpack.c.h.b16 %v1551
          %v2648 = vunpack.c.l.b16 %v1552
          %v2649 = vunpack.c.h.b16 %v1552
          %v2650 = vunpack.c.l.b16 %v1553
          %v2651 = vunpack.c.h.b16 %v1553
          %v2652 = vunpack.c.l.b16 %v1554
          %v2653 = vunpack.c.h.b16 %v1554
          %v2654 = vunpack.c.l.b16 %v1555
          %v2655 = vunpack.c.h.b16 %v1555
          %v2656 = vunpack.c.l.b16 %v1556
          %v2657 = vunpack.c.h.b16 %v1556
          %v2658 = vunpack.c.l.b16 %v1557
          %v2659 = vunpack.c.h.b16 %v1557
          %v2660 = vunpack.c.l.b16 %v1558
          %v2661 = vunpack.c.h.b16 %v1558
          %v2662 = vunpack.c.l.b16 %v1559
          %v2663 = vunpack.c.h.b16 %v1559
          %v2664 = vunpack.c.l.b16 %v1560
          %v2665 = vunpack.c.h.b16 %v1560
          %v2666 = vunpack.c.l.b16 %v1561
          %v2667 = vunpack.c.h.b16 %v1561
          %v2668 = vunpack.c.l.b16 %v1562
          %v2669 = vunpack.c.h.b16 %v1562
          %v2670 = vunpack.c.l.b16 %v1563
          %v2671 = vunpack.c.h.b16 %v1563
          %v2672 = vunpack.c.l.b16 %v1564
          %v2673 = vunpack.c.h.b16 %v1564
          %v2674 = vunpack.c.l.b16 %v1565
          %v2675 = vunpack.c.h.b16 %v1565
          %v2676 = vunpack.c.l.b16 %v1566
          %v2677 = vunpack.c.h.b16 %v1566
          %v2678 = vunpack.c.l.b16 %v1567
          %v2679 = vunpack.c.h.b16 %v1567
          %v2680 = vunpack.c.l.b16 %v1568
          %v2681 = vunpack.c.h.b16 %v1568
          %v2682 = vunpack.c.l.b16 %v1569
          %v2683 = vunpack.c.h.b16 %v1569
          %v2684 = vunpack.c.l.b16 %v1570
          %v2685 = vunpack.c.h.b16 %v1570
          %v2686 = vunpack.c.l.b16 %v1571
          %v2687 = vunpack.c.h.b16 %v1571
          %v2688 = vunpack.c.l.b16 %v1572
          %v2689 = vunpack.c.h.b16 %v1572
          %v2690 = vunpack.c.l.b16 %v1573
          %v2691 = vunpack.c.h.b16 %v1573
          %v2692 = vunpack.c.l.b16 %v1574
          %v2693 = vunpack.c.h.b16 %v1574
          %v2694 = vunpack.c.l.b16 %v1575
          %v2695 = vunpack.c.h.b16 %v1575
          %v2696 = vunpack.c.l.b16 %v1576
          %v2697 = vunpack.c.h.b16 %v1576
          %v2698 = vunpack.c.l.b16 %v1577
          %v2699 = vunpack.c.h.b16 %v1577
          %v2700 = vunpack.c.l.b16 %v1578
          %v2701 = vunpack.c.h.b16 %v1578
          %v2702 = vunpack.c.l.b16 %v1579
          %v2703 = vunpack.c.h.b16 %v1579
          %v2704 = vunpack.c.l.b16 %v1580
          %v2705 = vunpack.c.h.b16 %v1580
          %v2706 = vunpack.c.l.b16 %v1581
          %v2707 = vunpack.c.h.b16 %v1581
          %v2708 = vunpack.c.l.b16 %v1582
          %v2709 = vunpack.c.h.b16 %v1582
          %v2710 = vunpack.c.l.b16 %v1583
          %v2711 = vunpack.c.h.b16 %v1583
          %v2712 = vunpack.c.l.b16 %v1584
          %v2713 = vunpack.c.h.b16 %v1584
          %v2714 = vunpack.c.l.b16 %v1585
          %v2715 = vunpack.c.h.b16 %v1585
          %v2716 = vunpack.c.l.b16 %v1586
          %v2717 = vunpack.c.h.b16 %v1586
          %v2718 = vunpack.c.l.b16 %v1587
          %v2719 = vunpack.c.h.b16 %v1587
          %v2720 = vunpack.c.l.b16 %v1588
          %v2721 = vunpack.c.h.b16 %v1588
          %v2722 = vunpack.c.l.b16 %v1589
          %v2723 = vunpack.c.h.b16 %v1589
          %v2724 = vunpack.c.l.b16 %v1590
          %v2725 = vunpack.c.h.b16 %v1590
          %v2726 = vunpack.c.l.b16 %v1591
          %v2727 = vunpack.c.h.b16 %v1591
          %v2728 = vunpack.c.l.b16 %v1592
          %v2729 = vunpack.c.h.b16 %v1592
          %v2730 = vunpack.c.l.b16 %v1593
          %v2731 = vunpack.c.h.b16 %v1593
          %v2732 = vunpack.c.l.b16 %v1594
          %v2733 = vunpack.c.h.b16 %v1594
          %v2734 = vunpack.c.l.b16 %v1595
          %v2735 = vunpack.c.h.b16 %v1595
          %v2736 = vunpack.c.l.b16 %v1596
          %v2737 = vunpack.c.h.b16 %v1596
          %v2738 = vunpack.c.l.b16 %v1597
          %v2739 = vunpack.c.h.b16 %v1597
          %v2740 = vunpack.c.l.b16 %v1598
          %v2741 = vunpack.c.h.b16 %v1598
          %v2742 = vunpack.c.l.b16 %v1599
          %v2743 = vunpack.c.h.b16 %v1599
          %v2744 = vunpack.c.l.b16 %v1600
          %v2745 = vunpack.c.h.b16 %v1600
          %v2746 = vunpack.c.l.b16 %v1601
          %v2747 = vunpack.c.h.b16 %v1601
          %v2748 = vunpack.c.l.b16 %v1602
          %v2749 = vunpack.c.h.b16 %v1602
          %v2750 = vunpack.c.l.b16 %v1603
          %v2751 = vunpack.c.h.b16 %v1603
          %v2752 = vunpack.c.l.b16 %v1604
          %v2753 = vunpack.c.h.b16 %v1604
          %v2754 = vunpack.c.l.b16 %v1605
          %v2755 = vunpack.c.h.b16 %v1605
          %v2756 = vunpack.c.l.b16 %v1606
          %v2757 = vunpack.c.h.b16 %v1606
          %v2758 = vunpack.c.l.b16 %v1607
          %v2759 = vunpack.c.h.b16 %v1607
          %v2760 = vunpack.c.l.b16 %v1608
          %v2761 = vunpack.c.h.b16 %v1608
          %v2762 = vunpack.c.l.b16 %v1609
          %v2763 = vunpack.c.h.b16 %v1609
          %v2764 = vunpack.c.l.b16 %v1610
          %v2765 = vunpack.c.h.b16 %v1610
          %v2766 = vunpack.c.l.b16 %v1611
          %v2767 = vunpack.c.h.b16 %v1611
          %v2768 = vunpack.c.l.b16 %v1612
          %v2769 = vunpack.c.h.b16 %v1612
          %v2770 = vunpack.c.l.b16 %v1613
          %v2771 = vunpack.c.h.b16 %v1613
          %v2772 = vunpack.c.l.b16 %v1614
          %v2773 = vunpack.c.h.b16 %v1614
          %v2774 = vunpack.c.l.b16 %v1615
          %v2775 = vunpack.c.h.b16 %v1615
          %v2776 = vunpack.c.l.b16 %v1616
          %v2777 = vunpack.c.h.b16 %v1616
          %v2778 = vunpack.c.l.b16 %v1617
          %v2779 = vunpack.c.h.b16 %v1617
          %v2780 = vunpack.c.l.b16 %v1618
          %v2781 = vunpack.c.h.b16 %v1618
          %v2782 = vunpack.c.l.b16 %v1619
          %v2783 = vunpack.c.h.b16 %v1619
          %v2784 = vunpack.c.l.b16 %v1620
          %v2785 = vunpack.c.h.b16 %v1620
          %v2786 = vunpack.c.l.b16 %v1621
          %v2787 = vunpack.c.h.b16 %v1621
          %v2788 = vunpack.c.l.b16 %v1622
          %v2789 = vunpack.c.h.b16 %v1622
          %v2790 = vunpack.c.l.b16 %v1623
          %v2791 = vunpack.c.h.b16 %v1623
          %v2792 = vunpack.c.l.b16 %v1624
          %v2793 = vunpack.c.h.b16 %v1624
          %v2794 = vunpack.c.l.b16 %v1625
          %v2795 = vunpack.c.h.b16 %v1625
          %v2796 = vunpack.c.l.b16 %v1626
          %v2797 = vunpack.c.h.b16 %v1626
          %v2798 = vunpack.c.l.b16 %v1627
          %v2799 = vunpack.c.h.b16 %v1627
          %v2800 = vunpack.c.l.b16 %v1628
          %v2801 = vunpack.c.h.b16 %v1628
          %v2802 = vunpack.c.l.b16 %v1629
          %v2803 = vunpack.c.h.b16 %v1629
          %v2804 = vunpack.c.l.b16 %v1630
          %v2805 = vunpack.c.h.b16 %v1630
          %v2806 = vunpack.c.l.b16 %v1631
          %v2807 = vunpack.c.h.b16 %v1631
          %v2808 = vunpack.c.l.b16 %v1632
          %v2809 = vunpack.c.h.b16 %v1632
          %v2810 = vunpack.c.l.b16 %v1633
          %v2811 = vunpack.c.h.b16 %v1633
          %v2812 = vunpack.c.l.b16 %v1634
          %v2813 = vunpack.c.h.b16 %v1634
          %v2814 = vunpack.c.l.b16 %v1635
          %v2815 = vunpack.c.h.b16 %v1635
          %v2816 = vpack.c.b16 %v2060, %v2048
          %v2817 = vpack.c.b16 %v2061, %v2049
          %v2818 = vpack.c.b16 %v2062, %v2050
          %v2819 = vpack.c.b16 %v2063, %v2051
          %v2820 = vpack.c.b16 %v2064, %v2052
          %v2821 = vpack.c.b16 %v2065, %v2053
          %v2822 = vpack.c.b16 %v2066, %v2054
          %v2823 = vpack.c.b16 %v2067, %v2055
          %v2824 = vpack.c.b16 %v2068, %v2056
          %v2825 = vpack.c.b16 %v2069, %v2057
          %v2826 = vpack.c.b16 %v2070, %v2058
          %v2827 = vpack.c.b16 %v2071, %v2059
          %v2828 = vpack.c.b16 %v2084, %v2072
          %v2829 = vpack.c.b16 %v2085, %v2073
          %v2830 = vpack.c.b16 %v2086, %v2074
          %v2831 = vpack.c.b16 %v2087, %v2075
          %v2832 = vpack.c.b16 %v2088, %v2076
          %v2833 = vpack.c.b16 %v2089, %v2077
          %v2834 = vpack.c.b16 %v2090, %v2078
          %v2835 = vpack.c.b16 %v2091, %v2079
          %v2836 = vpack.c.b16 %v2092, %v2080
          %v2837 = vpack.c.b16 %v2093, %v2081
          %v2838 = vpack.c.b16 %v2094, %v2082
          %v2839 = vpack.c.b16 %v2095, %v2083
          %v2840 = vpack.c.b16 %v2108, %v2096
          %v2841 = vpack.c.b16 %v2109, %v2097
          %v2842 = vpack.c.b16 %v2110, %v2098
          %v2843 = vpack.c.b16 %v2111, %v2099
          %v2844 = vpack.c.b16 %v2112, %v2100
          %v2845 = vpack.c.b16 %v2113, %v2101
          %v2846 = vpack.c.b16 %v2114, %v2102
          %v2847 = vpack.c.b16 %v2115, %v2103
          %v2848 = vpack.c.b16 %v2116, %v2104
          %v2849 = vpack.c.b16 %v2117, %v2105
          %v2850 = vpack.c.b16 %v2118, %v2106
          %v2851 = vpack.c.b16 %v2119, %v2107
          %v2852 = vpack.c.b16 %v2132, %v2120
          %v2853 = vpack.c.b16 %v2133, %v2121
          %v2854 = vpack.c.b16 %v2134, %v2122
          %v2855 = vpack.c.b16 %v2135, %v2123
          %v2856 = vpack.c.b16 %v2136, %v2124
          %v2857 = vpack.c.b16 %v2137, %v2125
          %v2858 = vpack.c.b16 %v2138, %v2126
          %v2859 = vpack.c.b16 %v2139, %v2127
          %v2860 = vpack.c.b16 %v2140, %v2128
          %v2861 = vpack.c.b16 %v2141, %v2129
          %v2862 = vpack.c.b16 %v2142, %v2130
          %v2863 = vpack.c.b16 %v2143, %v2131
          %v2864 = vpack.c.b16 %v2156, %v2144
          %v2865 = vpack.c.b16 %v2157, %v2145
          %v2866 = vpack.c.b16 %v2158, %v2146
          %v2867 = vpack.c.b16 %v2159, %v2147
          %v2868 = vpack.c.b16 %v2160, %v2148
          %v2869 = vpack.c.b16 %v2161, %v2149
          %v2870 = vpack.c.b16 %v2162, %v2150
          %v2871 = vpack.c.b16 %v2163, %v2151
          %v2872 = vpack.c.b16 %v2164, %v2152
          %v2873 = vpack.c.b16 %v2165, %v2153
          %v2874 = vpack.c.b16 %v2166, %v2154
          %v2875 = vpack.c.b16 %v2167, %v2155
          %v2876 = vpack.c.b16 %v2180, %v2168
          %v2877 = vpack.c.b16 %v2181, %v2169
          %v2878 = vpack.c.b16 %v2182, %v2170
          %v2879 = vpack.c.b16 %v2183, %v2171
          %v2880 = vpack.c.b16 %v2184, %v2172
          %v2881 = vpack.c.b16 %v2185, %v2173
          %v2882 = vpack.c.b16 %v2186, %v2174
          %v2883 = vpack.c.b16 %v2187, %v2175
          %v2884 = vpack.c.b16 %v2188, %v2176
          %v2885 = vpack.c.b16 %v2189, %v2177
          %v2886 = vpack.c.b16 %v2190, %v2178
          %v2887 = vpack.c.b16 %v2191, %v2179
          %v2888 = vpack.c.b16 %v2204, %v2192
          %v2889 = vpack.c.b16 %v2205, %v2193
          %v2890 = vpack.c.b16 %v2206, %v2194
          %v2891 = vpack.c.b16 %v2207, %v2195
          %v2892 = vpack.c.b16 %v2208, %v2196
          %v2893 = vpack.c.b16 %v2209, %v2197
          %v2894 = vpack.c.b16 %v2210, %v2198
          %v2895 = vpack.c.b16 %v2211, %v2199
          %v2896 = vpack.c.b16 %v2212, %v2200
          %v2897 = vpack.c.b16 %v2213, %v2201
          %v2898 = vpack.c.b16 %v2214, %v2202
          %v2899 = vpack.c.b16 %v2215, %v2203
          %v2900 = vpack.c.b16 %v2228, %v2216
          %v2901 = vpack.c.b16 %v2229, %v2217
          %v2902 = vpack.c.b16 %v2230, %v2218
          %v2903 = vpack.c.b16 %v2231, %v2219
          %v2904 = vpack.c.b16 %v2232, %v2220
          %v2905 = vpack.c.b16 %v2233, %v2221
          %v2906 = vpack.c.b16 %v2234, %v2222
          %v2907 = vpack.c.b16 %v2235, %v2223
          %v2908 = vpack.c.b16 %v2236, %v2224
          %v2909 = vpack.c.b16 %v2237, %v2225
          %v2910 = vpack.c.b16 %v2238, %v2226
          %v2911 = vpack.c.b16 %v2239, %v2227
          %v2912 = vpack.c.b16 %v2252, %v2240
          %v2913 = vpack.c.b16 %v2253, %v2241
          %v2914 = vpack.c.b16 %v2254, %v2242
          %v2915 = vpack.c.b16 %v2255, %v2243
          %v2916 = vpack.c.b16 %v2256, %v2244
          %v2917 = vpack.c.b16 %v2257, %v2245
          %v2918 = vpack.c.b16 %v2258, %v2246
          %v2919 = vpack.c.b16 %v2259, %v2247
          %v2920 = vpack.c.b16 %v2260, %v2248
          %v2921 = vpack.c.b16 %v2261, %v2249
          %v2922 = vpack.c.b16 %v2262, %v2250
          %v2923 = vpack.c.b16 %v2263, %v2251
          %v2924 = vpack.c.b16 %v2276, %v2264
          %v2925 = vpack.c.b16 %v2277, %v2265
          %v2926 = vpack.c.b16 %v2278, %v2266
          %v2927 = vpack.c.b16 %v2279, %v2267
          %v2928 = vpack.c.b16 %v2280, %v2268
          %v2929 = vpack.c.b16 %v2281, %v2269
          %v2930 = vpack.c.b16 %v2282, %v2270
          %v2931 = vpack.c.b16 %v2283, %v2271
          %v2932 = vpack.c.b16 %v2284, %v2272
          %v2933 = vpack.c.b16 %v2285, %v2273
          %v2934 = vpack.c.b16 %v2286, %v2274
          %v2935 = vpack.c.b16 %v2287, %v2275
          %v2936 = vpack.c.b16 %v2300, %v2288
          %v2937 = vpack.c.b16 %v2301, %v2289
          %v2938 = vpack.c.b16 %v2302, %v2290
          %v2939 = vpack.c.b16 %v2303, %v2291
          %v2940 = vpack.c.b16 %v2304, %v2292
          %v2941 = vpack.c.b16 %v2305, %v2293
          %v2942 = vpack.c.b16 %v2306, %v2294
          %v2943 = vpack.c.b16 %v2307, %v2295
          %v2944 = vpack.c.b16 %v2308, %v2296
          %v2945 = vpack.c.b16 %v2309, %v2297
          %v2946 = vpack.c.b16 %v2310, %v2298
          %v2947 = vpack.c.b16 %v2311, %v2299
          %v2948 = vpack.c.b16 %v2324, %v2312
          %v2949 = vpack.c.b16 %v2325, %v2313
          %v2950 = vpack.c.b16 %v2326, %v2314
          %v2951 = vpack.c.b16 %v2327, %v2315
          %v2952 = vpack.c.b16 %v2328, %v2316
          %v2953 = vpack.c.b16 %v2329, %v2317
          %v2954 = vpack.c.b16 %v2330, %v2318
          %v2955 = vpack.c.b16 %v2331, %v2319
          %v2956 = vpack.c.b16 %v2332, %v2320
          %v2957 = vpack.c.b16 %v2333, %v2321
          %v2958 = vpack.c.b16 %v2334, %v2322
          %v2959 = vpack.c.b16 %v2335, %v2323
          %v2960 = vpack.c.b16 %v2348, %v2336
          %v2961 = vpack.c.b16 %v2349, %v2337
          %v2962 = vpack.c.b16 %v2350, %v2338
          %v2963 = vpack.c.b16 %v2351, %v2339
          %v2964 = vpack.c.b16 %v2352, %v2340
          %v2965 = vpack.c.b16 %v2353, %v2341
          %v2966 = vpack.c.b16 %v2354, %v2342
          %v2967 = vpack.c.b16 %v2355, %v2343
          %v2968 = vpack.c.b16 %v2356, %v2344
          %v2969 = vpack.c.b16 %v2357, %v2345
          %v2970 = vpack.c.b16 %v2358, %v2346
          %v2971 = vpack.c.b16 %v2359, %v2347
          %v2972 = vpack.c.b16 %v2372, %v2360
          %v2973 = vpack.c.b16 %v2373, %v2361
          %v2974 = vpack.c.b16 %v2374, %v2362
          %v2975 = vpack.c.b16 %v2375, %v2363
          %v2976 = vpack.c.b16 %v2376, %v2364
          %v2977 = vpack.c.b16 %v2377, %v2365
          %v2978 = vpack.c.b16 %v2378, %v2366
          %v2979 = vpack.c.b16 %v2379, %v2367
          %v2980 = vpack.c.b16 %v2380, %v2368
          %v2981 = vpack.c.b16 %v2381, %v2369
          %v2982 = vpack.c.b16 %v2382, %v2370
          %v2983 = vpack.c.b16 %v2383, %v2371
          %v2984 = vpack.c.b16 %v2396, %v2384
          %v2985 = vpack.c.b16 %v2397, %v2385
          %v2986 = vpack.c.b16 %v2398, %v2386
          %v2987 = vpack.c.b16 %v2399, %v2387
          %v2988 = vpack.c.b16 %v2400, %v2388
          %v2989 = vpack.c.b16 %v2401, %v2389
          %v2990 = vpack.c.b16 %v2402, %v2390
          %v2991 = vpack.c.b16 %v2403, %v2391
          %v2992 = vpack.c.b16 %v2404, %v2392
          %v2993 = vpack.c.b16 %v2405, %v2393
          %v2994 = vpack.c.b16 %v2406, %v2394
          %v2995 = vpack.c.b16 %v2407, %v2395
          %v2996 = vpack.c.b16 %v2420, %v2408
          %v2997 = vpack.c.b16 %v2421, %v2409
          %v2998 = vpack.c.b16 %v2422, %v2410
          %v2999 = vpack.c.b16 %v2423, %v2411
          %v3000 = vpack.c.b16 %v2424, %v2412
          %v3001 = vpack.c.b16 %v2425, %v2413
          %v3002 = vpack.c.b16 %v2426, %v2414
          %v3003 = vpack.c.b16 %v2427, %v2415
          %v3004 = vpack.c.b16 %v2428, %v2416
          %v3005 = vpack.c.b16 %v2429, %v2417
          %v3006 = vpack.c.b16 %v2430, %v2418
          %v3007 = vpack.c.b16 %v2431, %v2419
          %v3008 = vpack.c.b16 %v2444, %v2432
          %v3009 = vpack.c.b16 %v2445, %v2433
          %v3010 = vpack.c.b16 %v2446, %v2434
          %v3011 = vpack.c.b16 %v2447, %v2435
          %v3012 = vpack.c.b16 %v2448, %v2436
          %v3013 = vpack.c.b16 %v2449, %v2437
          %v3014 = vpack.c.b16 %v2450, %v2438
          %v3015 = vpack.c.b16 %v2451, %v2439
          %v3016 = vpack.c.b16 %v2452, %v2440
          %v3017 = vpack.c.b16 %v2453, %v2441
          %v3018 = vpack.c.b16 %v2454, %v2442
          %v3019 = vpack.c.b16 %v2455, %v2443
          %v3020 = vpack.c.b16 %v2468, %v2456
          %v3021 = vpack.c.b16 %v2469, %v2457
          %v3022 = vpack.c.b16 %v2470, %v2458
          %v3023 = vpack.c.b16 %v2471, %v2459
          %v3024 = vpack.c.b16 %v2472, %v2460
          %v3025 = vpack.c.b16 %v2473, %v2461
          %v3026 = vpack.c.b16 %v2474, %v2462
          %v3027 = vpack.c.b16 %v2475, %v2463
          %v3028 = vpack.c.b16 %v2476, %v2464
          %v3029 = vpack.c.b16 %v2477, %v2465
          %v3030 = vpack.c.b16 %v2478, %v2466
          %v3031 = vpack.c.b16 %v2479, %v2467
          %v3032 = vpack.c.b16 %v2492, %v2480
          %v3033 = vpack.c.b16 %v2493, %v2481
          %v3034 = vpack.c.b16 %v2494, %v2482
          %v3035 = vpack.c.b16 %v2495, %v2483
          %v3036 = vpack.c.b16 %v2496, %v2484
          %v3037 = vpack.c.b16 %v2497, %v2485
          %v3038 = vpack.c.b16 %v2498, %v2486
          %v3039 = vpack.c.b16 %v2499, %v2487
          %v3040 = vpack.c.b16 %v2500, %v2488
          %v3041 = vpack.c.b16 %v2501, %v2489
          %v3042 = vpack.c.b16 %v2502, %v2490
          %v3043 = vpack.c.b16 %v2503, %v2491
          %v3044 = vpack.c.b16 %v2516, %v2504
          %v3045 = vpack.c.b16 %v2517, %v2505
          %v3046 = vpack.c.b16 %v2518, %v2506
          %v3047 = vpack.c.b16 %v2519, %v2507
          %v3048 = vpack.c.b16 %v2520, %v2508
          %v3049 = vpack.c.b16 %v2521, %v2509
          %v3050 = vpack.c.b16 %v2522, %v2510
          %v3051 = vpack.c.b16 %v2523, %v2511
          %v3052 = vpack.c.b16 %v2524, %v2512
          %v3053 = vpack.c.b16 %v2525, %v2513
          %v3054 = vpack.c.b16 %v2526, %v2514
          %v3055 = vpack.c.b16 %v2527, %v2515
          %v3056 = vpack.c.b16 %v2540, %v2528
          %v3057 = vpack.c.b16 %v2541, %v2529
          %v3058 = vpack.c.b16 %v2542, %v2530
          %v3059 = vpack.c.b16 %v2543, %v2531
          %v3060 = vpack.c.b16 %v2544, %v2532
          %v3061 = vpack.c.b16 %v2545, %v2533
          %v3062 = vpack.c.b16 %v2546, %v2534
          %v3063 = vpack.c.b16 %v2547, %v2535
          %v3064 = vpack.c.b16 %v2548, %v2536
          %v3065 = vpack.c.b16 %v2549, %v2537
          %v3066 = vpack.c.b16 %v2550, %v2538
          %v3067 = vpack.c.b16 %v2551, %v2539
          %v3068 = vpack.c.b16 %v2564, %v2552
          %v3069 = vpack.c.b16 %v2565, %v2553
          %v3070 = vpack.c.b16 %v2566, %v2554
          %v3071 = vpack.c.b16 %v2567, %v2555
          %v3072 = vpack.c.b16 %v2568, %v2556
          %v3073 = vpack.c.b16 %v2569, %v2557
          %v3074 = vpack.c.b16 %v2570, %v2558
          %v3075 = vpack.c.b16 %v2571, %v2559
          %v3076 = vpack.c.b16 %v2572, %v2560
          %v3077 = vpack.c.b16 %v2573, %v2561
          %v3078 = vpack.c.b16 %v2574, %v2562
          %v3079 = vpack.c.b16 %v2575, %v2563
          %v3080 = vpack.c.b16 %v2588, %v2576
          %v3081 = vpack.c.b16 %v2589, %v2577
          %v3082 = vpack.c.b16 %v2590, %v2578
          %v3083 = vpack.c.b16 %v2591, %v2579
          %v3084 = vpack.c.b16 %v2592, %v2580
          %v3085 = vpack.c.b16 %v2593, %v2581
          %v3086 = vpack.c.b16 %v2594, %v2582
          %v3087 = vpack.c.b16 %v2595, %v2583
          %v3088 = vpack.c.b16 %v2596, %v2584
          %v3089 = vpack.c.b16 %v2597, %v2585
          %v3090 = vpack.c.b16 %v2598, %v2586
          %v3091 = vpack.c.b16 %v2599, %v2587
          %v3092 = vpack.c.b16 %v2612, %v2600
          %v3093 = vpack.c.b16 %v2613, %v2601
          %v3094 = vpack.c.b16 %v2614, %v2602
          %v3095 = vpack.c.b16 %v2615, %v2603
          %v3096 = vpack.c.b16 %v2616, %v2604
          %v3097 = vpack.c.b16 %v2617, %v2605
          %v3098 = vpack.c.b16 %v2618, %v2606
          %v3099 = vpack.c.b16 %v2619, %v2607
          %v3100 = vpack.c.b16 %v2620, %v2608
          %v3101 = vpack.c.b16 %v2621, %v2609
          %v3102 = vpack.c.b16 %v2622, %v2610
          %v3103 = vpack.c.b16 %v2623, %v2611
          %v3104 = vpack.c.b16 %v2636, %v2624
          %v3105 = vpack.c.b16 %v2637, %v2625
          %v3106 = vpack.c.b16 %v2638, %v2626
          %v3107 = vpack.c.b16 %v2639, %v2627
          %v3108 = vpack.c.b16 %v2640, %v2628
          %v3109 = vpack.c.b16 %v2641, %v2629
          %v3110 = vpack.c.b16 %v2642, %v2630
          %v3111 = vpack.c.b16 %v2643, %v2631
          %v3112 = vpack.c.b16 %v2644, %v2632
          %v3113 = vpack.c.b16 %v2645, %v2633
          %v3114 = vpack.c.b16 %v2646, %v2634
          %v3115 = vpack.c.b16 %v2647, %v2635
          %v3116 = vpack.c.b16 %v2660, %v2648
          %v3117 = vpack.c.b16 %v2661, %v2649
          %v3118 = vpack.c.b16 %v2662, %v2650
          %v3119 = vpack.c.b16 %v2663, %v2651
          %v3120 = vpack.c.b16 %v2664, %v2652
          %v3121 = vpack.c.b16 %v2665, %v2653
          %v3122 = vpack.c.b16 %v2666, %v2654
          %v3123 = vpack.c.b16 %v2667, %v2655
          %v3124 = vpack.c.b16 %v2668, %v2656
          %v3125 = vpack.c.b16 %v2669, %v2657
          %v3126 = vpack.c.b16 %v2670, %v2658
          %v3127 = vpack.c.b16 %v2671, %v2659
          %v3128 = vpack.c.b16 %v2684, %v2672
          %v3129 = vpack.c.b16 %v2685, %v2673
          %v3130 = vpack.c.b16 %v2686, %v2674
          %v3131 = vpack.c.b16 %v2687, %v2675
          %v3132 = vpack.c.b16 %v2688, %v2676
          %v3133 = vpack.c.b16 %v2689, %v2677
          %v3134 = vpack.c.b16 %v2690, %v2678
          %v3135 = vpack.c.b16 %v2691, %v2679
          %v3136 = vpack.c.b16 %v2692, %v2680
          %v3137 = vpack.c.b16 %v2693, %v2681
          %v3138 = vpack.c.b16 %v2694, %v2682
          %v3139 = vpack.c.b16 %v2695, %v2683
          %v3140 = vpack.c.b16 %v2708, %v2696
          %v3141 = vpack.c.b16 %v2709, %v2697
          %v3142 = vpack.c.b16 %v2710, %v2698
          %v3143 = vpack.c.b16 %v2711, %v2699
          %v3144 = vpack.c.b16 %v2712, %v2700
          %v3145 = vpack.c.b16 %v2713, %v2701
          %v3146 = vpack.c.b16 %v2714, %v2702
          %v3147 = vpack.c.b16 %v2715, %v2703
          %v3148 = vpack.c.b16 %v2716, %v2704
          %v3149 = vpack.c.b16 %v2717, %v2705
          %v3150 = vpack.c.b16 %v2718, %v2706
          %v3151 = vpack.c.b16 %v2719, %v2707
          %v3152 = vpack.c.b16 %v2732, %v2720
          %v3153 = vpack.c.b16 %v2733, %v2721
          %v3154 = vpack.c.b16 %v2734, %v2722
          %v3155 = vpack.c.b16 %v2735, %v2723
          %v3156 = vpack.c.b16 %v2736, %v2724
          %v3157 = vpack.c.b16 %v2737, %v2725
          %v3158 = vpack.c.b16 %v2738, %v2726
          %v3159 = vpack.c.b16 %v2739, %v2727
          %v3160 = vpack.c.b16 %v2740, %v2728
          %v3161 = vpack.c.b16 %v2741, %v2729
          %v3162 = vpack.c.b16 %v2742, %v2730
          %v3163 = vpack.c.b16 %v2743, %v2731
          %v3164 = vpack.c.b16 %v2756, %v2744
          %v3165 = vpack.c.b16 %v2757, %v2745
          %v3166 = vpack.c.b16 %v2758, %v2746
          %v3167 = vpack.c.b16 %v2759, %v2747
          %v3168 = vpack.c.b16 %v2760, %v2748
          %v3169 = vpack.c.b16 %v2761, %v2749
          %v3170 = vpack.c.b16 %v2762, %v2750
          %v3171 = vpack.c.b16 %v2763, %v2751
          %v3172 = vpack.c.b16 %v2764, %v2752
          %v3173 = vpack.c.b16 %v2765, %v2753
          %v3174 = vpack.c.b16 %v2766, %v2754
          %v3175 = vpack.c.b16 %v2767, %v2755
          %v3176 = vpack.c.b16 %v2780, %v2768
          %v3177 = vpack.c.b16 %v2781, %v2769
          %v3178 = vpack.c.b16 %v2782, %v2770
          %v3179 = vpack.c.b16 %v2783, %v2771
          %v3180 = vpack.c.b16 %v2784, %v2772
          %v3181 = vpack.c.b16 %v2785, %v2773
          %v3182 = vpack.c.b16 %v2786, %v2774
          %v3183 = vpack.c.b16 %v2787, %v2775
          %v3184 = vpack.c.b16 %v2788, %v2776
          %v3185 = vpack.c.b16 %v2789, %v2777
          %v3186 = vpack.c.b16 %v2790, %v2778
          %v3187 = vpack.c.b16 %v2791, %v2779
          %v3188 = vpack.c.b16 %v2804, %v2792
          %v3189 = vpack.c.b16 %v2805, %v2793
          %v3190 = vpack.c.b16 %v2806, %v2794
          %v3191 = vpack.c.b16 %v2807, %v2795
          %v3192 = vpack.c.b16 %v2808, %v2796
          %v3193 = vpack.c.b16 %v2809, %v2797
          %v3194 = vpack.c.b16 %v2810, %v2798
          %v3195 = vpack.c.b16 %v2811, %v2799
          %v3196 = vpack.c.b16 %v2812, %v2800
          %v3197 = vpack.c.b16 %v2813, %v2801
          %v3198 = vpack.c.b16 %v2814, %v2802
          %v3199 = vpack.c.b16 %v2815, %v2803
          %3584 = vmatpush.bf16.msra.mxu0 %v2900
          %3585 = vmatpush.bf16.msra.mxu0 %v2888
          %3586 = vmatpush.bf16.msra.mxu0 %v2876
          %3587 = vmatpush.bf16.msra.mxu0 %v2864
          %3588 = vmatpush.bf16.msra.mxu0 %v2852
          %3589 = vmatpush.bf16.msra.mxu0 %v2840
          %3590 = vmatpush.bf16.msra.mxu0 %v2828
          %3591 = vmatpush.bf16.msra.mxu0 %v2816
          %3592 = vmatmul.bf16.gmra.mxu0 %v1248
          %v3593 = vpop.f32.mrf.mxu0
          %v3594 = vadd.f32 %v1640, %v3593
          %v3595 = vpop.f32.mrf.mxu0
          %v3596 = vadd.f32 %v1640, %v3595
          %3597 = vdwg.mxu0
          %3598 = vmatpush.bf16.msra.mxu0 %v2996
          %3599 = vmatpush.bf16.msra.mxu0 %v2984
          %3600 = vmatpush.bf16.msra.mxu0 %v2972
          %3601 = vmatpush.bf16.msra.mxu0 %v2960
          %3602 = vmatpush.bf16.msra.mxu0 %v2948
          %3603 = vmatpush.bf16.msra.mxu0 %v2936
          %3604 = vmatpush.bf16.msra.mxu0 %v2924
          %3605 = vmatpush.bf16.msra.mxu0 %v2912
          %3606 = vmatmul.bf16.gmra.mxu0 %v1249
          %v3607 = vpop.f32.mrf.mxu0
          %v3608 = vadd.f32 %v3594, %v3607
          %v3609 = vpop.f32.mrf.mxu0
          %v3610 = vadd.f32 %v3596, %v3609
          %3611 = vdwg.mxu0
          %3612 = vmatpush.bf16.msra.mxu0 %v3092
          %3613 = vmatpush.bf16.msra.mxu0 %v3080
          %3614 = vmatpush.bf16.msra.mxu0 %v3068
          %3615 = vmatpush.bf16.msra.mxu0 %v3056
          %3616 = vmatpush.bf16.msra.mxu0 %v3044
          %3617 = vmatpush.bf16.msra.mxu0 %v3032
          %3618 = vmatpush.bf16.msra.mxu0 %v3020
          %3619 = vmatpush.bf16.msra.mxu0 %v3008
          %3620 = vmatmul.bf16.gmra.mxu0 %v1250
          %v3621 = vpop.f32.mrf.mxu0
          %v3622 = vadd.f32 %v3608, %v3621
          %v3623 = vpop.f32.mrf.mxu0
          %v3624 = vadd.f32 %v3610, %v3623
          %3625 = vdwg.mxu0
          %3626 = vmatpush.bf16.msra.mxu0 %v3188
          %3627 = vmatpush.bf16.msra.mxu0 %v3176
          %3628 = vmatpush.bf16.msra.mxu0 %v3164
          %3629 = vmatpush.bf16.msra.mxu0 %v3152
          %3630 = vmatpush.bf16.msra.mxu0 %v3140
          %3631 = vmatpush.bf16.msra.mxu0 %v3128
          %3632 = vmatpush.bf16.msra.mxu0 %v3116
          %3633 = vmatpush.bf16.msra.mxu0 %v3104
          %3634 = vmatmul.bf16.gmra.mxu0 %v1251
          %v3635 = vpop.f32.mrf.mxu0
          %v3636 = vadd.f32 %v3622, %v3635
          %v3637 = vpop.f32.mrf.mxu0
          %v3638 = vadd.f32 %v3624, %v3637
          %3639 = vdwg.mxu0
          %3640 = vmatpush.bf16.msra.mxu0 %v2901
          %3641 = vmatpush.bf16.msra.mxu0 %v2889
          %3642 = vmatpush.bf16.msra.mxu0 %v2877
          %3643 = vmatpush.bf16.msra.mxu0 %v2865
          %3644 = vmatpush.bf16.msra.mxu0 %v2853
          %3645 = vmatpush.bf16.msra.mxu0 %v2841
          %3646 = vmatpush.bf16.msra.mxu0 %v2829
          %3647 = vmatpush.bf16.msra.mxu0 %v2817
          %3648 = vmatmul.bf16.gmra.mxu0 %v1248
          %v3649 = vpop.f32.mrf.mxu0
          %v3650 = vadd.f32 %v1641, %v3649
          %v3651 = vpop.f32.mrf.mxu0
          %v3652 = vadd.f32 %v1641, %v3651
          %3653 = vdwg.mxu0
          %3654 = vmatpush.bf16.msra.mxu0 %v2997
          %3655 = vmatpush.bf16.msra.mxu0 %v2985
          %3656 = vmatpush.bf16.msra.mxu0 %v2973
          %3657 = vmatpush.bf16.msra.mxu0 %v2961
          %3658 = vmatpush.bf16.msra.mxu0 %v2949
          %3659 = vmatpush.bf16.msra.mxu0 %v2937
          %3660 = vmatpush.bf16.msra.mxu0 %v2925
          %3661 = vmatpush.bf16.msra.mxu0 %v2913
          %3662 = vmatmul.bf16.gmra.mxu0 %v1249
          %v3663 = vpop.f32.mrf.mxu0
          %v3664 = vadd.f32 %v3650, %v3663
          %v3665 = vpop.f32.mrf.mxu0
          %v3666 = vadd.f32 %v3652, %v3665
          %3667 = vdwg.mxu0
          %3668 = vmatpush.bf16.msra.mxu0 %v3093
          %3669 = vmatpush.bf16.msra.mxu0 %v3081
          %3670 = vmatpush.bf16.msra.mxu0 %v3069
          %3671 = vmatpush.bf16.msra.mxu0 %v3057
          %3672 = vmatpush.bf16.msra.mxu0 %v3045
          %3673 = vmatpush.bf16.msra.mxu0 %v3033
          %3674 = vmatpush.bf16.msra.mxu0 %v3021
          %3675 = vmatpush.bf16.msra.mxu0 %v3009
          %3676 = vmatmul.bf16.gmra.mxu0 %v1250
          %v3677 = vpop.f32.mrf.mxu0
          %v3678 = vadd.f32 %v3664, %v3677
          %v3679 = vpop.f32.mrf.mxu0
          %v3680 = vadd.f32 %v3666, %v3679
          %3681 = vdwg.mxu0
          %3682 = vmatpush.bf16.msra.mxu0 %v3189
          %3683 = vmatpush.bf16.msra.mxu0 %v3177
          %3684 = vmatpush.bf16.msra.mxu0 %v3165
          %3685 = vmatpush.bf16.msra.mxu0 %v3153
          %3686 = vmatpush.bf16.msra.mxu0 %v3141
          %3687 = vmatpush.bf16.msra.mxu0 %v3129
          %3688 = vmatpush.bf16.msra.mxu0 %v3117
          %3689 = vmatpush.bf16.msra.mxu0 %v3105
          %3690 = vmatmul.bf16.gmra.mxu0 %v1251
          %v3691 = vpop.f32.mrf.mxu0
          %v3692 = vadd.f32 %v3678, %v3691
          %v3693 = vpop.f32.mrf.mxu0
          %v3694 = vadd.f32 %v3680, %v3693
          %3695 = vdwg.mxu0
          %3696 = vmatpush.bf16.msra.mxu0 %v2902
          %3697 = vmatpush.bf16.msra.mxu0 %v2890
          %3698 = vmatpush.bf16.msra.mxu0 %v2878
          %3699 = vmatpush.bf16.msra.mxu0 %v2866
          %3700 = vmatpush.bf16.msra.mxu0 %v2854
          %3701 = vmatpush.bf16.msra.mxu0 %v2842
          %3702 = vmatpush.bf16.msra.mxu0 %v2830
          %3703 = vmatpush.bf16.msra.mxu0 %v2818
          %3704 = vmatmul.bf16.gmra.mxu0 %v1248
          %v3705 = vpop.f32.mrf.mxu0
          %v3706 = vadd.f32 %v1642, %v3705
          %v3707 = vpop.f32.mrf.mxu0
          %v3708 = vadd.f32 %v1642, %v3707
          %3709 = vdwg.mxu0
          %3710 = vmatpush.bf16.msra.mxu0 %v2998
          %3711 = vmatpush.bf16.msra.mxu0 %v2986
          %3712 = vmatpush.bf16.msra.mxu0 %v2974
          %3713 = vmatpush.bf16.msra.mxu0 %v2962
          %3714 = vmatpush.bf16.msra.mxu0 %v2950
          %3715 = vmatpush.bf16.msra.mxu0 %v2938
          %3716 = vmatpush.bf16.msra.mxu0 %v2926
          %3717 = vmatpush.bf16.msra.mxu0 %v2914
          %3718 = vmatmul.bf16.gmra.mxu0 %v1249
          %v3719 = vpop.f32.mrf.mxu0
          %v3720 = vadd.f32 %v3706, %v3719
          %v3721 = vpop.f32.mrf.mxu0
          %v3722 = vadd.f32 %v3708, %v3721
          %3723 = vdwg.mxu0
          %3724 = vmatpush.bf16.msra.mxu0 %v3094
          %3725 = vmatpush.bf16.msra.mxu0 %v3082
          %3726 = vmatpush.bf16.msra.mxu0 %v3070
          %3727 = vmatpush.bf16.msra.mxu0 %v3058
          %3728 = vmatpush.bf16.msra.mxu0 %v3046
          %3729 = vmatpush.bf16.msra.mxu0 %v3034
          %3730 = vmatpush.bf16.msra.mxu0 %v3022
          %3731 = vmatpush.bf16.msra.mxu0 %v3010
          %3732 = vmatmul.bf16.gmra.mxu0 %v1250
          %v3733 = vpop.f32.mrf.mxu0
          %v3734 = vadd.f32 %v3720, %v3733
          %v3735 = vpop.f32.mrf.mxu0
          %v3736 = vadd.f32 %v3722, %v3735
          %3737 = vdwg.mxu0
          %3738 = vmatpush.bf16.msra.mxu0 %v3190
          %3739 = vmatpush.bf16.msra.mxu0 %v3178
          %3740 = vmatpush.bf16.msra.mxu0 %v3166
          %3741 = vmatpush.bf16.msra.mxu0 %v3154
          %3742 = vmatpush.bf16.msra.mxu0 %v3142
          %3743 = vmatpush.bf16.msra.mxu0 %v3130
          %3744 = vmatpush.bf16.msra.mxu0 %v3118
          %3745 = vmatpush.bf16.msra.mxu0 %v3106
          %3746 = vmatmul.bf16.gmra.mxu0 %v1251
          %v3747 = vpop.f32.mrf.mxu0
          %v3748 = vadd.f32 %v3734, %v3747
          %v3749 = vpop.f32.mrf.mxu0
          %v3750 = vadd.f32 %v3736, %v3749
          %3751 = vdwg.mxu0
          %3752 = vmatpush.bf16.msra.mxu0 %v2903
          %3753 = vmatpush.bf16.msra.mxu0 %v2891
          %3754 = vmatpush.bf16.msra.mxu0 %v2879
          %3755 = vmatpush.bf16.msra.mxu0 %v2867
          %3756 = vmatpush.bf16.msra.mxu0 %v2855
          %3757 = vmatpush.bf16.msra.mxu0 %v2843
          %3758 = vmatpush.bf16.msra.mxu0 %v2831
          %3759 = vmatpush.bf16.msra.mxu0 %v2819
          %3760 = vmatmul.bf16.gmra.mxu0 %v1248
          %v3761 = vpop.f32.mrf.mxu0
          %v3762 = vadd.f32 %v1643, %v3761
          %v3763 = vpop.f32.mrf.mxu0
          %v3764 = vadd.f32 %v1643, %v3763
          %3765 = vdwg.mxu0
          %3766 = vmatpush.bf16.msra.mxu0 %v2999
          %3767 = vmatpush.bf16.msra.mxu0 %v2987
          %3768 = vmatpush.bf16.msra.mxu0 %v2975
          %3769 = vmatpush.bf16.msra.mxu0 %v2963
          %3770 = vmatpush.bf16.msra.mxu0 %v2951
          %3771 = vmatpush.bf16.msra.mxu0 %v2939
          %3772 = vmatpush.bf16.msra.mxu0 %v2927
          %3773 = vmatpush.bf16.msra.mxu0 %v2915
          %3774 = vmatmul.bf16.gmra.mxu0 %v1249
          %v3775 = vpop.f32.mrf.mxu0
          %v3776 = vadd.f32 %v3762, %v3775
          %v3777 = vpop.f32.mrf.mxu0
          %v3778 = vadd.f32 %v3764, %v3777
          %3779 = vdwg.mxu0
          %3780 = vmatpush.bf16.msra.mxu0 %v3095
          %3781 = vmatpush.bf16.msra.mxu0 %v3083
          %3782 = vmatpush.bf16.msra.mxu0 %v3071
          %3783 = vmatpush.bf16.msra.mxu0 %v3059
          %3784 = vmatpush.bf16.msra.mxu0 %v3047
          %3785 = vmatpush.bf16.msra.mxu0 %v3035
          %3786 = vmatpush.bf16.msra.mxu0 %v3023
          %3787 = vmatpush.bf16.msra.mxu0 %v3011
          %3788 = vmatmul.bf16.gmra.mxu0 %v1250
          %v3789 = vpop.f32.mrf.mxu0
          %v3790 = vadd.f32 %v3776, %v3789
          %v3791 = vpop.f32.mrf.mxu0
          %v3792 = vadd.f32 %v3778, %v3791
          %3793 = vdwg.mxu0
          %3794 = vmatpush.bf16.msra.mxu0 %v3191
          %3795 = vmatpush.bf16.msra.mxu0 %v3179
          %3796 = vmatpush.bf16.msra.mxu0 %v3167
          %3797 = vmatpush.bf16.msra.mxu0 %v3155
          %3798 = vmatpush.bf16.msra.mxu0 %v3143
          %3799 = vmatpush.bf16.msra.mxu0 %v3131
          %3800 = vmatpush.bf16.msra.mxu0 %v3119
          %3801 = vmatpush.bf16.msra.mxu0 %v3107
          %3802 = vmatmul.bf16.gmra.mxu0 %v1251
          %v3803 = vpop.f32.mrf.mxu0
          %v3804 = vadd.f32 %v3790, %v3803
          %v3805 = vpop.f32.mrf.mxu0
          %v3806 = vadd.f32 %v3792, %v3805
          %3807 = vdwg.mxu0
          %3808 = vmatpush.bf16.msra.mxu0 %v2904
          %3809 = vmatpush.bf16.msra.mxu0 %v2892
          %3810 = vmatpush.bf16.msra.mxu0 %v2880
          %3811 = vmatpush.bf16.msra.mxu0 %v2868
          %3812 = vmatpush.bf16.msra.mxu0 %v2856
          %3813 = vmatpush.bf16.msra.mxu0 %v2844
          %3814 = vmatpush.bf16.msra.mxu0 %v2832
          %3815 = vmatpush.bf16.msra.mxu0 %v2820
          %3816 = vmatmul.bf16.gmra.mxu0 %v1248
          %v3817 = vpop.f32.mrf.mxu0
          %v3818 = vadd.f32 %v1644, %v3817
          %v3819 = vpop.f32.mrf.mxu0
          %v3820 = vadd.f32 %v1644, %v3819
          %3821 = vdwg.mxu0
          %3822 = vmatpush.bf16.msra.mxu0 %v3000
          %3823 = vmatpush.bf16.msra.mxu0 %v2988
          %3824 = vmatpush.bf16.msra.mxu0 %v2976
          %3825 = vmatpush.bf16.msra.mxu0 %v2964
          %3826 = vmatpush.bf16.msra.mxu0 %v2952
          %3827 = vmatpush.bf16.msra.mxu0 %v2940
          %3828 = vmatpush.bf16.msra.mxu0 %v2928
          %3829 = vmatpush.bf16.msra.mxu0 %v2916
          %3830 = vmatmul.bf16.gmra.mxu0 %v1249
          %v3831 = vpop.f32.mrf.mxu0
          %v3832 = vadd.f32 %v3818, %v3831
          %v3833 = vpop.f32.mrf.mxu0
          %v3834 = vadd.f32 %v3820, %v3833
          %3835 = vdwg.mxu0
          %3836 = vmatpush.bf16.msra.mxu0 %v3096
          %3837 = vmatpush.bf16.msra.mxu0 %v3084
          %3838 = vmatpush.bf16.msra.mxu0 %v3072
          %3839 = vmatpush.bf16.msra.mxu0 %v3060
          %3840 = vmatpush.bf16.msra.mxu0 %v3048
          %3841 = vmatpush.bf16.msra.mxu0 %v3036
          %3842 = vmatpush.bf16.msra.mxu0 %v3024
          %3843 = vmatpush.bf16.msra.mxu0 %v3012
          %3844 = vmatmul.bf16.gmra.mxu0 %v1250
          %v3845 = vpop.f32.mrf.mxu0
          %v3846 = vadd.f32 %v3832, %v3845
          %v3847 = vpop.f32.mrf.mxu0
          %v3848 = vadd.f32 %v3834, %v3847
          %3849 = vdwg.mxu0
          %3850 = vmatpush.bf16.msra.mxu0 %v3192
          %3851 = vmatpush.bf16.msra.mxu0 %v3180
          %3852 = vmatpush.bf16.msra.mxu0 %v3168
          %3853 = vmatpush.bf16.msra.mxu0 %v3156
          %3854 = vmatpush.bf16.msra.mxu0 %v3144
          %3855 = vmatpush.bf16.msra.mxu0 %v3132
          %3856 = vmatpush.bf16.msra.mxu0 %v3120
          %3857 = vmatpush.bf16.msra.mxu0 %v3108
          %3858 = vmatmul.bf16.gmra.mxu0 %v1251
          %v3859 = vpop.f32.mrf.mxu0
          %v3860 = vadd.f32 %v3846, %v3859
          %v3861 = vpop.f32.mrf.mxu0
          %v3862 = vadd.f32 %v3848, %v3861
          %3863 = vdwg.mxu0
          %3864 = vmatpush.bf16.msra.mxu0 %v2905
          %3865 = vmatpush.bf16.msra.mxu0 %v2893
          %3866 = vmatpush.bf16.msra.mxu0 %v2881
          %3867 = vmatpush.bf16.msra.mxu0 %v2869
          %3868 = vmatpush.bf16.msra.mxu0 %v2857
          %3869 = vmatpush.bf16.msra.mxu0 %v2845
          %3870 = vmatpush.bf16.msra.mxu0 %v2833
          %3871 = vmatpush.bf16.msra.mxu0 %v2821
          %3872 = vmatmul.bf16.gmra.mxu0 %v1248
          %v3873 = vpop.f32.mrf.mxu0
          %v3874 = vadd.f32 %v1645, %v3873
          %v3875 = vpop.f32.mrf.mxu0
          %v3876 = vadd.f32 %v1645, %v3875
          %3877 = vdwg.mxu0
          %3878 = vmatpush.bf16.msra.mxu0 %v3001
          %3879 = vmatpush.bf16.msra.mxu0 %v2989
          %3880 = vmatpush.bf16.msra.mxu0 %v2977
          %3881 = vmatpush.bf16.msra.mxu0 %v2965
          %3882 = vmatpush.bf16.msra.mxu0 %v2953
          %3883 = vmatpush.bf16.msra.mxu0 %v2941
          %3884 = vmatpush.bf16.msra.mxu0 %v2929
          %3885 = vmatpush.bf16.msra.mxu0 %v2917
          %3886 = vmatmul.bf16.gmra.mxu0 %v1249
          %v3887 = vpop.f32.mrf.mxu0
          %v3888 = vadd.f32 %v3874, %v3887
          %v3889 = vpop.f32.mrf.mxu0
          %v3890 = vadd.f32 %v3876, %v3889
          %3891 = vdwg.mxu0
          %3892 = vmatpush.bf16.msra.mxu0 %v3097
          %3893 = vmatpush.bf16.msra.mxu0 %v3085
          %3894 = vmatpush.bf16.msra.mxu0 %v3073
          %3895 = vmatpush.bf16.msra.mxu0 %v3061
          %3896 = vmatpush.bf16.msra.mxu0 %v3049
          %3897 = vmatpush.bf16.msra.mxu0 %v3037
          %3898 = vmatpush.bf16.msra.mxu0 %v3025
          %3899 = vmatpush.bf16.msra.mxu0 %v3013
          %3900 = vmatmul.bf16.gmra.mxu0 %v1250
          %v3901 = vpop.f32.mrf.mxu0
          %v3902 = vadd.f32 %v3888, %v3901
          %v3903 = vpop.f32.mrf.mxu0
          %v3904 = vadd.f32 %v3890, %v3903
          %3905 = vdwg.mxu0
          %3906 = vmatpush.bf16.msra.mxu0 %v3193
          %3907 = vmatpush.bf16.msra.mxu0 %v3181
          %3908 = vmatpush.bf16.msra.mxu0 %v3169
          %3909 = vmatpush.bf16.msra.mxu0 %v3157
          %3910 = vmatpush.bf16.msra.mxu0 %v3145
          %3911 = vmatpush.bf16.msra.mxu0 %v3133
          %3912 = vmatpush.bf16.msra.mxu0 %v3121
          %3913 = vmatpush.bf16.msra.mxu0 %v3109
          %3914 = vmatmul.bf16.gmra.mxu0 %v1251
          %v3915 = vpop.f32.mrf.mxu0
          %v3916 = vadd.f32 %v3902, %v3915
          %v3917 = vpop.f32.mrf.mxu0
          %v3918 = vadd.f32 %v3904, %v3917
          %3919 = vdwg.mxu0
          %3920 = vmatpush.bf16.msra.mxu0 %v2906
          %3921 = vmatpush.bf16.msra.mxu0 %v2894
          %3922 = vmatpush.bf16.msra.mxu0 %v2882
          %3923 = vmatpush.bf16.msra.mxu0 %v2870
          %3924 = vmatpush.bf16.msra.mxu0 %v2858
          %3925 = vmatpush.bf16.msra.mxu0 %v2846
          %3926 = vmatpush.bf16.msra.mxu0 %v2834
          %3927 = vmatpush.bf16.msra.mxu0 %v2822
          %3928 = vmatmul.bf16.gmra.mxu0 %v1248
          %v3929 = vpop.f32.mrf.mxu0
          %v3930 = vadd.f32 %v1646, %v3929
          %v3931 = vpop.f32.mrf.mxu0
          %v3932 = vadd.f32 %v1646, %v3931
          %3933 = vdwg.mxu0
          %3934 = vmatpush.bf16.msra.mxu0 %v3002
          %3935 = vmatpush.bf16.msra.mxu0 %v2990
          %3936 = vmatpush.bf16.msra.mxu0 %v2978
          %3937 = vmatpush.bf16.msra.mxu0 %v2966
          %3938 = vmatpush.bf16.msra.mxu0 %v2954
          %3939 = vmatpush.bf16.msra.mxu0 %v2942
          %3940 = vmatpush.bf16.msra.mxu0 %v2930
          %3941 = vmatpush.bf16.msra.mxu0 %v2918
          %3942 = vmatmul.bf16.gmra.mxu0 %v1249
          %v3943 = vpop.f32.mrf.mxu0
          %v3944 = vadd.f32 %v3930, %v3943
          %v3945 = vpop.f32.mrf.mxu0
          %v3946 = vadd.f32 %v3932, %v3945
          %3947 = vdwg.mxu0
          %3948 = vmatpush.bf16.msra.mxu0 %v3098
          %3949 = vmatpush.bf16.msra.mxu0 %v3086
          %3950 = vmatpush.bf16.msra.mxu0 %v3074
          %3951 = vmatpush.bf16.msra.mxu0 %v3062
          %3952 = vmatpush.bf16.msra.mxu0 %v3050
          %3953 = vmatpush.bf16.msra.mxu0 %v3038
          %3954 = vmatpush.bf16.msra.mxu0 %v3026
          %3955 = vmatpush.bf16.msra.mxu0 %v3014
          %3956 = vmatmul.bf16.gmra.mxu0 %v1250
          %v3957 = vpop.f32.mrf.mxu0
          %v3958 = vadd.f32 %v3944, %v3957
          %v3959 = vpop.f32.mrf.mxu0
          %v3960 = vadd.f32 %v3946, %v3959
          %3961 = vdwg.mxu0
          %3962 = vmatpush.bf16.msra.mxu0 %v3194
          %3963 = vmatpush.bf16.msra.mxu0 %v3182
          %3964 = vmatpush.bf16.msra.mxu0 %v3170
          %3965 = vmatpush.bf16.msra.mxu0 %v3158
          %3966 = vmatpush.bf16.msra.mxu0 %v3146
          %3967 = vmatpush.bf16.msra.mxu0 %v3134
          %3968 = vmatpush.bf16.msra.mxu0 %v3122
          %3969 = vmatpush.bf16.msra.mxu0 %v3110
          %3970 = vmatmul.bf16.gmra.mxu0 %v1251
          %v3971 = vpop.f32.mrf.mxu0
          %v3972 = vadd.f32 %v3958, %v3971
          %v3973 = vpop.f32.mrf.mxu0
          %v3974 = vadd.f32 %v3960, %v3973
          %3975 = vdwg.mxu0
          %3976 = vmatpush.bf16.msra.mxu0 %v2907
          %3977 = vmatpush.bf16.msra.mxu0 %v2895
          %3978 = vmatpush.bf16.msra.mxu0 %v2883
          %3979 = vmatpush.bf16.msra.mxu0 %v2871
          %3980 = vmatpush.bf16.msra.mxu0 %v2859
          %3981 = vmatpush.bf16.msra.mxu0 %v2847
          %3982 = vmatpush.bf16.msra.mxu0 %v2835
          %3983 = vmatpush.bf16.msra.mxu0 %v2823
          %3984 = vmatmul.bf16.gmra.mxu0 %v1248
          %v3985 = vpop.f32.mrf.mxu0
          %v3986 = vadd.f32 %v1647, %v3985
          %v3987 = vpop.f32.mrf.mxu0
          %v3988 = vadd.f32 %v1647, %v3987
          %3989 = vdwg.mxu0
          %3990 = vmatpush.bf16.msra.mxu0 %v3003
          %3991 = vmatpush.bf16.msra.mxu0 %v2991
          %3992 = vmatpush.bf16.msra.mxu0 %v2979
          %3993 = vmatpush.bf16.msra.mxu0 %v2967
          %3994 = vmatpush.bf16.msra.mxu0 %v2955
          %3995 = vmatpush.bf16.msra.mxu0 %v2943
          %3996 = vmatpush.bf16.msra.mxu0 %v2931
          %3997 = vmatpush.bf16.msra.mxu0 %v2919
          %3998 = vmatmul.bf16.gmra.mxu0 %v1249
          %v3999 = vpop.f32.mrf.mxu0
          %v4000 = vadd.f32 %v3986, %v3999
          %v4001 = vpop.f32.mrf.mxu0
          %v4002 = vadd.f32 %v3988, %v4001
          %4003 = vdwg.mxu0
          %4004 = vmatpush.bf16.msra.mxu0 %v3099
          %4005 = vmatpush.bf16.msra.mxu0 %v3087
          %4006 = vmatpush.bf16.msra.mxu0 %v3075
          %4007 = vmatpush.bf16.msra.mxu0 %v3063
          %4008 = vmatpush.bf16.msra.mxu0 %v3051
          %4009 = vmatpush.bf16.msra.mxu0 %v3039
          %4010 = vmatpush.bf16.msra.mxu0 %v3027
          %4011 = vmatpush.bf16.msra.mxu0 %v3015
          %4012 = vmatmul.bf16.gmra.mxu0 %v1250
          %v4013 = vpop.f32.mrf.mxu0
          %v4014 = vadd.f32 %v4000, %v4013
          %v4015 = vpop.f32.mrf.mxu0
          %v4016 = vadd.f32 %v4002, %v4015
          %4017 = vdwg.mxu0
          %4018 = vmatpush.bf16.msra.mxu0 %v3195
          %4019 = vmatpush.bf16.msra.mxu0 %v3183
          %4020 = vmatpush.bf16.msra.mxu0 %v3171
          %4021 = vmatpush.bf16.msra.mxu0 %v3159
          %4022 = vmatpush.bf16.msra.mxu0 %v3147
          %4023 = vmatpush.bf16.msra.mxu0 %v3135
          %4024 = vmatpush.bf16.msra.mxu0 %v3123
          %4025 = vmatpush.bf16.msra.mxu0 %v3111
          %4026 = vmatmul.bf16.gmra.mxu0 %v1251
          %v4027 = vpop.f32.mrf.mxu0
          %v4028 = vadd.f32 %v4014, %v4027
          %v4029 = vpop.f32.mrf.mxu0
          %v4030 = vadd.f32 %v4016, %v4029
          %4031 = vdwg.mxu0
          %4032 = vmatpush.bf16.msra.mxu0 %v2908
          %4033 = vmatpush.bf16.msra.mxu0 %v2896
          %4034 = vmatpush.bf16.msra.mxu0 %v2884
          %4035 = vmatpush.bf16.msra.mxu0 %v2872
          %4036 = vmatpush.bf16.msra.mxu0 %v2860
          %4037 = vmatpush.bf16.msra.mxu0 %v2848
          %4038 = vmatpush.bf16.msra.mxu0 %v2836
          %4039 = vmatpush.bf16.msra.mxu0 %v2824
          %4040 = vmatmul.bf16.gmra.mxu0 %v1248
          %v4041 = vpop.f32.mrf.mxu0
          %v4042 = vadd.f32 %v1648, %v4041
          %v4043 = vpop.f32.mrf.mxu0
          %v4044 = vadd.f32 %v1648, %v4043
          %4045 = vdwg.mxu0
          %4046 = vmatpush.bf16.msra.mxu0 %v3004
          %4047 = vmatpush.bf16.msra.mxu0 %v2992
          %4048 = vmatpush.bf16.msra.mxu0 %v2980
          %4049 = vmatpush.bf16.msra.mxu0 %v2968
          %4050 = vmatpush.bf16.msra.mxu0 %v2956
          %4051 = vmatpush.bf16.msra.mxu0 %v2944
          %4052 = vmatpush.bf16.msra.mxu0 %v2932
          %4053 = vmatpush.bf16.msra.mxu0 %v2920
          %4054 = vmatmul.bf16.gmra.mxu0 %v1249
          %v4055 = vpop.f32.mrf.mxu0
          %v4056 = vadd.f32 %v4042, %v4055
          %v4057 = vpop.f32.mrf.mxu0
          %v4058 = vadd.f32 %v4044, %v4057
          %4059 = vdwg.mxu0
          %4060 = vmatpush.bf16.msra.mxu0 %v3100
          %4061 = vmatpush.bf16.msra.mxu0 %v3088
          %4062 = vmatpush.bf16.msra.mxu0 %v3076
          %4063 = vmatpush.bf16.msra.mxu0 %v3064
          %4064 = vmatpush.bf16.msra.mxu0 %v3052
          %4065 = vmatpush.bf16.msra.mxu0 %v3040
          %4066 = vmatpush.bf16.msra.mxu0 %v3028
          %4067 = vmatpush.bf16.msra.mxu0 %v3016
          %4068 = vmatmul.bf16.gmra.mxu0 %v1250
          %v4069 = vpop.f32.mrf.mxu0
          %v4070 = vadd.f32 %v4056, %v4069
          %v4071 = vpop.f32.mrf.mxu0
          %v4072 = vadd.f32 %v4058, %v4071
          %4073 = vdwg.mxu0
          %4074 = vmatpush.bf16.msra.mxu0 %v3196
          %4075 = vmatpush.bf16.msra.mxu0 %v3184
          %4076 = vmatpush.bf16.msra.mxu0 %v3172
          %4077 = vmatpush.bf16.msra.mxu0 %v3160
          %4078 = vmatpush.bf16.msra.mxu0 %v3148
          %4079 = vmatpush.bf16.msra.mxu0 %v3136
          %4080 = vmatpush.bf16.msra.mxu0 %v3124
          %4081 = vmatpush.bf16.msra.mxu0 %v3112
          %4082 = vmatmul.bf16.gmra.mxu0 %v1251
          %v4083 = vpop.f32.mrf.mxu0
          %v4084 = vadd.f32 %v4070, %v4083
          %v4085 = vpop.f32.mrf.mxu0
          %v4086 = vadd.f32 %v4072, %v4085
          %4087 = vdwg.mxu0
          %4088 = vmatpush.bf16.msra.mxu0 %v2909
          %4089 = vmatpush.bf16.msra.mxu0 %v2897
          %4090 = vmatpush.bf16.msra.mxu0 %v2885
          %4091 = vmatpush.bf16.msra.mxu0 %v2873
          %4092 = vmatpush.bf16.msra.mxu0 %v2861
          %4093 = vmatpush.bf16.msra.mxu0 %v2849
          %4094 = vmatpush.bf16.msra.mxu0 %v2837
          %4095 = vmatpush.bf16.msra.mxu0 %v2825
          %4096 = vmatmul.bf16.gmra.mxu0 %v1248
          %v4097 = vpop.f32.mrf.mxu0
          %v4098 = vadd.f32 %v1649, %v4097
          %v4099 = vpop.f32.mrf.mxu0
          %v4100 = vadd.f32 %v1649, %v4099
          %4101 = vdwg.mxu0
          %4102 = vmatpush.bf16.msra.mxu0 %v3005
          %4103 = vmatpush.bf16.msra.mxu0 %v2993
          %4104 = vmatpush.bf16.msra.mxu0 %v2981
          %4105 = vmatpush.bf16.msra.mxu0 %v2969
          %4106 = vmatpush.bf16.msra.mxu0 %v2957
          %4107 = vmatpush.bf16.msra.mxu0 %v2945
          %4108 = vmatpush.bf16.msra.mxu0 %v2933
          %4109 = vmatpush.bf16.msra.mxu0 %v2921
          %4110 = vmatmul.bf16.gmra.mxu0 %v1249
          %v4111 = vpop.f32.mrf.mxu0
          %v4112 = vadd.f32 %v4098, %v4111
          %v4113 = vpop.f32.mrf.mxu0
          %v4114 = vadd.f32 %v4100, %v4113
          %4115 = vdwg.mxu0
          %4116 = vmatpush.bf16.msra.mxu0 %v3101
          %4117 = vmatpush.bf16.msra.mxu0 %v3089
          %4118 = vmatpush.bf16.msra.mxu0 %v3077
          %4119 = vmatpush.bf16.msra.mxu0 %v3065
          %4120 = vmatpush.bf16.msra.mxu0 %v3053
          %4121 = vmatpush.bf16.msra.mxu0 %v3041
          %4122 = vmatpush.bf16.msra.mxu0 %v3029
          %4123 = vmatpush.bf16.msra.mxu0 %v3017
          %4124 = vmatmul.bf16.gmra.mxu0 %v1250
          %v4125 = vpop.f32.mrf.mxu0
          %v4126 = vadd.f32 %v4112, %v4125
          %v4127 = vpop.f32.mrf.mxu0
          %v4128 = vadd.f32 %v4114, %v4127
          %4129 = vdwg.mxu0
          %4130 = vmatpush.bf16.msra.mxu0 %v3197
          %4131 = vmatpush.bf16.msra.mxu0 %v3185
          %4132 = vmatpush.bf16.msra.mxu0 %v3173
          %4133 = vmatpush.bf16.msra.mxu0 %v3161
          %4134 = vmatpush.bf16.msra.mxu0 %v3149
          %4135 = vmatpush.bf16.msra.mxu0 %v3137
          %4136 = vmatpush.bf16.msra.mxu0 %v3125
          %4137 = vmatpush.bf16.msra.mxu0 %v3113
          %4138 = vmatmul.bf16.gmra.mxu0 %v1251
          %v4139 = vpop.f32.mrf.mxu0
          %v4140 = vadd.f32 %v4126, %v4139
          %v4141 = vpop.f32.mrf.mxu0
          %v4142 = vadd.f32 %v4128, %v4141
          %4143 = vdwg.mxu0
          %4144 = vmatpush.bf16.msra.mxu0 %v2910
          %4145 = vmatpush.bf16.msra.mxu0 %v2898
          %4146 = vmatpush.bf16.msra.mxu0 %v2886
          %4147 = vmatpush.bf16.msra.mxu0 %v2874
          %4148 = vmatpush.bf16.msra.mxu0 %v2862
          %4149 = vmatpush.bf16.msra.mxu0 %v2850
          %4150 = vmatpush.bf16.msra.mxu0 %v2838
          %4151 = vmatpush.bf16.msra.mxu0 %v2826
          %4152 = vmatmul.bf16.gmra.mxu0 %v1248
          %v4153 = vpop.f32.mrf.mxu0
          %v4154 = vadd.f32 %v1650, %v4153
          %v4155 = vpop.f32.mrf.mxu0
          %v4156 = vadd.f32 %v1650, %v4155
          %4157 = vdwg.mxu0
          %4158 = vmatpush.bf16.msra.mxu0 %v3006
          %4159 = vmatpush.bf16.msra.mxu0 %v2994
          %4160 = vmatpush.bf16.msra.mxu0 %v2982
          %4161 = vmatpush.bf16.msra.mxu0 %v2970
          %4162 = vmatpush.bf16.msra.mxu0 %v2958
          %4163 = vmatpush.bf16.msra.mxu0 %v2946
          %4164 = vmatpush.bf16.msra.mxu0 %v2934
          %4165 = vmatpush.bf16.msra.mxu0 %v2922
          %4166 = vmatmul.bf16.gmra.mxu0 %v1249
          %v4167 = vpop.f32.mrf.mxu0
          %v4168 = vadd.f32 %v4154, %v4167
          %v4169 = vpop.f32.mrf.mxu0
          %v4170 = vadd.f32 %v4156, %v4169
          %4171 = vdwg.mxu0
          %4172 = vmatpush.bf16.msra.mxu0 %v3102
          %4173 = vmatpush.bf16.msra.mxu0 %v3090
          %4174 = vmatpush.bf16.msra.mxu0 %v3078
          %4175 = vmatpush.bf16.msra.mxu0 %v3066
          %4176 = vmatpush.bf16.msra.mxu0 %v3054
          %4177 = vmatpush.bf16.msra.mxu0 %v3042
          %4178 = vmatpush.bf16.msra.mxu0 %v3030
          %4179 = vmatpush.bf16.msra.mxu0 %v3018
          %4180 = vmatmul.bf16.gmra.mxu0 %v1250
          %v4181 = vpop.f32.mrf.mxu0
          %v4182 = vadd.f32 %v4168, %v4181
          %v4183 = vpop.f32.mrf.mxu0
          %v4184 = vadd.f32 %v4170, %v4183
          %4185 = vdwg.mxu0
          %4186 = vmatpush.bf16.msra.mxu0 %v3198
          %4187 = vmatpush.bf16.msra.mxu0 %v3186
          %4188 = vmatpush.bf16.msra.mxu0 %v3174
          %4189 = vmatpush.bf16.msra.mxu0 %v3162
          %4190 = vmatpush.bf16.msra.mxu0 %v3150
          %4191 = vmatpush.bf16.msra.mxu0 %v3138
          %4192 = vmatpush.bf16.msra.mxu0 %v3126
          %4193 = vmatpush.bf16.msra.mxu0 %v3114
          %4194 = vmatmul.bf16.gmra.mxu0 %v1251
          %v4195 = vpop.f32.mrf.mxu0
          %v4196 = vadd.f32 %v4182, %v4195
          %v4197 = vpop.f32.mrf.mxu0
          %v4198 = vadd.f32 %v4184, %v4197
          %4199 = vdwg.mxu0
          %4200 = vmatpush.bf16.msra.mxu0 %v2911
          %4201 = vmatpush.bf16.msra.mxu0 %v2899
          %4202 = vmatpush.bf16.msra.mxu0 %v2887
          %4203 = vmatpush.bf16.msra.mxu0 %v2875
          %4204 = vmatpush.bf16.msra.mxu0 %v2863
          %4205 = vmatpush.bf16.msra.mxu0 %v2851
          %4206 = vmatpush.bf16.msra.mxu0 %v2839
          %4207 = vmatpush.bf16.msra.mxu0 %v2827
          %4208 = vmatmul.bf16.gmra.mxu0 %v1248
          %v4209 = vpop.f32.mrf.mxu0
          %v4210 = vadd.f32 %v1651, %v4209
          %v4211 = vpop.f32.mrf.mxu0
          %v4212 = vadd.f32 %v1651, %v4211
          %4213 = vdwg.mxu0
          %4214 = vmatpush.bf16.msra.mxu0 %v3007
          %4215 = vmatpush.bf16.msra.mxu0 %v2995
          %4216 = vmatpush.bf16.msra.mxu0 %v2983
          %4217 = vmatpush.bf16.msra.mxu0 %v2971
          %4218 = vmatpush.bf16.msra.mxu0 %v2959
          %4219 = vmatpush.bf16.msra.mxu0 %v2947
          %4220 = vmatpush.bf16.msra.mxu0 %v2935
          %4221 = vmatpush.bf16.msra.mxu0 %v2923
          %4222 = vmatmul.bf16.gmra.mxu0 %v1249
          %v4223 = vpop.f32.mrf.mxu0
          %v4224 = vadd.f32 %v4210, %v4223
          %v4225 = vpop.f32.mrf.mxu0
          %v4226 = vadd.f32 %v4212, %v4225
          %4227 = vdwg.mxu0
          %4228 = vmatpush.bf16.msra.mxu0 %v3103
          %4229 = vmatpush.bf16.msra.mxu0 %v3091
          %4230 = vmatpush.bf16.msra.mxu0 %v3079
          %4231 = vmatpush.bf16.msra.mxu0 %v3067
          %4232 = vmatpush.bf16.msra.mxu0 %v3055
          %4233 = vmatpush.bf16.msra.mxu0 %v3043
          %4234 = vmatpush.bf16.msra.mxu0 %v3031
          %4235 = vmatpush.bf16.msra.mxu0 %v3019
          %4236 = vmatmul.bf16.gmra.mxu0 %v1250
          %v4237 = vpop.f32.mrf.mxu0
          %v4238 = vadd.f32 %v4224, %v4237
          %v4239 = vpop.f32.mrf.mxu0
          %v4240 = vadd.f32 %v4226, %v4239
          %4241 = vdwg.mxu0
          %4242 = vmatpush.bf16.msra.mxu0 %v3199
          %4243 = vmatpush.bf16.msra.mxu0 %v3187
          %4244 = vmatpush.bf16.msra.mxu0 %v3175
          %4245 = vmatpush.bf16.msra.mxu0 %v3163
          %4246 = vmatpush.bf16.msra.mxu0 %v3151
          %4247 = vmatpush.bf16.msra.mxu0 %v3139
          %4248 = vmatpush.bf16.msra.mxu0 %v3127
          %4249 = vmatpush.bf16.msra.mxu0 %v3115
          %4250 = vmatmul.bf16.gmra.mxu0 %v1251
          %v4251 = vpop.f32.mrf.mxu0
          %v4252 = vadd.f32 %v4238, %v4251
          %v4253 = vpop.f32.mrf.mxu0
          %v4254 = vadd.f32 %v4240, %v4253
          %4255 = vdwg.mxu0
          %v4256 = vpack.c.bf16 %v3692, %v3636
          %v4257 = vpack.c.bf16 %v3804, %v3748
          %v4258 = vpack.c.bf16 %v3916, %v3860
          %v4259 = vpack.c.bf16 %v4028, %v3972
          %v4260 = vpack.c.bf16 %v4140, %v4084
          %v4261 = vpack.c.bf16 %v4252, %v4196
          %v4262 = vpack.c.bf16 %v3694, %v3638
          %v4263 = vpack.c.bf16 %v3806, %v3750
          %v4264 = vpack.c.bf16 %v3918, %v3862
          %v4265 = vpack.c.bf16 %v4030, %v3974
          %v4266 = vpack.c.bf16 %v4142, %v4086
          %v4267 = vpack.c.bf16 %v4254, %v4198
          %v4268 = vld [vmem:[%s3] sm:$0xff]
          %v4269 = vld [vmem:[%s3 + $0x8] sm:$0xff]
          %v4272 = vunpack.c.l.b16 %v4256
          %v4273 = vunpack.c.l.b16 %v4262
          %v4274 = vpack.c.b16 %v4273, %v4272
          %v4277 = vunpack.c.l.b16 %v4258
          %v4278 = vunpack.c.l.b16 %v4264
          %v4279 = vpack.c.b16 %v4278, %v4277
          %vm4280 = vcmask 523264
          %v4282 = vsel %vm4280, %v4274, 0
          %v4285 = vsel %vm4280, %v4279, 0
          %4287 = vmatpush.bf16.xpose.msra.mxu0 0
          %4288 = vmatpush.bf16.xpose.msra.mxu0 0
          %4289 = vmatpush.bf16.xpose.msra.mxu0 0
          %4290 = vmatpush.bf16.xpose.msra.mxu0 0
          %4291 = vmatpush.bf16.xpose.msra.mxu0 0
          %4292 = vmatpush.bf16.xpose.msra.mxu0 0
          %4293 = vmatpush.bf16.xpose.msra.mxu0 0
          %4294 = vmatpush.bf16.xpose.msra.mxu0 %v4285
          %4295 = vmatmul.bf16.gmra.mxu0 %v4282
          %v4296 = vpop.f32.mrf.mxu0
          %v4297 = vadd.f32 0.0, %v4296
          %v4298 = vpop.f32.mrf.mxu0
          %v4299 = vadd.f32 0.0, %v4298
          %4300 = vdwg.mxu0
          %v4301 = vmul.f32 %v4297, 0.125
          %v4302 = vmul.f32 %v4299, 0.125
          %v4303 = vadd.f32 %v4301, %v4268
          %v4304 = vadd.f32 %v4302, %v4269
          %vm4305 = vcmask 130048
          %v4306 = vsel %vm4305, %v4303, -inf
          %4307 = vmax.xlane.f32.xlu0 %v4306
          %v4308 = vpop.xlane.xlu0 %4307
          %v4309 = vsel %vm4305, %v4304, -inf
          %4310 = vmax.xlane.f32.xlu0 %v4309
          %v4311 = vpop.xlane.xlu0 %4310
          %v4312 = vsub.f32 %v4303, %v4308
          %v4313 = vsub.f32 %v4304, %v4311
          %v4314 = vmul.f32 %v4312, 1.442695
          %v4315 = vpow.pop %v4314
          %v4316 = vmul.f32 %v4313, 1.442695
          %v4317 = vpow.pop %v4316
          %v4318 = vsel %vm4305, %v4315, 0.0
          %4319 = vadd.xlane.f32.xlu0 %v4318
          %v4320 = vpop.xlane.xlu0 %4319
          %v4321 = vsel %vm4305, %v4317, 0.0
          %4322 = vadd.xlane.f32.xlu0 %v4321
          %v4323 = vpop.xlane.xlu0 %4322
          %v4324 = vrcp.pop %v4320
          %v4325 = vrcp.pop %v4323
          %v4326 = vmul.f32 %v4315, %v4324
          %v4327 = vmul.f32 %v4317, %v4325
          %v4328 = vpack.c.bf16 %v4327, %v4326
          %v4331 = vunpack.c.l.b16 %v4260
          %v4332 = vunpack.c.l.b16 %v4266
          %v4333 = vpack.c.b16 %v4332, %v4331
          %v4336 = vsel %vm4305, %v4328, 0
          %4338 = vmatpush.bf16.msra.mxu0 0
          %4339 = vmatpush.bf16.msra.mxu0 0
          %4340 = vmatpush.bf16.msra.mxu0 0
          %4341 = vmatpush.bf16.msra.mxu0 0
          %4342 = vmatpush.bf16.msra.mxu0 0
          %4343 = vmatpush.bf16.msra.mxu0 0
          %4344 = vmatpush.bf16.msra.mxu0 0
          %4345 = vmatpush.bf16.msra.mxu0 %v4333
          %4346 = vmatmul.bf16.gmra.mxu0 %v4336
          %v4347 = vpop.f32.mrf.mxu0
          %v4348 = vadd.f32 0.0, %v4347
          %v4349 = vpop.f32.mrf.mxu0
          %v4350 = vadd.f32 0.0, %v4349
          %4351 = vdwg.mxu0
          %4352 = vrot.lane.b32.xlu0 %v4274, 64
          %v4353 = vpop.permute.xlu0 %4352
          %4354 = vrot.lane.b32.xlu0 %v4279, 64
          %v4355 = vpop.permute.xlu0 %4354
          %v4357 = vsel %vm4280, %v4353, 0
          %v4360 = vsel %vm4280, %v4355, 0
          %4362 = vmatpush.bf16.xpose.msra.mxu0 0
          %4363 = vmatpush.bf16.xpose.msra.mxu0 0
          %4364 = vmatpush.bf16.xpose.msra.mxu0 0
          %4365 = vmatpush.bf16.xpose.msra.mxu0 0
          %4366 = vmatpush.bf16.xpose.msra.mxu0 0
          %4367 = vmatpush.bf16.xpose.msra.mxu0 0
          %4368 = vmatpush.bf16.xpose.msra.mxu0 0
          %4369 = vmatpush.bf16.xpose.msra.mxu0 %v4360
          %4370 = vmatmul.bf16.gmra.mxu0 %v4357
          %v4371 = vpop.f32.mrf.mxu0
          %v4372 = vadd.f32 0.0, %v4371
          %v4373 = vpop.f32.mrf.mxu0
          %v4374 = vadd.f32 0.0, %v4373
          %4375 = vdwg.mxu0
          %v4376 = vmul.f32 %v4372, 0.125
          %v4377 = vmul.f32 %v4374, 0.125
          %v4378 = vadd.f32 %v4376, %v4268
          %v4379 = vadd.f32 %v4377, %v4269
          %v4380 = vsel %vm4305, %v4378, -inf
          %4381 = vmax.xlane.f32.xlu0 %v4380
          %v4382 = vpop.xlane.xlu0 %4381
          %v4383 = vsel %vm4305, %v4379, -inf
          %4384 = vmax.xlane.f32.xlu0 %v4383
          %v4385 = vpop.xlane.xlu0 %4384
          %v4386 = vsub.f32 %v4378, %v4382
          %v4387 = vsub.f32 %v4379, %v4385
          %v4388 = vmul.f32 %v4386, 1.442695
          %v4389 = vpow.pop %v4388
          %v4390 = vmul.f32 %v4387, 1.442695
          %v4391 = vpow.pop %v4390
          %v4392 = vsel %vm4305, %v4389, 0.0
          %4393 = vadd.xlane.f32.xlu0 %v4392
          %v4394 = vpop.xlane.xlu0 %4393
          %v4395 = vsel %vm4305, %v4391, 0.0
          %4396 = vadd.xlane.f32.xlu0 %v4395
          %v4397 = vpop.xlane.xlu0 %4396
          %v4398 = vrcp.pop %v4394
          %v4399 = vrcp.pop %v4397
          %v4400 = vmul.f32 %v4389, %v4398
          %v4401 = vmul.f32 %v4391, %v4399
          %v4402 = vpack.c.bf16 %v4401, %v4400
          %4403 = vrot.lane.b32.xlu0 %v4333, 64
          %v4404 = vpop.permute.xlu0 %4403
          %v4407 = vsel %vm4305, %v4402, 0
          %4409 = vmatpush.bf16.msra.mxu0 0
          %4410 = vmatpush.bf16.msra.mxu0 0
          %4411 = vmatpush.bf16.msra.mxu0 0
          %4412 = vmatpush.bf16.msra.mxu0 0
          %4413 = vmatpush.bf16.msra.mxu0 0
          %4414 = vmatpush.bf16.msra.mxu0 0
          %4415 = vmatpush.bf16.msra.mxu0 0
          %4416 = vmatpush.bf16.msra.mxu0 %v4404
          %4417 = vmatmul.bf16.gmra.mxu0 %v4407
          %v4418 = vpop.f32.mrf.mxu0
          %v4419 = vadd.f32 0.0, %v4418
          %v4420 = vpop.f32.mrf.mxu0
          %v4421 = vadd.f32 0.0, %v4420
          %4422 = vdwg.mxu0
          %v4423 = vunpack.c.h.b16 %v4256
          %v4424 = vunpack.c.h.b16 %v4262
          %v4425 = vpack.c.b16 %v4424, %v4423
          %v4426 = vunpack.c.h.b16 %v4258
          %v4427 = vunpack.c.h.b16 %v4264
          %v4428 = vpack.c.b16 %v4427, %v4426
          %v4430 = vsel %vm4280, %v4425, 0
          %v4433 = vsel %vm4280, %v4428, 0
          %4435 = vmatpush.bf16.xpose.msra.mxu0 0
          %4436 = vmatpush.bf16.xpose.msra.mxu0 0
          %4437 = vmatpush.bf16.xpose.msra.mxu0 0
          %4438 = vmatpush.bf16.xpose.msra.mxu0 0
          %4439 = vmatpush.bf16.xpose.msra.mxu0 0
          %4440 = vmatpush.bf16.xpose.msra.mxu0 0
          %4441 = vmatpush.bf16.xpose.msra.mxu0 0
          %4442 = vmatpush.bf16.xpose.msra.mxu0 %v4433
          %4443 = vmatmul.bf16.gmra.mxu0 %v4430
          %v4444 = vpop.f32.mrf.mxu0
          %v4445 = vadd.f32 0.0, %v4444
          %v4446 = vpop.f32.mrf.mxu0
          %v4447 = vadd.f32 0.0, %v4446
          %4448 = vdwg.mxu0
          %v4449 = vmul.f32 %v4445, 0.125
          %v4450 = vmul.f32 %v4447, 0.125
          %v4451 = vadd.f32 %v4449, %v4268
          %v4452 = vadd.f32 %v4450, %v4269
          %v4453 = vsel %vm4305, %v4451, -inf
          %4454 = vmax.xlane.f32.xlu0 %v4453
          %v4455 = vpop.xlane.xlu0 %4454
          %v4456 = vsel %vm4305, %v4452, -inf
          %4457 = vmax.xlane.f32.xlu0 %v4456
          %v4458 = vpop.xlane.xlu0 %4457
          %v4459 = vsub.f32 %v4451, %v4455
          %v4460 = vsub.f32 %v4452, %v4458
          %v4461 = vmul.f32 %v4459, 1.442695
          %v4462 = vpow.pop %v4461
          %v4463 = vmul.f32 %v4460, 1.442695
          %v4464 = vpow.pop %v4463
          %v4465 = vsel %vm4305, %v4462, 0.0
          %4466 = vadd.xlane.f32.xlu0 %v4465
          %v4467 = vpop.xlane.xlu0 %4466
          %v4468 = vsel %vm4305, %v4464, 0.0
          %4469 = vadd.xlane.f32.xlu0 %v4468
          %v4470 = vpop.xlane.xlu0 %4469
          %v4471 = vrcp.pop %v4467
          %v4472 = vrcp.pop %v4470
          %v4473 = vmul.f32 %v4462, %v4471
          %v4474 = vmul.f32 %v4464, %v4472
          %v4475 = vpack.c.bf16 %v4474, %v4473
          %v4476 = vunpack.c.h.b16 %v4260
          %v4477 = vunpack.c.h.b16 %v4266
          %v4478 = vpack.c.b16 %v4477, %v4476
          %v4481 = vsel %vm4305, %v4475, 0
          %4483 = vmatpush.bf16.msra.mxu0 0
          %4484 = vmatpush.bf16.msra.mxu0 0
          %4485 = vmatpush.bf16.msra.mxu0 0
          %4486 = vmatpush.bf16.msra.mxu0 0
          %4487 = vmatpush.bf16.msra.mxu0 0
          %4488 = vmatpush.bf16.msra.mxu0 0
          %4489 = vmatpush.bf16.msra.mxu0 0
          %4490 = vmatpush.bf16.msra.mxu0 %v4478
          %4491 = vmatmul.bf16.gmra.mxu0 %v4481
          %v4492 = vpop.f32.mrf.mxu0
          %v4493 = vadd.f32 0.0, %v4492
          %v4494 = vpop.f32.mrf.mxu0
          %v4495 = vadd.f32 0.0, %v4494
          %4496 = vdwg.mxu0
          %4497 = vrot.lane.b32.xlu0 %v4425, 64
          %v4498 = vpop.permute.xlu0 %4497
          %4499 = vrot.lane.b32.xlu0 %v4428, 64
          %v4500 = vpop.permute.xlu0 %4499
          %v4502 = vsel %vm4280, %v4498, 0
          %v4505 = vsel %vm4280, %v4500, 0
          %4507 = vmatpush.bf16.xpose.msra.mxu0 0
          %4508 = vmatpush.bf16.xpose.msra.mxu0 0
          %4509 = vmatpush.bf16.xpose.msra.mxu0 0
          %4510 = vmatpush.bf16.xpose.msra.mxu0 0
          %4511 = vmatpush.bf16.xpose.msra.mxu0 0
          %4512 = vmatpush.bf16.xpose.msra.mxu0 0
          %4513 = vmatpush.bf16.xpose.msra.mxu0 0
          %4514 = vmatpush.bf16.xpose.msra.mxu0 %v4505
          %4515 = vmatmul.bf16.gmra.mxu0 %v4502
          %v4516 = vpop.f32.mrf.mxu0
          %v4517 = vadd.f32 0.0, %v4516
          %v4518 = vpop.f32.mrf.mxu0
          %v4519 = vadd.f32 0.0, %v4518
          %4520 = vdwg.mxu0
          %v4521 = vmul.f32 %v4517, 0.125
          %v4522 = vmul.f32 %v4519, 0.125
          %v4523 = vadd.f32 %v4521, %v4268
          %v4524 = vadd.f32 %v4522, %v4269
          %v4525 = vsel %vm4305, %v4523, -inf
          %4526 = vmax.xlane.f32.xlu0 %v4525
          %v4527 = vpop.xlane.xlu0 %4526
          %v4528 = vsel %vm4305, %v4524, -inf
          %4529 = vmax.xlane.f32.xlu0 %v4528
          %v4530 = vpop.xlane.xlu0 %4529
          %v4531 = vsub.f32 %v4523, %v4527
          %v4532 = vsub.f32 %v4524, %v4530
          %v4533 = vmul.f32 %v4531, 1.442695
          %v4534 = vpow.pop %v4533
          %v4535 = vmul.f32 %v4532, 1.442695
          %v4536 = vpow.pop %v4535
          %v4537 = vsel %vm4305, %v4534, 0.0
          %4538 = vadd.xlane.f32.xlu0 %v4537
          %v4539 = vpop.xlane.xlu0 %4538
          %v4540 = vsel %vm4305, %v4536, 0.0
          %4541 = vadd.xlane.f32.xlu0 %v4540
          %v4542 = vpop.xlane.xlu0 %4541
          %v4543 = vrcp.pop %v4539
          %v4544 = vrcp.pop %v4542
          %v4545 = vmul.f32 %v4534, %v4543
          %v4546 = vmul.f32 %v4536, %v4544
          %v4547 = vpack.c.bf16 %v4546, %v4545
          %4548 = vrot.lane.b32.xlu0 %v4478, 64
          %v4549 = vpop.permute.xlu0 %4548
          %v4552 = vsel %vm4305, %v4547, 0
          %4554 = vmatpush.bf16.msra.mxu0 0
          %4555 = vmatpush.bf16.msra.mxu0 0
          %4556 = vmatpush.bf16.msra.mxu0 0
          %4557 = vmatpush.bf16.msra.mxu0 0
          %4558 = vmatpush.bf16.msra.mxu0 0
          %4559 = vmatpush.bf16.msra.mxu0 0
          %4560 = vmatpush.bf16.msra.mxu0 0
          %4561 = vmatpush.bf16.msra.mxu0 %v4549
          %4562 = vmatmul.bf16.gmra.mxu0 %v4552
          %v4563 = vpop.f32.mrf.mxu0
          %v4564 = vadd.f32 0.0, %v4563
          %v4565 = vpop.f32.mrf.mxu0
          %v4566 = vadd.f32 0.0, %v4565
          %4567 = vdwg.mxu0
          %v4570 = vunpack.c.l.b16 %v4257
          %v4571 = vunpack.c.l.b16 %v4263
          %v4572 = vpack.c.b16 %v4571, %v4570
          %v4575 = vunpack.c.l.b16 %v4259
          %v4576 = vunpack.c.l.b16 %v4265
          %v4577 = vpack.c.b16 %v4576, %v4575
          %v4579 = vsel %vm4280, %v4572, 0
          %v4582 = vsel %vm4280, %v4577, 0
          %4584 = vmatpush.bf16.xpose.msra.mxu0 0
          %4585 = vmatpush.bf16.xpose.msra.mxu0 0
          %4586 = vmatpush.bf16.xpose.msra.mxu0 0
          %4587 = vmatpush.bf16.xpose.msra.mxu0 0
          %4588 = vmatpush.bf16.xpose.msra.mxu0 0
          %4589 = vmatpush.bf16.xpose.msra.mxu0 0
          %4590 = vmatpush.bf16.xpose.msra.mxu0 0
          %4591 = vmatpush.bf16.xpose.msra.mxu0 %v4582
          %4592 = vmatmul.bf16.gmra.mxu0 %v4579
          %v4593 = vpop.f32.mrf.mxu0
          %v4594 = vadd.f32 0.0, %v4593
          %v4595 = vpop.f32.mrf.mxu0
          %v4596 = vadd.f32 0.0, %v4595
          %4597 = vdwg.mxu0
          %v4598 = vmul.f32 %v4594, 0.125
          %v4599 = vmul.f32 %v4596, 0.125
          %v4600 = vadd.f32 %v4598, %v4268
          %v4601 = vadd.f32 %v4599, %v4269
          %v4602 = vsel %vm4305, %v4600, -inf
          %4603 = vmax.xlane.f32.xlu0 %v4602
          %v4604 = vpop.xlane.xlu0 %4603
          %v4605 = vsel %vm4305, %v4601, -inf
          %4606 = vmax.xlane.f32.xlu0 %v4605
          %v4607 = vpop.xlane.xlu0 %4606
          %v4608 = vsub.f32 %v4600, %v4604
          %v4609 = vsub.f32 %v4601, %v4607
          %v4610 = vmul.f32 %v4608, 1.442695
          %v4611 = vpow.pop %v4610
          %v4612 = vmul.f32 %v4609, 1.442695
          %v4613 = vpow.pop %v4612
          %v4614 = vsel %vm4305, %v4611, 0.0
          %4615 = vadd.xlane.f32.xlu0 %v4614
          %v4616 = vpop.xlane.xlu0 %4615
          %v4617 = vsel %vm4305, %v4613, 0.0
          %4618 = vadd.xlane.f32.xlu0 %v4617
          %v4619 = vpop.xlane.xlu0 %4618
          %v4620 = vrcp.pop %v4616
          %v4621 = vrcp.pop %v4619
          %v4622 = vmul.f32 %v4611, %v4620
          %v4623 = vmul.f32 %v4613, %v4621
          %v4624 = vpack.c.bf16 %v4623, %v4622
          %v4627 = vunpack.c.l.b16 %v4261
          %v4628 = vunpack.c.l.b16 %v4267
          %v4629 = vpack.c.b16 %v4628, %v4627
          %v4632 = vsel %vm4305, %v4624, 0
          %4634 = vmatpush.bf16.msra.mxu0 0
          %4635 = vmatpush.bf16.msra.mxu0 0
          %4636 = vmatpush.bf16.msra.mxu0 0
          %4637 = vmatpush.bf16.msra.mxu0 0
          %4638 = vmatpush.bf16.msra.mxu0 0
          %4639 = vmatpush.bf16.msra.mxu0 0
          %4640 = vmatpush.bf16.msra.mxu0 0
          %4641 = vmatpush.bf16.msra.mxu0 %v4629
          %4642 = vmatmul.bf16.gmra.mxu0 %v4632
          %v4643 = vpop.f32.mrf.mxu0
          %v4644 = vadd.f32 0.0, %v4643
          %v4645 = vpop.f32.mrf.mxu0
          %v4646 = vadd.f32 0.0, %v4645
          %4647 = vdwg.mxu0
          %4648 = vrot.lane.b32.xlu0 %v4572, 64
          %v4649 = vpop.permute.xlu0 %4648
          %4650 = vrot.lane.b32.xlu0 %v4577, 64
          %v4651 = vpop.permute.xlu0 %4650
          %v4653 = vsel %vm4280, %v4649, 0
          %v4656 = vsel %vm4280, %v4651, 0
          %4658 = vmatpush.bf16.xpose.msra.mxu0 0
          %4659 = vmatpush.bf16.xpose.msra.mxu0 0
          %4660 = vmatpush.bf16.xpose.msra.mxu0 0
          %4661 = vmatpush.bf16.xpose.msra.mxu0 0
          %4662 = vmatpush.bf16.xpose.msra.mxu0 0
          %4663 = vmatpush.bf16.xpose.msra.mxu0 0
          %4664 = vmatpush.bf16.xpose.msra.mxu0 0
          %4665 = vmatpush.bf16.xpose.msra.mxu0 %v4656
          %4666 = vmatmul.bf16.gmra.mxu0 %v4653
          %v4667 = vpop.f32.mrf.mxu0
          %v4668 = vadd.f32 0.0, %v4667
          %v4669 = vpop.f32.mrf.mxu0
          %v4670 = vadd.f32 0.0, %v4669
          %4671 = vdwg.mxu0
          %v4672 = vmul.f32 %v4668, 0.125
          %v4673 = vmul.f32 %v4670, 0.125
          %v4674 = vadd.f32 %v4672, %v4268
          %v4675 = vadd.f32 %v4673, %v4269
          %v4676 = vsel %vm4305, %v4674, -inf
          %4677 = vmax.xlane.f32.xlu0 %v4676
          %v4678 = vpop.xlane.xlu0 %4677
          %v4679 = vsel %vm4305, %v4675, -inf
          %4680 = vmax.xlane.f32.xlu0 %v4679
          %v4681 = vpop.xlane.xlu0 %4680
          %v4682 = vsub.f32 %v4674, %v4678
          %v4683 = vsub.f32 %v4675, %v4681
          %v4684 = vmul.f32 %v4682, 1.442695
          %v4685 = vpow.pop %v4684
          %v4686 = vmul.f32 %v4683, 1.442695
          %v4687 = vpow.pop %v4686
          %v4688 = vsel %vm4305, %v4685, 0.0
          %4689 = vadd.xlane.f32.xlu0 %v4688
          %v4690 = vpop.xlane.xlu0 %4689
          %v4691 = vsel %vm4305, %v4687, 0.0
          %4692 = vadd.xlane.f32.xlu0 %v4691
          %v4693 = vpop.xlane.xlu0 %4692
          %v4694 = vrcp.pop %v4690
          %v4695 = vrcp.pop %v4693
          %v4696 = vmul.f32 %v4685, %v4694
          %v4697 = vmul.f32 %v4687, %v4695
          %v4698 = vpack.c.bf16 %v4697, %v4696
          %4699 = vrot.lane.b32.xlu0 %v4629, 64
          %v4700 = vpop.permute.xlu0 %4699
          %v4703 = vsel %vm4305, %v4698, 0
          %4705 = vmatpush.bf16.msra.mxu0 0
          %4706 = vmatpush.bf16.msra.mxu0 0
          %4707 = vmatpush.bf16.msra.mxu0 0
          %4708 = vmatpush.bf16.msra.mxu0 0
          %4709 = vmatpush.bf16.msra.mxu0 0
          %4710 = vmatpush.bf16.msra.mxu0 0
          %4711 = vmatpush.bf16.msra.mxu0 0
          %4712 = vmatpush.bf16.msra.mxu0 %v4700
          %4713 = vmatmul.bf16.gmra.mxu0 %v4703
          %v4714 = vpop.f32.mrf.mxu0
          %v4715 = vadd.f32 0.0, %v4714
          %v4716 = vpop.f32.mrf.mxu0
          %v4717 = vadd.f32 0.0, %v4716
          %4718 = vdwg.mxu0
          %v4719 = vunpack.c.h.b16 %v4257
          %v4720 = vunpack.c.h.b16 %v4263
          %v4721 = vpack.c.b16 %v4720, %v4719
          %v4722 = vunpack.c.h.b16 %v4259
          %v4723 = vunpack.c.h.b16 %v4265
          %v4724 = vpack.c.b16 %v4723, %v4722
          %v4726 = vsel %vm4280, %v4721, 0
          %v4729 = vsel %vm4280, %v4724, 0
          %4731 = vmatpush.bf16.xpose.msra.mxu0 0
          %4732 = vmatpush.bf16.xpose.msra.mxu0 0
          %4733 = vmatpush.bf16.xpose.msra.mxu0 0
          %4734 = vmatpush.bf16.xpose.msra.mxu0 0
          %4735 = vmatpush.bf16.xpose.msra.mxu0 0
          %4736 = vmatpush.bf16.xpose.msra.mxu0 0
          %4737 = vmatpush.bf16.xpose.msra.mxu0 0
          %4738 = vmatpush.bf16.xpose.msra.mxu0 %v4729
          %4739 = vmatmul.bf16.gmra.mxu0 %v4726
          %v4740 = vpop.f32.mrf.mxu0
          %v4741 = vadd.f32 0.0, %v4740
          %v4742 = vpop.f32.mrf.mxu0
          %v4743 = vadd.f32 0.0, %v4742
          %4744 = vdwg.mxu0
          %v4745 = vmul.f32 %v4741, 0.125
          %v4746 = vmul.f32 %v4743, 0.125
          %v4747 = vadd.f32 %v4745, %v4268
          %v4748 = vadd.f32 %v4746, %v4269
          %v4749 = vsel %vm4305, %v4747, -inf
          %4750 = vmax.xlane.f32.xlu0 %v4749
          %v4751 = vpop.xlane.xlu0 %4750
          %v4752 = vsel %vm4305, %v4748, -inf
          %4753 = vmax.xlane.f32.xlu0 %v4752
          %v4754 = vpop.xlane.xlu0 %4753
          %v4755 = vsub.f32 %v4747, %v4751
          %v4756 = vsub.f32 %v4748, %v4754
          %v4757 = vmul.f32 %v4755, 1.442695
          %v4758 = vpow.pop %v4757
          %v4759 = vmul.f32 %v4756, 1.442695
          %v4760 = vpow.pop %v4759
          %v4761 = vsel %vm4305, %v4758, 0.0
          %4762 = vadd.xlane.f32.xlu0 %v4761
          %v4763 = vpop.xlane.xlu0 %4762
          %v4764 = vsel %vm4305, %v4760, 0.0
          %4765 = vadd.xlane.f32.xlu0 %v4764
          %v4766 = vpop.xlane.xlu0 %4765
          %v4767 = vrcp.pop %v4763
          %v4768 = vrcp.pop %v4766
          %v4769 = vmul.f32 %v4758, %v4767
          %v4770 = vmul.f32 %v4760, %v4768
          %v4771 = vpack.c.bf16 %v4770, %v4769
          %v4772 = vunpack.c.h.b16 %v4261
          %v4773 = vunpack.c.h.b16 %v4267
          %v4774 = vpack.c.b16 %v4773, %v4772
          %v4777 = vsel %vm4305, %v4771, 0
          %4779 = vmatpush.bf16.msra.mxu0 0
          %4780 = vmatpush.bf16.msra.mxu0 0
          %4781 = vmatpush.bf16.msra.mxu0 0
          %4782 = vmatpush.bf16.msra.mxu0 0
          %4783 = vmatpush.bf16.msra.mxu0 0
          %4784 = vmatpush.bf16.msra.mxu0 0
          %4785 = vmatpush.bf16.msra.mxu0 0
          %4786 = vmatpush.bf16.msra.mxu0 %v4774
          %4787 = vmatmul.bf16.gmra.mxu0 %v4777
          %v4788 = vpop.f32.mrf.mxu0
          %v4789 = vadd.f32 0.0, %v4788
          %v4790 = vpop.f32.mrf.mxu0
          %v4791 = vadd.f32 0.0, %v4790
          %4792 = vdwg.mxu0
          %4793 = vrot.lane.b32.xlu0 %v4721, 64
          %v4794 = vpop.permute.xlu0 %4793
          %4795 = vrot.lane.b32.xlu0 %v4724, 64
          %v4796 = vpop.permute.xlu0 %4795
          %v4798 = vsel %vm4280, %v4794, 0
          %v4801 = vsel %vm4280, %v4796, 0
          %4803 = vmatpush.bf16.xpose.msra.mxu0 0
          %4804 = vmatpush.bf16.xpose.msra.mxu0 0
          %4805 = vmatpush.bf16.xpose.msra.mxu0 0
          %4806 = vmatpush.bf16.xpose.msra.mxu0 0
          %4807 = vmatpush.bf16.xpose.msra.mxu0 0
          %4808 = vmatpush.bf16.xpose.msra.mxu0 0
          %4809 = vmatpush.bf16.xpose.msra.mxu0 0
          %4810 = vmatpush.bf16.xpose.msra.mxu0 %v4801
          %4811 = vmatmul.bf16.gmra.mxu0 %v4798
          %v4812 = vpop.f32.mrf.mxu0
          %v4813 = vadd.f32 0.0, %v4812
          %v4814 = vpop.f32.mrf.mxu0
          %v4815 = vadd.f32 0.0, %v4814
          %4816 = vdwg.mxu0
          %v4817 = vmul.f32 %v4813, 0.125
          %v4818 = vmul.f32 %v4815, 0.125
          %v4819 = vadd.f32 %v4817, %v4268
          %v4820 = vadd.f32 %v4818, %v4269
          %v4821 = vsel %vm4305, %v4819, -inf
          %4822 = vmax.xlane.f32.xlu0 %v4821
          %v4823 = vpop.xlane.xlu0 %4822
          %v4824 = vsel %vm4305, %v4820, -inf
          %4825 = vmax.xlane.f32.xlu0 %v4824
          %v4826 = vpop.xlane.xlu0 %4825
          %v4827 = vsub.f32 %v4819, %v4823
          %v4828 = vsub.f32 %v4820, %v4826
          %v4829 = vmul.f32 %v4827, 1.442695
          %v4830 = vpow.pop %v4829
          %v4831 = vmul.f32 %v4828, 1.442695
          %v4832 = vpow.pop %v4831
          %v4833 = vsel %vm4305, %v4830, 0.0
          %4834 = vadd.xlane.f32.xlu0 %v4833
          %v4835 = vpop.xlane.xlu0 %4834
          %v4836 = vsel %vm4305, %v4832, 0.0
          %4837 = vadd.xlane.f32.xlu0 %v4836
          %v4838 = vpop.xlane.xlu0 %4837
          %v4839 = vrcp.pop %v4835
          %v4840 = vrcp.pop %v4838
          %v4841 = vmul.f32 %v4830, %v4839
          %v4842 = vmul.f32 %v4832, %v4840
          %v4843 = vpack.c.bf16 %v4842, %v4841
          %4844 = vrot.lane.b32.xlu0 %v4774, 64
          %v4845 = vpop.permute.xlu0 %4844
          %v4848 = vsel %vm4305, %v4843, 0
          %4850 = vmatpush.bf16.msra.mxu0 0
          %4851 = vmatpush.bf16.msra.mxu0 0
          %4852 = vmatpush.bf16.msra.mxu0 0
          %4853 = vmatpush.bf16.msra.mxu0 0
          %4854 = vmatpush.bf16.msra.mxu0 0
          %4855 = vmatpush.bf16.msra.mxu0 0
          %4856 = vmatpush.bf16.msra.mxu0 0
          %4857 = vmatpush.bf16.msra.mxu0 %v4845
          %4858 = vmatmul.bf16.gmra.mxu0 %v4848
          %v4859 = vpop.f32.mrf.mxu0
          %v4860 = vadd.f32 0.0, %v4859
          %v4861 = vpop.f32.mrf.mxu0
          %v4862 = vadd.f32 0.0, %v4861
          %4863 = vdwg.mxu0
          %4866 = vrot.lane.b32.xlu0 %v4419, 64
          %v4867 = vpop.permute.xlu0 %4866
          %4868 = vrot.lane.b32.xlu0 %v4421, 64
          %v4869 = vpop.permute.xlu0 %4868
          %4874 = vrot.lane.b32.xlu0 %v4564, 64
          %v4875 = vpop.permute.xlu0 %4874
          %4876 = vrot.lane.b32.xlu0 %v4566, 64
          %v4877 = vpop.permute.xlu0 %4876
          %4882 = vrot.lane.b32.xlu0 %v4715, 64
          %v4883 = vpop.permute.xlu0 %4882
          %4884 = vrot.lane.b32.xlu0 %v4717, 64
          %v4885 = vpop.permute.xlu0 %4884
          %4890 = vrot.lane.b32.xlu0 %v4860, 64
          %v4891 = vpop.permute.xlu0 %4890
          %4892 = vrot.lane.b32.xlu0 %v4862, 64
          %v4893 = vpop.permute.xlu0 %4892
          %v4896 = vsel %vm4280, %v4348, %v4867
          %v4897 = vsel %vm4280, %v4350, %v4869
          %v4898 = vsel %vm4280, %v4493, %v4875
          %v4899 = vsel %vm4280, %v4495, %v4877
          %v4900 = vsel %vm4280, %v4644, %v4883
          %v4901 = vsel %vm4280, %v4646, %v4885
          %v4902 = vsel %vm4280, %v4789, %v4891
          %v4903 = vsel %vm4280, %v4791, %v4893
          %v4904 = vpack.c.bf16 %v4897, %v4896
          %v4905 = vpack.c.bf16 %v4899, %v4898
          %v4906 = vpack.c.bf16 %v4901, %v4900
          %v4907 = vpack.c.bf16 %v4903, %v4902
          %v4908 = vld [vmem:[%s892] sm:$0xff]
          %v4909 = vld [vmem:[%s892 + $0x8] sm:$0xff]
          %v4910 = vld [vmem:[%s892 + $0x10] sm:$0xff]
          %v4911 = vld [vmem:[%s892 + $0x18] sm:$0xff]
          %v4912 = vld [vmem:[%s892 + $0x20] sm:$0xff]
          %v4913 = vld [vmem:[%s892 + $0x28] sm:$0xff]
          %v4914 = vld [vmem:[%s892 + $0x30] sm:$0xff]
          %v4915 = vld [vmem:[%s892 + $0x38] sm:$0xff]
          %v4916 = vld [vmem:[%s892 + $0x40] sm:$0xff]
          %v4917 = vld [vmem:[%s892 + $0x48] sm:$0xff]
          %v4918 = vld [vmem:[%s892 + $0x50] sm:$0xff]
          %v4919 = vld [vmem:[%s892 + $0x58] sm:$0xff]
          %v4920 = vld [vmem:[%s892 + $0x60] sm:$0xff]
          %v4921 = vld [vmem:[%s892 + $0x68] sm:$0xff]
          %v4922 = vld [vmem:[%s892 + $0x70] sm:$0xff]
          %v4923 = vld [vmem:[%s892 + $0x78] sm:$0xff]
          %v4924 = vld [vmem:[%s892 + $0x80] sm:$0xff]
          %v4925 = vld [vmem:[%s892 + $0x88] sm:$0xff]
          %v4926 = vld [vmem:[%s892 + $0x90] sm:$0xff]
          %v4927 = vld [vmem:[%s892 + $0x98] sm:$0xff]
          %v4928 = vld [vmem:[%s892 + $0xa0] sm:$0xff]
          %v4929 = vld [vmem:[%s892 + $0xa8] sm:$0xff]
          %v4930 = vld [vmem:[%s892 + $0xb0] sm:$0xff]
          %v4931 = vld [vmem:[%s892 + $0xb8] sm:$0xff]
          %v4932 = vld [vmem:[%s892 + $0xc0] sm:$0xff]
          %v4933 = vld [vmem:[%s892 + $0xc8] sm:$0xff]
          %v4934 = vld [vmem:[%s892 + $0xd0] sm:$0xff]
          %v4935 = vld [vmem:[%s892 + $0xd8] sm:$0xff]
          %v4936 = vld [vmem:[%s892 + $0xe0] sm:$0xff]
          %v4937 = vld [vmem:[%s892 + $0xe8] sm:$0xff]
          %v4938 = vld [vmem:[%s892 + $0xf0] sm:$0xff]
          %v4939 = vld [vmem:[%s892 + $0xf8] sm:$0xff]
          %v4940 = vld [vmem:[%s892 + $0x100] sm:$0xff]
          %v4941 = vld [vmem:[%s892 + $0x108] sm:$0xff]
          %v4942 = vld [vmem:[%s892 + $0x110] sm:$0xff]
          %v4943 = vld [vmem:[%s892 + $0x118] sm:$0xff]
          %v4944 = vld [vmem:[%s892 + $0x120] sm:$0xff]
          %v4945 = vld [vmem:[%s892 + $0x128] sm:$0xff]
          %v4946 = vld [vmem:[%s892 + $0x130] sm:$0xff]
          %v4947 = vld [vmem:[%s892 + $0x138] sm:$0xff]
          %v4948 = vld [vmem:[%s892 + $0x140] sm:$0xff]
          %v4949 = vld [vmem:[%s892 + $0x148] sm:$0xff]
          %v4950 = vld [vmem:[%s892 + $0x150] sm:$0xff]
          %v4951 = vld [vmem:[%s892 + $0x158] sm:$0xff]
          %v4952 = vld [vmem:[%s892 + $0x160] sm:$0xff]
          %v4953 = vld [vmem:[%s892 + $0x168] sm:$0xff]
          %v4954 = vld [vmem:[%s892 + $0x170] sm:$0xff]
          %v4955 = vld [vmem:[%s892 + $0x178] sm:$0xff]
          %v4956 = vld [vmem:[%s892 + $0x180] sm:$0xff]
          %v4957 = vld [vmem:[%s892 + $0x188] sm:$0xff]
          %v4958 = vld [vmem:[%s892 + $0x190] sm:$0xff]
          %v4959 = vld [vmem:[%s892 + $0x198] sm:$0xff]
          %v4960 = vld [vmem:[%s892 + $0x1a0] sm:$0xff]
          %v4961 = vld [vmem:[%s892 + $0x1a8] sm:$0xff]
          %v4962 = vld [vmem:[%s892 + $0x1b0] sm:$0xff]
          %v4963 = vld [vmem:[%s892 + $0x1b8] sm:$0xff]
          %v4964 = vld [vmem:[%s892 + $0x1c0] sm:$0xff]
          %v4965 = vld [vmem:[%s892 + $0x1c8] sm:$0xff]
          %v4966 = vld [vmem:[%s892 + $0x1d0] sm:$0xff]
          %v4967 = vld [vmem:[%s892 + $0x1d8] sm:$0xff]
          %v4968 = vld [vmem:[%s892 + $0x1e0] sm:$0xff]
          %v4969 = vld [vmem:[%s892 + $0x1e8] sm:$0xff]
          %v4970 = vld [vmem:[%s892 + $0x1f0] sm:$0xff]
          %v4971 = vld [vmem:[%s892 + $0x1f8] sm:$0xff]
          %v4972 = vld [vmem:[%s892 + $0x200] sm:$0xff]
          %v4973 = vld [vmem:[%s892 + $0x208] sm:$0xff]
          %v4974 = vld [vmem:[%s892 + $0x210] sm:$0xff]
          %v4975 = vld [vmem:[%s892 + $0x218] sm:$0xff]
          %v4976 = vld [vmem:[%s892 + $0x220] sm:$0xff]
          %v4977 = vld [vmem:[%s892 + $0x228] sm:$0xff]
          %v4978 = vld [vmem:[%s892 + $0x230] sm:$0xff]
          %v4979 = vld [vmem:[%s892 + $0x238] sm:$0xff]
          %v4980 = vld [vmem:[%s892 + $0x240] sm:$0xff]
          %v4981 = vld [vmem:[%s892 + $0x248] sm:$0xff]
          %v4982 = vld [vmem:[%s892 + $0x250] sm:$0xff]
          %v4983 = vld [vmem:[%s892 + $0x258] sm:$0xff]
          %v4984 = vld [vmem:[%s892 + $0x260] sm:$0xff]
          %v4985 = vld [vmem:[%s892 + $0x268] sm:$0xff]
          %v4986 = vld [vmem:[%s892 + $0x270] sm:$0xff]
          %v4987 = vld [vmem:[%s892 + $0x278] sm:$0xff]
          %v4988 = vld [vmem:[%s892 + $0x280] sm:$0xff]
          %v4989 = vld [vmem:[%s892 + $0x288] sm:$0xff]
          %v4990 = vld [vmem:[%s892 + $0x290] sm:$0xff]
          %v4991 = vld [vmem:[%s892 + $0x298] sm:$0xff]
          %v4992 = vld [vmem:[%s892 + $0x2a0] sm:$0xff]
          %v4993 = vld [vmem:[%s892 + $0x2a8] sm:$0xff]
          %v4994 = vld [vmem:[%s892 + $0x2b0] sm:$0xff]
          %v4995 = vld [vmem:[%s892 + $0x2b8] sm:$0xff]
          %v4996 = vld [vmem:[%s892 + $0x2c0] sm:$0xff]
          %v4997 = vld [vmem:[%s892 + $0x2c8] sm:$0xff]
          %v4998 = vld [vmem:[%s892 + $0x2d0] sm:$0xff]
          %v4999 = vld [vmem:[%s892 + $0x2d8] sm:$0xff]
          %v5000 = vld [vmem:[%s892 + $0x2e0] sm:$0xff]
          %v5001 = vld [vmem:[%s892 + $0x2e8] sm:$0xff]
          %v5002 = vld [vmem:[%s892 + $0x2f0] sm:$0xff]
          %v5003 = vld [vmem:[%s892 + $0x2f8] sm:$0xff]
          %v5004 = vld [vmem:[%s892 + $0x300] sm:$0xff]
          %v5005 = vld [vmem:[%s892 + $0x308] sm:$0xff]
          %v5006 = vld [vmem:[%s892 + $0x310] sm:$0xff]
          %v5007 = vld [vmem:[%s892 + $0x318] sm:$0xff]
          %v5008 = vld [vmem:[%s892 + $0x320] sm:$0xff]
          %v5009 = vld [vmem:[%s892 + $0x328] sm:$0xff]
          %v5010 = vld [vmem:[%s892 + $0x330] sm:$0xff]
          %v5011 = vld [vmem:[%s892 + $0x338] sm:$0xff]
          %v5012 = vld [vmem:[%s892 + $0x340] sm:$0xff]
          %v5013 = vld [vmem:[%s892 + $0x348] sm:$0xff]
          %v5014 = vld [vmem:[%s892 + $0x350] sm:$0xff]
          %v5015 = vld [vmem:[%s892 + $0x358] sm:$0xff]
          %v5016 = vld [vmem:[%s892 + $0x360] sm:$0xff]
          %v5017 = vld [vmem:[%s892 + $0x368] sm:$0xff]
          %v5018 = vld [vmem:[%s892 + $0x370] sm:$0xff]
          %v5019 = vld [vmem:[%s892 + $0x378] sm:$0xff]
          %v5020 = vld [vmem:[%s892 + $0x380] sm:$0xff]
          %v5021 = vld [vmem:[%s892 + $0x388] sm:$0xff]
          %v5022 = vld [vmem:[%s892 + $0x390] sm:$0xff]
          %v5023 = vld [vmem:[%s892 + $0x398] sm:$0xff]
          %v5024 = vld [vmem:[%s892 + $0x3a0] sm:$0xff]
          %v5025 = vld [vmem:[%s892 + $0x3a8] sm:$0xff]
          %v5026 = vld [vmem:[%s892 + $0x3b0] sm:$0xff]
          %v5027 = vld [vmem:[%s892 + $0x3b8] sm:$0xff]
          %v5028 = vld [vmem:[%s892 + $0x3c0] sm:$0xff]
          %v5029 = vld [vmem:[%s892 + $0x3c8] sm:$0xff]
          %v5030 = vld [vmem:[%s892 + $0x3d0] sm:$0xff]
          %v5031 = vld [vmem:[%s892 + $0x3d8] sm:$0xff]
          %v5032 = vld [vmem:[%s892 + $0x3e0] sm:$0xff]
          %v5033 = vld [vmem:[%s892 + $0x3e8] sm:$0xff]
          %v5034 = vld [vmem:[%s892 + $0x3f0] sm:$0xff]
          %v5035 = vld [vmem:[%s892 + $0x3f8] sm:$0xff]
          %v5036 = vld [vmem:[%s902] sm:$0xf]
          %v5038 = vperm.slane %v5036, 0
          %v5039 = vperm.slane %v5036, 1
          %v5040 = vperm.slane %v5036, 2
          %v5041 = vperm.slane %v5036, 3
          %v5174 = vunpack.c.l.b16 %v4908
          %v5175 = vunpack.c.h.b16 %v4908
          %v5176 = vunpack.c.l.b16 %v4909
          %v5177 = vunpack.c.h.b16 %v4909
          %v5178 = vunpack.c.l.b16 %v4910
          %v5179 = vunpack.c.h.b16 %v4910
          %v5180 = vunpack.c.l.b16 %v4911
          %v5181 = vunpack.c.h.b16 %v4911
          %v5182 = vunpack.c.l.b16 %v4912
          %v5183 = vunpack.c.h.b16 %v4912
          %v5184 = vunpack.c.l.b16 %v4913
          %v5185 = vunpack.c.h.b16 %v4913
          %v5186 = vunpack.c.l.b16 %v4914
          %v5187 = vunpack.c.h.b16 %v4914
          %v5188 = vunpack.c.l.b16 %v4915
          %v5189 = vunpack.c.h.b16 %v4915
          %v5190 = vunpack.c.l.b16 %v4916
          %v5191 = vunpack.c.h.b16 %v4916
          %v5192 = vunpack.c.l.b16 %v4917
          %v5193 = vunpack.c.h.b16 %v4917
          %v5194 = vunpack.c.l.b16 %v4918
          %v5195 = vunpack.c.h.b16 %v4918
          %v5196 = vunpack.c.l.b16 %v4919
          %v5197 = vunpack.c.h.b16 %v4919
          %v5198 = vunpack.c.l.b16 %v4920
          %v5199 = vunpack.c.h.b16 %v4920
          %v5200 = vunpack.c.l.b16 %v4921
          %v5201 = vunpack.c.h.b16 %v4921
          %v5202 = vunpack.c.l.b16 %v4922
          %v5203 = vunpack.c.h.b16 %v4922
          %v5204 = vunpack.c.l.b16 %v4923
          %v5205 = vunpack.c.h.b16 %v4923
          %v5206 = vunpack.c.l.b16 %v4924
          %v5207 = vunpack.c.h.b16 %v4924
          %v5208 = vunpack.c.l.b16 %v4925
          %v5209 = vunpack.c.h.b16 %v4925
          %v5210 = vunpack.c.l.b16 %v4926
          %v5211 = vunpack.c.h.b16 %v4926
          %v5212 = vunpack.c.l.b16 %v4927
          %v5213 = vunpack.c.h.b16 %v4927
          %v5214 = vunpack.c.l.b16 %v4928
          %v5215 = vunpack.c.h.b16 %v4928
          %v5216 = vunpack.c.l.b16 %v4929
          %v5217 = vunpack.c.h.b16 %v4929
          %v5218 = vunpack.c.l.b16 %v4930
          %v5219 = vunpack.c.h.b16 %v4930
          %v5220 = vunpack.c.l.b16 %v4931
          %v5221 = vunpack.c.h.b16 %v4931
          %v5222 = vunpack.c.l.b16 %v4932
          %v5223 = vunpack.c.h.b16 %v4932
          %v5224 = vunpack.c.l.b16 %v4933
          %v5225 = vunpack.c.h.b16 %v4933
          %v5226 = vunpack.c.l.b16 %v4934
          %v5227 = vunpack.c.h.b16 %v4934
          %v5228 = vunpack.c.l.b16 %v4935
          %v5229 = vunpack.c.h.b16 %v4935
          %v5230 = vunpack.c.l.b16 %v4936
          %v5231 = vunpack.c.h.b16 %v4936
          %v5232 = vunpack.c.l.b16 %v4937
          %v5233 = vunpack.c.h.b16 %v4937
          %v5234 = vunpack.c.l.b16 %v4938
          %v5235 = vunpack.c.h.b16 %v4938
          %v5236 = vunpack.c.l.b16 %v4939
          %v5237 = vunpack.c.h.b16 %v4939
          %v5238 = vunpack.c.l.b16 %v4940
          %v5239 = vunpack.c.h.b16 %v4940
          %v5240 = vunpack.c.l.b16 %v4941
          %v5241 = vunpack.c.h.b16 %v4941
          %v5242 = vunpack.c.l.b16 %v4942
          %v5243 = vunpack.c.h.b16 %v4942
          %v5244 = vunpack.c.l.b16 %v4943
          %v5245 = vunpack.c.h.b16 %v4943
          %v5246 = vunpack.c.l.b16 %v4944
          %v5247 = vunpack.c.h.b16 %v4944
          %v5248 = vunpack.c.l.b16 %v4945
          %v5249 = vunpack.c.h.b16 %v4945
          %v5250 = vunpack.c.l.b16 %v4946
          %v5251 = vunpack.c.h.b16 %v4946
          %v5252 = vunpack.c.l.b16 %v4947
          %v5253 = vunpack.c.h.b16 %v4947
          %v5254 = vunpack.c.l.b16 %v4948
          %v5255 = vunpack.c.h.b16 %v4948
          %v5256 = vunpack.c.l.b16 %v4949
          %v5257 = vunpack.c.h.b16 %v4949
          %v5258 = vunpack.c.l.b16 %v4950
          %v5259 = vunpack.c.h.b16 %v4950
          %v5260 = vunpack.c.l.b16 %v4951
          %v5261 = vunpack.c.h.b16 %v4951
          %v5262 = vunpack.c.l.b16 %v4952
          %v5263 = vunpack.c.h.b16 %v4952
          %v5264 = vunpack.c.l.b16 %v4953
          %v5265 = vunpack.c.h.b16 %v4953
          %v5266 = vunpack.c.l.b16 %v4954
          %v5267 = vunpack.c.h.b16 %v4954
          %v5268 = vunpack.c.l.b16 %v4955
          %v5269 = vunpack.c.h.b16 %v4955
          %v5270 = vunpack.c.l.b16 %v4956
          %v5271 = vunpack.c.h.b16 %v4956
          %v5272 = vunpack.c.l.b16 %v4957
          %v5273 = vunpack.c.h.b16 %v4957
          %v5274 = vunpack.c.l.b16 %v4958
          %v5275 = vunpack.c.h.b16 %v4958
          %v5276 = vunpack.c.l.b16 %v4959
          %v5277 = vunpack.c.h.b16 %v4959
          %v5278 = vunpack.c.l.b16 %v4960
          %v5279 = vunpack.c.h.b16 %v4960
          %v5280 = vunpack.c.l.b16 %v4961
          %v5281 = vunpack.c.h.b16 %v4961
          %v5282 = vunpack.c.l.b16 %v4962
          %v5283 = vunpack.c.h.b16 %v4962
          %v5284 = vunpack.c.l.b16 %v4963
          %v5285 = vunpack.c.h.b16 %v4963
          %v5286 = vunpack.c.l.b16 %v4964
          %v5287 = vunpack.c.h.b16 %v4964
          %v5288 = vunpack.c.l.b16 %v4965
          %v5289 = vunpack.c.h.b16 %v4965
          %v5290 = vunpack.c.l.b16 %v4966
          %v5291 = vunpack.c.h.b16 %v4966
          %v5292 = vunpack.c.l.b16 %v4967
          %v5293 = vunpack.c.h.b16 %v4967
          %v5294 = vunpack.c.l.b16 %v4968
          %v5295 = vunpack.c.h.b16 %v4968
          %v5296 = vunpack.c.l.b16 %v4969
          %v5297 = vunpack.c.h.b16 %v4969
          %v5298 = vunpack.c.l.b16 %v4970
          %v5299 = vunpack.c.h.b16 %v4970
          %v5300 = vunpack.c.l.b16 %v4971
          %v5301 = vunpack.c.h.b16 %v4971
          %v5302 = vunpack.c.l.b16 %v4972
          %v5303 = vunpack.c.h.b16 %v4972
          %v5304 = vunpack.c.l.b16 %v4973
          %v5305 = vunpack.c.h.b16 %v4973
          %v5306 = vunpack.c.l.b16 %v4974
          %v5307 = vunpack.c.h.b16 %v4974
          %v5308 = vunpack.c.l.b16 %v4975
          %v5309 = vunpack.c.h.b16 %v4975
          %v5310 = vunpack.c.l.b16 %v4976
          %v5311 = vunpack.c.h.b16 %v4976
          %v5312 = vunpack.c.l.b16 %v4977
          %v5313 = vunpack.c.h.b16 %v4977
          %v5314 = vunpack.c.l.b16 %v4978
          %v5315 = vunpack.c.h.b16 %v4978
          %v5316 = vunpack.c.l.b16 %v4979
          %v5317 = vunpack.c.h.b16 %v4979
          %v5318 = vunpack.c.l.b16 %v4980
          %v5319 = vunpack.c.h.b16 %v4980
          %v5320 = vunpack.c.l.b16 %v4981
          %v5321 = vunpack.c.h.b16 %v4981
          %v5322 = vunpack.c.l.b16 %v4982
          %v5323 = vunpack.c.h.b16 %v4982
          %v5324 = vunpack.c.l.b16 %v4983
          %v5325 = vunpack.c.h.b16 %v4983
          %v5326 = vunpack.c.l.b16 %v4984
          %v5327 = vunpack.c.h.b16 %v4984
          %v5328 = vunpack.c.l.b16 %v4985
          %v5329 = vunpack.c.h.b16 %v4985
          %v5330 = vunpack.c.l.b16 %v4986
          %v5331 = vunpack.c.h.b16 %v4986
          %v5332 = vunpack.c.l.b16 %v4987
          %v5333 = vunpack.c.h.b16 %v4987
          %v5334 = vunpack.c.l.b16 %v4988
          %v5335 = vunpack.c.h.b16 %v4988
          %v5336 = vunpack.c.l.b16 %v4989
          %v5337 = vunpack.c.h.b16 %v4989
          %v5338 = vunpack.c.l.b16 %v4990
          %v5339 = vunpack.c.h.b16 %v4990
          %v5340 = vunpack.c.l.b16 %v4991
          %v5341 = vunpack.c.h.b16 %v4991
          %v5342 = vunpack.c.l.b16 %v4992
          %v5343 = vunpack.c.h.b16 %v4992
          %v5344 = vunpack.c.l.b16 %v4993
          %v5345 = vunpack.c.h.b16 %v4993
          %v5346 = vunpack.c.l.b16 %v4994
          %v5347 = vunpack.c.h.b16 %v4994
          %v5348 = vunpack.c.l.b16 %v4995
          %v5349 = vunpack.c.h.b16 %v4995
          %v5350 = vunpack.c.l.b16 %v4996
          %v5351 = vunpack.c.h.b16 %v4996
          %v5352 = vunpack.c.l.b16 %v4997
          %v5353 = vunpack.c.h.b16 %v4997
          %v5354 = vunpack.c.l.b16 %v4998
          %v5355 = vunpack.c.h.b16 %v4998
          %v5356 = vunpack.c.l.b16 %v4999
          %v5357 = vunpack.c.h.b16 %v4999
          %v5358 = vunpack.c.l.b16 %v5000
          %v5359 = vunpack.c.h.b16 %v5000
          %v5360 = vunpack.c.l.b16 %v5001
          %v5361 = vunpack.c.h.b16 %v5001
          %v5362 = vunpack.c.l.b16 %v5002
          %v5363 = vunpack.c.h.b16 %v5002
          %v5364 = vunpack.c.l.b16 %v5003
          %v5365 = vunpack.c.h.b16 %v5003
          %v5366 = vunpack.c.l.b16 %v5004
          %v5367 = vunpack.c.h.b16 %v5004
          %v5368 = vunpack.c.l.b16 %v5005
          %v5369 = vunpack.c.h.b16 %v5005
          %v5370 = vunpack.c.l.b16 %v5006
          %v5371 = vunpack.c.h.b16 %v5006
          %v5372 = vunpack.c.l.b16 %v5007
          %v5373 = vunpack.c.h.b16 %v5007
          %v5374 = vunpack.c.l.b16 %v5008
          %v5375 = vunpack.c.h.b16 %v5008
          %v5376 = vunpack.c.l.b16 %v5009
          %v5377 = vunpack.c.h.b16 %v5009
          %v5378 = vunpack.c.l.b16 %v5010
          %v5379 = vunpack.c.h.b16 %v5010
          %v5380 = vunpack.c.l.b16 %v5011
          %v5381 = vunpack.c.h.b16 %v5011
          %v5382 = vunpack.c.l.b16 %v5012
          %v5383 = vunpack.c.h.b16 %v5012
          %v5384 = vunpack.c.l.b16 %v5013
          %v5385 = vunpack.c.h.b16 %v5013
          %v5386 = vunpack.c.l.b16 %v5014
          %v5387 = vunpack.c.h.b16 %v5014
          %v5388 = vunpack.c.l.b16 %v5015
          %v5389 = vunpack.c.h.b16 %v5015
          %v5390 = vunpack.c.l.b16 %v5016
          %v5391 = vunpack.c.h.b16 %v5016
          %v5392 = vunpack.c.l.b16 %v5017
          %v5393 = vunpack.c.h.b16 %v5017
          %v5394 = vunpack.c.l.b16 %v5018
          %v5395 = vunpack.c.h.b16 %v5018
          %v5396 = vunpack.c.l.b16 %v5019
          %v5397 = vunpack.c.h.b16 %v5019
          %v5398 = vunpack.c.l.b16 %v5020
          %v5399 = vunpack.c.h.b16 %v5020
          %v5400 = vunpack.c.l.b16 %v5021
          %v5401 = vunpack.c.h.b16 %v5021
          %v5402 = vunpack.c.l.b16 %v5022
          %v5403 = vunpack.c.h.b16 %v5022
          %v5404 = vunpack.c.l.b16 %v5023
          %v5405 = vunpack.c.h.b16 %v5023
          %v5406 = vunpack.c.l.b16 %v5024
          %v5407 = vunpack.c.h.b16 %v5024
          %v5408 = vunpack.c.l.b16 %v5025
          %v5409 = vunpack.c.h.b16 %v5025
          %v5410 = vunpack.c.l.b16 %v5026
          %v5411 = vunpack.c.h.b16 %v5026
          %v5412 = vunpack.c.l.b16 %v5027
          %v5413 = vunpack.c.h.b16 %v5027
          %v5414 = vunpack.c.l.b16 %v5028
          %v5415 = vunpack.c.h.b16 %v5028
          %v5416 = vunpack.c.l.b16 %v5029
          %v5417 = vunpack.c.h.b16 %v5029
          %v5418 = vunpack.c.l.b16 %v5030
          %v5419 = vunpack.c.h.b16 %v5030
          %v5420 = vunpack.c.l.b16 %v5031
          %v5421 = vunpack.c.h.b16 %v5031
          %v5422 = vunpack.c.l.b16 %v5032
          %v5423 = vunpack.c.h.b16 %v5032
          %v5424 = vunpack.c.l.b16 %v5033
          %v5425 = vunpack.c.h.b16 %v5033
          %v5426 = vunpack.c.l.b16 %v5034
          %v5427 = vunpack.c.h.b16 %v5034
          %v5428 = vunpack.c.l.b16 %v5035
          %v5429 = vunpack.c.h.b16 %v5035
          %v5430 = vpack.c.b16 %v5178, %v5174
          %v5431 = vpack.c.b16 %v5179, %v5175
          %v5432 = vpack.c.b16 %v5180, %v5176
          %v5433 = vpack.c.b16 %v5181, %v5177
          %v5434 = vpack.c.b16 %v5186, %v5182
          %v5435 = vpack.c.b16 %v5187, %v5183
          %v5436 = vpack.c.b16 %v5188, %v5184
          %v5437 = vpack.c.b16 %v5189, %v5185
          %v5438 = vpack.c.b16 %v5194, %v5190
          %v5439 = vpack.c.b16 %v5195, %v5191
          %v5440 = vpack.c.b16 %v5196, %v5192
          %v5441 = vpack.c.b16 %v5197, %v5193
          %v5442 = vpack.c.b16 %v5202, %v5198
          %v5443 = vpack.c.b16 %v5203, %v5199
          %v5444 = vpack.c.b16 %v5204, %v5200
          %v5445 = vpack.c.b16 %v5205, %v5201
          %v5446 = vpack.c.b16 %v5210, %v5206
          %v5447 = vpack.c.b16 %v5211, %v5207
          %v5448 = vpack.c.b16 %v5212, %v5208
          %v5449 = vpack.c.b16 %v5213, %v5209
          %v5450 = vpack.c.b16 %v5218, %v5214
          %v5451 = vpack.c.b16 %v5219, %v5215
          %v5452 = vpack.c.b16 %v5220, %v5216
          %v5453 = vpack.c.b16 %v5221, %v5217
          %v5454 = vpack.c.b16 %v5226, %v5222
          %v5455 = vpack.c.b16 %v5227, %v5223
          %v5456 = vpack.c.b16 %v5228, %v5224
          %v5457 = vpack.c.b16 %v5229, %v5225
          %v5458 = vpack.c.b16 %v5234, %v5230
          %v5459 = vpack.c.b16 %v5235, %v5231
          %v5460 = vpack.c.b16 %v5236, %v5232
          %v5461 = vpack.c.b16 %v5237, %v5233
          %v5462 = vpack.c.b16 %v5242, %v5238
          %v5463 = vpack.c.b16 %v5243, %v5239
          %v5464 = vpack.c.b16 %v5244, %v5240
          %v5465 = vpack.c.b16 %v5245, %v5241
          %v5466 = vpack.c.b16 %v5250, %v5246
          %v5467 = vpack.c.b16 %v5251, %v5247
          %v5468 = vpack.c.b16 %v5252, %v5248
          %v5469 = vpack.c.b16 %v5253, %v5249
          %v5470 = vpack.c.b16 %v5258, %v5254
          %v5471 = vpack.c.b16 %v5259, %v5255
          %v5472 = vpack.c.b16 %v5260, %v5256
          %v5473 = vpack.c.b16 %v5261, %v5257
          %v5474 = vpack.c.b16 %v5266, %v5262
          %v5475 = vpack.c.b16 %v5267, %v5263
          %v5476 = vpack.c.b16 %v5268, %v5264
          %v5477 = vpack.c.b16 %v5269, %v5265
          %v5478 = vpack.c.b16 %v5274, %v5270
          %v5479 = vpack.c.b16 %v5275, %v5271
          %v5480 = vpack.c.b16 %v5276, %v5272
          %v5481 = vpack.c.b16 %v5277, %v5273
          %v5482 = vpack.c.b16 %v5282, %v5278
          %v5483 = vpack.c.b16 %v5283, %v5279
          %v5484 = vpack.c.b16 %v5284, %v5280
          %v5485 = vpack.c.b16 %v5285, %v5281
          %v5486 = vpack.c.b16 %v5290, %v5286
          %v5487 = vpack.c.b16 %v5291, %v5287
          %v5488 = vpack.c.b16 %v5292, %v5288
          %v5489 = vpack.c.b16 %v5293, %v5289
          %v5490 = vpack.c.b16 %v5298, %v5294
          %v5491 = vpack.c.b16 %v5299, %v5295
          %v5492 = vpack.c.b16 %v5300, %v5296
          %v5493 = vpack.c.b16 %v5301, %v5297
          %v5494 = vpack.c.b16 %v5306, %v5302
          %v5495 = vpack.c.b16 %v5307, %v5303
          %v5496 = vpack.c.b16 %v5308, %v5304
          %v5497 = vpack.c.b16 %v5309, %v5305
          %v5498 = vpack.c.b16 %v5314, %v5310
          %v5499 = vpack.c.b16 %v5315, %v5311
          %v5500 = vpack.c.b16 %v5316, %v5312
          %v5501 = vpack.c.b16 %v5317, %v5313
          %v5502 = vpack.c.b16 %v5322, %v5318
          %v5503 = vpack.c.b16 %v5323, %v5319
          %v5504 = vpack.c.b16 %v5324, %v5320
          %v5505 = vpack.c.b16 %v5325, %v5321
          %v5506 = vpack.c.b16 %v5330, %v5326
          %v5507 = vpack.c.b16 %v5331, %v5327
          %v5508 = vpack.c.b16 %v5332, %v5328
          %v5509 = vpack.c.b16 %v5333, %v5329
          %v5510 = vpack.c.b16 %v5338, %v5334
          %v5511 = vpack.c.b16 %v5339, %v5335
          %v5512 = vpack.c.b16 %v5340, %v5336
          %v5513 = vpack.c.b16 %v5341, %v5337
          %v5514 = vpack.c.b16 %v5346, %v5342
          %v5515 = vpack.c.b16 %v5347, %v5343
          %v5516 = vpack.c.b16 %v5348, %v5344
          %v5517 = vpack.c.b16 %v5349, %v5345
          %v5518 = vpack.c.b16 %v5354, %v5350
          %v5519 = vpack.c.b16 %v5355, %v5351
          %v5520 = vpack.c.b16 %v5356, %v5352
          %v5521 = vpack.c.b16 %v5357, %v5353
          %v5522 = vpack.c.b16 %v5362, %v5358
          %v5523 = vpack.c.b16 %v5363, %v5359
          %v5524 = vpack.c.b16 %v5364, %v5360
          %v5525 = vpack.c.b16 %v5365, %v5361
          %v5526 = vpack.c.b16 %v5370, %v5366
          %v5527 = vpack.c.b16 %v5371, %v5367
          %v5528 = vpack.c.b16 %v5372, %v5368
          %v5529 = vpack.c.b16 %v5373, %v5369
          %v5530 = vpack.c.b16 %v5378, %v5374
          %v5531 = vpack.c.b16 %v5379, %v5375
          %v5532 = vpack.c.b16 %v5380, %v5376
          %v5533 = vpack.c.b16 %v5381, %v5377
          %v5534 = vpack.c.b16 %v5386, %v5382
          %v5535 = vpack.c.b16 %v5387, %v5383
          %v5536 = vpack.c.b16 %v5388, %v5384
          %v5537 = vpack.c.b16 %v5389, %v5385
          %v5538 = vpack.c.b16 %v5394, %v5390
          %v5539 = vpack.c.b16 %v5395, %v5391
          %v5540 = vpack.c.b16 %v5396, %v5392
          %v5541 = vpack.c.b16 %v5397, %v5393
          %v5542 = vpack.c.b16 %v5402, %v5398
          %v5543 = vpack.c.b16 %v5403, %v5399
          %v5544 = vpack.c.b16 %v5404, %v5400
          %v5545 = vpack.c.b16 %v5405, %v5401
          %v5546 = vpack.c.b16 %v5410, %v5406
          %v5547 = vpack.c.b16 %v5411, %v5407
          %v5548 = vpack.c.b16 %v5412, %v5408
          %v5549 = vpack.c.b16 %v5413, %v5409
          %v5550 = vpack.c.b16 %v5418, %v5414
          %v5551 = vpack.c.b16 %v5419, %v5415
          %v5552 = vpack.c.b16 %v5420, %v5416
          %v5553 = vpack.c.b16 %v5421, %v5417
          %v5554 = vpack.c.b16 %v5426, %v5422
          %v5555 = vpack.c.b16 %v5427, %v5423
          %v5556 = vpack.c.b16 %v5428, %v5424
          %v5557 = vpack.c.b16 %v5429, %v5425
          %5686 = vmatpush.bf16.msra.mxu0 %v5458
          %5687 = vmatpush.bf16.msra.mxu0 %v5454
          %5688 = vmatpush.bf16.msra.mxu0 %v5450
          %5689 = vmatpush.bf16.msra.mxu0 %v5446
          %5690 = vmatpush.bf16.msra.mxu0 %v5442
          %5691 = vmatpush.bf16.msra.mxu0 %v5438
          %5692 = vmatpush.bf16.msra.mxu0 %v5434
          %5693 = vmatpush.bf16.msra.mxu0 %v5430
          %5694 = vmatmul.bf16.gmra.mxu0 %v4904
          %v5695 = vpop.f32.mrf.mxu0
          %v5696 = vadd.f32 %v5038, %v5695
          %v5697 = vpop.f32.mrf.mxu0
          %v5698 = vadd.f32 %v5038, %v5697
          %5699 = vdwg.mxu0
          %5700 = vmatpush.bf16.msra.mxu0 %v5490
          %5701 = vmatpush.bf16.msra.mxu0 %v5486
          %5702 = vmatpush.bf16.msra.mxu0 %v5482
          %5703 = vmatpush.bf16.msra.mxu0 %v5478
          %5704 = vmatpush.bf16.msra.mxu0 %v5474
          %5705 = vmatpush.bf16.msra.mxu0 %v5470
          %5706 = vmatpush.bf16.msra.mxu0 %v5466
          %5707 = vmatpush.bf16.msra.mxu0 %v5462
          %5708 = vmatmul.bf16.gmra.mxu0 %v4905
          %v5709 = vpop.f32.mrf.mxu0
          %v5710 = vadd.f32 %v5696, %v5709
          %v5711 = vpop.f32.mrf.mxu0
          %v5712 = vadd.f32 %v5698, %v5711
          %5713 = vdwg.mxu0
          %5714 = vmatpush.bf16.msra.mxu0 %v5522
          %5715 = vmatpush.bf16.msra.mxu0 %v5518
          %5716 = vmatpush.bf16.msra.mxu0 %v5514
          %5717 = vmatpush.bf16.msra.mxu0 %v5510
          %5718 = vmatpush.bf16.msra.mxu0 %v5506
          %5719 = vmatpush.bf16.msra.mxu0 %v5502
          %5720 = vmatpush.bf16.msra.mxu0 %v5498
          %5721 = vmatpush.bf16.msra.mxu0 %v5494
          %5722 = vmatmul.bf16.gmra.mxu0 %v4906
          %v5723 = vpop.f32.mrf.mxu0
          %v5724 = vadd.f32 %v5710, %v5723
          %v5725 = vpop.f32.mrf.mxu0
          %v5726 = vadd.f32 %v5712, %v5725
          %5727 = vdwg.mxu0
          %5728 = vmatpush.bf16.msra.mxu0 %v5554
          %5729 = vmatpush.bf16.msra.mxu0 %v5550
          %5730 = vmatpush.bf16.msra.mxu0 %v5546
          %5731 = vmatpush.bf16.msra.mxu0 %v5542
          %5732 = vmatpush.bf16.msra.mxu0 %v5538
          %5733 = vmatpush.bf16.msra.mxu0 %v5534
          %5734 = vmatpush.bf16.msra.mxu0 %v5530
          %5735 = vmatpush.bf16.msra.mxu0 %v5526
          %5736 = vmatmul.bf16.gmra.mxu0 %v4907
          %v5737 = vpop.f32.mrf.mxu0
          %v5738 = vadd.f32 %v5724, %v5737
          %v5739 = vpop.f32.mrf.mxu0
          %v5740 = vadd.f32 %v5726, %v5739
          %5741 = vdwg.mxu0
          %5742 = vmatpush.bf16.msra.mxu0 %v5459
          %5743 = vmatpush.bf16.msra.mxu0 %v5455
          %5744 = vmatpush.bf16.msra.mxu0 %v5451
          %5745 = vmatpush.bf16.msra.mxu0 %v5447
          %5746 = vmatpush.bf16.msra.mxu0 %v5443
          %5747 = vmatpush.bf16.msra.mxu0 %v5439
          %5748 = vmatpush.bf16.msra.mxu0 %v5435
          %5749 = vmatpush.bf16.msra.mxu0 %v5431
          %5750 = vmatmul.bf16.gmra.mxu0 %v4904
          %v5751 = vpop.f32.mrf.mxu0
          %v5752 = vadd.f32 %v5039, %v5751
          %v5753 = vpop.f32.mrf.mxu0
          %v5754 = vadd.f32 %v5039, %v5753
          %5755 = vdwg.mxu0
          %5756 = vmatpush.bf16.msra.mxu0 %v5491
          %5757 = vmatpush.bf16.msra.mxu0 %v5487
          %5758 = vmatpush.bf16.msra.mxu0 %v5483
          %5759 = vmatpush.bf16.msra.mxu0 %v5479
          %5760 = vmatpush.bf16.msra.mxu0 %v5475
          %5761 = vmatpush.bf16.msra.mxu0 %v5471
          %5762 = vmatpush.bf16.msra.mxu0 %v5467
          %5763 = vmatpush.bf16.msra.mxu0 %v5463
          %5764 = vmatmul.bf16.gmra.mxu0 %v4905
          %v5765 = vpop.f32.mrf.mxu0
          %v5766 = vadd.f32 %v5752, %v5765
          %v5767 = vpop.f32.mrf.mxu0
          %v5768 = vadd.f32 %v5754, %v5767
          %5769 = vdwg.mxu0
          %5770 = vmatpush.bf16.msra.mxu0 %v5523
          %5771 = vmatpush.bf16.msra.mxu0 %v5519
          %5772 = vmatpush.bf16.msra.mxu0 %v5515
          %5773 = vmatpush.bf16.msra.mxu0 %v5511
          %5774 = vmatpush.bf16.msra.mxu0 %v5507
          %5775 = vmatpush.bf16.msra.mxu0 %v5503
          %5776 = vmatpush.bf16.msra.mxu0 %v5499
          %5777 = vmatpush.bf16.msra.mxu0 %v5495
          %5778 = vmatmul.bf16.gmra.mxu0 %v4906
          %v5779 = vpop.f32.mrf.mxu0
          %v5780 = vadd.f32 %v5766, %v5779
          %v5781 = vpop.f32.mrf.mxu0
          %v5782 = vadd.f32 %v5768, %v5781
          %5783 = vdwg.mxu0
          %5784 = vmatpush.bf16.msra.mxu0 %v5555
          %5785 = vmatpush.bf16.msra.mxu0 %v5551
          %5786 = vmatpush.bf16.msra.mxu0 %v5547
          %5787 = vmatpush.bf16.msra.mxu0 %v5543
          %5788 = vmatpush.bf16.msra.mxu0 %v5539
          %5789 = vmatpush.bf16.msra.mxu0 %v5535
          %5790 = vmatpush.bf16.msra.mxu0 %v5531
          %5791 = vmatpush.bf16.msra.mxu0 %v5527
          %5792 = vmatmul.bf16.gmra.mxu0 %v4907
          %v5793 = vpop.f32.mrf.mxu0
          %v5794 = vadd.f32 %v5780, %v5793
          %v5795 = vpop.f32.mrf.mxu0
          %v5796 = vadd.f32 %v5782, %v5795
          %5797 = vdwg.mxu0
          %5798 = vmatpush.bf16.msra.mxu0 %v5460
          %5799 = vmatpush.bf16.msra.mxu0 %v5456
          %5800 = vmatpush.bf16.msra.mxu0 %v5452
          %5801 = vmatpush.bf16.msra.mxu0 %v5448
          %5802 = vmatpush.bf16.msra.mxu0 %v5444
          %5803 = vmatpush.bf16.msra.mxu0 %v5440
          %5804 = vmatpush.bf16.msra.mxu0 %v5436
          %5805 = vmatpush.bf16.msra.mxu0 %v5432
          %5806 = vmatmul.bf16.gmra.mxu0 %v4904
          %v5807 = vpop.f32.mrf.mxu0
          %v5808 = vadd.f32 %v5040, %v5807
          %v5809 = vpop.f32.mrf.mxu0
          %v5810 = vadd.f32 %v5040, %v5809
          %5811 = vdwg.mxu0
          %5812 = vmatpush.bf16.msra.mxu0 %v5492
          %5813 = vmatpush.bf16.msra.mxu0 %v5488
          %5814 = vmatpush.bf16.msra.mxu0 %v5484
          %5815 = vmatpush.bf16.msra.mxu0 %v5480
          %5816 = vmatpush.bf16.msra.mxu0 %v5476
          %5817 = vmatpush.bf16.msra.mxu0 %v5472
          %5818 = vmatpush.bf16.msra.mxu0 %v5468
          %5819 = vmatpush.bf16.msra.mxu0 %v5464
          %5820 = vmatmul.bf16.gmra.mxu0 %v4905
          %v5821 = vpop.f32.mrf.mxu0
          %v5822 = vadd.f32 %v5808, %v5821
          %v5823 = vpop.f32.mrf.mxu0
          %v5824 = vadd.f32 %v5810, %v5823
          %5825 = vdwg.mxu0
          %5826 = vmatpush.bf16.msra.mxu0 %v5524
          %5827 = vmatpush.bf16.msra.mxu0 %v5520
          %5828 = vmatpush.bf16.msra.mxu0 %v5516
          %5829 = vmatpush.bf16.msra.mxu0 %v5512
          %5830 = vmatpush.bf16.msra.mxu0 %v5508
          %5831 = vmatpush.bf16.msra.mxu0 %v5504
          %5832 = vmatpush.bf16.msra.mxu0 %v5500
          %5833 = vmatpush.bf16.msra.mxu0 %v5496
          %5834 = vmatmul.bf16.gmra.mxu0 %v4906
          %v5835 = vpop.f32.mrf.mxu0
          %v5836 = vadd.f32 %v5822, %v5835
          %v5837 = vpop.f32.mrf.mxu0
          %v5838 = vadd.f32 %v5824, %v5837
          %5839 = vdwg.mxu0
          %5840 = vmatpush.bf16.msra.mxu0 %v5556
          %5841 = vmatpush.bf16.msra.mxu0 %v5552
          %5842 = vmatpush.bf16.msra.mxu0 %v5548
          %5843 = vmatpush.bf16.msra.mxu0 %v5544
          %5844 = vmatpush.bf16.msra.mxu0 %v5540
          %5845 = vmatpush.bf16.msra.mxu0 %v5536
          %5846 = vmatpush.bf16.msra.mxu0 %v5532
          %5847 = vmatpush.bf16.msra.mxu0 %v5528
          %5848 = vmatmul.bf16.gmra.mxu0 %v4907
          %v5849 = vpop.f32.mrf.mxu0
          %v5850 = vadd.f32 %v5836, %v5849
          %v5851 = vpop.f32.mrf.mxu0
          %v5852 = vadd.f32 %v5838, %v5851
          %5853 = vdwg.mxu0
          %5854 = vmatpush.bf16.msra.mxu0 %v5461
          %5855 = vmatpush.bf16.msra.mxu0 %v5457
          %5856 = vmatpush.bf16.msra.mxu0 %v5453
          %5857 = vmatpush.bf16.msra.mxu0 %v5449
          %5858 = vmatpush.bf16.msra.mxu0 %v5445
          %5859 = vmatpush.bf16.msra.mxu0 %v5441
          %5860 = vmatpush.bf16.msra.mxu0 %v5437
          %5861 = vmatpush.bf16.msra.mxu0 %v5433
          %5862 = vmatmul.bf16.gmra.mxu0 %v4904
          %v5863 = vpop.f32.mrf.mxu0
          %v5864 = vadd.f32 %v5041, %v5863
          %v5865 = vpop.f32.mrf.mxu0
          %v5866 = vadd.f32 %v5041, %v5865
          %5867 = vdwg.mxu0
          %5868 = vmatpush.bf16.msra.mxu0 %v5493
          %5869 = vmatpush.bf16.msra.mxu0 %v5489
          %5870 = vmatpush.bf16.msra.mxu0 %v5485
          %5871 = vmatpush.bf16.msra.mxu0 %v5481
          %5872 = vmatpush.bf16.msra.mxu0 %v5477
          %5873 = vmatpush.bf16.msra.mxu0 %v5473
          %5874 = vmatpush.bf16.msra.mxu0 %v5469
          %5875 = vmatpush.bf16.msra.mxu0 %v5465
          %5876 = vmatmul.bf16.gmra.mxu0 %v4905
          %v5877 = vpop.f32.mrf.mxu0
          %v5878 = vadd.f32 %v5864, %v5877
          %v5879 = vpop.f32.mrf.mxu0
          %v5880 = vadd.f32 %v5866, %v5879
          %5881 = vdwg.mxu0
          %5882 = vmatpush.bf16.msra.mxu0 %v5525
          %5883 = vmatpush.bf16.msra.mxu0 %v5521
          %5884 = vmatpush.bf16.msra.mxu0 %v5517
          %5885 = vmatpush.bf16.msra.mxu0 %v5513
          %5886 = vmatpush.bf16.msra.mxu0 %v5509
          %5887 = vmatpush.bf16.msra.mxu0 %v5505
          %5888 = vmatpush.bf16.msra.mxu0 %v5501
          %5889 = vmatpush.bf16.msra.mxu0 %v5497
          %5890 = vmatmul.bf16.gmra.mxu0 %v4906
          %v5891 = vpop.f32.mrf.mxu0
          %v5892 = vadd.f32 %v5878, %v5891
          %v5893 = vpop.f32.mrf.mxu0
          %v5894 = vadd.f32 %v5880, %v5893
          %5895 = vdwg.mxu0
          %5896 = vmatpush.bf16.msra.mxu0 %v5557
          %5897 = vmatpush.bf16.msra.mxu0 %v5553
          %5898 = vmatpush.bf16.msra.mxu0 %v5549
          %5899 = vmatpush.bf16.msra.mxu0 %v5545
          %5900 = vmatpush.bf16.msra.mxu0 %v5541
          %5901 = vmatpush.bf16.msra.mxu0 %v5537
          %5902 = vmatpush.bf16.msra.mxu0 %v5533
          %5903 = vmatpush.bf16.msra.mxu0 %v5529
          %5904 = vmatmul.bf16.gmra.mxu0 %v4907
          %v5905 = vpop.f32.mrf.mxu0
          %v5906 = vadd.f32 %v5892, %v5905
          %v5907 = vpop.f32.mrf.mxu0
          %v5908 = vadd.f32 %v5894, %v5907
          %5909 = vdwg.mxu0
          %v5910 = vadd.f32 %v1240, %v5738
          %v5911 = vadd.f32 %v1241, %v5794
          %v5912 = vadd.f32 %v1242, %v5850
          %v5913 = vadd.f32 %v1243, %v5906
          %v5914 = vadd.f32 %v1244, %v5740
          %v5915 = vadd.f32 %v1245, %v5796
          %v5916 = vadd.f32 %v1246, %v5852
          %v5917 = vadd.f32 %v1247, %v5908
          %v5918 = vld [vmem:[%s912] sm:$0xf]
          %v5919 = vld [vmem:[%s922] sm:$0xf]
          %v5920 = vadd.f32 %v5910, %v5911
          %v5921 = vadd.f32 %v5920, %v5912
          %v5922 = vadd.f32 %v5921, %v5913
          %5923 = vadd.xlane.f32.xlu0 %v5922
          %v5924 = vpop.xlane.xlu0 %5923
          %v5925 = vadd.f32 %v5914, %v5915
          %v5926 = vadd.f32 %v5925, %v5916
          %v5927 = vadd.f32 %v5926, %v5917
          %5928 = vadd.xlane.f32.xlu0 %v5927
          %v5929 = vpop.xlane.xlu0 %5928
          %v5930 = vrcp.pop 512.0
          %v5931 = vmul.f32 512.0, %v5930
          %v5932 = vsub.f32 1.0, %v5931
          %v5933 = vmul.f32 %v5930, %v5932
          %v5934 = vadd.f32 %v5930, %v5933
          %vm5935 = vweird.f32 %v5930
          %v5936 = vsel %vm5935, %v5930, %v5934
          %v5937 = vmul.f32 %v5924, %v5936
          %v5938 = vmul.f32 %v5929, %v5936
          %v5939 = vsub.f32 %v5910, %v5937
          %v5940 = vsub.f32 %v5911, %v5937
          %v5941 = vsub.f32 %v5912, %v5937
          %v5942 = vsub.f32 %v5913, %v5937
          %v5943 = vsub.f32 %v5914, %v5938
          %v5944 = vsub.f32 %v5915, %v5938
          %v5945 = vsub.f32 %v5916, %v5938
          %v5946 = vsub.f32 %v5917, %v5938
          %v5947 = vmul.f32 %v5939, %v5939
          %v5948 = vmul.f32 %v5940, %v5940
          %v5949 = vmul.f32 %v5941, %v5941
          %v5950 = vmul.f32 %v5942, %v5942
          %v5951 = vmul.f32 %v5943, %v5943
          %v5952 = vmul.f32 %v5944, %v5944
          %v5953 = vmul.f32 %v5945, %v5945
          %v5954 = vmul.f32 %v5946, %v5946
          %v5955 = vadd.f32 %v5947, %v5948
          %v5956 = vadd.f32 %v5955, %v5949
          %v5957 = vadd.f32 %v5956, %v5950
          %5958 = vadd.xlane.f32.xlu0 %v5957
          %v5959 = vpop.xlane.xlu0 %5958
          %v5960 = vadd.f32 %v5951, %v5952
          %v5961 = vadd.f32 %v5960, %v5953
          %v5962 = vadd.f32 %v5961, %v5954
          %5963 = vadd.xlane.f32.xlu0 %v5962
          %v5964 = vpop.xlane.xlu0 %5963
          %v5965 = vmul.f32 %v5959, %v5936
          %v5966 = vmul.f32 %v5964, %v5936
          %v5967 = vadd.f32 %v5965, 1e-05
          %v5968 = vadd.f32 %v5966, 1e-05
          %v5969 = vrsqrt.pop %v5967
          %v5970 = vmul.f32 %v5969, %v5967
          %v5971 = vmul.f32 %v5970, %v5969
          %v5972 = vmul.f32 0.5, %v5971
          %v5973 = vsub.f32 1.5, %v5972
          %v5974 = vmul.f32 %v5969, %v5973
          %vm5975 = vweird.f32 %v5967
          %vm5976 = vweird.f32 %v5969
          %vm5977 = vmor %vm5975, %vm5976
          %v5978 = vsel %vm5977, %v5969, %v5974
          %v5979 = vrsqrt.pop %v5968
          %v5980 = vmul.f32 %v5979, %v5968
          %v5981 = vmul.f32 %v5980, %v5979
          %v5982 = vmul.f32 0.5, %v5981
          %v5983 = vsub.f32 1.5, %v5982
          %v5984 = vmul.f32 %v5979, %v5983
          %vm5985 = vweird.f32 %v5968
          %vm5986 = vweird.f32 %v5979
          %vm5987 = vmor %vm5985, %vm5986
          %v5988 = vsel %vm5987, %v5979, %v5984
          %v5989 = vmul.f32 %v5939, %v5978
          %v5990 = vmul.f32 %v5940, %v5978
          %v5991 = vmul.f32 %v5941, %v5978
          %v5992 = vmul.f32 %v5942, %v5978
          %v5993 = vmul.f32 %v5943, %v5988
          %v5994 = vmul.f32 %v5944, %v5988
          %v5995 = vmul.f32 %v5945, %v5988
          %v5996 = vmul.f32 %v5946, %v5988
          %v5998 = vperm.slane %v5918, 0
          %v5999 = vperm.slane %v5918, 1
          %v6000 = vperm.slane %v5918, 2
          %v6001 = vperm.slane %v5918, 3
          %v6006 = vmul.f32 %v5989, %v5998
          %v6007 = vmul.f32 %v5990, %v5999
          %v6008 = vmul.f32 %v5991, %v6000
          %v6009 = vmul.f32 %v5992, %v6001
          %v6010 = vmul.f32 %v5993, %v5998
          %v6011 = vmul.f32 %v5994, %v5999
          %v6012 = vmul.f32 %v5995, %v6000
          %v6013 = vmul.f32 %v5996, %v6001
          %v6015 = vperm.slane %v5919, 0
          %v6016 = vperm.slane %v5919, 1
          %v6017 = vperm.slane %v5919, 2
          %v6018 = vperm.slane %v5919, 3
          %v6023 = vadd.f32 %v6006, %v6015
          %v6024 = vadd.f32 %v6007, %v6016
          %v6025 = vadd.f32 %v6008, %v6017
          %v6026 = vadd.f32 %v6009, %v6018
          %v6027 = vadd.f32 %v6010, %v6015
          %v6028 = vadd.f32 %v6011, %v6016
          %v6029 = vadd.f32 %v6012, %v6017
          %v6030 = vadd.f32 %v6013, %v6018
          %6031 = vst [vmem:[#allocation3] sm:$0xff] %v6023
          %6032 = vst [vmem:[#allocation3 + $0x8] sm:$0xff] %v6024
          %6033 = vst [vmem:[#allocation3 + $0x10] sm:$0xff] %v6025
          %6034 = vst [vmem:[#allocation3 + $0x18] sm:$0xff] %v6026
          %6035 = vst [vmem:[#allocation3 + $0x20] sm:$0xff] %v6027
          %6036 = vst [vmem:[#allocation3 + $0x28] sm:$0xff] %v6028
          %6037 = vst [vmem:[#allocation3 + $0x30] sm:$0xff] %v6029
          %6038 = vst [vmem:[#allocation3 + $0x38] sm:$0xff] %v6030
          %6039 = vst [vmem:[#allocation4] sm:$0xff] 0.0
          %6040 = vst [vmem:[#allocation4 + $0x8] sm:$0xff] 0.0
          %6041 = vst [vmem:[#allocation4 + $0x10] sm:$0xff] 0.0
          %6042 = vst [vmem:[#allocation4 + $0x18] sm:$0xff] 0.0
          %6043 = vst [vmem:[#allocation4 + $0x20] sm:$0xff] 0.0
          %6044 = vst [vmem:[#allocation4 + $0x28] sm:$0xff] 0.0
          %6045 = vst [vmem:[#allocation4 + $0x30] sm:$0xff] 0.0
          %6046 = vst [vmem:[#allocation4 + $0x38] sm:$0xff] 0.0
        $region164: #{pos_model_forward.1} parent=91 // pred_fallthru
          _
        %v6047 = vld [vmem:[#allocation3] sm:$0xff]
        %v6048 = vld [vmem:[#allocation3 + $0x8] sm:$0xff]
        %v6049 = vld [vmem:[#allocation3 + $0x10] sm:$0xff]
        %v6050 = vld [vmem:[#allocation3 + $0x18] sm:$0xff]
        %v6051 = vld [vmem:[#allocation3 + $0x20] sm:$0xff]
        %v6052 = vld [vmem:[#allocation3 + $0x28] sm:$0xff]
        %v6053 = vld [vmem:[#allocation3 + $0x30] sm:$0xff]
        %v6054 = vld [vmem:[#allocation3 + $0x38] sm:$0xff]
        %v6055 = vpack.c.bf16 %v6051, %v6047
        %v6056 = vpack.c.bf16 %v6052, %v6048
        %v6057 = vpack.c.bf16 %v6053, %v6049
        %v6058 = vpack.c.bf16 %v6054, %v6050
        %v6059 = vld [vmem:[%s932] sm:$0xff]
        %v6060 = vld [vmem:[%s932 + $0x8] sm:$0xff]
        %v6061 = vld [vmem:[%s932 + $0x10] sm:$0xff]
        %v6062 = vld [vmem:[%s932 + $0x18] sm:$0xff]
        %v6063 = vld [vmem:[%s932 + $0x20] sm:$0xff]
        %v6064 = vld [vmem:[%s932 + $0x28] sm:$0xff]
        %v6065 = vld [vmem:[%s932 + $0x30] sm:$0xff]
        %v6066 = vld [vmem:[%s932 + $0x38] sm:$0xff]
        %v6067 = vld [vmem:[%s932 + $0x40] sm:$0xff]
        %v6068 = vld [vmem:[%s932 + $0x48] sm:$0xff]
        %v6069 = vld [vmem:[%s932 + $0x50] sm:$0xff]
        %v6070 = vld [vmem:[%s932 + $0x58] sm:$0xff]
        %v6071 = vld [vmem:[%s932 + $0x60] sm:$0xff]
        %v6072 = vld [vmem:[%s932 + $0x68] sm:$0xff]
        %v6073 = vld [vmem:[%s932 + $0x70] sm:$0xff]
        %v6074 = vld [vmem:[%s932 + $0x78] sm:$0xff]
        %v6075 = vld [vmem:[%s932 + $0x80] sm:$0xff]
        %v6076 = vld [vmem:[%s932 + $0x88] sm:$0xff]
        %v6077 = vld [vmem:[%s932 + $0x90] sm:$0xff]
        %v6078 = vld [vmem:[%s932 + $0x98] sm:$0xff]
        %v6079 = vld [vmem:[%s932 + $0xa0] sm:$0xff]
        %v6080 = vld [vmem:[%s932 + $0xa8] sm:$0xff]
        %v6081 = vld [vmem:[%s932 + $0xb0] sm:$0xff]
        %v6082 = vld [vmem:[%s932 + $0xb8] sm:$0xff]
        %v6083 = vld [vmem:[%s932 + $0xc0] sm:$0xff]
        %v6084 = vld [vmem:[%s932 + $0xc8] sm:$0xff]
        %v6085 = vld [vmem:[%s932 + $0xd0] sm:$0xff]
        %v6086 = vld [vmem:[%s932 + $0xd8] sm:$0xff]
        %v6087 = vld [vmem:[%s932 + $0xe0] sm:$0xff]
        %v6088 = vld [vmem:[%s932 + $0xe8] sm:$0xff]
        %v6089 = vld [vmem:[%s932 + $0xf0] sm:$0xff]
        %v6090 = vld [vmem:[%s932 + $0xf8] sm:$0xff]
        %v6091 = vld [vmem:[%s932 + $0x100] sm:$0xff]
        %v6092 = vld [vmem:[%s932 + $0x108] sm:$0xff]
        %v6093 = vld [vmem:[%s932 + $0x110] sm:$0xff]
        %v6094 = vld [vmem:[%s932 + $0x118] sm:$0xff]
        %v6095 = vld [vmem:[%s932 + $0x120] sm:$0xff]
        %v6096 = vld [vmem:[%s932 + $0x128] sm:$0xff]
        %v6097 = vld [vmem:[%s932 + $0x130] sm:$0xff]
        %v6098 = vld [vmem:[%s932 + $0x138] sm:$0xff]
        %v6099 = vld [vmem:[%s932 + $0x140] sm:$0xff]
        %v6100 = vld [vmem:[%s932 + $0x148] sm:$0xff]
        %v6101 = vld [vmem:[%s932 + $0x150] sm:$0xff]
        %v6102 = vld [vmem:[%s932 + $0x158] sm:$0xff]
        %v6103 = vld [vmem:[%s932 + $0x160] sm:$0xff]
        %v6104 = vld [vmem:[%s932 + $0x168] sm:$0xff]
        %v6105 = vld [vmem:[%s932 + $0x170] sm:$0xff]
        %v6106 = vld [vmem:[%s932 + $0x178] sm:$0xff]
        %v6107 = vld [vmem:[%s932 + $0x180] sm:$0xff]
        %v6108 = vld [vmem:[%s932 + $0x188] sm:$0xff]
        %v6109 = vld [vmem:[%s932 + $0x190] sm:$0xff]
        %v6110 = vld [vmem:[%s932 + $0x198] sm:$0xff]
        %v6111 = vld [vmem:[%s932 + $0x1a0] sm:$0xff]
        %v6112 = vld [vmem:[%s932 + $0x1a8] sm:$0xff]
        %v6113 = vld [vmem:[%s932 + $0x1b0] sm:$0xff]
        %v6114 = vld [vmem:[%s932 + $0x1b8] sm:$0xff]
        %v6115 = vld [vmem:[%s932 + $0x1c0] sm:$0xff]
        %v6116 = vld [vmem:[%s932 + $0x1c8] sm:$0xff]
        %v6117 = vld [vmem:[%s932 + $0x1d0] sm:$0xff]
        %v6118 = vld [vmem:[%s932 + $0x1d8] sm:$0xff]
        %v6119 = vld [vmem:[%s932 + $0x1e0] sm:$0xff]
        %v6120 = vld [vmem:[%s932 + $0x1e8] sm:$0xff]
        %v6121 = vld [vmem:[%s932 + $0x1f0] sm:$0xff]
        %v6122 = vld [vmem:[%s932 + $0x1f8] sm:$0xff]
        %v6123 = vld [vmem:[%s932 + $0x200] sm:$0xff]
        %v6124 = vld [vmem:[%s932 + $0x208] sm:$0xff]
        %v6125 = vld [vmem:[%s932 + $0x210] sm:$0xff]
        %v6126 = vld [vmem:[%s932 + $0x218] sm:$0xff]
        %v6127 = vld [vmem:[%s932 + $0x220] sm:$0xff]
        %v6128 = vld [vmem:[%s932 + $0x228] sm:$0xff]
        %v6129 = vld [vmem:[%s932 + $0x230] sm:$0xff]
        %v6130 = vld [vmem:[%s932 + $0x238] sm:$0xff]
        %v6131 = vld [vmem:[%s932 + $0x240] sm:$0xff]
        %v6132 = vld [vmem:[%s932 + $0x248] sm:$0xff]
        %v6133 = vld [vmem:[%s932 + $0x250] sm:$0xff]
        %v6134 = vld [vmem:[%s932 + $0x258] sm:$0xff]
        %v6135 = vld [vmem:[%s932 + $0x260] sm:$0xff]
        %v6136 = vld [vmem:[%s932 + $0x268] sm:$0xff]
        %v6137 = vld [vmem:[%s932 + $0x270] sm:$0xff]
        %v6138 = vld [vmem:[%s932 + $0x278] sm:$0xff]
        %v6139 = vld [vmem:[%s932 + $0x280] sm:$0xff]
        %v6140 = vld [vmem:[%s932 + $0x288] sm:$0xff]
        %v6141 = vld [vmem:[%s932 + $0x290] sm:$0xff]
        %v6142 = vld [vmem:[%s932 + $0x298] sm:$0xff]
        %v6143 = vld [vmem:[%s932 + $0x2a0] sm:$0xff]
        %v6144 = vld [vmem:[%s932 + $0x2a8] sm:$0xff]
        %v6145 = vld [vmem:[%s932 + $0x2b0] sm:$0xff]
        %v6146 = vld [vmem:[%s932 + $0x2b8] sm:$0xff]
        %v6147 = vld [vmem:[%s932 + $0x2c0] sm:$0xff]
        %v6148 = vld [vmem:[%s932 + $0x2c8] sm:$0xff]
        %v6149 = vld [vmem:[%s932 + $0x2d0] sm:$0xff]
        %v6150 = vld [vmem:[%s932 + $0x2d8] sm:$0xff]
        %v6151 = vld [vmem:[%s932 + $0x2e0] sm:$0xff]
        %v6152 = vld [vmem:[%s932 + $0x2e8] sm:$0xff]
        %v6153 = vld [vmem:[%s932 + $0x2f0] sm:$0xff]
        %v6154 = vld [vmem:[%s932 + $0x2f8] sm:$0xff]
        %v6155 = vld [vmem:[%s932 + $0x300] sm:$0xff]
        %v6156 = vld [vmem:[%s932 + $0x308] sm:$0xff]
        %v6157 = vld [vmem:[%s932 + $0x310] sm:$0xff]
        %v6158 = vld [vmem:[%s932 + $0x318] sm:$0xff]
        %v6159 = vld [vmem:[%s932 + $0x320] sm:$0xff]
        %v6160 = vld [vmem:[%s932 + $0x328] sm:$0xff]
        %v6161 = vld [vmem:[%s932 + $0x330] sm:$0xff]
        %v6162 = vld [vmem:[%s932 + $0x338] sm:$0xff]
        %v6163 = vld [vmem:[%s932 + $0x340] sm:$0xff]
        %v6164 = vld [vmem:[%s932 + $0x348] sm:$0xff]
        %v6165 = vld [vmem:[%s932 + $0x350] sm:$0xff]
        %v6166 = vld [vmem:[%s932 + $0x358] sm:$0xff]
        %v6167 = vld [vmem:[%s932 + $0x360] sm:$0xff]
        %v6168 = vld [vmem:[%s932 + $0x368] sm:$0xff]
        %v6169 = vld [vmem:[%s932 + $0x370] sm:$0xff]
        %v6170 = vld [vmem:[%s932 + $0x378] sm:$0xff]
        %v6171 = vld [vmem:[%s932 + $0x380] sm:$0xff]
        %v6172 = vld [vmem:[%s932 + $0x388] sm:$0xff]
        %v6173 = vld [vmem:[%s932 + $0x390] sm:$0xff]
        %v6174 = vld [vmem:[%s932 + $0x398] sm:$0xff]
        %v6175 = vld [vmem:[%s932 + $0x3a0] sm:$0xff]
        %v6176 = vld [vmem:[%s932 + $0x3a8] sm:$0xff]
        %v6177 = vld [vmem:[%s932 + $0x3b0] sm:$0xff]
        %v6178 = vld [vmem:[%s932 + $0x3b8] sm:$0xff]
        %v6179 = vld [vmem:[%s932 + $0x3c0] sm:$0xff]
        %v6180 = vld [vmem:[%s932 + $0x3c8] sm:$0xff]
        %v6181 = vld [vmem:[%s932 + $0x3d0] sm:$0xff]
        %v6182 = vld [vmem:[%s932 + $0x3d8] sm:$0xff]
        %v6183 = vld [vmem:[%s932 + $0x3e0] sm:$0xff]
        %v6184 = vld [vmem:[%s932 + $0x3e8] sm:$0xff]
        %v6185 = vld [vmem:[%s932 + $0x3f0] sm:$0xff]
        %v6186 = vld [vmem:[%s932 + $0x3f8] sm:$0xff]
        %v6187 = vld [vmem:[%s942] sm:$0xf]
        %v6189 = vperm.slane %v6187, 0
        %v6190 = vperm.slane %v6187, 1
        %v6191 = vperm.slane %v6187, 2
        %v6192 = vperm.slane %v6187, 3
        %v6325 = vunpack.c.l.b16 %v6059
        %v6326 = vunpack.c.h.b16 %v6059
        %v6327 = vunpack.c.l.b16 %v6060
        %v6328 = vunpack.c.h.b16 %v6060
        %v6329 = vunpack.c.l.b16 %v6061
        %v6330 = vunpack.c.h.b16 %v6061
        %v6331 = vunpack.c.l.b16 %v6062
        %v6332 = vunpack.c.h.b16 %v6062
        %v6333 = vunpack.c.l.b16 %v6063
        %v6334 = vunpack.c.h.b16 %v6063
        %v6335 = vunpack.c.l.b16 %v6064
        %v6336 = vunpack.c.h.b16 %v6064
        %v6337 = vunpack.c.l.b16 %v6065
        %v6338 = vunpack.c.h.b16 %v6065
        %v6339 = vunpack.c.l.b16 %v6066
        %v6340 = vunpack.c.h.b16 %v6066
        %v6341 = vunpack.c.l.b16 %v6067
        %v6342 = vunpack.c.h.b16 %v6067
        %v6343 = vunpack.c.l.b16 %v6068
        %v6344 = vunpack.c.h.b16 %v6068
        %v6345 = vunpack.c.l.b16 %v6069
        %v6346 = vunpack.c.h.b16 %v6069
        %v6347 = vunpack.c.l.b16 %v6070
        %v6348 = vunpack.c.h.b16 %v6070
        %v6349 = vunpack.c.l.b16 %v6071
        %v6350 = vunpack.c.h.b16 %v6071
        %v6351 = vunpack.c.l.b16 %v6072
        %v6352 = vunpack.c.h.b16 %v6072
        %v6353 = vunpack.c.l.b16 %v6073
        %v6354 = vunpack.c.h.b16 %v6073
        %v6355 = vunpack.c.l.b16 %v6074
        %v6356 = vunpack.c.h.b16 %v6074
        %v6357 = vunpack.c.l.b16 %v6075
        %v6358 = vunpack.c.h.b16 %v6075
        %v6359 = vunpack.c.l.b16 %v6076
        %v6360 = vunpack.c.h.b16 %v6076
        %v6361 = vunpack.c.l.b16 %v6077
        %v6362 = vunpack.c.h.b16 %v6077
        %v6363 = vunpack.c.l.b16 %v6078
        %v6364 = vunpack.c.h.b16 %v6078
        %v6365 = vunpack.c.l.b16 %v6079
        %v6366 = vunpack.c.h.b16 %v6079
        %v6367 = vunpack.c.l.b16 %v6080
        %v6368 = vunpack.c.h.b16 %v6080
        %v6369 = vunpack.c.l.b16 %v6081
        %v6370 = vunpack.c.h.b16 %v6081
        %v6371 = vunpack.c.l.b16 %v6082
        %v6372 = vunpack.c.h.b16 %v6082
        %v6373 = vunpack.c.l.b16 %v6083
        %v6374 = vunpack.c.h.b16 %v6083
        %v6375 = vunpack.c.l.b16 %v6084
        %v6376 = vunpack.c.h.b16 %v6084
        %v6377 = vunpack.c.l.b16 %v6085
        %v6378 = vunpack.c.h.b16 %v6085
        %v6379 = vunpack.c.l.b16 %v6086
        %v6380 = vunpack.c.h.b16 %v6086
        %v6381 = vunpack.c.l.b16 %v6087
        %v6382 = vunpack.c.h.b16 %v6087
        %v6383 = vunpack.c.l.b16 %v6088
        %v6384 = vunpack.c.h.b16 %v6088
        %v6385 = vunpack.c.l.b16 %v6089
        %v6386 = vunpack.c.h.b16 %v6089
        %v6387 = vunpack.c.l.b16 %v6090
        %v6388 = vunpack.c.h.b16 %v6090
        %v6389 = vunpack.c.l.b16 %v6091
        %v6390 = vunpack.c.h.b16 %v6091
        %v6391 = vunpack.c.l.b16 %v6092
        %v6392 = vunpack.c.h.b16 %v6092
        %v6393 = vunpack.c.l.b16 %v6093
        %v6394 = vunpack.c.h.b16 %v6093
        %v6395 = vunpack.c.l.b16 %v6094
        %v6396 = vunpack.c.h.b16 %v6094
        %v6397 = vunpack.c.l.b16 %v6095
        %v6398 = vunpack.c.h.b16 %v6095
        %v6399 = vunpack.c.l.b16 %v6096
        %v6400 = vunpack.c.h.b16 %v6096
        %v6401 = vunpack.c.l.b16 %v6097
        %v6402 = vunpack.c.h.b16 %v6097
        %v6403 = vunpack.c.l.b16 %v6098
        %v6404 = vunpack.c.h.b16 %v6098
        %v6405 = vunpack.c.l.b16 %v6099
        %v6406 = vunpack.c.h.b16 %v6099
        %v6407 = vunpack.c.l.b16 %v6100
        %v6408 = vunpack.c.h.b16 %v6100
        %v6409 = vunpack.c.l.b16 %v6101
        %v6410 = vunpack.c.h.b16 %v6101
        %v6411 = vunpack.c.l.b16 %v6102
        %v6412 = vunpack.c.h.b16 %v6102
        %v6413 = vunpack.c.l.b16 %v6103
        %v6414 = vunpack.c.h.b16 %v6103
        %v6415 = vunpack.c.l.b16 %v6104
        %v6416 = vunpack.c.h.b16 %v6104
        %v6417 = vunpack.c.l.b16 %v6105
        %v6418 = vunpack.c.h.b16 %v6105
        %v6419 = vunpack.c.l.b16 %v6106
        %v6420 = vunpack.c.h.b16 %v6106
        %v6421 = vunpack.c.l.b16 %v6107
        %v6422 = vunpack.c.h.b16 %v6107
        %v6423 = vunpack.c.l.b16 %v6108
        %v6424 = vunpack.c.h.b16 %v6108
        %v6425 = vunpack.c.l.b16 %v6109
        %v6426 = vunpack.c.h.b16 %v6109
        %v6427 = vunpack.c.l.b16 %v6110
        %v6428 = vunpack.c.h.b16 %v6110
        %v6429 = vunpack.c.l.b16 %v6111
        %v6430 = vunpack.c.h.b16 %v6111
        %v6431 = vunpack.c.l.b16 %v6112
        %v6432 = vunpack.c.h.b16 %v6112
        %v6433 = vunpack.c.l.b16 %v6113
        %v6434 = vunpack.c.h.b16 %v6113
        %v6435 = vunpack.c.l.b16 %v6114
        %v6436 = vunpack.c.h.b16 %v6114
        %v6437 = vunpack.c.l.b16 %v6115
        %v6438 = vunpack.c.h.b16 %v6115
        %v6439 = vunpack.c.l.b16 %v6116
        %v6440 = vunpack.c.h.b16 %v6116
        %v6441 = vunpack.c.l.b16 %v6117
        %v6442 = vunpack.c.h.b16 %v6117
        %v6443 = vunpack.c.l.b16 %v6118
        %v6444 = vunpack.c.h.b16 %v6118
        %v6445 = vunpack.c.l.b16 %v6119
        %v6446 = vunpack.c.h.b16 %v6119
        %v6447 = vunpack.c.l.b16 %v6120
        %v6448 = vunpack.c.h.b16 %v6120
        %v6449 = vunpack.c.l.b16 %v6121
        %v6450 = vunpack.c.h.b16 %v6121
        %v6451 = vunpack.c.l.b16 %v6122
        %v6452 = vunpack.c.h.b16 %v6122
        %v6453 = vunpack.c.l.b16 %v6123
        %v6454 = vunpack.c.h.b16 %v6123
        %v6455 = vunpack.c.l.b16 %v6124
        %v6456 = vunpack.c.h.b16 %v6124
        %v6457 = vunpack.c.l.b16 %v6125
        %v6458 = vunpack.c.h.b16 %v6125
        %v6459 = vunpack.c.l.b16 %v6126
        %v6460 = vunpack.c.h.b16 %v6126
        %v6461 = vunpack.c.l.b16 %v6127
        %v6462 = vunpack.c.h.b16 %v6127
        %v6463 = vunpack.c.l.b16 %v6128
        %v6464 = vunpack.c.h.b16 %v6128
        %v6465 = vunpack.c.l.b16 %v6129
        %v6466 = vunpack.c.h.b16 %v6129
        %v6467 = vunpack.c.l.b16 %v6130
        %v6468 = vunpack.c.h.b16 %v6130
        %v6469 = vunpack.c.l.b16 %v6131
        %v6470 = vunpack.c.h.b16 %v6131
        %v6471 = vunpack.c.l.b16 %v6132
        %v6472 = vunpack.c.h.b16 %v6132
        %v6473 = vunpack.c.l.b16 %v6133
        %v6474 = vunpack.c.h.b16 %v6133
        %v6475 = vunpack.c.l.b16 %v6134
        %v6476 = vunpack.c.h.b16 %v6134
        %v6477 = vunpack.c.l.b16 %v6135
        %v6478 = vunpack.c.h.b16 %v6135
        %v6479 = vunpack.c.l.b16 %v6136
        %v6480 = vunpack.c.h.b16 %v6136
        %v6481 = vunpack.c.l.b16 %v6137
        %v6482 = vunpack.c.h.b16 %v6137
        %v6483 = vunpack.c.l.b16 %v6138
        %v6484 = vunpack.c.h.b16 %v6138
        %v6485 = vunpack.c.l.b16 %v6139
        %v6486 = vunpack.c.h.b16 %v6139
        %v6487 = vunpack.c.l.b16 %v6140
        %v6488 = vunpack.c.h.b16 %v6140
        %v6489 = vunpack.c.l.b16 %v6141
        %v6490 = vunpack.c.h.b16 %v6141
        %v6491 = vunpack.c.l.b16 %v6142
        %v6492 = vunpack.c.h.b16 %v6142
        %v6493 = vunpack.c.l.b16 %v6143
        %v6494 = vunpack.c.h.b16 %v6143
        %v6495 = vunpack.c.l.b16 %v6144
        %v6496 = vunpack.c.h.b16 %v6144
        %v6497 = vunpack.c.l.b16 %v6145
        %v6498 = vunpack.c.h.b16 %v6145
        %v6499 = vunpack.c.l.b16 %v6146
        %v6500 = vunpack.c.h.b16 %v6146
        %v6501 = vunpack.c.l.b16 %v6147
        %v6502 = vunpack.c.h.b16 %v6147
        %v6503 = vunpack.c.l.b16 %v6148
        %v6504 = vunpack.c.h.b16 %v6148
        %v6505 = vunpack.c.l.b16 %v6149
        %v6506 = vunpack.c.h.b16 %v6149
        %v6507 = vunpack.c.l.b16 %v6150
        %v6508 = vunpack.c.h.b16 %v6150
        %v6509 = vunpack.c.l.b16 %v6151
        %v6510 = vunpack.c.h.b16 %v6151
        %v6511 = vunpack.c.l.b16 %v6152
        %v6512 = vunpack.c.h.b16 %v6152
        %v6513 = vunpack.c.l.b16 %v6153
        %v6514 = vunpack.c.h.b16 %v6153
        %v6515 = vunpack.c.l.b16 %v6154
        %v6516 = vunpack.c.h.b16 %v6154
        %v6517 = vunpack.c.l.b16 %v6155
        %v6518 = vunpack.c.h.b16 %v6155
        %v6519 = vunpack.c.l.b16 %v6156
        %v6520 = vunpack.c.h.b16 %v6156
        %v6521 = vunpack.c.l.b16 %v6157
        %v6522 = vunpack.c.h.b16 %v6157
        %v6523 = vunpack.c.l.b16 %v6158
        %v6524 = vunpack.c.h.b16 %v6158
        %v6525 = vunpack.c.l.b16 %v6159
        %v6526 = vunpack.c.h.b16 %v6159
        %v6527 = vunpack.c.l.b16 %v6160
        %v6528 = vunpack.c.h.b16 %v6160
        %v6529 = vunpack.c.l.b16 %v6161
        %v6530 = vunpack.c.h.b16 %v6161
        %v6531 = vunpack.c.l.b16 %v6162
        %v6532 = vunpack.c.h.b16 %v6162
        %v6533 = vunpack.c.l.b16 %v6163
        %v6534 = vunpack.c.h.b16 %v6163
        %v6535 = vunpack.c.l.b16 %v6164
        %v6536 = vunpack.c.h.b16 %v6164
        %v6537 = vunpack.c.l.b16 %v6165
        %v6538 = vunpack.c.h.b16 %v6165
        %v6539 = vunpack.c.l.b16 %v6166
        %v6540 = vunpack.c.h.b16 %v6166
        %v6541 = vunpack.c.l.b16 %v6167
        %v6542 = vunpack.c.h.b16 %v6167
        %v6543 = vunpack.c.l.b16 %v6168
        %v6544 = vunpack.c.h.b16 %v6168
        %v6545 = vunpack.c.l.b16 %v6169
        %v6546 = vunpack.c.h.b16 %v6169
        %v6547 = vunpack.c.l.b16 %v6170
        %v6548 = vunpack.c.h.b16 %v6170
        %v6549 = vunpack.c.l.b16 %v6171
        %v6550 = vunpack.c.h.b16 %v6171
        %v6551 = vunpack.c.l.b16 %v6172
        %v6552 = vunpack.c.h.b16 %v6172
        %v6553 = vunpack.c.l.b16 %v6173
        %v6554 = vunpack.c.h.b16 %v6173
        %v6555 = vunpack.c.l.b16 %v6174
        %v6556 = vunpack.c.h.b16 %v6174
        %v6557 = vunpack.c.l.b16 %v6175
        %v6558 = vunpack.c.h.b16 %v6175
        %v6559 = vunpack.c.l.b16 %v6176
        %v6560 = vunpack.c.h.b16 %v6176
        %v6561 = vunpack.c.l.b16 %v6177
        %v6562 = vunpack.c.h.b16 %v6177
        %v6563 = vunpack.c.l.b16 %v6178
        %v6564 = vunpack.c.h.b16 %v6178
        %v6565 = vunpack.c.l.b16 %v6179
        %v6566 = vunpack.c.h.b16 %v6179
        %v6567 = vunpack.c.l.b16 %v6180
        %v6568 = vunpack.c.h.b16 %v6180
        %v6569 = vunpack.c.l.b16 %v6181
        %v6570 = vunpack.c.h.b16 %v6181
        %v6571 = vunpack.c.l.b16 %v6182
        %v6572 = vunpack.c.h.b16 %v6182
        %v6573 = vunpack.c.l.b16 %v6183
        %v6574 = vunpack.c.h.b16 %v6183
        %v6575 = vunpack.c.l.b16 %v6184
        %v6576 = vunpack.c.h.b16 %v6184
        %v6577 = vunpack.c.l.b16 %v6185
        %v6578 = vunpack.c.h.b16 %v6185
        %v6579 = vunpack.c.l.b16 %v6186
        %v6580 = vunpack.c.h.b16 %v6186
        %v6581 = vpack.c.b16 %v6329, %v6325
        %v6582 = vpack.c.b16 %v6330, %v6326
        %v6583 = vpack.c.b16 %v6331, %v6327
        %v6584 = vpack.c.b16 %v6332, %v6328
        %v6585 = vpack.c.b16 %v6337, %v6333
        %v6586 = vpack.c.b16 %v6338, %v6334
        %v6587 = vpack.c.b16 %v6339, %v6335
        %v6588 = vpack.c.b16 %v6340, %v6336
        %v6589 = vpack.c.b16 %v6345, %v6341
        %v6590 = vpack.c.b16 %v6346, %v6342
        %v6591 = vpack.c.b16 %v6347, %v6343
        %v6592 = vpack.c.b16 %v6348, %v6344
        %v6593 = vpack.c.b16 %v6353, %v6349
        %v6594 = vpack.c.b16 %v6354, %v6350
        %v6595 = vpack.c.b16 %v6355, %v6351
        %v6596 = vpack.c.b16 %v6356, %v6352
        %v6597 = vpack.c.b16 %v6361, %v6357
        %v6598 = vpack.c.b16 %v6362, %v6358
        %v6599 = vpack.c.b16 %v6363, %v6359
        %v6600 = vpack.c.b16 %v6364, %v6360
        %v6601 = vpack.c.b16 %v6369, %v6365
        %v6602 = vpack.c.b16 %v6370, %v6366
        %v6603 = vpack.c.b16 %v6371, %v6367
        %v6604 = vpack.c.b16 %v6372, %v6368
        %v6605 = vpack.c.b16 %v6377, %v6373
        %v6606 = vpack.c.b16 %v6378, %v6374
        %v6607 = vpack.c.b16 %v6379, %v6375
        %v6608 = vpack.c.b16 %v6380, %v6376
        %v6609 = vpack.c.b16 %v6385, %v6381
        %v6610 = vpack.c.b16 %v6386, %v6382
        %v6611 = vpack.c.b16 %v6387, %v6383
        %v6612 = vpack.c.b16 %v6388, %v6384
        %v6613 = vpack.c.b16 %v6393, %v6389
        %v6614 = vpack.c.b16 %v6394, %v6390
        %v6615 = vpack.c.b16 %v6395, %v6391
        %v6616 = vpack.c.b16 %v6396, %v6392
        %v6617 = vpack.c.b16 %v6401, %v6397
        %v6618 = vpack.c.b16 %v6402, %v6398
        %v6619 = vpack.c.b16 %v6403, %v6399
        %v6620 = vpack.c.b16 %v6404, %v6400
        %v6621 = vpack.c.b16 %v6409, %v6405
        %v6622 = vpack.c.b16 %v6410, %v6406
        %v6623 = vpack.c.b16 %v6411, %v6407
        %v6624 = vpack.c.b16 %v6412, %v6408
        %v6625 = vpack.c.b16 %v6417, %v6413
        %v6626 = vpack.c.b16 %v6418, %v6414
        %v6627 = vpack.c.b16 %v6419, %v6415
        %v6628 = vpack.c.b16 %v6420, %v6416
        %v6629 = vpack.c.b16 %v6425, %v6421
        %v6630 = vpack.c.b16 %v6426, %v6422
        %v6631 = vpack.c.b16 %v6427, %v6423
        %v6632 = vpack.c.b16 %v6428, %v6424
        %v6633 = vpack.c.b16 %v6433, %v6429
        %v6634 = vpack.c.b16 %v6434, %v6430
        %v6635 = vpack.c.b16 %v6435, %v6431
        %v6636 = vpack.c.b16 %v6436, %v6432
        %v6637 = vpack.c.b16 %v6441, %v6437
        %v6638 = vpack.c.b16 %v6442, %v6438
        %v6639 = vpack.c.b16 %v6443, %v6439
        %v6640 = vpack.c.b16 %v6444, %v6440
        %v6641 = vpack.c.b16 %v6449, %v6445
        %v6642 = vpack.c.b16 %v6450, %v6446
        %v6643 = vpack.c.b16 %v6451, %v6447
        %v6644 = vpack.c.b16 %v6452, %v6448
        %v6645 = vpack.c.b16 %v6457, %v6453
        %v6646 = vpack.c.b16 %v6458, %v6454
        %v6647 = vpack.c.b16 %v6459, %v6455
        %v6648 = vpack.c.b16 %v6460, %v6456
        %v6649 = vpack.c.b16 %v6465, %v6461
        %v6650 = vpack.c.b16 %v6466, %v6462
        %v6651 = vpack.c.b16 %v6467, %v6463
        %v6652 = vpack.c.b16 %v6468, %v6464
        %v6653 = vpack.c.b16 %v6473, %v6469
        %v6654 = vpack.c.b16 %v6474, %v6470
        %v6655 = vpack.c.b16 %v6475, %v6471
        %v6656 = vpack.c.b16 %v6476, %v6472
        %v6657 = vpack.c.b16 %v6481, %v6477
        %v6658 = vpack.c.b16 %v6482, %v6478
        %v6659 = vpack.c.b16 %v6483, %v6479
        %v6660 = vpack.c.b16 %v6484, %v6480
        %v6661 = vpack.c.b16 %v6489, %v6485
        %v6662 = vpack.c.b16 %v6490, %v6486
        %v6663 = vpack.c.b16 %v6491, %v6487
        %v6664 = vpack.c.b16 %v6492, %v6488
        %v6665 = vpack.c.b16 %v6497, %v6493
        %v6666 = vpack.c.b16 %v6498, %v6494
        %v6667 = vpack.c.b16 %v6499, %v6495
        %v6668 = vpack.c.b16 %v6500, %v6496
        %v6669 = vpack.c.b16 %v6505, %v6501
        %v6670 = vpack.c.b16 %v6506, %v6502
        %v6671 = vpack.c.b16 %v6507, %v6503
        %v6672 = vpack.c.b16 %v6508, %v6504
        %v6673 = vpack.c.b16 %v6513, %v6509
        %v6674 = vpack.c.b16 %v6514, %v6510
        %v6675 = vpack.c.b16 %v6515, %v6511
        %v6676 = vpack.c.b16 %v6516, %v6512
        %v6677 = vpack.c.b16 %v6521, %v6517
        %v6678 = vpack.c.b16 %v6522, %v6518
        %v6679 = vpack.c.b16 %v6523, %v6519
        %v6680 = vpack.c.b16 %v6524, %v6520
        %v6681 = vpack.c.b16 %v6529, %v6525
        %v6682 = vpack.c.b16 %v6530, %v6526
        %v6683 = vpack.c.b16 %v6531, %v6527
        %v6684 = vpack.c.b16 %v6532, %v6528
        %v6685 = vpack.c.b16 %v6537, %v6533
        %v6686 = vpack.c.b16 %v6538, %v6534
        %v6687 = vpack.c.b16 %v6539, %v6535
        %v6688 = vpack.c.b16 %v6540, %v6536
        %v6689 = vpack.c.b16 %v6545, %v6541
        %v6690 = vpack.c.b16 %v6546, %v6542
        %v6691 = vpack.c.b16 %v6547, %v6543
        %v6692 = vpack.c.b16 %v6548, %v6544
        %v6693 = vpack.c.b16 %v6553, %v6549
        %v6694 = vpack.c.b16 %v6554, %v6550
        %v6695 = vpack.c.b16 %v6555, %v6551
        %v6696 = vpack.c.b16 %v6556, %v6552
        %v6697 = vpack.c.b16 %v6561, %v6557
        %v6698 = vpack.c.b16 %v6562, %v6558
        %v6699 = vpack.c.b16 %v6563, %v6559
        %v6700 = vpack.c.b16 %v6564, %v6560
        %v6701 = vpack.c.b16 %v6569, %v6565
        %v6702 = vpack.c.b16 %v6570, %v6566
        %v6703 = vpack.c.b16 %v6571, %v6567
        %v6704 = vpack.c.b16 %v6572, %v6568
        %v6705 = vpack.c.b16 %v6577, %v6573
        %v6706 = vpack.c.b16 %v6578, %v6574
        %v6707 = vpack.c.b16 %v6579, %v6575
        %v6708 = vpack.c.b16 %v6580, %v6576
        %6837 = vmatpush.bf16.msra.mxu0 %v6609
        %6838 = vmatpush.bf16.msra.mxu0 %v6605
        %6839 = vmatpush.bf16.msra.mxu0 %v6601
        %6840 = vmatpush.bf16.msra.mxu0 %v6597
        %6841 = vmatpush.bf16.msra.mxu0 %v6593
        %6842 = vmatpush.bf16.msra.mxu0 %v6589
        %6843 = vmatpush.bf16.msra.mxu0 %v6585
        %6844 = vmatpush.bf16.msra.mxu0 %v6581
        %6845 = vmatmul.bf16.gmra.mxu0 %v6055
        %v6846 = vpop.f32.mrf.mxu0
        %v6847 = vadd.f32 %v6189, %v6846
        %v6848 = vpop.f32.mrf.mxu0
        %v6849 = vadd.f32 %v6189, %v6848
        %6850 = vdwg.mxu0
        %6851 = vmatpush.bf16.msra.mxu0 %v6641
        %6852 = vmatpush.bf16.msra.mxu0 %v6637
        %6853 = vmatpush.bf16.msra.mxu0 %v6633
        %6854 = vmatpush.bf16.msra.mxu0 %v6629
        %6855 = vmatpush.bf16.msra.mxu0 %v6625
        %6856 = vmatpush.bf16.msra.mxu0 %v6621
        %6857 = vmatpush.bf16.msra.mxu0 %v6617
        %6858 = vmatpush.bf16.msra.mxu0 %v6613
        %6859 = vmatmul.bf16.gmra.mxu0 %v6056
        %v6860 = vpop.f32.mrf.mxu0
        %v6861 = vadd.f32 %v6847, %v6860
        %v6862 = vpop.f32.mrf.mxu0
        %v6863 = vadd.f32 %v6849, %v6862
        %6864 = vdwg.mxu0
        %6865 = vmatpush.bf16.msra.mxu0 %v6673
        %6866 = vmatpush.bf16.msra.mxu0 %v6669
        %6867 = vmatpush.bf16.msra.mxu0 %v6665
        %6868 = vmatpush.bf16.msra.mxu0 %v6661
        %6869 = vmatpush.bf16.msra.mxu0 %v6657
        %6870 = vmatpush.bf16.msra.mxu0 %v6653
        %6871 = vmatpush.bf16.msra.mxu0 %v6649
        %6872 = vmatpush.bf16.msra.mxu0 %v6645
        %6873 = vmatmul.bf16.gmra.mxu0 %v6057
        %v6874 = vpop.f32.mrf.mxu0
        %v6875 = vadd.f32 %v6861, %v6874
        %v6876 = vpop.f32.mrf.mxu0
        %v6877 = vadd.f32 %v6863, %v6876
        %6878 = vdwg.mxu0
        %6879 = vmatpush.bf16.msra.mxu0 %v6705
        %6880 = vmatpush.bf16.msra.mxu0 %v6701
        %6881 = vmatpush.bf16.msra.mxu0 %v6697
        %6882 = vmatpush.bf16.msra.mxu0 %v6693
        %6883 = vmatpush.bf16.msra.mxu0 %v6689
        %6884 = vmatpush.bf16.msra.mxu0 %v6685
        %6885 = vmatpush.bf16.msra.mxu0 %v6681
        %6886 = vmatpush.bf16.msra.mxu0 %v6677
        %6887 = vmatmul.bf16.gmra.mxu0 %v6058
        %v6888 = vpop.f32.mrf.mxu0
        %v6889 = vadd.f32 %v6875, %v6888
        %v6890 = vpop.f32.mrf.mxu0
        %v6891 = vadd.f32 %v6877, %v6890
        %6892 = vdwg.mxu0
        %6893 = vmatpush.bf16.msra.mxu0 %v6610
        %6894 = vmatpush.bf16.msra.mxu0 %v6606
        %6895 = vmatpush.bf16.msra.mxu0 %v6602
        %6896 = vmatpush.bf16.msra.mxu0 %v6598
        %6897 = vmatpush.bf16.msra.mxu0 %v6594
        %6898 = vmatpush.bf16.msra.mxu0 %v6590
        %6899 = vmatpush.bf16.msra.mxu0 %v6586
        %6900 = vmatpush.bf16.msra.mxu0 %v6582
        %6901 = vmatmul.bf16.gmra.mxu0 %v6055
        %v6902 = vpop.f32.mrf.mxu0
        %v6903 = vadd.f32 %v6190, %v6902
        %v6904 = vpop.f32.mrf.mxu0
        %v6905 = vadd.f32 %v6190, %v6904
        %6906 = vdwg.mxu0
        %6907 = vmatpush.bf16.msra.mxu0 %v6642
        %6908 = vmatpush.bf16.msra.mxu0 %v6638
        %6909 = vmatpush.bf16.msra.mxu0 %v6634
        %6910 = vmatpush.bf16.msra.mxu0 %v6630
        %6911 = vmatpush.bf16.msra.mxu0 %v6626
        %6912 = vmatpush.bf16.msra.mxu0 %v6622
        %6913 = vmatpush.bf16.msra.mxu0 %v6618
        %6914 = vmatpush.bf16.msra.mxu0 %v6614
        %6915 = vmatmul.bf16.gmra.mxu0 %v6056
        %v6916 = vpop.f32.mrf.mxu0
        %v6917 = vadd.f32 %v6903, %v6916
        %v6918 = vpop.f32.mrf.mxu0
        %v6919 = vadd.f32 %v6905, %v6918
        %6920 = vdwg.mxu0
        %6921 = vmatpush.bf16.msra.mxu0 %v6674
        %6922 = vmatpush.bf16.msra.mxu0 %v6670
        %6923 = vmatpush.bf16.msra.mxu0 %v6666
        %6924 = vmatpush.bf16.msra.mxu0 %v6662
        %6925 = vmatpush.bf16.msra.mxu0 %v6658
        %6926 = vmatpush.bf16.msra.mxu0 %v6654
        %6927 = vmatpush.bf16.msra.mxu0 %v6650
        %6928 = vmatpush.bf16.msra.mxu0 %v6646
        %6929 = vmatmul.bf16.gmra.mxu0 %v6057
        %v6930 = vpop.f32.mrf.mxu0
        %v6931 = vadd.f32 %v6917, %v6930
        %v6932 = vpop.f32.mrf.mxu0
        %v6933 = vadd.f32 %v6919, %v6932
        %6934 = vdwg.mxu0
        %6935 = vmatpush.bf16.msra.mxu0 %v6706
        %6936 = vmatpush.bf16.msra.mxu0 %v6702
        %6937 = vmatpush.bf16.msra.mxu0 %v6698
        %6938 = vmatpush.bf16.msra.mxu0 %v6694
        %6939 = vmatpush.bf16.msra.mxu0 %v6690
        %6940 = vmatpush.bf16.msra.mxu0 %v6686
        %6941 = vmatpush.bf16.msra.mxu0 %v6682
        %6942 = vmatpush.bf16.msra.mxu0 %v6678
        %6943 = vmatmul.bf16.gmra.mxu0 %v6058
        %v6944 = vpop.f32.mrf.mxu0
        %v6945 = vadd.f32 %v6931, %v6944
        %v6946 = vpop.f32.mrf.mxu0
        %v6947 = vadd.f32 %v6933, %v6946
        %6948 = vdwg.mxu0
        %6949 = vmatpush.bf16.msra.mxu0 %v6611
        %6950 = vmatpush.bf16.msra.mxu0 %v6607
        %6951 = vmatpush.bf16.msra.mxu0 %v6603
        %6952 = vmatpush.bf16.msra.mxu0 %v6599
        %6953 = vmatpush.bf16.msra.mxu0 %v6595
        %6954 = vmatpush.bf16.msra.mxu0 %v6591
        %6955 = vmatpush.bf16.msra.mxu0 %v6587
        %6956 = vmatpush.bf16.msra.mxu0 %v6583
        %6957 = vmatmul.bf16.gmra.mxu0 %v6055
        %v6958 = vpop.f32.mrf.mxu0
        %v6959 = vadd.f32 %v6191, %v6958
        %v6960 = vpop.f32.mrf.mxu0
        %v6961 = vadd.f32 %v6191, %v6960
        %6962 = vdwg.mxu0
        %6963 = vmatpush.bf16.msra.mxu0 %v6643
        %6964 = vmatpush.bf16.msra.mxu0 %v6639
        %6965 = vmatpush.bf16.msra.mxu0 %v6635
        %6966 = vmatpush.bf16.msra.mxu0 %v6631
        %6967 = vmatpush.bf16.msra.mxu0 %v6627
        %6968 = vmatpush.bf16.msra.mxu0 %v6623
        %6969 = vmatpush.bf16.msra.mxu0 %v6619
        %6970 = vmatpush.bf16.msra.mxu0 %v6615
        %6971 = vmatmul.bf16.gmra.mxu0 %v6056
        %v6972 = vpop.f32.mrf.mxu0
        %v6973 = vadd.f32 %v6959, %v6972
        %v6974 = vpop.f32.mrf.mxu0
        %v6975 = vadd.f32 %v6961, %v6974
        %6976 = vdwg.mxu0
        %6977 = vmatpush.bf16.msra.mxu0 %v6675
        %6978 = vmatpush.bf16.msra.mxu0 %v6671
        %6979 = vmatpush.bf16.msra.mxu0 %v6667
        %6980 = vmatpush.bf16.msra.mxu0 %v6663
        %6981 = vmatpush.bf16.msra.mxu0 %v6659
        %6982 = vmatpush.bf16.msra.mxu0 %v6655
        %6983 = vmatpush.bf16.msra.mxu0 %v6651
        %6984 = vmatpush.bf16.msra.mxu0 %v6647
        %6985 = vmatmul.bf16.gmra.mxu0 %v6057
        %v6986 = vpop.f32.mrf.mxu0
        %v6987 = vadd.f32 %v6973, %v6986
        %v6988 = vpop.f32.mrf.mxu0
        %v6989 = vadd.f32 %v6975, %v6988
        %6990 = vdwg.mxu0
        %6991 = vmatpush.bf16.msra.mxu0 %v6707
        %6992 = vmatpush.bf16.msra.mxu0 %v6703
        %6993 = vmatpush.bf16.msra.mxu0 %v6699
        %6994 = vmatpush.bf16.msra.mxu0 %v6695
        %6995 = vmatpush.bf16.msra.mxu0 %v6691
        %6996 = vmatpush.bf16.msra.mxu0 %v6687
        %6997 = vmatpush.bf16.msra.mxu0 %v6683
        %6998 = vmatpush.bf16.msra.mxu0 %v6679
        %6999 = vmatmul.bf16.gmra.mxu0 %v6058
        %v7000 = vpop.f32.mrf.mxu0
        %v7001 = vadd.f32 %v6987, %v7000
        %v7002 = vpop.f32.mrf.mxu0
        %v7003 = vadd.f32 %v6989, %v7002
        %7004 = vdwg.mxu0
        %7005 = vmatpush.bf16.msra.mxu0 %v6612
        %7006 = vmatpush.bf16.msra.mxu0 %v6608
        %7007 = vmatpush.bf16.msra.mxu0 %v6604
        %7008 = vmatpush.bf16.msra.mxu0 %v6600
        %7009 = vmatpush.bf16.msra.mxu0 %v6596
        %7010 = vmatpush.bf16.msra.mxu0 %v6592
        %7011 = vmatpush.bf16.msra.mxu0 %v6588
        %7012 = vmatpush.bf16.msra.mxu0 %v6584
        %7013 = vmatmul.bf16.gmra.mxu0 %v6055
        %v7014 = vpop.f32.mrf.mxu0
        %v7015 = vadd.f32 %v6192, %v7014
        %v7016 = vpop.f32.mrf.mxu0
        %v7017 = vadd.f32 %v6192, %v7016
        %7018 = vdwg.mxu0
        %7019 = vmatpush.bf16.msra.mxu0 %v6644
        %7020 = vmatpush.bf16.msra.mxu0 %v6640
        %7021 = vmatpush.bf16.msra.mxu0 %v6636
        %7022 = vmatpush.bf16.msra.mxu0 %v6632
        %7023 = vmatpush.bf16.msra.mxu0 %v6628
        %7024 = vmatpush.bf16.msra.mxu0 %v6624
        %7025 = vmatpush.bf16.msra.mxu0 %v6620
        %7026 = vmatpush.bf16.msra.mxu0 %v6616
        %7027 = vmatmul.bf16.gmra.mxu0 %v6056
        %v7028 = vpop.f32.mrf.mxu0
        %v7029 = vadd.f32 %v7015, %v7028
        %v7030 = vpop.f32.mrf.mxu0
        %v7031 = vadd.f32 %v7017, %v7030
        %7032 = vdwg.mxu0
        %7033 = vmatpush.bf16.msra.mxu0 %v6676
        %7034 = vmatpush.bf16.msra.mxu0 %v6672
        %7035 = vmatpush.bf16.msra.mxu0 %v6668
        %7036 = vmatpush.bf16.msra.mxu0 %v6664
        %7037 = vmatpush.bf16.msra.mxu0 %v6660
        %7038 = vmatpush.bf16.msra.mxu0 %v6656
        %7039 = vmatpush.bf16.msra.mxu0 %v6652
        %7040 = vmatpush.bf16.msra.mxu0 %v6648
        %7041 = vmatmul.bf16.gmra.mxu0 %v6057
        %v7042 = vpop.f32.mrf.mxu0
        %v7043 = vadd.f32 %v7029, %v7042
        %v7044 = vpop.f32.mrf.mxu0
        %v7045 = vadd.f32 %v7031, %v7044
        %7046 = vdwg.mxu0
        %7047 = vmatpush.bf16.msra.mxu0 %v6708
        %7048 = vmatpush.bf16.msra.mxu0 %v6704
        %7049 = vmatpush.bf16.msra.mxu0 %v6700
        %7050 = vmatpush.bf16.msra.mxu0 %v6696
        %7051 = vmatpush.bf16.msra.mxu0 %v6692
        %7052 = vmatpush.bf16.msra.mxu0 %v6688
        %7053 = vmatpush.bf16.msra.mxu0 %v6684
        %7054 = vmatpush.bf16.msra.mxu0 %v6680
        %7055 = vmatmul.bf16.gmra.mxu0 %v6058
        %v7056 = vpop.f32.mrf.mxu0
        %v7057 = vadd.f32 %v7043, %v7056
        %v7058 = vpop.f32.mrf.mxu0
        %v7059 = vadd.f32 %v7045, %v7058
        %7060 = vdwg.mxu0
        %v7061 = vmax.f32 %v6889, 0.0
        %v7062 = vmax.f32 %v6945, 0.0
        %v7063 = vmax.f32 %v7001, 0.0
        %v7064 = vmax.f32 %v7057, 0.0
        %v7065 = vmax.f32 %v6891, 0.0
        %v7066 = vmax.f32 %v6947, 0.0
        %v7067 = vmax.f32 %v7003, 0.0
        %v7068 = vmax.f32 %v7059, 0.0
        %v7069 = vld [vmem:[#allocation4] sm:$0xff]
        %v7070 = vld [vmem:[#allocation4 + $0x8] sm:$0xff]
        %v7071 = vld [vmem:[#allocation4 + $0x10] sm:$0xff]
        %v7072 = vld [vmem:[#allocation4 + $0x18] sm:$0xff]
        %v7073 = vld [vmem:[#allocation4 + $0x20] sm:$0xff]
        %v7074 = vld [vmem:[#allocation4 + $0x28] sm:$0xff]
        %v7075 = vld [vmem:[#allocation4 + $0x30] sm:$0xff]
        %v7076 = vld [vmem:[#allocation4 + $0x38] sm:$0xff]
        %v7077 = vpack.c.bf16 %v7065, %v7061
        %v7078 = vpack.c.bf16 %v7066, %v7062
        %v7079 = vpack.c.bf16 %v7067, %v7063
        %v7080 = vpack.c.bf16 %v7068, %v7064
        %v7081 = vld [vmem:[%s952] sm:$0xff]
        %v7082 = vld [vmem:[%s952 + $0x8] sm:$0xff]
        %v7083 = vld [vmem:[%s952 + $0x10] sm:$0xff]
        %v7084 = vld [vmem:[%s952 + $0x18] sm:$0xff]
        %v7085 = vld [vmem:[%s952 + $0x20] sm:$0xff]
        %v7086 = vld [vmem:[%s952 + $0x28] sm:$0xff]
        %v7087 = vld [vmem:[%s952 + $0x30] sm:$0xff]
        %v7088 = vld [vmem:[%s952 + $0x38] sm:$0xff]
        %v7089 = vld [vmem:[%s952 + $0x40] sm:$0xff]
        %v7090 = vld [vmem:[%s952 + $0x48] sm:$0xff]
        %v7091 = vld [vmem:[%s952 + $0x50] sm:$0xff]
        %v7092 = vld [vmem:[%s952 + $0x58] sm:$0xff]
        %v7093 = vld [vmem:[%s952 + $0x60] sm:$0xff]
        %v7094 = vld [vmem:[%s952 + $0x68] sm:$0xff]
        %v7095 = vld [vmem:[%s952 + $0x70] sm:$0xff]
        %v7096 = vld [vmem:[%s952 + $0x78] sm:$0xff]
        %v7097 = vld [vmem:[%s952 + $0x80] sm:$0xff]
        %v7098 = vld [vmem:[%s952 + $0x88] sm:$0xff]
        %v7099 = vld [vmem:[%s952 + $0x90] sm:$0xff]
        %v7100 = vld [vmem:[%s952 + $0x98] sm:$0xff]
        %v7101 = vld [vmem:[%s952 + $0xa0] sm:$0xff]
        %v7102 = vld [vmem:[%s952 + $0xa8] sm:$0xff]
        %v7103 = vld [vmem:[%s952 + $0xb0] sm:$0xff]
        %v7104 = vld [vmem:[%s952 + $0xb8] sm:$0xff]
        %v7105 = vld [vmem:[%s952 + $0xc0] sm:$0xff]
        %v7106 = vld [vmem:[%s952 + $0xc8] sm:$0xff]
        %v7107 = vld [vmem:[%s952 + $0xd0] sm:$0xff]
        %v7108 = vld [vmem:[%s952 + $0xd8] sm:$0xff]
        %v7109 = vld [vmem:[%s952 + $0xe0] sm:$0xff]
        %v7110 = vld [vmem:[%s952 + $0xe8] sm:$0xff]
        %v7111 = vld [vmem:[%s952 + $0xf0] sm:$0xff]
        %v7112 = vld [vmem:[%s952 + $0xf8] sm:$0xff]
        %v7113 = vld [vmem:[%s952 + $0x100] sm:$0xff]
        %v7114 = vld [vmem:[%s952 + $0x108] sm:$0xff]
        %v7115 = vld [vmem:[%s952 + $0x110] sm:$0xff]
        %v7116 = vld [vmem:[%s952 + $0x118] sm:$0xff]
        %v7117 = vld [vmem:[%s952 + $0x120] sm:$0xff]
        %v7118 = vld [vmem:[%s952 + $0x128] sm:$0xff]
        %v7119 = vld [vmem:[%s952 + $0x130] sm:$0xff]
        %v7120 = vld [vmem:[%s952 + $0x138] sm:$0xff]
        %v7121 = vld [vmem:[%s952 + $0x140] sm:$0xff]
        %v7122 = vld [vmem:[%s952 + $0x148] sm:$0xff]
        %v7123 = vld [vmem:[%s952 + $0x150] sm:$0xff]
        %v7124 = vld [vmem:[%s952 + $0x158] sm:$0xff]
        %v7125 = vld [vmem:[%s952 + $0x160] sm:$0xff]
        %v7126 = vld [vmem:[%s952 + $0x168] sm:$0xff]
        %v7127 = vld [vmem:[%s952 + $0x170] sm:$0xff]
        %v7128 = vld [vmem:[%s952 + $0x178] sm:$0xff]
        %v7129 = vld [vmem:[%s952 + $0x180] sm:$0xff]
        %v7130 = vld [vmem:[%s952 + $0x188] sm:$0xff]
        %v7131 = vld [vmem:[%s952 + $0x190] sm:$0xff]
        %v7132 = vld [vmem:[%s952 + $0x198] sm:$0xff]
        %v7133 = vld [vmem:[%s952 + $0x1a0] sm:$0xff]
        %v7134 = vld [vmem:[%s952 + $0x1a8] sm:$0xff]
        %v7135 = vld [vmem:[%s952 + $0x1b0] sm:$0xff]
        %v7136 = vld [vmem:[%s952 + $0x1b8] sm:$0xff]
        %v7137 = vld [vmem:[%s952 + $0x1c0] sm:$0xff]
        %v7138 = vld [vmem:[%s952 + $0x1c8] sm:$0xff]
        %v7139 = vld [vmem:[%s952 + $0x1d0] sm:$0xff]
        %v7140 = vld [vmem:[%s952 + $0x1d8] sm:$0xff]
        %v7141 = vld [vmem:[%s952 + $0x1e0] sm:$0xff]
        %v7142 = vld [vmem:[%s952 + $0x1e8] sm:$0xff]
        %v7143 = vld [vmem:[%s952 + $0x1f0] sm:$0xff]
        %v7144 = vld [vmem:[%s952 + $0x1f8] sm:$0xff]
        %v7145 = vld [vmem:[%s952 + $0x200] sm:$0xff]
        %v7146 = vld [vmem:[%s952 + $0x208] sm:$0xff]
        %v7147 = vld [vmem:[%s952 + $0x210] sm:$0xff]
        %v7148 = vld [vmem:[%s952 + $0x218] sm:$0xff]
        %v7149 = vld [vmem:[%s952 + $0x220] sm:$0xff]
        %v7150 = vld [vmem:[%s952 + $0x228] sm:$0xff]
        %v7151 = vld [vmem:[%s952 + $0x230] sm:$0xff]
        %v7152 = vld [vmem:[%s952 + $0x238] sm:$0xff]
        %v7153 = vld [vmem:[%s952 + $0x240] sm:$0xff]
        %v7154 = vld [vmem:[%s952 + $0x248] sm:$0xff]
        %v7155 = vld [vmem:[%s952 + $0x250] sm:$0xff]
        %v7156 = vld [vmem:[%s952 + $0x258] sm:$0xff]
        %v7157 = vld [vmem:[%s952 + $0x260] sm:$0xff]
        %v7158 = vld [vmem:[%s952 + $0x268] sm:$0xff]
        %v7159 = vld [vmem:[%s952 + $0x270] sm:$0xff]
        %v7160 = vld [vmem:[%s952 + $0x278] sm:$0xff]
        %v7161 = vld [vmem:[%s952 + $0x280] sm:$0xff]
        %v7162 = vld [vmem:[%s952 + $0x288] sm:$0xff]
        %v7163 = vld [vmem:[%s952 + $0x290] sm:$0xff]
        %v7164 = vld [vmem:[%s952 + $0x298] sm:$0xff]
        %v7165 = vld [vmem:[%s952 + $0x2a0] sm:$0xff]
        %v7166 = vld [vmem:[%s952 + $0x2a8] sm:$0xff]
        %v7167 = vld [vmem:[%s952 + $0x2b0] sm:$0xff]
        %v7168 = vld [vmem:[%s952 + $0x2b8] sm:$0xff]
        %v7169 = vld [vmem:[%s952 + $0x2c0] sm:$0xff]
        %v7170 = vld [vmem:[%s952 + $0x2c8] sm:$0xff]
        %v7171 = vld [vmem:[%s952 + $0x2d0] sm:$0xff]
        %v7172 = vld [vmem:[%s952 + $0x2d8] sm:$0xff]
        %v7173 = vld [vmem:[%s952 + $0x2e0] sm:$0xff]
        %v7174 = vld [vmem:[%s952 + $0x2e8] sm:$0xff]
        %v7175 = vld [vmem:[%s952 + $0x2f0] sm:$0xff]
        %v7176 = vld [vmem:[%s952 + $0x2f8] sm:$0xff]
        %v7177 = vld [vmem:[%s952 + $0x300] sm:$0xff]
        %v7178 = vld [vmem:[%s952 + $0x308] sm:$0xff]
        %v7179 = vld [vmem:[%s952 + $0x310] sm:$0xff]
        %v7180 = vld [vmem:[%s952 + $0x318] sm:$0xff]
        %v7181 = vld [vmem:[%s952 + $0x320] sm:$0xff]
        %v7182 = vld [vmem:[%s952 + $0x328] sm:$0xff]
        %v7183 = vld [vmem:[%s952 + $0x330] sm:$0xff]
        %v7184 = vld [vmem:[%s952 + $0x338] sm:$0xff]
        %v7185 = vld [vmem:[%s952 + $0x340] sm:$0xff]
        %v7186 = vld [vmem:[%s952 + $0x348] sm:$0xff]
        %v7187 = vld [vmem:[%s952 + $0x350] sm:$0xff]
        %v7188 = vld [vmem:[%s952 + $0x358] sm:$0xff]
        %v7189 = vld [vmem:[%s952 + $0x360] sm:$0xff]
        %v7190 = vld [vmem:[%s952 + $0x368] sm:$0xff]
        %v7191 = vld [vmem:[%s952 + $0x370] sm:$0xff]
        %v7192 = vld [vmem:[%s952 + $0x378] sm:$0xff]
        %v7193 = vld [vmem:[%s952 + $0x380] sm:$0xff]
        %v7194 = vld [vmem:[%s952 + $0x388] sm:$0xff]
        %v7195 = vld [vmem:[%s952 + $0x390] sm:$0xff]
        %v7196 = vld [vmem:[%s952 + $0x398] sm:$0xff]
        %v7197 = vld [vmem:[%s952 + $0x3a0] sm:$0xff]
        %v7198 = vld [vmem:[%s952 + $0x3a8] sm:$0xff]
        %v7199 = vld [vmem:[%s952 + $0x3b0] sm:$0xff]
        %v7200 = vld [vmem:[%s952 + $0x3b8] sm:$0xff]
        %v7201 = vld [vmem:[%s952 + $0x3c0] sm:$0xff]
        %v7202 = vld [vmem:[%s952 + $0x3c8] sm:$0xff]
        %v7203 = vld [vmem:[%s952 + $0x3d0] sm:$0xff]
        %v7204 = vld [vmem:[%s952 + $0x3d8] sm:$0xff]
        %v7205 = vld [vmem:[%s952 + $0x3e0] sm:$0xff]
        %v7206 = vld [vmem:[%s952 + $0x3e8] sm:$0xff]
        %v7207 = vld [vmem:[%s952 + $0x3f0] sm:$0xff]
        %v7208 = vld [vmem:[%s952 + $0x3f8] sm:$0xff]
        %v7337 = vunpack.c.l.b16 %v7081
        %v7338 = vunpack.c.h.b16 %v7081
        %v7339 = vunpack.c.l.b16 %v7082
        %v7340 = vunpack.c.h.b16 %v7082
        %v7341 = vunpack.c.l.b16 %v7083
        %v7342 = vunpack.c.h.b16 %v7083
        %v7343 = vunpack.c.l.b16 %v7084
        %v7344 = vunpack.c.h.b16 %v7084
        %v7345 = vunpack.c.l.b16 %v7085
        %v7346 = vunpack.c.h.b16 %v7085
        %v7347 = vunpack.c.l.b16 %v7086
        %v7348 = vunpack.c.h.b16 %v7086
        %v7349 = vunpack.c.l.b16 %v7087
        %v7350 = vunpack.c.h.b16 %v7087
        %v7351 = vunpack.c.l.b16 %v7088
        %v7352 = vunpack.c.h.b16 %v7088
        %v7353 = vunpack.c.l.b16 %v7089
        %v7354 = vunpack.c.h.b16 %v7089
        %v7355 = vunpack.c.l.b16 %v7090
        %v7356 = vunpack.c.h.b16 %v7090
        %v7357 = vunpack.c.l.b16 %v7091
        %v7358 = vunpack.c.h.b16 %v7091
        %v7359 = vunpack.c.l.b16 %v7092
        %v7360 = vunpack.c.h.b16 %v7092
        %v7361 = vunpack.c.l.b16 %v7093
        %v7362 = vunpack.c.h.b16 %v7093
        %v7363 = vunpack.c.l.b16 %v7094
        %v7364 = vunpack.c.h.b16 %v7094
        %v7365 = vunpack.c.l.b16 %v7095
        %v7366 = vunpack.c.h.b16 %v7095
        %v7367 = vunpack.c.l.b16 %v7096
        %v7368 = vunpack.c.h.b16 %v7096
        %v7369 = vunpack.c.l.b16 %v7097
        %v7370 = vunpack.c.h.b16 %v7097
        %v7371 = vunpack.c.l.b16 %v7098
        %v7372 = vunpack.c.h.b16 %v7098
        %v7373 = vunpack.c.l.b16 %v7099
        %v7374 = vunpack.c.h.b16 %v7099
        %v7375 = vunpack.c.l.b16 %v7100
        %v7376 = vunpack.c.h.b16 %v7100
        %v7377 = vunpack.c.l.b16 %v7101
        %v7378 = vunpack.c.h.b16 %v7101
        %v7379 = vunpack.c.l.b16 %v7102
        %v7380 = vunpack.c.h.b16 %v7102
        %v7381 = vunpack.c.l.b16 %v7103
        %v7382 = vunpack.c.h.b16 %v7103
        %v7383 = vunpack.c.l.b16 %v7104
        %v7384 = vunpack.c.h.b16 %v7104
        %v7385 = vunpack.c.l.b16 %v7105
        %v7386 = vunpack.c.h.b16 %v7105
        %v7387 = vunpack.c.l.b16 %v7106
        %v7388 = vunpack.c.h.b16 %v7106
        %v7389 = vunpack.c.l.b16 %v7107
        %v7390 = vunpack.c.h.b16 %v7107
        %v7391 = vunpack.c.l.b16 %v7108
        %v7392 = vunpack.c.h.b16 %v7108
        %v7393 = vunpack.c.l.b16 %v7109
        %v7394 = vunpack.c.h.b16 %v7109
        %v7395 = vunpack.c.l.b16 %v7110
        %v7396 = vunpack.c.h.b16 %v7110
        %v7397 = vunpack.c.l.b16 %v7111
        %v7398 = vunpack.c.h.b16 %v7111
        %v7399 = vunpack.c.l.b16 %v7112
        %v7400 = vunpack.c.h.b16 %v7112
        %v7401 = vunpack.c.l.b16 %v7113
        %v7402 = vunpack.c.h.b16 %v7113
        %v7403 = vunpack.c.l.b16 %v7114
        %v7404 = vunpack.c.h.b16 %v7114
        %v7405 = vunpack.c.l.b16 %v7115
        %v7406 = vunpack.c.h.b16 %v7115
        %v7407 = vunpack.c.l.b16 %v7116
        %v7408 = vunpack.c.h.b16 %v7116
        %v7409 = vunpack.c.l.b16 %v7117
        %v7410 = vunpack.c.h.b16 %v7117
        %v7411 = vunpack.c.l.b16 %v7118
        %v7412 = vunpack.c.h.b16 %v7118
        %v7413 = vunpack.c.l.b16 %v7119
        %v7414 = vunpack.c.h.b16 %v7119
        %v7415 = vunpack.c.l.b16 %v7120
        %v7416 = vunpack.c.h.b16 %v7120
        %v7417 = vunpack.c.l.b16 %v7121
        %v7418 = vunpack.c.h.b16 %v7121
        %v7419 = vunpack.c.l.b16 %v7122
        %v7420 = vunpack.c.h.b16 %v7122
        %v7421 = vunpack.c.l.b16 %v7123
        %v7422 = vunpack.c.h.b16 %v7123
        %v7423 = vunpack.c.l.b16 %v7124
        %v7424 = vunpack.c.h.b16 %v7124
        %v7425 = vunpack.c.l.b16 %v7125
        %v7426 = vunpack.c.h.b16 %v7125
        %v7427 = vunpack.c.l.b16 %v7126
        %v7428 = vunpack.c.h.b16 %v7126
        %v7429 = vunpack.c.l.b16 %v7127
        %v7430 = vunpack.c.h.b16 %v7127
        %v7431 = vunpack.c.l.b16 %v7128
        %v7432 = vunpack.c.h.b16 %v7128
        %v7433 = vunpack.c.l.b16 %v7129
        %v7434 = vunpack.c.h.b16 %v7129
        %v7435 = vunpack.c.l.b16 %v7130
        %v7436 = vunpack.c.h.b16 %v7130
        %v7437 = vunpack.c.l.b16 %v7131
        %v7438 = vunpack.c.h.b16 %v7131
        %v7439 = vunpack.c.l.b16 %v7132
        %v7440 = vunpack.c.h.b16 %v7132
        %v7441 = vunpack.c.l.b16 %v7133
        %v7442 = vunpack.c.h.b16 %v7133
        %v7443 = vunpack.c.l.b16 %v7134
        %v7444 = vunpack.c.h.b16 %v7134
        %v7445 = vunpack.c.l.b16 %v7135
        %v7446 = vunpack.c.h.b16 %v7135
        %v7447 = vunpack.c.l.b16 %v7136
        %v7448 = vunpack.c.h.b16 %v7136
        %v7449 = vunpack.c.l.b16 %v7137
        %v7450 = vunpack.c.h.b16 %v7137
        %v7451 = vunpack.c.l.b16 %v7138
        %v7452 = vunpack.c.h.b16 %v7138
        %v7453 = vunpack.c.l.b16 %v7139
        %v7454 = vunpack.c.h.b16 %v7139
        %v7455 = vunpack.c.l.b16 %v7140
        %v7456 = vunpack.c.h.b16 %v7140
        %v7457 = vunpack.c.l.b16 %v7141
        %v7458 = vunpack.c.h.b16 %v7141
        %v7459 = vunpack.c.l.b16 %v7142
        %v7460 = vunpack.c.h.b16 %v7142
        %v7461 = vunpack.c.l.b16 %v7143
        %v7462 = vunpack.c.h.b16 %v7143
        %v7463 = vunpack.c.l.b16 %v7144
        %v7464 = vunpack.c.h.b16 %v7144
        %v7465 = vunpack.c.l.b16 %v7145
        %v7466 = vunpack.c.h.b16 %v7145
        %v7467 = vunpack.c.l.b16 %v7146
        %v7468 = vunpack.c.h.b16 %v7146
        %v7469 = vunpack.c.l.b16 %v7147
        %v7470 = vunpack.c.h.b16 %v7147
        %v7471 = vunpack.c.l.b16 %v7148
        %v7472 = vunpack.c.h.b16 %v7148
        %v7473 = vunpack.c.l.b16 %v7149
        %v7474 = vunpack.c.h.b16 %v7149
        %v7475 = vunpack.c.l.b16 %v7150
        %v7476 = vunpack.c.h.b16 %v7150
        %v7477 = vunpack.c.l.b16 %v7151
        %v7478 = vunpack.c.h.b16 %v7151
        %v7479 = vunpack.c.l.b16 %v7152
        %v7480 = vunpack.c.h.b16 %v7152
        %v7481 = vunpack.c.l.b16 %v7153
        %v7482 = vunpack.c.h.b16 %v7153
        %v7483 = vunpack.c.l.b16 %v7154
        %v7484 = vunpack.c.h.b16 %v7154
        %v7485 = vunpack.c.l.b16 %v7155
        %v7486 = vunpack.c.h.b16 %v7155
        %v7487 = vunpack.c.l.b16 %v7156
        %v7488 = vunpack.c.h.b16 %v7156
        %v7489 = vunpack.c.l.b16 %v7157
        %v7490 = vunpack.c.h.b16 %v7157
        %v7491 = vunpack.c.l.b16 %v7158
        %v7492 = vunpack.c.h.b16 %v7158
        %v7493 = vunpack.c.l.b16 %v7159
        %v7494 = vunpack.c.h.b16 %v7159
        %v7495 = vunpack.c.l.b16 %v7160
        %v7496 = vunpack.c.h.b16 %v7160
        %v7497 = vunpack.c.l.b16 %v7161
        %v7498 = vunpack.c.h.b16 %v7161
        %v7499 = vunpack.c.l.b16 %v7162
        %v7500 = vunpack.c.h.b16 %v7162
        %v7501 = vunpack.c.l.b16 %v7163
        %v7502 = vunpack.c.h.b16 %v7163
        %v7503 = vunpack.c.l.b16 %v7164
        %v7504 = vunpack.c.h.b16 %v7164
        %v7505 = vunpack.c.l.b16 %v7165
        %v7506 = vunpack.c.h.b16 %v7165
        %v7507 = vunpack.c.l.b16 %v7166
        %v7508 = vunpack.c.h.b16 %v7166
        %v7509 = vunpack.c.l.b16 %v7167
        %v7510 = vunpack.c.h.b16 %v7167
        %v7511 = vunpack.c.l.b16 %v7168
        %v7512 = vunpack.c.h.b16 %v7168
        %v7513 = vunpack.c.l.b16 %v7169
        %v7514 = vunpack.c.h.b16 %v7169
        %v7515 = vunpack.c.l.b16 %v7170
        %v7516 = vunpack.c.h.b16 %v7170
        %v7517 = vunpack.c.l.b16 %v7171
        %v7518 = vunpack.c.h.b16 %v7171
        %v7519 = vunpack.c.l.b16 %v7172
        %v7520 = vunpack.c.h.b16 %v7172
        %v7521 = vunpack.c.l.b16 %v7173
        %v7522 = vunpack.c.h.b16 %v7173
        %v7523 = vunpack.c.l.b16 %v7174
        %v7524 = vunpack.c.h.b16 %v7174
        %v7525 = vunpack.c.l.b16 %v7175
        %v7526 = vunpack.c.h.b16 %v7175
        %v7527 = vunpack.c.l.b16 %v7176
        %v7528 = vunpack.c.h.b16 %v7176
        %v7529 = vunpack.c.l.b16 %v7177
        %v7530 = vunpack.c.h.b16 %v7177
        %v7531 = vunpack.c.l.b16 %v7178
        %v7532 = vunpack.c.h.b16 %v7178
        %v7533 = vunpack.c.l.b16 %v7179
        %v7534 = vunpack.c.h.b16 %v7179
        %v7535 = vunpack.c.l.b16 %v7180
        %v7536 = vunpack.c.h.b16 %v7180
        %v7537 = vunpack.c.l.b16 %v7181
        %v7538 = vunpack.c.h.b16 %v7181
        %v7539 = vunpack.c.l.b16 %v7182
        %v7540 = vunpack.c.h.b16 %v7182
        %v7541 = vunpack.c.l.b16 %v7183
        %v7542 = vunpack.c.h.b16 %v7183
        %v7543 = vunpack.c.l.b16 %v7184
        %v7544 = vunpack.c.h.b16 %v7184
        %v7545 = vunpack.c.l.b16 %v7185
        %v7546 = vunpack.c.h.b16 %v7185
        %v7547 = vunpack.c.l.b16 %v7186
        %v7548 = vunpack.c.h.b16 %v7186
        %v7549 = vunpack.c.l.b16 %v7187
        %v7550 = vunpack.c.h.b16 %v7187
        %v7551 = vunpack.c.l.b16 %v7188
        %v7552 = vunpack.c.h.b16 %v7188
        %v7553 = vunpack.c.l.b16 %v7189
        %v7554 = vunpack.c.h.b16 %v7189
        %v7555 = vunpack.c.l.b16 %v7190
        %v7556 = vunpack.c.h.b16 %v7190
        %v7557 = vunpack.c.l.b16 %v7191
        %v7558 = vunpack.c.h.b16 %v7191
        %v7559 = vunpack.c.l.b16 %v7192
        %v7560 = vunpack.c.h.b16 %v7192
        %v7561 = vunpack.c.l.b16 %v7193
        %v7562 = vunpack.c.h.b16 %v7193
        %v7563 = vunpack.c.l.b16 %v7194
        %v7564 = vunpack.c.h.b16 %v7194
        %v7565 = vunpack.c.l.b16 %v7195
        %v7566 = vunpack.c.h.b16 %v7195
        %v7567 = vunpack.c.l.b16 %v7196
        %v7568 = vunpack.c.h.b16 %v7196
        %v7569 = vunpack.c.l.b16 %v7197
        %v7570 = vunpack.c.h.b16 %v7197
        %v7571 = vunpack.c.l.b16 %v7198
        %v7572 = vunpack.c.h.b16 %v7198
        %v7573 = vunpack.c.l.b16 %v7199
        %v7574 = vunpack.c.h.b16 %v7199
        %v7575 = vunpack.c.l.b16 %v7200
        %v7576 = vunpack.c.h.b16 %v7200
        %v7577 = vunpack.c.l.b16 %v7201
        %v7578 = vunpack.c.h.b16 %v7201
        %v7579 = vunpack.c.l.b16 %v7202
        %v7580 = vunpack.c.h.b16 %v7202
        %v7581 = vunpack.c.l.b16 %v7203
        %v7582 = vunpack.c.h.b16 %v7203
        %v7583 = vunpack.c.l.b16 %v7204
        %v7584 = vunpack.c.h.b16 %v7204
        %v7585 = vunpack.c.l.b16 %v7205
        %v7586 = vunpack.c.h.b16 %v7205
        %v7587 = vunpack.c.l.b16 %v7206
        %v7588 = vunpack.c.h.b16 %v7206
        %v7589 = vunpack.c.l.b16 %v7207
        %v7590 = vunpack.c.h.b16 %v7207
        %v7591 = vunpack.c.l.b16 %v7208
        %v7592 = vunpack.c.h.b16 %v7208
        %v7593 = vpack.c.b16 %v7341, %v7337
        %v7594 = vpack.c.b16 %v7342, %v7338
        %v7595 = vpack.c.b16 %v7343, %v7339
        %v7596 = vpack.c.b16 %v7344, %v7340
        %v7597 = vpack.c.b16 %v7349, %v7345
        %v7598 = vpack.c.b16 %v7350, %v7346
        %v7599 = vpack.c.b16 %v7351, %v7347
        %v7600 = vpack.c.b16 %v7352, %v7348
        %v7601 = vpack.c.b16 %v7357, %v7353
        %v7602 = vpack.c.b16 %v7358, %v7354
        %v7603 = vpack.c.b16 %v7359, %v7355
        %v7604 = vpack.c.b16 %v7360, %v7356
        %v7605 = vpack.c.b16 %v7365, %v7361
        %v7606 = vpack.c.b16 %v7366, %v7362
        %v7607 = vpack.c.b16 %v7367, %v7363
        %v7608 = vpack.c.b16 %v7368, %v7364
        %v7609 = vpack.c.b16 %v7373, %v7369
        %v7610 = vpack.c.b16 %v7374, %v7370
        %v7611 = vpack.c.b16 %v7375, %v7371
        %v7612 = vpack.c.b16 %v7376, %v7372
        %v7613 = vpack.c.b16 %v7381, %v7377
        %v7614 = vpack.c.b16 %v7382, %v7378
        %v7615 = vpack.c.b16 %v7383, %v7379
        %v7616 = vpack.c.b16 %v7384, %v7380
        %v7617 = vpack.c.b16 %v7389, %v7385
        %v7618 = vpack.c.b16 %v7390, %v7386
        %v7619 = vpack.c.b16 %v7391, %v7387
        %v7620 = vpack.c.b16 %v7392, %v7388
        %v7621 = vpack.c.b16 %v7397, %v7393
        %v7622 = vpack.c.b16 %v7398, %v7394
        %v7623 = vpack.c.b16 %v7399, %v7395
        %v7624 = vpack.c.b16 %v7400, %v7396
        %v7625 = vpack.c.b16 %v7405, %v7401
        %v7626 = vpack.c.b16 %v7406, %v7402
        %v7627 = vpack.c.b16 %v7407, %v7403
        %v7628 = vpack.c.b16 %v7408, %v7404
        %v7629 = vpack.c.b16 %v7413, %v7409
        %v7630 = vpack.c.b16 %v7414, %v7410
        %v7631 = vpack.c.b16 %v7415, %v7411
        %v7632 = vpack.c.b16 %v7416, %v7412
        %v7633 = vpack.c.b16 %v7421, %v7417
        %v7634 = vpack.c.b16 %v7422, %v7418
        %v7635 = vpack.c.b16 %v7423, %v7419
        %v7636 = vpack.c.b16 %v7424, %v7420
        %v7637 = vpack.c.b16 %v7429, %v7425
        %v7638 = vpack.c.b16 %v7430, %v7426
        %v7639 = vpack.c.b16 %v7431, %v7427
        %v7640 = vpack.c.b16 %v7432, %v7428
        %v7641 = vpack.c.b16 %v7437, %v7433
        %v7642 = vpack.c.b16 %v7438, %v7434
        %v7643 = vpack.c.b16 %v7439, %v7435
        %v7644 = vpack.c.b16 %v7440, %v7436
        %v7645 = vpack.c.b16 %v7445, %v7441
        %v7646 = vpack.c.b16 %v7446, %v7442
        %v7647 = vpack.c.b16 %v7447, %v7443
        %v7648 = vpack.c.b16 %v7448, %v7444
        %v7649 = vpack.c.b16 %v7453, %v7449
        %v7650 = vpack.c.b16 %v7454, %v7450
        %v7651 = vpack.c.b16 %v7455, %v7451
        %v7652 = vpack.c.b16 %v7456, %v7452
        %v7653 = vpack.c.b16 %v7461, %v7457
        %v7654 = vpack.c.b16 %v7462, %v7458
        %v7655 = vpack.c.b16 %v7463, %v7459
        %v7656 = vpack.c.b16 %v7464, %v7460
        %v7657 = vpack.c.b16 %v7469, %v7465
        %v7658 = vpack.c.b16 %v7470, %v7466
        %v7659 = vpack.c.b16 %v7471, %v7467
        %v7660 = vpack.c.b16 %v7472, %v7468
        %v7661 = vpack.c.b16 %v7477, %v7473
        %v7662 = vpack.c.b16 %v7478, %v7474
        %v7663 = vpack.c.b16 %v7479, %v7475
        %v7664 = vpack.c.b16 %v7480, %v7476
        %v7665 = vpack.c.b16 %v7485, %v7481
        %v7666 = vpack.c.b16 %v7486, %v7482
        %v7667 = vpack.c.b16 %v7487, %v7483
        %v7668 = vpack.c.b16 %v7488, %v7484
        %v7669 = vpack.c.b16 %v7493, %v7489
        %v7670 = vpack.c.b16 %v7494, %v7490
        %v7671 = vpack.c.b16 %v7495, %v7491
        %v7672 = vpack.c.b16 %v7496, %v7492
        %v7673 = vpack.c.b16 %v7501, %v7497
        %v7674 = vpack.c.b16 %v7502, %v7498
        %v7675 = vpack.c.b16 %v7503, %v7499
        %v7676 = vpack.c.b16 %v7504, %v7500
        %v7677 = vpack.c.b16 %v7509, %v7505
        %v7678 = vpack.c.b16 %v7510, %v7506
        %v7679 = vpack.c.b16 %v7511, %v7507
        %v7680 = vpack.c.b16 %v7512, %v7508
        %v7681 = vpack.c.b16 %v7517, %v7513
        %v7682 = vpack.c.b16 %v7518, %v7514
        %v7683 = vpack.c.b16 %v7519, %v7515
        %v7684 = vpack.c.b16 %v7520, %v7516
        %v7685 = vpack.c.b16 %v7525, %v7521
        %v7686 = vpack.c.b16 %v7526, %v7522
        %v7687 = vpack.c.b16 %v7527, %v7523
        %v7688 = vpack.c.b16 %v7528, %v7524
        %v7689 = vpack.c.b16 %v7533, %v7529
        %v7690 = vpack.c.b16 %v7534, %v7530
        %v7691 = vpack.c.b16 %v7535, %v7531
        %v7692 = vpack.c.b16 %v7536, %v7532
        %v7693 = vpack.c.b16 %v7541, %v7537
        %v7694 = vpack.c.b16 %v7542, %v7538
        %v7695 = vpack.c.b16 %v7543, %v7539
        %v7696 = vpack.c.b16 %v7544, %v7540
        %v7697 = vpack.c.b16 %v7549, %v7545
        %v7698 = vpack.c.b16 %v7550, %v7546
        %v7699 = vpack.c.b16 %v7551, %v7547
        %v7700 = vpack.c.b16 %v7552, %v7548
        %v7701 = vpack.c.b16 %v7557, %v7553
        %v7702 = vpack.c.b16 %v7558, %v7554
        %v7703 = vpack.c.b16 %v7559, %v7555
        %v7704 = vpack.c.b16 %v7560, %v7556
        %v7705 = vpack.c.b16 %v7565, %v7561
        %v7706 = vpack.c.b16 %v7566, %v7562
        %v7707 = vpack.c.b16 %v7567, %v7563
        %v7708 = vpack.c.b16 %v7568, %v7564
        %v7709 = vpack.c.b16 %v7573, %v7569
        %v7710 = vpack.c.b16 %v7574, %v7570
        %v7711 = vpack.c.b16 %v7575, %v7571
        %v7712 = vpack.c.b16 %v7576, %v7572
        %v7713 = vpack.c.b16 %v7581, %v7577
        %v7714 = vpack.c.b16 %v7582, %v7578
        %v7715 = vpack.c.b16 %v7583, %v7579
        %v7716 = vpack.c.b16 %v7584, %v7580
        %v7717 = vpack.c.b16 %v7589, %v7585
        %v7718 = vpack.c.b16 %v7590, %v7586
        %v7719 = vpack.c.b16 %v7591, %v7587
        %v7720 = vpack.c.b16 %v7592, %v7588
        %7849 = vmatpush.bf16.msra.mxu0 %v7621
        %7850 = vmatpush.bf16.msra.mxu0 %v7617
        %7851 = vmatpush.bf16.msra.mxu0 %v7613
        %7852 = vmatpush.bf16.msra.mxu0 %v7609
        %7853 = vmatpush.bf16.msra.mxu0 %v7605
        %7854 = vmatpush.bf16.msra.mxu0 %v7601
        %7855 = vmatpush.bf16.msra.mxu0 %v7597
        %7856 = vmatpush.bf16.msra.mxu0 %v7593
        %7857 = vmatmul.bf16.gmra.mxu0 %v7077
        %v7858 = vpop.f32.mrf.mxu0
        %v7859 = vadd.f32 0.0, %v7858
        %v7860 = vpop.f32.mrf.mxu0
        %v7861 = vadd.f32 0.0, %v7860
        %7862 = vdwg.mxu0
        %7863 = vmatpush.bf16.msra.mxu0 %v7653
        %7864 = vmatpush.bf16.msra.mxu0 %v7649
        %7865 = vmatpush.bf16.msra.mxu0 %v7645
        %7866 = vmatpush.bf16.msra.mxu0 %v7641
        %7867 = vmatpush.bf16.msra.mxu0 %v7637
        %7868 = vmatpush.bf16.msra.mxu0 %v7633
        %7869 = vmatpush.bf16.msra.mxu0 %v7629
        %7870 = vmatpush.bf16.msra.mxu0 %v7625
        %7871 = vmatmul.bf16.gmra.mxu0 %v7078
        %v7872 = vpop.f32.mrf.mxu0
        %v7873 = vadd.f32 %v7859, %v7872
        %v7874 = vpop.f32.mrf.mxu0
        %v7875 = vadd.f32 %v7861, %v7874
        %7876 = vdwg.mxu0
        %7877 = vmatpush.bf16.msra.mxu0 %v7685
        %7878 = vmatpush.bf16.msra.mxu0 %v7681
        %7879 = vmatpush.bf16.msra.mxu0 %v7677
        %7880 = vmatpush.bf16.msra.mxu0 %v7673
        %7881 = vmatpush.bf16.msra.mxu0 %v7669
        %7882 = vmatpush.bf16.msra.mxu0 %v7665
        %7883 = vmatpush.bf16.msra.mxu0 %v7661
        %7884 = vmatpush.bf16.msra.mxu0 %v7657
        %7885 = vmatmul.bf16.gmra.mxu0 %v7079
        %v7886 = vpop.f32.mrf.mxu0
        %v7887 = vadd.f32 %v7873, %v7886
        %v7888 = vpop.f32.mrf.mxu0
        %v7889 = vadd.f32 %v7875, %v7888
        %7890 = vdwg.mxu0
        %7891 = vmatpush.bf16.msra.mxu0 %v7717
        %7892 = vmatpush.bf16.msra.mxu0 %v7713
        %7893 = vmatpush.bf16.msra.mxu0 %v7709
        %7894 = vmatpush.bf16.msra.mxu0 %v7705
        %7895 = vmatpush.bf16.msra.mxu0 %v7701
        %7896 = vmatpush.bf16.msra.mxu0 %v7697
        %7897 = vmatpush.bf16.msra.mxu0 %v7693
        %7898 = vmatpush.bf16.msra.mxu0 %v7689
        %7899 = vmatmul.bf16.gmra.mxu0 %v7080
        %v7900 = vpop.f32.mrf.mxu0
        %v7901 = vadd.f32 %v7887, %v7900
        %v7902 = vpop.f32.mrf.mxu0
        %v7903 = vadd.f32 %v7889, %v7902
        %7904 = vdwg.mxu0
        %7905 = vmatpush.bf16.msra.mxu0 %v7622
        %7906 = vmatpush.bf16.msra.mxu0 %v7618
        %7907 = vmatpush.bf16.msra.mxu0 %v7614
        %7908 = vmatpush.bf16.msra.mxu0 %v7610
        %7909 = vmatpush.bf16.msra.mxu0 %v7606
        %7910 = vmatpush.bf16.msra.mxu0 %v7602
        %7911 = vmatpush.bf16.msra.mxu0 %v7598
        %7912 = vmatpush.bf16.msra.mxu0 %v7594
        %7913 = vmatmul.bf16.gmra.mxu0 %v7077
        %v7914 = vpop.f32.mrf.mxu0
        %v7915 = vadd.f32 0.0, %v7914
        %v7916 = vpop.f32.mrf.mxu0
        %v7917 = vadd.f32 0.0, %v7916
        %7918 = vdwg.mxu0
        %7919 = vmatpush.bf16.msra.mxu0 %v7654
        %7920 = vmatpush.bf16.msra.mxu0 %v7650
        %7921 = vmatpush.bf16.msra.mxu0 %v7646
        %7922 = vmatpush.bf16.msra.mxu0 %v7642
        %7923 = vmatpush.bf16.msra.mxu0 %v7638
        %7924 = vmatpush.bf16.msra.mxu0 %v7634
        %7925 = vmatpush.bf16.msra.mxu0 %v7630
        %7926 = vmatpush.bf16.msra.mxu0 %v7626
        %7927 = vmatmul.bf16.gmra.mxu0 %v7078
        %v7928 = vpop.f32.mrf.mxu0
        %v7929 = vadd.f32 %v7915, %v7928
        %v7930 = vpop.f32.mrf.mxu0
        %v7931 = vadd.f32 %v7917, %v7930
        %7932 = vdwg.mxu0
        %7933 = vmatpush.bf16.msra.mxu0 %v7686
        %7934 = vmatpush.bf16.msra.mxu0 %v7682
        %7935 = vmatpush.bf16.msra.mxu0 %v7678
        %7936 = vmatpush.bf16.msra.mxu0 %v7674
        %7937 = vmatpush.bf16.msra.mxu0 %v7670
        %7938 = vmatpush.bf16.msra.mxu0 %v7666
        %7939 = vmatpush.bf16.msra.mxu0 %v7662
        %7940 = vmatpush.bf16.msra.mxu0 %v7658
        %7941 = vmatmul.bf16.gmra.mxu0 %v7079
        %v7942 = vpop.f32.mrf.mxu0
        %v7943 = vadd.f32 %v7929, %v7942
        %v7944 = vpop.f32.mrf.mxu0
        %v7945 = vadd.f32 %v7931, %v7944
        %7946 = vdwg.mxu0
        %7947 = vmatpush.bf16.msra.mxu0 %v7718
        %7948 = vmatpush.bf16.msra.mxu0 %v7714
        %7949 = vmatpush.bf16.msra.mxu0 %v7710
        %7950 = vmatpush.bf16.msra.mxu0 %v7706
        %7951 = vmatpush.bf16.msra.mxu0 %v7702
        %7952 = vmatpush.bf16.msra.mxu0 %v7698
        %7953 = vmatpush.bf16.msra.mxu0 %v7694
        %7954 = vmatpush.bf16.msra.mxu0 %v7690
        %7955 = vmatmul.bf16.gmra.mxu0 %v7080
        %v7956 = vpop.f32.mrf.mxu0
        %v7957 = vadd.f32 %v7943, %v7956
        %v7958 = vpop.f32.mrf.mxu0
        %v7959 = vadd.f32 %v7945, %v7958
        %7960 = vdwg.mxu0
        %7961 = vmatpush.bf16.msra.mxu0 %v7623
        %7962 = vmatpush.bf16.msra.mxu0 %v7619
        %7963 = vmatpush.bf16.msra.mxu0 %v7615
        %7964 = vmatpush.bf16.msra.mxu0 %v7611
        %7965 = vmatpush.bf16.msra.mxu0 %v7607
        %7966 = vmatpush.bf16.msra.mxu0 %v7603
        %7967 = vmatpush.bf16.msra.mxu0 %v7599
        %7968 = vmatpush.bf16.msra.mxu0 %v7595
        %7969 = vmatmul.bf16.gmra.mxu0 %v7077
        %v7970 = vpop.f32.mrf.mxu0
        %v7971 = vadd.f32 0.0, %v7970
        %v7972 = vpop.f32.mrf.mxu0
        %v7973 = vadd.f32 0.0, %v7972
        %7974 = vdwg.mxu0
        %7975 = vmatpush.bf16.msra.mxu0 %v7655
        %7976 = vmatpush.bf16.msra.mxu0 %v7651
        %7977 = vmatpush.bf16.msra.mxu0 %v7647
        %7978 = vmatpush.bf16.msra.mxu0 %v7643
        %7979 = vmatpush.bf16.msra.mxu0 %v7639
        %7980 = vmatpush.bf16.msra.mxu0 %v7635
        %7981 = vmatpush.bf16.msra.mxu0 %v7631
        %7982 = vmatpush.bf16.msra.mxu0 %v7627
        %7983 = vmatmul.bf16.gmra.mxu0 %v7078
        %v7984 = vpop.f32.mrf.mxu0
        %v7985 = vadd.f32 %v7971, %v7984
        %v7986 = vpop.f32.mrf.mxu0
        %v7987 = vadd.f32 %v7973, %v7986
        %7988 = vdwg.mxu0
        %7989 = vmatpush.bf16.msra.mxu0 %v7687
        %7990 = vmatpush.bf16.msra.mxu0 %v7683
        %7991 = vmatpush.bf16.msra.mxu0 %v7679
        %7992 = vmatpush.bf16.msra.mxu0 %v7675
        %7993 = vmatpush.bf16.msra.mxu0 %v7671
        %7994 = vmatpush.bf16.msra.mxu0 %v7667
        %7995 = vmatpush.bf16.msra.mxu0 %v7663
        %7996 = vmatpush.bf16.msra.mxu0 %v7659
        %7997 = vmatmul.bf16.gmra.mxu0 %v7079
        %v7998 = vpop.f32.mrf.mxu0
        %v7999 = vadd.f32 %v7985, %v7998
        %v8000 = vpop.f32.mrf.mxu0
        %v8001 = vadd.f32 %v7987, %v8000
        %8002 = vdwg.mxu0
        %8003 = vmatpush.bf16.msra.mxu0 %v7719
        %8004 = vmatpush.bf16.msra.mxu0 %v7715
        %8005 = vmatpush.bf16.msra.mxu0 %v7711
        %8006 = vmatpush.bf16.msra.mxu0 %v7707
        %8007 = vmatpush.bf16.msra.mxu0 %v7703
        %8008 = vmatpush.bf16.msra.mxu0 %v7699
        %8009 = vmatpush.bf16.msra.mxu0 %v7695
        %8010 = vmatpush.bf16.msra.mxu0 %v7691
        %8011 = vmatmul.bf16.gmra.mxu0 %v7080
        %v8012 = vpop.f32.mrf.mxu0
        %v8013 = vadd.f32 %v7999, %v8012
        %v8014 = vpop.f32.mrf.mxu0
        %v8015 = vadd.f32 %v8001, %v8014
        %8016 = vdwg.mxu0
        %8017 = vmatpush.bf16.msra.mxu0 %v7624
        %8018 = vmatpush.bf16.msra.mxu0 %v7620
        %8019 = vmatpush.bf16.msra.mxu0 %v7616
        %8020 = vmatpush.bf16.msra.mxu0 %v7612
        %8021 = vmatpush.bf16.msra.mxu0 %v7608
        %8022 = vmatpush.bf16.msra.mxu0 %v7604
        %8023 = vmatpush.bf16.msra.mxu0 %v7600
        %8024 = vmatpush.bf16.msra.mxu0 %v7596
        %8025 = vmatmul.bf16.gmra.mxu0 %v7077
        %v8026 = vpop.f32.mrf.mxu0
        %v8027 = vadd.f32 0.0, %v8026
        %v8028 = vpop.f32.mrf.mxu0
        %v8029 = vadd.f32 0.0, %v8028
        %8030 = vdwg.mxu0
        %8031 = vmatpush.bf16.msra.mxu0 %v7656
        %8032 = vmatpush.bf16.msra.mxu0 %v7652
        %8033 = vmatpush.bf16.msra.mxu0 %v7648
        %8034 = vmatpush.bf16.msra.mxu0 %v7644
        %8035 = vmatpush.bf16.msra.mxu0 %v7640
        %8036 = vmatpush.bf16.msra.mxu0 %v7636
        %8037 = vmatpush.bf16.msra.mxu0 %v7632
        %8038 = vmatpush.bf16.msra.mxu0 %v7628
        %8039 = vmatmul.bf16.gmra.mxu0 %v7078
        %v8040 = vpop.f32.mrf.mxu0
        %v8041 = vadd.f32 %v8027, %v8040
        %v8042 = vpop.f32.mrf.mxu0
        %v8043 = vadd.f32 %v8029, %v8042
        %8044 = vdwg.mxu0
        %8045 = vmatpush.bf16.msra.mxu0 %v7688
        %8046 = vmatpush.bf16.msra.mxu0 %v7684
        %8047 = vmatpush.bf16.msra.mxu0 %v7680
        %8048 = vmatpush.bf16.msra.mxu0 %v7676
        %8049 = vmatpush.bf16.msra.mxu0 %v7672
        %8050 = vmatpush.bf16.msra.mxu0 %v7668
        %8051 = vmatpush.bf16.msra.mxu0 %v7664
        %8052 = vmatpush.bf16.msra.mxu0 %v7660
        %8053 = vmatmul.bf16.gmra.mxu0 %v7079
        %v8054 = vpop.f32.mrf.mxu0
        %v8055 = vadd.f32 %v8041, %v8054
        %v8056 = vpop.f32.mrf.mxu0
        %v8057 = vadd.f32 %v8043, %v8056
        %8058 = vdwg.mxu0
        %8059 = vmatpush.bf16.msra.mxu0 %v7720
        %8060 = vmatpush.bf16.msra.mxu0 %v7716
        %8061 = vmatpush.bf16.msra.mxu0 %v7712
        %8062 = vmatpush.bf16.msra.mxu0 %v7708
        %8063 = vmatpush.bf16.msra.mxu0 %v7704
        %8064 = vmatpush.bf16.msra.mxu0 %v7700
        %8065 = vmatpush.bf16.msra.mxu0 %v7696
        %8066 = vmatpush.bf16.msra.mxu0 %v7692
        %8067 = vmatmul.bf16.gmra.mxu0 %v7080
        %v8068 = vpop.f32.mrf.mxu0
        %v8069 = vadd.f32 %v8055, %v8068
        %v8070 = vpop.f32.mrf.mxu0
        %v8071 = vadd.f32 %v8057, %v8070
        %8072 = vdwg.mxu0
        %v8073 = vadd.f32 %v7069, %v7901
        %v8074 = vadd.f32 %v7070, %v7957
        %v8075 = vadd.f32 %v7071, %v8013
        %v8076 = vadd.f32 %v7072, %v8069
        %v8077 = vadd.f32 %v7073, %v7903
        %v8078 = vadd.f32 %v7074, %v7959
        %v8079 = vadd.f32 %v7075, %v8015
        %v8080 = vadd.f32 %v7076, %v8071
        %8081 = vst [vmem:[#allocation4] sm:$0xff] %v8073
        %8082 = vst [vmem:[#allocation4 + $0x8] sm:$0xff] %v8074
        %8083 = vst [vmem:[#allocation4 + $0x10] sm:$0xff] %v8075
        %8084 = vst [vmem:[#allocation4 + $0x18] sm:$0xff] %v8076
        %8085 = vst [vmem:[#allocation4 + $0x20] sm:$0xff] %v8077
        %8086 = vst [vmem:[#allocation4 + $0x28] sm:$0xff] %v8078
        %8087 = vst [vmem:[#allocation4 + $0x30] sm:$0xff] %v8079
        %8088 = vst [vmem:[#allocation4 + $0x38] sm:$0xff] %v8080
        %p8089 = scmp.eq.s32.totalorder %s39, 3
        // Predicated region
        $region165: #{pos_model_forward.1} parent=91 // pred_check
          %p8090 = pneg %p8089
        $region166: #{pos_model_forward.1} parent=91 // pred_check_branch
          %8092 = sbr.rel (%p8090) target = $region168
        $region167: #{pos_model_forward.1} parent=91 // pred_region
          %v8093 = vld [vmem:[#allocation3] sm:$0xff]
          %v8094 = vld [vmem:[#allocation3 + $0x8] sm:$0xff]
          %v8095 = vld [vmem:[#allocation3 + $0x10] sm:$0xff]
          %v8096 = vld [vmem:[#allocation3 + $0x18] sm:$0xff]
          %v8097 = vld [vmem:[#allocation3 + $0x20] sm:$0xff]
          %v8098 = vld [vmem:[#allocation3 + $0x28] sm:$0xff]
          %v8099 = vld [vmem:[#allocation3 + $0x30] sm:$0xff]
          %v8100 = vld [vmem:[#allocation3 + $0x38] sm:$0xff]
          %v8101 = vld [vmem:[#allocation4] sm:$0xff]
          %v8102 = vld [vmem:[#allocation4 + $0x8] sm:$0xff]
          %v8103 = vld [vmem:[#allocation4 + $0x10] sm:$0xff]
          %v8104 = vld [vmem:[#allocation4 + $0x18] sm:$0xff]
          %v8105 = vld [vmem:[#allocation4 + $0x20] sm:$0xff]
          %v8106 = vld [vmem:[#allocation4 + $0x28] sm:$0xff]
          %v8107 = vld [vmem:[#allocation4 + $0x30] sm:$0xff]
          %v8108 = vld [vmem:[#allocation4 + $0x38] sm:$0xff]
          %v8109 = vadd.f32 %v8093, %v8101
          %v8110 = vadd.f32 %v8094, %v8102
          %v8111 = vadd.f32 %v8095, %v8103
          %v8112 = vadd.f32 %v8096, %v8104
          %v8113 = vadd.f32 %v8097, %v8105
          %v8114 = vadd.f32 %v8098, %v8106
          %v8115 = vadd.f32 %v8099, %v8107
          %v8116 = vadd.f32 %v8100, %v8108
          %v8117 = vld [vmem:[%s962] sm:$0xf]
          %v8119 = vperm.slane %v8117, 0
          %v8120 = vperm.slane %v8117, 1
          %v8121 = vperm.slane %v8117, 2
          %v8122 = vperm.slane %v8117, 3
          %v8127 = vadd.f32 %v8109, %v8119
          %v8128 = vadd.f32 %v8110, %v8120
          %v8129 = vadd.f32 %v8111, %v8121
          %v8130 = vadd.f32 %v8112, %v8122
          %v8131 = vadd.f32 %v8113, %v8119
          %v8132 = vadd.f32 %v8114, %v8120
          %v8133 = vadd.f32 %v8115, %v8121
          %v8134 = vadd.f32 %v8116, %v8122
          %v8135 = vld [vmem:[%s972] sm:$0xf]
          %v8136 = vld [vmem:[%s982] sm:$0xf]
          %v8137 = vadd.f32 %v8127, %v8128
          %v8138 = vadd.f32 %v8137, %v8129
          %v8139 = vadd.f32 %v8138, %v8130
          %8140 = vadd.xlane.f32.xlu0 %v8139
          %v8141 = vpop.xlane.xlu0 %8140
          %v8142 = vadd.f32 %v8131, %v8132
          %v8143 = vadd.f32 %v8142, %v8133
          %v8144 = vadd.f32 %v8143, %v8134
          %8145 = vadd.xlane.f32.xlu0 %v8144
          %v8146 = vpop.xlane.xlu0 %8145
          %v8147 = vrcp.pop 512.0
          %v8148 = vmul.f32 512.0, %v8147
          %v8149 = vsub.f32 1.0, %v8148
          %v8150 = vmul.f32 %v8147, %v8149
          %v8151 = vadd.f32 %v8147, %v8150
          %vm8152 = vweird.f32 %v8147
          %v8153 = vsel %vm8152, %v8147, %v8151
          %v8154 = vmul.f32 %v8141, %v8153
          %v8155 = vmul.f32 %v8146, %v8153
          %v8156 = vsub.f32 %v8127, %v8154
          %v8157 = vsub.f32 %v8128, %v8154
          %v8158 = vsub.f32 %v8129, %v8154
          %v8159 = vsub.f32 %v8130, %v8154
          %v8160 = vsub.f32 %v8131, %v8155
          %v8161 = vsub.f32 %v8132, %v8155
          %v8162 = vsub.f32 %v8133, %v8155
          %v8163 = vsub.f32 %v8134, %v8155
          %v8164 = vmul.f32 %v8156, %v8156
          %v8165 = vmul.f32 %v8157, %v8157
          %v8166 = vmul.f32 %v8158, %v8158
          %v8167 = vmul.f32 %v8159, %v8159
          %v8168 = vmul.f32 %v8160, %v8160
          %v8169 = vmul.f32 %v8161, %v8161
          %v8170 = vmul.f32 %v8162, %v8162
          %v8171 = vmul.f32 %v8163, %v8163
          %v8172 = vadd.f32 %v8164, %v8165
          %v8173 = vadd.f32 %v8172, %v8166
          %v8174 = vadd.f32 %v8173, %v8167
          %8175 = vadd.xlane.f32.xlu0 %v8174
          %v8176 = vpop.xlane.xlu0 %8175
          %v8177 = vadd.f32 %v8168, %v8169
          %v8178 = vadd.f32 %v8177, %v8170
          %v8179 = vadd.f32 %v8178, %v8171
          %8180 = vadd.xlane.f32.xlu0 %v8179
          %v8181 = vpop.xlane.xlu0 %8180
          %v8182 = vmul.f32 %v8176, %v8153
          %v8183 = vmul.f32 %v8181, %v8153
          %v8184 = vadd.f32 %v8182, 1e-05
          %v8185 = vadd.f32 %v8183, 1e-05
          %v8186 = vrsqrt.pop %v8184
          %v8187 = vmul.f32 %v8186, %v8184
          %v8188 = vmul.f32 %v8187, %v8186
          %v8189 = vmul.f32 0.5, %v8188
          %v8190 = vsub.f32 1.5, %v8189
          %v8191 = vmul.f32 %v8186, %v8190
          %vm8192 = vweird.f32 %v8184
          %vm8193 = vweird.f32 %v8186
          %vm8194 = vmor %vm8192, %vm8193
          %v8195 = vsel %vm8194, %v8186, %v8191
          %v8196 = vrsqrt.pop %v8185
          %v8197 = vmul.f32 %v8196, %v8185
          %v8198 = vmul.f32 %v8197, %v8196
          %v8199 = vmul.f32 0.5, %v8198
          %v8200 = vsub.f32 1.5, %v8199
          %v8201 = vmul.f32 %v8196, %v8200
          %vm8202 = vweird.f32 %v8185
          %vm8203 = vweird.f32 %v8196
          %vm8204 = vmor %vm8202, %vm8203
          %v8205 = vsel %vm8204, %v8196, %v8201
          %v8206 = vmul.f32 %v8156, %v8195
          %v8207 = vmul.f32 %v8157, %v8195
          %v8208 = vmul.f32 %v8158, %v8195
          %v8209 = vmul.f32 %v8159, %v8195
          %v8210 = vmul.f32 %v8160, %v8205
          %v8211 = vmul.f32 %v8161, %v8205
          %v8212 = vmul.f32 %v8162, %v8205
          %v8213 = vmul.f32 %v8163, %v8205
          %v8215 = vperm.slane %v8135, 0
          %v8216 = vperm.slane %v8135, 1
          %v8217 = vperm.slane %v8135, 2
          %v8218 = vperm.slane %v8135, 3
          %v8223 = vmul.f32 %v8206, %v8215
          %v8224 = vmul.f32 %v8207, %v8216
          %v8225 = vmul.f32 %v8208, %v8217
          %v8226 = vmul.f32 %v8209, %v8218
          %v8227 = vmul.f32 %v8210, %v8215
          %v8228 = vmul.f32 %v8211, %v8216
          %v8229 = vmul.f32 %v8212, %v8217
          %v8230 = vmul.f32 %v8213, %v8218
          %v8232 = vperm.slane %v8136, 0
          %v8233 = vperm.slane %v8136, 1
          %v8234 = vperm.slane %v8136, 2
          %v8235 = vperm.slane %v8136, 3
          %v8240 = vadd.f32 %v8223, %v8232
          %v8241 = vadd.f32 %v8224, %v8233
          %v8242 = vadd.f32 %v8225, %v8234
          %v8243 = vadd.f32 %v8226, %v8235
          %v8244 = vadd.f32 %v8227, %v8232
          %v8245 = vadd.f32 %v8228, %v8233
          %v8246 = vadd.f32 %v8229, %v8234
          %v8247 = vadd.f32 %v8230, %v8235
          %8248 = vst [vmem:[#allocation2] sm:$0xff] %v8240
          %8249 = vst [vmem:[#allocation2 + $0x8] sm:$0xff] %v8241
          %8250 = vst [vmem:[#allocation2 + $0x10] sm:$0xff] %v8242
          %8251 = vst [vmem:[#allocation2 + $0x18] sm:$0xff] %v8243
          %8252 = vst [vmem:[#allocation2 + $0x20] sm:$0xff] %v8244
          %8253 = vst [vmem:[#allocation2 + $0x28] sm:$0xff] %v8245
          %8254 = vst [vmem:[#allocation2 + $0x30] sm:$0xff] %v8246
          %8255 = vst [vmem:[#allocation2 + $0x38] sm:$0xff] %v8247
        $region168: #{pos_model_forward.1} parent=91 // pred_fallthru
          _
        %p8256 = scmp.eq.s32.totalorder %s38, 1
        %p8257 = pnand %p8256, %p8089
        %p8258 = pneg %p8257
        // Predicated region
        $region169: #{pos_model_forward.1} parent=91 // pred_check
          _
        $region170: #{pos_model_forward.1} parent=91 // pred_check_branch
          %8260 = sbr.rel (%p8257) target = $region172
        $region171: #{pos_model_forward.1} parent=91 // pred_region
          %v8261 = vld [vmem:[#allocation2] sm:$0xff]
          %v8262 = vld [vmem:[#allocation2 + $0x8] sm:$0xff]
          %v8263 = vld [vmem:[#allocation2 + $0x10] sm:$0xff]
          %v8264 = vld [vmem:[#allocation2 + $0x18] sm:$0xff]
          %v8265 = vld [vmem:[#allocation2 + $0x20] sm:$0xff]
          %v8266 = vld [vmem:[#allocation2 + $0x28] sm:$0xff]
          %v8267 = vld [vmem:[#allocation2 + $0x30] sm:$0xff]
          %v8268 = vld [vmem:[#allocation2 + $0x38] sm:$0xff]
          %v8269 = vpack.c.bf16 %v8265, %v8261
          %v8270 = vpack.c.bf16 %v8266, %v8262
          %v8271 = vpack.c.bf16 %v8267, %v8263
          %v8272 = vpack.c.bf16 %v8268, %v8264
          %v8273 = vld [vmem:[#allocation21] sm:$0xf]
          %v8274 = vld [vmem:[#allocation21 + $0x4] sm:$0xf]
          %v8275 = vld [vmem:[#allocation21 + $0x8] sm:$0xf]
          %v8276 = vld [vmem:[#allocation21 + $0xc] sm:$0xf]
          %v8277 = vld [vmem:[#allocation21 + $0x10] sm:$0xf]
          %v8278 = vld [vmem:[#allocation21 + $0x14] sm:$0xf]
          %v8279 = vld [vmem:[#allocation21 + $0x18] sm:$0xf]
          %v8280 = vld [vmem:[#allocation21 + $0x1c] sm:$0xf]
          %v8281 = vld [vmem:[#allocation21 + $0x20] sm:$0xf]
          %v8282 = vld [vmem:[#allocation21 + $0x24] sm:$0xf]
          %v8283 = vld [vmem:[#allocation21 + $0x28] sm:$0xf]
          %v8284 = vld [vmem:[#allocation21 + $0x2c] sm:$0xf]
          %v8285 = vld [vmem:[#allocation21 + $0x30] sm:$0xf]
          %v8286 = vld [vmem:[#allocation21 + $0x34] sm:$0xf]
          %v8287 = vld [vmem:[#allocation21 + $0x38] sm:$0xf]
          %v8288 = vld [vmem:[#allocation21 + $0x3c] sm:$0xf]
          %v8289 = vld [vmem:[#allocation21 + $0x40] sm:$0xf]
          %v8290 = vld [vmem:[#allocation21 + $0x44] sm:$0xf]
          %v8291 = vld [vmem:[#allocation21 + $0x48] sm:$0xf]
          %v8292 = vld [vmem:[#allocation21 + $0x4c] sm:$0xf]
          %v8293 = vld [vmem:[#allocation21 + $0x50] sm:$0xf]
          %v8294 = vld [vmem:[#allocation21 + $0x54] sm:$0xf]
          %v8295 = vld [vmem:[#allocation21 + $0x58] sm:$0xf]
          %v8296 = vld [vmem:[#allocation21 + $0x5c] sm:$0xf]
          %v8297 = vld [vmem:[#allocation21 + $0x60] sm:$0xf]
          %v8298 = vld [vmem:[#allocation21 + $0x64] sm:$0xf]
          %v8299 = vld [vmem:[#allocation21 + $0x68] sm:$0xf]
          %v8300 = vld [vmem:[#allocation21 + $0x6c] sm:$0xf]
          %v8301 = vld [vmem:[#allocation21 + $0x70] sm:$0xf]
          %v8302 = vld [vmem:[#allocation21 + $0x74] sm:$0xf]
          %v8303 = vld [vmem:[#allocation21 + $0x78] sm:$0xf]
          %v8304 = vld [vmem:[#allocation21 + $0x7c] sm:$0xf]
          %v8305 = vld [vmem:[#allocation21 + $0x80] sm:$0xf]
          %v8306 = vld [vmem:[#allocation21 + $0x84] sm:$0xf]
          %v8307 = vld [vmem:[#allocation21 + $0x88] sm:$0xf]
          %v8308 = vld [vmem:[#allocation21 + $0x8c] sm:$0xf]
          %v8309 = vld [vmem:[#allocation21 + $0x90] sm:$0xf]
          %v8310 = vld [vmem:[#allocation21 + $0x94] sm:$0xf]
          %v8311 = vld [vmem:[#allocation21 + $0x98] sm:$0xf]
          %v8312 = vld [vmem:[#allocation21 + $0x9c] sm:$0xf]
          %v8313 = vld [vmem:[#allocation21 + $0xa0] sm:$0xf]
          %v8314 = vld [vmem:[#allocation21 + $0xa4] sm:$0xf]
          %v8315 = vld [vmem:[#allocation21 + $0xa8] sm:$0xf]
          %v8316 = vld [vmem:[#allocation21 + $0xac] sm:$0xf]
          %v8317 = vld [vmem:[#allocation21 + $0xb0] sm:$0xf]
          %v8318 = vld [vmem:[#allocation21 + $0xb4] sm:$0xf]
          %v8319 = vld [vmem:[#allocation21 + $0xb8] sm:$0xf]
          %v8320 = vld [vmem:[#allocation21 + $0xbc] sm:$0xf]
          %v8321 = vld [vmem:[#allocation21 + $0xc0] sm:$0xf]
          %v8322 = vld [vmem:[#allocation21 + $0xc4] sm:$0xf]
          %v8323 = vld [vmem:[#allocation21 + $0xc8] sm:$0xf]
          %v8324 = vld [vmem:[#allocation21 + $0xcc] sm:$0xf]
          %v8325 = vld [vmem:[#allocation21 + $0xd0] sm:$0xf]
          %v8326 = vld [vmem:[#allocation21 + $0xd4] sm:$0xf]
          %v8327 = vld [vmem:[#allocation21 + $0xd8] sm:$0xf]
          %v8328 = vld [vmem:[#allocation21 + $0xdc] sm:$0xf]
          %v8329 = vld [vmem:[#allocation21 + $0xe0] sm:$0xf]
          %v8330 = vld [vmem:[#allocation21 + $0xe4] sm:$0xf]
          %v8331 = vld [vmem:[#allocation21 + $0xe8] sm:$0xf]
          %v8332 = vld [vmem:[#allocation21 + $0xec] sm:$0xf]
          %v8333 = vld [vmem:[#allocation21 + $0xf0] sm:$0xf]
          %v8334 = vld [vmem:[#allocation21 + $0xf4] sm:$0xf]
          %v8335 = vld [vmem:[#allocation21 + $0xf8] sm:$0xf]
          %v8336 = vld [vmem:[#allocation21 + $0xfc] sm:$0xf]
          %v8337 = vld [vmem:[#allocation22] sm:$0x1]
          %v8339 = vperm.slane %v8337, 0
          %v8405 = vunpack.c.l.b16 %v8273
          %v8406 = vunpack.c.l.b16 %v8274
          %v8407 = vunpack.c.l.b16 %v8275
          %v8408 = vunpack.c.l.b16 %v8276
          %v8409 = vunpack.c.l.b16 %v8277
          %v8410 = vunpack.c.l.b16 %v8278
          %v8411 = vunpack.c.l.b16 %v8279
          %v8412 = vunpack.c.l.b16 %v8280
          %v8413 = vunpack.c.l.b16 %v8281
          %v8414 = vunpack.c.l.b16 %v8282
          %v8415 = vunpack.c.l.b16 %v8283
          %v8416 = vunpack.c.l.b16 %v8284
          %v8417 = vunpack.c.l.b16 %v8285
          %v8418 = vunpack.c.l.b16 %v8286
          %v8419 = vunpack.c.l.b16 %v8287
          %v8420 = vunpack.c.l.b16 %v8288
          %v8421 = vunpack.c.l.b16 %v8289
          %v8422 = vunpack.c.l.b16 %v8290
          %v8423 = vunpack.c.l.b16 %v8291
          %v8424 = vunpack.c.l.b16 %v8292
          %v8425 = vunpack.c.l.b16 %v8293
          %v8426 = vunpack.c.l.b16 %v8294
          %v8427 = vunpack.c.l.b16 %v8295
          %v8428 = vunpack.c.l.b16 %v8296
          %v8429 = vunpack.c.l.b16 %v8297
          %v8430 = vunpack.c.l.b16 %v8298
          %v8431 = vunpack.c.l.b16 %v8299
          %v8432 = vunpack.c.l.b16 %v8300
          %v8433 = vunpack.c.l.b16 %v8301
          %v8434 = vunpack.c.l.b16 %v8302
          %v8435 = vunpack.c.l.b16 %v8303
          %v8436 = vunpack.c.l.b16 %v8304
          %v8437 = vunpack.c.l.b16 %v8305
          %v8438 = vunpack.c.l.b16 %v8306
          %v8439 = vunpack.c.l.b16 %v8307
          %v8440 = vunpack.c.l.b16 %v8308
          %v8441 = vunpack.c.l.b16 %v8309
          %v8442 = vunpack.c.l.b16 %v8310
          %v8443 = vunpack.c.l.b16 %v8311
          %v8444 = vunpack.c.l.b16 %v8312
          %v8445 = vunpack.c.l.b16 %v8313
          %v8446 = vunpack.c.l.b16 %v8314
          %v8447 = vunpack.c.l.b16 %v8315
          %v8448 = vunpack.c.l.b16 %v8316
          %v8449 = vunpack.c.l.b16 %v8317
          %v8450 = vunpack.c.l.b16 %v8318
          %v8451 = vunpack.c.l.b16 %v8319
          %v8452 = vunpack.c.l.b16 %v8320
          %v8453 = vunpack.c.l.b16 %v8321
          %v8454 = vunpack.c.l.b16 %v8322
          %v8455 = vunpack.c.l.b16 %v8323
          %v8456 = vunpack.c.l.b16 %v8324
          %v8457 = vunpack.c.l.b16 %v8325
          %v8458 = vunpack.c.l.b16 %v8326
          %v8459 = vunpack.c.l.b16 %v8327
          %v8460 = vunpack.c.l.b16 %v8328
          %v8461 = vunpack.c.l.b16 %v8329
          %v8462 = vunpack.c.l.b16 %v8330
          %v8463 = vunpack.c.l.b16 %v8331
          %v8464 = vunpack.c.l.b16 %v8332
          %v8465 = vunpack.c.l.b16 %v8333
          %v8466 = vunpack.c.l.b16 %v8334
          %v8467 = vunpack.c.l.b16 %v8335
          %v8468 = vunpack.c.l.b16 %v8336
          %v8469 = vpack.c.b16 %v8406, %v8405
          %v8470 = vpack.c.b16 %v8408, %v8407
          %v8471 = vpack.c.b16 %v8410, %v8409
          %v8472 = vpack.c.b16 %v8412, %v8411
          %v8473 = vpack.c.b16 %v8414, %v8413
          %v8474 = vpack.c.b16 %v8416, %v8415
          %v8475 = vpack.c.b16 %v8418, %v8417
          %v8476 = vpack.c.b16 %v8420, %v8419
          %v8477 = vpack.c.b16 %v8422, %v8421
          %v8478 = vpack.c.b16 %v8424, %v8423
          %v8479 = vpack.c.b16 %v8426, %v8425
          %v8480 = vpack.c.b16 %v8428, %v8427
          %v8481 = vpack.c.b16 %v8430, %v8429
          %v8482 = vpack.c.b16 %v8432, %v8431
          %v8483 = vpack.c.b16 %v8434, %v8433
          %v8484 = vpack.c.b16 %v8436, %v8435
          %v8485 = vpack.c.b16 %v8438, %v8437
          %v8486 = vpack.c.b16 %v8440, %v8439
          %v8487 = vpack.c.b16 %v8442, %v8441
          %v8488 = vpack.c.b16 %v8444, %v8443
          %v8489 = vpack.c.b16 %v8446, %v8445
          %v8490 = vpack.c.b16 %v8448, %v8447
          %v8491 = vpack.c.b16 %v8450, %v8449
          %v8492 = vpack.c.b16 %v8452, %v8451
          %v8493 = vpack.c.b16 %v8454, %v8453
          %v8494 = vpack.c.b16 %v8456, %v8455
          %v8495 = vpack.c.b16 %v8458, %v8457
          %v8496 = vpack.c.b16 %v8460, %v8459
          %v8497 = vpack.c.b16 %v8462, %v8461
          %v8498 = vpack.c.b16 %v8464, %v8463
          %v8499 = vpack.c.b16 %v8466, %v8465
          %v8500 = vpack.c.b16 %v8468, %v8467
          %8533 = vmatpush.bf16.msra.mxu0 %v8476
          %8534 = vmatpush.bf16.msra.mxu0 %v8475
          %8535 = vmatpush.bf16.msra.mxu0 %v8474
          %8536 = vmatpush.bf16.msra.mxu0 %v8473
          %8537 = vmatpush.bf16.msra.mxu0 %v8472
          %8538 = vmatpush.bf16.msra.mxu0 %v8471
          %8539 = vmatpush.bf16.msra.mxu0 %v8470
          %8540 = vmatpush.bf16.msra.mxu0 %v8469
          %8541 = vmatmul.bf16.gmra.mxu0 %v8269
          %v8542 = vpop.f32.mrf.mxu0
          %v8543 = vadd.f32 %v8339, %v8542
          %v8544 = vpop.f32.mrf.mxu0
          %v8545 = vadd.f32 %v8339, %v8544
          %8546 = vdwg.mxu0
          %8547 = vmatpush.bf16.msra.mxu0 %v8484
          %8548 = vmatpush.bf16.msra.mxu0 %v8483
          %8549 = vmatpush.bf16.msra.mxu0 %v8482
          %8550 = vmatpush.bf16.msra.mxu0 %v8481
          %8551 = vmatpush.bf16.msra.mxu0 %v8480
          %8552 = vmatpush.bf16.msra.mxu0 %v8479
          %8553 = vmatpush.bf16.msra.mxu0 %v8478
          %8554 = vmatpush.bf16.msra.mxu0 %v8477
          %8555 = vmatmul.bf16.gmra.mxu0 %v8270
          %v8556 = vpop.f32.mrf.mxu0
          %v8557 = vadd.f32 %v8543, %v8556
          %v8558 = vpop.f32.mrf.mxu0
          %v8559 = vadd.f32 %v8545, %v8558
          %8560 = vdwg.mxu0
          %8561 = vmatpush.bf16.msra.mxu0 %v8492
          %8562 = vmatpush.bf16.msra.mxu0 %v8491
          %8563 = vmatpush.bf16.msra.mxu0 %v8490
          %8564 = vmatpush.bf16.msra.mxu0 %v8489
          %8565 = vmatpush.bf16.msra.mxu0 %v8488
          %8566 = vmatpush.bf16.msra.mxu0 %v8487
          %8567 = vmatpush.bf16.msra.mxu0 %v8486
          %8568 = vmatpush.bf16.msra.mxu0 %v8485
          %8569 = vmatmul.bf16.gmra.mxu0 %v8271
          %v8570 = vpop.f32.mrf.mxu0
          %v8571 = vadd.f32 %v8557, %v8570
          %v8572 = vpop.f32.mrf.mxu0
          %v8573 = vadd.f32 %v8559, %v8572
          %8574 = vdwg.mxu0
          %8575 = vmatpush.bf16.msra.mxu0 %v8500
          %8576 = vmatpush.bf16.msra.mxu0 %v8499
          %8577 = vmatpush.bf16.msra.mxu0 %v8498
          %8578 = vmatpush.bf16.msra.mxu0 %v8497
          %8579 = vmatpush.bf16.msra.mxu0 %v8496
          %8580 = vmatpush.bf16.msra.mxu0 %v8495
          %8581 = vmatpush.bf16.msra.mxu0 %v8494
          %8582 = vmatpush.bf16.msra.mxu0 %v8493
          %8583 = vmatmul.bf16.gmra.mxu0 %v8272
          %v8584 = vpop.f32.mrf.mxu0
          %v8585 = vadd.f32 %v8571, %v8584
          %v8586 = vpop.f32.mrf.mxu0
          %v8587 = vadd.f32 %v8573, %v8586
          %8588 = vdwg.mxu0
          %8589 = vmax.xlane.f32.xlu0 %v8585
          %v8590 = vpop.xlane.xlu0 %8589
          %8591 = vmax.xlane.f32.xlu0 %v8587
          %v8592 = vpop.xlane.xlu0 %8591
          %v8593 = vsub.f32 %v8585, %v8590
          %v8594 = vsub.f32 %v8587, %v8592
          %v8595 = vmul.f32 %v8593, 1.442695
          %v8596 = vpow.pop %v8595
          %v8597 = vmul.f32 %v8594, 1.442695
          %v8598 = vpow.pop %v8597
          %8599 = vadd.xlane.f32.xlu0 %v8596
          %v8600 = vpop.xlane.xlu0 %8599
          %8601 = vadd.xlane.f32.xlu0 %v8598
          %v8602 = vpop.xlane.xlu0 %8601
          %v8603 = vrcp.pop %v8600
          %v8604 = vmul.f32 %v8600, %v8603
          %v8605 = vsub.f32 1.0, %v8604
          %v8606 = vmul.f32 %v8603, %v8605
          %v8607 = vadd.f32 %v8603, %v8606
          %vm8608 = vweird.f32 %v8600
          %vm8609 = vweird.f32 %v8603
          %vm8610 = vmor %vm8608, %vm8609
          %v8611 = vsel %vm8610, %v8603, %v8607
          %v8612 = vand.u32 2147483647, %v8600
          %vm8613 = vcmp.eq.f32.partialorder %v8612, 8.507059e+37
          %v8614 = vand.u32 %v8600, 2147483648
          %v8615 = vor.u32 1.1754944e-38, %v8614
          %v8616 = vsel %vm8613, %v8615, %v8611
          %v8617 = vmul.f32 %v8596, %v8616
          %v8618 = vrcp.pop %v8602
          %v8619 = vmul.f32 %v8602, %v8618
          %v8620 = vsub.f32 1.0, %v8619
          %v8621 = vmul.f32 %v8618, %v8620
          %v8622 = vadd.f32 %v8618, %v8621
          %vm8623 = vweird.f32 %v8602
          %vm8624 = vweird.f32 %v8618
          %vm8625 = vmor %vm8623, %vm8624
          %v8626 = vsel %vm8625, %v8618, %v8622
          %v8627 = vand.u32 2147483647, %v8602
          %vm8628 = vcmp.eq.f32.partialorder %v8627, 8.507059e+37
          %v8629 = vand.u32 %v8602, 2147483648
          %v8630 = vor.u32 1.1754944e-38, %v8629
          %v8631 = vsel %vm8628, %v8630, %v8626
          %v8632 = vmul.f32 %v8598, %v8631
          %8633 = vst [vmem:[%s18] sm:$0xff] %v8617
          %8634 = vst [vmem:[%s18 + $0x8] sm:$0xff] %v8632
          %v8635 = vlog2.pop %v8600
          %v8636 = vmul.f32 %v8635, 0.6931472
          %v8637 = vlog2.pop %v8602
          %v8638 = vmul.f32 %v8637, 0.6931472
          %v8639 = vsub.f32 %v8593, %v8636
          %v8640 = vsub.f32 %v8594, %v8638
          %8641 = vst [vmem:[%s19] sm:$0xff] %v8639
          %8642 = vst [vmem:[%s19 + $0x8] sm:$0xff] %v8640
        $region172: #{pos_model_forward.1} parent=91 // pred_fallthru
          _
        // Predicated region
        $region173: #{pos_model_forward.1} parent=91 // pred_check
          %p8643 = pneg %p503
        $region174: #{pos_model_forward.1} parent=91 // pred_check_branch
          %8645 = sbr.rel (%p8643) target = $region176
        $region175: #{pos_model_forward.1} parent=91 // pred_region
          _
        $region176: #{pos_model_forward.1} parent=91 // pred_fallthru
          _
        // Predicated region
        $region177: #{pos_model_forward.1} parent=91 // pred_check
          %p8646 = pneg %p524
        $region178: #{pos_model_forward.1} parent=91 // pred_check_branch
          %8648 = sbr.rel (%p8646) target = $region180
        $region179: #{pos_model_forward.1} parent=91 // pred_region
          _
        $region180: #{pos_model_forward.1} parent=91 // pred_fallthru
          _
        // Predicated region
        $region181: #{pos_model_forward.1} parent=91 // pred_check
          %p8649 = pneg %p503
        $region182: #{pos_model_forward.1} parent=91 // pred_check_branch
          %8651 = sbr.rel (%p8649) target = $region184
        $region183: #{pos_model_forward.1} parent=91 // pred_region
          _
        $region184: #{pos_model_forward.1} parent=91 // pred_fallthru
          _
        // Predicated region
        $region185: #{pos_model_forward.1} parent=91 // pred_check
          %p8652 = pneg %p524
        $region186: #{pos_model_forward.1} parent=91 // pred_check_branch
          %8654 = sbr.rel (%p8652) target = $region188
        $region187: #{pos_model_forward.1} parent=91 // pred_region
          _
        $region188: #{pos_model_forward.1} parent=91 // pred_fallthru
          _
      $region92: #{pos_model_forward.1} parent=5 // pred_fallthru
        _
      %p8655 = scmp.le.s32.totalorder 2, %s29
      // Predicated region
      $region189: #{pos_model_forward.1} parent=5 // pred_check
        %p8656 = pneg %p8655
      $region190: #{pos_model_forward.1} parent=5 // pred_check_branch
        %8658 = sbr.rel (%p8656) target = $region192
      $region191: #{pos_model_forward.1} parent=5 // pred_region
        %s8659 = ssub.s32 %s29, 2
      $region192: #{pos_model_forward.1} parent=5 // pred_fallthru
        _
    $region6: #{pos_model_forward.1} parent=1 // loop_footer
      %s33 = sadd.s32 1, %s29
    $region7: #{pos_model_forward.1} parent=1 // loop_footer_branch
      %28 = sbr.rel target = $region3
    $region8: #{pos_model_forward.1} parent=1 // loop_exit
      _
    %8660 = vsyncpa [#allocation6], 1
    %s8661 = scalar_lea.sflag [#allocation6], 1
    %8662 = vsyncpa %s8661, 1
    %8663 = vsyncpa [#allocation8], 1
    %8664 = vsyncpa [#allocation23], 1

</llo_original>
